<compile_context>
chip_gen: v6e
topology: v6e:2x2x1
jax: 0.10.0
libtpu: 0.0.40
codegen_flags: <defaults>
</compile_context>

<pallas_src>
import functools

import jax
import jax.numpy as jnp
import numpy as np
from jax.experimental import pallas as pl
from jax.experimental.pallas import tpu as pltpu


def _round_up(a, b):
    return -(-a // b) * b


def _pick_k_tile(k):
    for c in (512, 256, 128):
        if k % c == 0:
            return c
    return k


def _tpu_defaults():
    """Per-generation (1x1 row tile, VMEM budget in bytes)."""
    try:
        kind = jax.devices()[0].device_kind.lower()
    except Exception:  # pragma: no cover
        kind = ""
    if "v5" in kind or "v6" in kind:
        # 128 MiB VMEM parts: bigger row tiles halve the per-row-block weight
        # re-fetches that make the conv3 K loop HBM-bound on v6e.
        return 1024, 100 * 1024 * 1024
    # v7x (64 MiB physical VMEM) and unknown parts: preserve double-buffering.
    return 512, 48 * 1024 * 1024


_TM_1X1, _VMEM_LIMIT = _tpu_defaults()


# ----------------------------- Pallas kernels ------------------------------ #

def _mm_bias_kernel(x_ref, w_ref, b_ref, o_ref, acc_ref, *, relu):
    """out = relu?(x @ w + bias); grid = (row blocks, K blocks)."""
    k = pl.program_id(1)

    @pl.when(k == 0)
    def _():
        acc_ref[...] = jnp.zeros_like(acc_ref)

    acc_ref[...] += jnp.dot(x_ref[...].astype(jnp.bfloat16), w_ref[...],
                            preferred_element_type=jnp.float32)

    @pl.when(k == pl.num_programs(1) - 1)
    def _():
        out = acc_ref[...] + b_ref[...]
        if relu:
            out = jnp.maximum(out, 0.0)
        o_ref[...] = out.astype(o_ref.dtype)


def _mm_bias_res_kernel(x_ref, w_ref, b_ref, r_ref, o_ref, acc_ref):
    """out = relu(x @ w + bias + residual)   (identity skip path)."""
    k = pl.program_id(1)

    @pl.when(k == 0)
    def _():
        acc_ref[...] = jnp.zeros_like(acc_ref)

    acc_ref[...] += jnp.dot(x_ref[...].astype(jnp.bfloat16), w_ref[...],
                            preferred_element_type=jnp.float32)

    @pl.when(k == pl.num_programs(1) - 1)
    def _():
        out = acc_ref[...] + b_ref[...] + r_ref[...].astype(jnp.float32)
        o_ref[...] = jnp.maximum(out, 0.0).astype(o_ref.dtype)


def _mm_bias_ds_kernel(x_ref, w_ref, b_ref, xd_ref, wd_ref, o_ref, acc_ref):
    """out = relu(x @ w + xd @ wd + bias)  (conv3+bn3 fused with downsample)."""
    k = pl.program_id(1)

    @pl.when(k == 0)
    def _():
        # Downsample matmul initializes the accumulator; xd/wd index maps are
        # constant along k so their blocks are fetched once per row block.
        acc_ref[...] = jnp.dot(xd_ref[...].astype(jnp.bfloat16), wd_ref[...],
                               preferred_element_type=jnp.float32)

    acc_ref[...] += jnp.dot(x_ref[...].astype(jnp.bfloat16), w_ref[...],
                            preferred_element_type=jnp.float32)

    @pl.when(k == pl.num_programs(1) - 1)
    def _():
        out = acc_ref[...] + b_ref[...]
        o_ref[...] = jnp.maximum(out, 0.0).astype(o_ref.dtype)


def _conv3x3_bn_relu_kernel(x_ref, w_ref, b_ref, o_ref, *,
                            taps, tm, sub_r, sub_c, win_rows):
    """3x3 conv as 9 shift-offset matmuls on bf16 tap views; bias + ReLU.

    x_ref holds the whole flattened per-image slab (fetched once per image:
    its index map is constant along the row-block grid axis).  For every
    sub_r-row sub-block we do ONE aligned dynamic load of the haloed window;
    the 9 taps are cheap static (sublane-shifted) views of it, fed straight to
    the MXU in bf16.  acc is at most (sub_r, sub_c) f32 so it stays in vregs.
    """
    cout = o_ref.shape[-1]
    for s in range(tm // sub_r):
        base = pl.multiple_of(pl.program_id(1) * tm + s * sub_r, sub_r)
        win = x_ref[pl.ds(base, win_rows), :]            # bf16, aligned start
        for co in range(0, cout, sub_c):
            acc = jnp.zeros((sub_r, sub_c), jnp.float32)
            for t, off in enumerate(taps):               # static unroll, 9 taps
                acc = acc + jnp.dot(win[off:off + sub_r, :],
                                    w_ref[t, :, co:co + sub_c],
                                    preferred_element_type=jnp.float32)
            out = jnp.maximum(acc + b_ref[:, co:co + sub_c], 0.0)
            o_ref[s * sub_r:(s + 1) * sub_r, co:co + sub_c] = out.astype(o_ref.dtype)


# ------------------------------ Kernel wrappers ----------------------------- #

def fused_conv1x1_bn(x2d, w, bias, *, relu=True, residual=None, ds=None,
                     out_dtype=jnp.float32, tm=None):
    """y = relu?(x2d @ w + bias [+ residual | + xd @ wd]).

    x2d: (M, K) f32 or bf16 (cast to bf16 per block inside the kernel);
    w:   (K, Cout) pre-folded bf16; bias: (Cout,) f32 (BN already folded);
    residual: (M, Cout); ds = (xd2d (M, Kd), wd (Kd, Cout) bf16).
    """
    M, K = x2d.shape
    cout = w.shape[1]

    tm = _TM_1X1 if tm is None else tm
    tm = min(tm, _round_up(M, 8))
    m_pad = _round_up(M, tm)
    tk = _pick_k_tile(K)
    grid = (m_pad // tm, K // tk)

    def pad_rows(a):
        return a if m_pad == M else jnp.pad(a, ((0, m_pad - M), (0, 0)))

    xb = pad_rows(x2d)
    bias_v = bias.reshape(1, cout).astype(jnp.float32)

    x_spec = pl.BlockSpec((tm, tk), lambda i, k: (i, k))
    w_spec = pl.BlockSpec((tk, cout), lambda i, k: (k, 0))
    b_spec = pl.BlockSpec((1, cout), lambda i, k: (0, 0))
    o_spec = pl.BlockSpec((tm, cout), lambda i, k: (i, 0))

    flops = 2 * m_pad * K * cout
    bytes_acc = (xb.size * xb.dtype.itemsize + w.size * 2 * grid[0]
                 + m_pad * cout * np.dtype(out_dtype).itemsize)

    if ds is not None:
        xd2d, wd = ds
        kd = xd2d.shape[1]
        xdb = pad_rows(xd2d)
        kernel = _mm_bias_ds_kernel
        inputs = [xb, w, bias_v, xdb, wd]
        in_specs = [x_spec, w_spec, b_spec,
                    pl.BlockSpec((tm, kd), lambda i, k: (i, 0)),
                    pl.BlockSpec((kd, cout), lambda i, k: (0, 0))]
        flops += 2 * m_pad * kd * cout
        bytes_acc += xdb.size * xdb.dtype.itemsize + wd.size * 2
    elif residual is not None:
        rb = pad_rows(residual)
        kernel = _mm_bias_res_kernel
        inputs = [xb, w, bias_v, rb]
        in_specs = [x_spec, w_spec, b_spec,
                    pl.BlockSpec((tm, cout), lambda i, k: (i, 0))]
        bytes_acc += rb.size * rb.dtype.itemsize
    else:
        kernel = functools.partial(_mm_bias_kernel, relu=relu)
        inputs = [xb, w, bias_v]
        in_specs = [x_spec, w_spec, b_spec]

    out = pl.pallas_call(
        kernel,
        out_shape=jax.ShapeDtypeStruct((m_pad, cout), out_dtype),
        grid_spec=pltpu.PrefetchScalarGridSpec(
            num_scalar_prefetch=0,
            grid=grid,
            in_specs=in_specs,
            out_specs=o_spec,
            scratch_shapes=[pltpu.VMEM((tm, cout), jnp.float32)]),
        compiler_params=pltpu.CompilerParams(
            dimension_semantics=("parallel", "arbitrary"),
            vmem_limit_bytes=_VMEM_LIMIT),
        cost_estimate=pl.CostEstimate(flops=int(flops), transcendentals=0,
                                      bytes_accessed=int(bytes_acc)),
    )(*inputs)
    return out if m_pad == M else out[:M]


def conv3x3_bn_relu(x_nhwc, w9, bias, *, dilation=1, tm_target=512):
    """3x3 conv (stride=1, groups=1, padding=dilation) + folded BN + ReLU.

    x_nhwc: (N, H, W, C) bf16; w9: (9, C, Cout) pre-folded bf16; bias (Cout,).
    Returns NHWC bf16.
    """
    N, H, W, C = x_nhwc.shape
    d = int(dilation)
    cout = w9.shape[-1]

    # Pad the row width to a multiple of 16 so the ky tap offsets stay
    # sublane-aligned for bf16 (only kx in {1,2} remain unaligned).
    Wp = _round_up(W + 2 * d, 16)
    mo = H * Wp                              # output rows/image (incl. cropped cols)
    sub_r = 128
    sub_c = 256 if (cout > 256 and cout % 256 == 0) else cout
    tm = min(tm_target, _round_up(mo, sub_r))
    nb = -(-mo // tm)
    halo = 2 * d * Wp + 2 * d                # largest tap offset
    win_rows = _round_up(sub_r + halo, 16)
    need = nb * tm - sub_r + win_rows        # highest read of the last window
    Hp_tot = max(H + 2 * d, -(-need // Wp))
    flat_len = Hp_tot * Wp

    # One pad supplies the conv halo AND the flattened over-read tail in a
    # single pass (no second pad, no halo duplication, no jnp.stack).
    xp = jnp.pad(x_nhwc.astype(jnp.bfloat16),
                 ((0, 0), (d, Hp_tot - H - d), (d, Wp - W - d), (0, 0)))
    xflat = xp.reshape(N, flat_len, C)

    taps = tuple(ky * d * Wp + kx * d for ky in range(3) for kx in range(3))
    bias_v = bias.reshape(1, cout).astype(jnp.float32)

    flops = 2 * N * nb * tm * 9 * C * cout
    bytes_acc = xflat.size * 2 + w9.size * 2 + N * nb * tm * cout * 2

    out = pl.pallas_call(
        functools.partial(_conv3x3_bn_relu_kernel, taps=taps, tm=tm,
                          sub_r=sub_r, sub_c=sub_c, win_rows=win_rows),
        out_shape=jax.ShapeDtypeStruct((N, nb * tm, cout), jnp.bfloat16),
        grid_spec=pltpu.PrefetchScalarGridSpec(
            num_scalar_prefetch=0,
            grid=(N, nb),
            in_specs=[pl.BlockSpec((None, flat_len, C), lambda n, b: (n, 0, 0)),
                      pl.BlockSpec((9, C, cout), lambda n, b: (0, 0, 0)),
                      pl.BlockSpec((1, cout), lambda n, b: (0, 0))],
            out_specs=pl.BlockSpec((None, tm, cout), lambda n, b: (n, b, 0))),
        compiler_params=pltpu.CompilerParams(
            dimension_semantics=("parallel", "arbitrary"),
            vmem_limit_bytes=_VMEM_LIMIT),
        cost_estimate=pl.CostEstimate(flops=int(flops), transcendentals=0,
                                      bytes_accessed=int(bytes_acc)),
    )(xflat, w9, bias_v)

    out = out[:, :mo, :].reshape(N, H, Wp, cout)
    # TODO(synk): the Wp->W column crop is one extra copy pass; deferring it to
    # the final transpose would require Wp-padded identity/downsample inputs.
    return out[:, :, :W, :]


# ------------------------------- JAX glue ---------------------------------- #

def _im2col_3x3(x_nhwc, stride=1, dilation=1):
    """3x3, padding=dilation, groups=1.  Returns ((N*Ho*Wo, 9*C), (N, Ho, Wo))."""
    N, H, W, C = x_nhwc.shape
    pad = dilation
    xp = jnp.pad(x_nhwc, ((0, 0), (pad, pad), (pad, pad), (0, 0)))
    Ho = (H + 2 * pad - dilation * 2 - 1) // stride + 1
    Wo = (W + 2 * pad - dilation * 2 - 1) // stride + 1
    cols = []
    for ky in range(3):
        for kx in range(3):
            y0, x0 = ky * dilation, kx * dilation
            patch = xp[:, y0:y0 + (Ho - 1) * stride + 1:stride,
                          x0:x0 + (Wo - 1) * stride + 1:stride, :]
            cols.append(patch)
    cols = jnp.concatenate(cols, axis=-1)            # (N, Ho, Wo, 9*C)
    return cols.reshape(N * Ho * Wo, 9 * C), (N, Ho, Wo)


def _bn_fold(gamma, beta, mean, var, eps=1e-5):
    scale = gamma / jnp.sqrt(var + eps)
    bias = beta - mean * scale
    return scale, bias


def init_bottleneck_params(key, inplanes, planes, stride=1, groups=1, base_width=64):
    expansion = 4
    width = int(planes * (base_width / 64.0)) * groups
    outp = planes * expansion
    keys = iter(jax.random.split(key, 20))

    def bn_params(c):
        g = 0.5 + jax.random.uniform(next(keys), (c,), jnp.float32)
        b = 0.1 * jax.random.normal(next(keys), (c,), jnp.float32)
        m = 0.1 * jax.random.normal(next(keys), (c,), jnp.float32)
        v = 0.5 + jax.random.uniform(next(keys), (c,), jnp.float32)
        return (g, b, m, v)

    p = {}
    # conv1: (Cin, width); conv2: 3x3 flattened (ky,kx,cin)->cout as
    # (9*width, width); conv3: (width, 4*planes).
    p["w1"] = 0.3 * jax.random.normal(next(keys), (inplanes, width), jnp.float32)
    p["bn1"] = bn_params(width)
    p["w2"] = 0.2 * jax.random.normal(next(keys), (9 * width, width), jnp.float32)
    p["bn2"] = bn_params(width)
    p["w3"] = 0.3 * jax.random.normal(next(keys), (width, outp), jnp.float32)
    p["bn3"] = bn_params(outp)
    if stride != 1 or inplanes != outp:
        p["wd"] = 0.3 * jax.random.normal(next(keys), (inplanes, outp), jnp.float32)
        p["bnd"] = bn_params(outp)
    return p


def fold_bottleneck_params(p):
    """Fold BN running stats into bf16 weights + f32 biases ONCE (inference)."""
    def fold(w, bn):
        s, b = _bn_fold(*bn)
        return (w * s[None, :]).astype(jnp.bfloat16), b.astype(jnp.float32)

    width = p["w1"].shape[1]
    fp = {}
    fp["w1"], fp["b1"] = fold(p["w1"], p["bn1"])
    w2, fp["b2"] = fold(p["w2"], p["bn2"])
    fp["w2"] = w2.reshape(9, width, width)               # (tap, cin, cout)
    fp["w3"], fp["b3"] = fold(p["w3"], p["bn3"])
    if "wd" in p:
        fp["wd"], bd = fold(p["wd"], p["bnd"])
        fp["b3"] = fp["b3"] + bd                          # biases always sum pre-ReLU
    return fp


def bottleneck_forward(x_nchw, fp, *, stride=1, dilation=1):
    """Pallas implementation of Bottleneck.forward (folded params); NCHW f32 I/O."""
    x = jnp.transpose(x_nchw, (0, 2, 3, 1))               # NCHW -> NHWC
    N, H, W, cin = x.shape
    M = N * H * W
    width = fp["w1"].shape[1]
    outp = fp["w3"].shape[1]

    # conv1 (1x1) + bn1 + relu  (f32 -> bf16 cast happens inside the kernel)
    h = fused_conv1x1_bn(x.reshape(M, cin), fp["w1"], fp["b1"],
                         relu=True, out_dtype=jnp.bfloat16)

    # conv2 (3x3, stride, dilation, groups=1) + bn2 + relu
    if stride == 1:
        h2 = conv3x3_bn_relu(h.reshape(N, H, W, width), fp["w2"], fp["b2"],
                             dilation=dilation)
        Ho, Wo = H, W
        h2d = h2.reshape(N * Ho * Wo, width)
    else:
        # TODO(synk): slow path (materialized im2col); only used for stride != 1.
        cols, (_, Ho, Wo) = _im2col_3x3(h.reshape(N, H, W, width),
                                        stride, dilation)
        h2d = fused_conv1x1_bn(cols, fp["w2"].reshape(9 * width, width),
                               fp["b2"], relu=True, out_dtype=jnp.bfloat16)

    # conv3 (1x1) + bn3 (+ downsample / identity) + add + relu
    M3 = N * Ho * Wo
    if "wd" in fp:
        xd = x[:, ::stride, ::stride, :].reshape(M3, cin)
        out = fused_conv1x1_bn(h2d, fp["w3"], fp["b3"], relu=True,
                               ds=(xd, fp["wd"]), out_dtype=jnp.float32)
    else:
        assert stride == 1 and cin == outp, (
            "identity shortcut requires stride == 1 and inplanes == 4*planes")
        out = fused_conv1x1_bn(h2d, fp["w3"], fp["b3"], relu=True,
                               residual=x.reshape(M3, cin),
                               out_dtype=jnp.float32)

    out = out.reshape(N, Ho, Wo, outp)
    return jnp.transpose(out, (0, 3, 1, 2))               # NHWC -> NCHW


# ------------------------- pure-JAX reference checks ------------------------ #

def bottleneck_reference(x_nchw, p, *, stride=1, dilation=1):
    """f32 reference on the raw (unfolded) parameters."""
    x = jnp.transpose(x_nchw, (0, 2, 3, 1)).astype(jnp.float32)

    def bn(y, bp):
        g, b, m, v = bp
        return (y - m) / jnp.sqrt(v + 1e-5) * g + b

    def conv1x1(y, w, s=1):
        y = y[:, ::s, ::s, :]
        return jnp.einsum("nhwc,co->nhwo", y, w, precision="highest")

    def conv3x3(y, w9, s, d):
        cols, (n, ho, wo) = _im2col_3x3(y, s, d)
        out = jnp.einsum("mk,ko->mo", cols, w9, precision="highest")
        return out.reshape(n, ho, wo, -1)

    out = jax.nn.relu(bn(conv1x1(x, p["w1"]), p["bn1"]))
    out = jax.nn.relu(bn(conv3x3(out, p["w2"], stride, dilation), p["bn2"]))
    out = bn(conv1x1(out, p["w3"]), p["bn3"])
    identity = bn(conv1x1(x, p["wd"], stride), p["bnd"]) if "wd" in p else x
    out = jax.nn.relu(out + identity)
    return jnp.transpose(out, (0, 3, 1, 2))


def bottleneck_reference_bf16(x_nchw, fp, *, stride=1, dilation=1):
    """Reference mirroring the kernels' bf16 cast points (tight structural check)."""
    x = jnp.transpose(x_nchw, (0, 2, 3, 1)).astype(jnp.float32)
    N, H, W, cin = x.shape
    width = fp["w1"].shape[1]
    bf = lambda a: a.astype(jnp.bfloat16).astype(jnp.float32)
    f32 = lambda a: a.astype(jnp.float32)

    h1 = jax.nn.relu(jnp.einsum("nhwc,co->nhwo", bf(x), f32(fp["w1"]),
                                precision="highest") + fp["b1"])
    h1 = bf(h1)
    cols, (n, ho, wo) = _im2col_3x3(h1, stride, dilation)
    h2 = jax.nn.relu(jnp.einsum("mk,ko->mo", cols,
                                f32(fp["w2"].reshape(9 * width, width)),
                                precision="highest") + fp["b2"])
    h2 = bf(h2)
    out = jnp.einsum("mk,ko->mo", h2, f32(fp["w3"]), precision="highest") + fp["b3"]
    if "wd" in fp:
        xd = bf(x[:, ::stride, ::stride, :]).reshape(n * ho * wo, cin)
        out = out + jnp.einsum("mk,ko->mo", xd, f32(fp["wd"]), precision="highest")
    else:
        out = out + x.reshape(n * ho * wo, cin)
    out = jax.nn.relu(out).reshape(n, ho, wo, -1)
    return jnp.transpose(out, (0, 3, 1, 2))


if __name__ == "__main__":
    k0, k1, k2, k3 = jax.random.split(jax.random.PRNGKey(0), 4)

    # --- config 1: projection (downsample) shortcut ------------------------ #
    inplanes, planes, stride = 4, 4, 1            # width=4, out=16 != inplanes
    x = jax.random.normal(k0, (2, inplanes, 16, 16), dtype=jnp.float32)
    raw = init_bottleneck_params(k1, inplanes, planes, stride)
    folded = fold_bottleneck_params(raw)

    fwd = jax.jit(functools.partial(bottleneck_forward, stride=stride))
    out = jax.block_until_ready(fwd(x, folded))
    assert out.shape == (2, planes * 4, 16, 16), out.shape

    np.testing.assert_allclose(                   # tight: same bf16 cast points
        np.asarray(out),
        np.asarray(bottleneck_reference_bf16(x, folded, stride=stride)),
        rtol=1e-2, atol=1e-2)
    np.testing.assert_allclose(                   # loose: true f32 reference
        np.asarray(out),
        np.asarray(bottleneck_reference(x, raw, stride=stride)),
        rtol=1e-1, atol=1e-1)

    # --- config 2: identity shortcut ---------------------------------------- #
    inplanes2, planes2 = 16, 4                    # inplanes == 4*planes
    x2 = jax.random.normal(k2, (2, inplanes2, 8, 8), dtype=jnp.float32)
    raw2 = init_bottleneck_params(k3, inplanes2, planes2, 1)
    folded2 = fold_bottleneck_params(raw2)

    out2 = jax.block_until_ready(jax.jit(bottleneck_forward)(x2, folded2))
    assert out2.shape == (2, 4 * planes2, 8, 8), out2.shape
    np.testing.assert_allclose(
        np.asarray(out2), np.asarray(bottleneck_reference_bf16(x2, folded2)),
        rtol=1e-2, atol=1e-2)
    np.testing.assert_allclose(
        np.asarray(out2), np.asarray(bottleneck_reference(x2, raw2)),
        rtol=1e-1, atol=1e-1)

    print("KERNEL_OK")
</pallas_src>

<mosaic_0001>
module attributes {stable_mosaic.version = 11 : i64} {
  func.func @_mm_bias_kernel(%arg0: i32, %arg1: i32, %arg2: memref<512x4xf32, #tpu.memory_space<vmem>>, %arg3: memref<4x4xbf16, #tpu.memory_space<vmem>>, %arg4: memref<1x4xf32, #tpu.memory_space<vmem>>, %arg5: memref<512x4xbf16, #tpu.memory_space<vmem>>, %arg6: memref<512x4xf32, #tpu.memory_space<vmem>>) attributes {dimension_semantics = [#tpu.dimension_semantics<parallel>, #tpu.dimension_semantics<arbitrary>], iteration_bounds = array<i64: 1, 1>, scalar_prefetch = 0 : i64, scratch_operands = 1 : i64, tpu.core_type = #tpu.core_type<tc>, window_params = [{transform_indices = @transform_0, window_bounds = array<i64: 512, 4>}, {transform_indices = @transform_1, window_bounds = array<i64: 4, 4>}, {pipeline_mode = #tpu.pipeline_mode<synchronous>, transform_indices = @transform_2, window_bounds = array<i64: 1, 4>}, {transform_indices = @transform_3, window_bounds = array<i64: 512, 4>}]} {
    %c0_i32 = arith.constant 0 : i32
    %0 = arith.cmpi eq, %arg1, %c0_i32 : i32
    %1 = arith.extui %0 : i1 to i32
    %c0_i32_0 = arith.constant 0 : i32
    %2 = arith.cmpi ne, %1, %c0_i32_0 : i32
    scf.if %2 {
      %cst_10 = arith.constant 0.000000e+00 : f32
      %13 = vector.broadcast %cst_10 : f32 to vector<512x4xf32>
      %c0_11 = arith.constant 0 : index
      %c0_12 = arith.constant 0 : index
      %14 = vector.load %arg6[%c0_11, %c0_12] : memref<512x4xf32, #tpu.memory_space<vmem>>, vector<512x4xf32>
      tpu.vector_store %arg6[%c0_11, %c0_12], %13 {strides = array<i32>} : memref<512x4xf32, #tpu.memory_space<vmem>>, vector<512x4xf32>,
    } else {
    }
    %c0 = arith.constant 0 : index
    %c0_1 = arith.constant 0 : index
    %3 = vector.load %arg6[%c0, %c0_1] : memref<512x4xf32, #tpu.memory_space<vmem>>, vector<512x4xf32>
    %c0_2 = arith.constant 0 : index
    %c0_3 = arith.constant 0 : index
    %4 = vector.load %arg2[%c0_2, %c0_3] : memref<512x4xf32, #tpu.memory_space<vmem>>, vector<512x4xf32>
    %5 = arith.truncf %4 : vector<512x4xf32> to vector<512x4xbf16>
    %c0_4 = arith.constant 0 : index
    %c0_5 = arith.constant 0 : index
    %6 = vector.load %arg3[%c0_4, %c0_5] : memref<4x4xbf16, #tpu.memory_space<vmem>>, vector<4x4xbf16>
    %cst = arith.constant dense<0.000000e+00> : vector<512x4xf32>
    %7 = tpu.matmul %5, %6, %cst {dimension_numbers = #tpu.dot_dimension_numbers<[1], [0], [0], [1], [0, 0, 1, 1], [], []>} : vector<512x4xbf16>, vector<4x4xbf16>, vector<512x4xf32> -> vector<512x4xf32>
    %8 = arith.addf %3, %7 : vector<512x4xf32>
    %c0_6 = arith.constant 0 : index
    %c0_7 = arith.constant 0 : index
    %9 = vector.load %arg6[%c0_6, %c0_7] : memref<512x4xf32, #tpu.memory_space<vmem>>, vector<512x4xf32>
    tpu.vector_store %arg6[%c0_6, %c0_7], %8 {strides = array<i32>} : memref<512x4xf32, #tpu.memory_space<vmem>>, vector<512x4xf32>,
    %c0_i32_8 = arith.constant 0 : i32
    %10 = arith.cmpi eq, %arg1, %c0_i32_8 : i32
    %11 = arith.extui %10 : i1 to i32
    %c0_i32_9 = arith.constant 0 : i32
    %12 = arith.cmpi ne, %11, %c0_i32_9 : i32
    scf.if %12 {
      %c0_10 = arith.constant 0 : index
      %c0_11 = arith.constant 0 : index
      %13 = vector.load %arg6[%c0_10, %c0_11] : memref<512x4xf32, #tpu.memory_space<vmem>>, vector<512x4xf32>
      %c0_12 = arith.constant 0 : index
      %c0_13 = arith.constant 0 : index
      %14 = vector.load %arg4[%c0_12, %c0_13] : memref<1x4xf32, #tpu.memory_space<vmem>>, vector<1x4xf32>
      %15 = vector.broadcast %14 : vector<1x4xf32> to vector<512x4xf32>
      %16 = arith.addf %13, %15 : vector<512x4xf32>
      %cst_14 = arith.constant 0.000000e+00 : f32
      %17 = vector.broadcast %cst_14 : f32 to vector<512x4xf32>
      %18 = arith.maximumf %16, %17 : vector<512x4xf32>
      %19 = arith.truncf %18 : vector<512x4xf32> to vector<512x4xbf16>
      %c0_15 = arith.constant 0 : index
      %c0_16 = arith.constant 0 : index
      %20 = vector.load %arg5[%c0_15, %c0_16] : memref<512x4xbf16, #tpu.memory_space<vmem>>, vector<512x4xbf16>
      tpu.vector_store %arg5[%c0_15, %c0_16], %19 {strides = array<i32>} : memref<512x4xbf16, #tpu.memory_space<vmem>>, vector<512x4xbf16>,
    } else {
    }
    return
  }
  func.func @transform_0(%arg0: i32, %arg1: i32) -> (i32, i32) {
    %c0_i32 = arith.constant 0 : i32
    return %arg0, %arg1 : i32, i32
  }
  func.func @transform_1(%arg0: i32, %arg1: i32) -> (i32, i32) {
    %c0_i32 = arith.constant 0 : i32
    %c0_i32_0 = arith.constant 0 : i32
    return %arg1, %c0_i32 : i32, i32
  }
  func.func @transform_2(%arg0: i32, %arg1: i32) -> (i32, i32) {
    %c0_i32 = arith.constant 0 : i32
    %c0_i32_0 = arith.constant 0 : i32
    %c0_i32_1 = arith.constant 0 : i32
    return %c0_i32, %c0_i32_0 : i32, i32
  }
  func.func @transform_3(%arg0: i32, %arg1: i32) -> (i32, i32) {
    %c0_i32 = arith.constant 0 : i32
    %c0_i32_0 = arith.constant 0 : i32
    return %arg0, %c0_i32 : i32, i32
  }
}

module attributes {stable_mosaic.version = 11 : i64} {
  func.func @_conv3x3_bn_relu_kernel(%arg0: i32, %arg1: i32, %arg2: memref<1x608x4xbf16, #tpu.memory_space<vmem>>, %arg3: memref<9x4x4xbf16, #tpu.memory_space<vmem>>, %arg4: memref<1x4xf32, #tpu.memory_space<vmem>>, %arg5: memref<1x512x4xbf16, #tpu.memory_space<vmem>>) attributes {dimension_semantics = [#tpu.dimension_semantics<parallel>, #tpu.dimension_semantics<arbitrary>], iteration_bounds = array<i64: 2, 1>, scalar_prefetch = 0 : i64, scratch_operands = 0 : i64, tpu.core_type = #tpu.core_type<tc>, window_params = [{transform_indices = @transform_0, window_bounds = array<i64: 1, 608, 4>}, {pipeline_mode = #tpu.pipeline_mode<synchronous>, transform_indices = @transform_1, window_bounds = array<i64: 9, 4, 4>}, {pipeline_mode = #tpu.pipeline_mode<synchronous>, transform_indices = @transform_2, window_bounds = array<i64: 1, 4>}, {transform_indices = @transform_3, window_bounds = array<i64: 1, 512, 4>}]} {
    %c512_i32 = arith.constant 512 : i32
    %0 = arith.muli %arg1, %c512_i32 : i32
    %c0_i32 = arith.constant 0 : i32
    %1 = arith.addi %0, %c0_i32 : i32
    %2 = tpu.assume_multiple %1, 128 : i32
    %c0 = arith.constant 0 : index
    %3 = arith.index_cast %2 : i32 to index
    %c0_0 = arith.constant 0 : index
    %4 = vector.load %arg2[%c0, %3, %c0_0] : memref<1x608x4xbf16, #tpu.memory_space<vmem>>, vector<1x208x4xbf16>
    %5 = vector.shape_cast %4 : vector<1x208x4xbf16> to vector<208x4xbf16>
    %cst = arith.constant 0.000000e+00 : f32
    %6 = vector.broadcast %cst : f32 to vector<128x4xf32>
    %7 = vector.extract_strided_slice %5 {offsets = [0, 0], sizes = [128, 4], strides = [1, 1]} : vector<208x4xbf16> to vector<128x4xbf16>
    %c0_1 = arith.constant 0 : index
    %c0_2 = arith.constant 0 : index
    %c0_3 = arith.constant 0 : index
    %8 = vector.load %arg3[%c0_1, %c0_2, %c0_3] : memref<9x4x4xbf16, #tpu.memory_space<vmem>>, vector<1x4x4xbf16>
    %9 = vector.shape_cast %8 : vector<1x4x4xbf16> to vector<4x4xbf16>
    %cst_4 = arith.constant dense<0.000000e+00> : vector<128x4xf32>
    %10 = tpu.matmul %7, %9, %cst_4 {dimension_numbers = #tpu.dot_dimension_numbers<[1], [0], [0], [1], [0, 0, 1, 1], [], []>} : vector<128x4xbf16>, vector<4x4xbf16>, vector<128x4xf32> -> vector<128x4xf32>
    %11 = arith.addf %6, %10 : vector<128x4xf32>
    %12 = vector.extract_strided_slice %5 {offsets = [1, 0], sizes = [128, 4], strides = [1, 1]} : vector<208x4xbf16> to vector<128x4xbf16>
    %c1 = arith.constant 1 : index
    %c0_5 = arith.constant 0 : index
    %c0_6 = arith.constant 0 : index
    %13 = vector.load %arg3[%c1, %c0_5, %c0_6] : memref<9x4x4xbf16, #tpu.memory_space<vmem>>, vector<1x4x4xbf16>
    %14 = vector.shape_cast %13 : vector<1x4x4xbf16> to vector<4x4xbf16>
    %cst_7 = arith.constant dense<0.000000e+00> : vector<128x4xf32>
    %15 = tpu.matmul %12, %14, %cst_7 {dimension_numbers = #tpu.dot_dimension_numbers<[1], [0], [0], [1], [0, 0, 1, 1], [], []>} : vector<128x4xbf16>, vector<4x4xbf16>, vector<128x4xf32> -> vector<128x4xf32>
    %16 = arith.addf %11, %15 : vector<128x4xf32>
    %17 = vector.extract_strided_slice %5 {offsets = [2, 0], sizes = [128, 4], strides = [1, 1]} : vector<208x4xbf16> to vector<128x4xbf16>
    %c2 = arith.constant 2 : index
    %c0_8 = arith.constant 0 : index
    %c0_9 = arith.constant 0 : index
    %18 = vector.load %arg3[%c2, %c0_8, %c0_9] : memref<9x4x4xbf16, #tpu.memory_space<vmem>>, vector<1x4x4xbf16>
    %19 = vector.shape_cast %18 : vector<1x4x4xbf16> to vector<4x4xbf16>
    %cst_10 = arith.constant dense<0.000000e+00> : vector<128x4xf32>
    %20 = tpu.matmul %17, %19, %cst_10 {dimension_numbers = #tpu.dot_dimension_numbers<[1], [0], [0], [1], [0, 0, 1, 1], [], []>} : vector<128x4xbf16>, vector<4x4xbf16>, vector<128x4xf32> -> vector<128x4xf32>
    %21 = arith.addf %16, %20 : vector<128x4xf32>
    %22 = vector.extract_strided_slice %5 {offsets = [32, 0], sizes = [128, 4], strides = [1, 1]} : vector<208x4xbf16> to vector<128x4xbf16>
    %c3 = arith.constant 3 : index
    %c0_11 = arith.constant 0 : index
    %c0_12 = arith.constant 0 : index
    %23 = vector.load %arg3[%c3, %c0_11, %c0_12] : memref<9x4x4xbf16, #tpu.memory_space<vmem>>, vector<1x4x4xbf16>
    %24 = vector.shape_cast %23 : vector<1x4x4xbf16> to vector<4x4xbf16>
    %cst_13 = arith.constant dense<0.000000e+00> : vector<128x4xf32>
    %25 = tpu.matmul %22, %24, %cst_13 {dimension_numbers = #tpu.dot_dimension_numbers<[1], [0], [0], [1], [0, 0, 1, 1], [], []>} : vector<128x4xbf16>, vector<4x4xbf16>, vector<128x4xf32> -> vector<128x4xf32>
    %26 = arith.addf %21, %25 : vector<128x4xf32>
    %27 = vector.extract_strided_slice %5 {offsets = [33, 0], sizes = [128, 4], strides = [1, 1]} : vector<208x4xbf16> to vector<128x4xbf16>
    %c4 = arith.constant 4 : index
    %c0_14 = arith.constant 0 : index
    %c0_15 = arith.constant 0 : index
    %28 = vector.load %arg3[%c4, %c0_14, %c0_15] : memref<9x4x4xbf16, #tpu.memory_space<vmem>>, vector<1x4x4xbf16>
    %29 = vector.shape_cast %28 : vector<1x4x4xbf16> to vector<4x4xbf16>
    %cst_16 = arith.constant dense<0.000000e+00> : vector<128x4xf32>
    %30 = tpu.matmul %27, %29, %cst_16 {dimension_numbers = #tpu.dot_dimension_numbers<[1], [0], [0], [1], [0, 0, 1, 1], [], []>} : vector<128x4xbf16>, vector<4x4xbf16>, vector<128x4xf32> -> vector<128x4xf32>
    %31 = arith.addf %26, %30 : vector<128x4xf32>
    %32 = vector.extract_strided_slice %5 {offsets = [34, 0], sizes = [128, 4], strides = [1, 1]} : vector<208x4xbf16> to vector<128x4xbf16>
    %c5 = arith.constant 5 : index
    %c0_17 = arith.constant 0 : index
    %c0_18 = arith.constant 0 : index
    %33 = vector.load %arg3[%c5, %c0_17, %c0_18] : memref<9x4x4xbf16, #tpu.memory_space<vmem>>, vector<1x4x4xbf16>
    %34 = vector.shape_cast %33 : vector<1x4x4xbf16> to vector<4x4xbf16>
    %cst_19 = arith.constant dense<0.000000e+00> : vector<128x4xf32>
    %35 = tpu.matmul %32, %34, %cst_19 {dimension_numbers = #tpu.dot_dimension_numbers<[1], [0], [0], [1], [0, 0, 1, 1], [], []>} : vector<128x4xbf16>, vector<4x4xbf16>, vector<128x4xf32> -> vector<128x4xf32>
    %36 = arith.addf %31, %35 : vector<128x4xf32>
    %37 = vector.extract_strided_slice %5 {offsets = [64, 0], sizes = [128, 4], strides = [1, 1]} : vector<208x4xbf16> to vector<128x4xbf16>
    %c6 = arith.constant 6 : index
    %c0_20 = arith.constant 0 : index
    %c0_21 = arith.constant 0 : index
    %38 = vector.load %arg3[%c6, %c0_20, %c0_21] : memref<9x4x4xbf16, #tpu.memory_space<vmem>>, vector<1x4x4xbf16>
    %39 = vector.shape_cast %38 : vector<1x4x4xbf16> to vector<4x4xbf16>
    %cst_22 = arith.constant dense<0.000000e+00> : vector<128x4xf32>
    %40 = tpu.matmul %37, %39, %cst_22 {dimension_numbers = #tpu.dot_dimension_numbers<[1], [0], [0], [1], [0, 0, 1, 1], [], []>} : vector<128x4xbf16>, vector<4x4xbf16>, vector<128x4xf32> -> vector<128x4xf32>
    %41 = arith.addf %36, %40 : vector<128x4xf32>
    %42 = vector.extract_strided_slice %5 {offsets = [65, 0], sizes = [128, 4], strides = [1, 1]} : vector<208x4xbf16> to vector<128x4xbf16>
    %c7 = arith.constant 7 : index
    %c0_23 = arith.constant 0 : index
    %c0_24 = arith.constant 0 : index
    %43 = vector.load %arg3[%c7, %c0_23, %c0_24] : memref<9x4x4xbf16, #tpu.memory_space<vmem>>, vector<1x4x4xbf16>
    %44 = vector.shape_cast %43 : vector<1x4x4xbf16> to vector<4x4xbf16>
    %cst_25 = arith.constant dense<0.000000e+00> : vector<128x4xf32>
    %45 = tpu.matmul %42, %44, %cst_25 {dimension_numbers = #tpu.dot_dimension_numbers<[1], [0], [0], [1], [0, 0, 1, 1], [], []>} : vector<128x4xbf16>, vector<4x4xbf16>, vector<128x4xf32> -> vector<128x4xf32>
    %46 = arith.addf %41, %45 : vector<128x4xf32>
    %47 = vector.extract_strided_slice %5 {offsets = [66, 0], sizes = [128, 4], strides = [1, 1]} : vector<208x4xbf16> to vector<128x4xbf16>
    %c8 = arith.constant 8 : index
    %c0_26 = arith.constant 0 : index
    %c0_27 = arith.constant 0 : index
    %48 = vector.load %arg3[%c8, %c0_26, %c0_27] : memref<9x4x4xbf16, #tpu.memory_space<vmem>>, vector<1x4x4xbf16>
    %49 = vector.shape_cast %48 : vector<1x4x4xbf16> to vector<4x4xbf16>
    %cst_28 = arith.constant dense<0.000000e+00> : vector<128x4xf32>
    %50 = tpu.matmul %47, %49, %cst_28 {dimension_numbers = #tpu.dot_dimension_numbers<[1], [0], [0], [1], [0, 0, 1, 1], [], []>} : vector<128x4xbf16>, vector<4x4xbf16>, vector<128x4xf32> -> vector<128x4xf32>
    %51 = arith.addf %46, %50 : vector<128x4xf32>
    %c0_29 = arith.constant 0 : index
    %c0_30 = arith.constant 0 : index
    %52 = vector.load %arg4[%c0_29, %c0_30] : memref<1x4xf32, #tpu.memory_space<vmem>>, vector<1x4xf32>
    %53 = vector.broadcast %52 : vector<1x4xf32> to vector<128x4xf32>
    %54 = arith.addf %51, %53 : vector<128x4xf32>
    %cst_31 = arith.constant 0.000000e+00 : f32
    %55 = vector.broadcast %cst_31 : f32 to vector<128x4xf32>
    %56 = arith.maximumf %54, %55 : vector<128x4xf32>
    %57 = arith.truncf %56 : vector<128x4xf32> to vector<128x4xbf16>
    %c0_32 = arith.constant 0 : index
    %c0_33 = arith.constant 0 : index
    %c0_34 = arith.constant 0 : index
    %58 = vector.load %arg5[%c0_32, %c0_33, %c0_34] : memref<1x512x4xbf16, #tpu.memory_space<vmem>>, vector<1x128x4xbf16>
    %59 = vector.shape_cast %58 : vector<1x128x4xbf16> to vector<128x4xbf16>
    %60 = vector.shape_cast %57 : vector<128x4xbf16> to vector<1x128x4xbf16>
    tpu.vector_store %arg5[%c0_32, %c0_33, %c0_34], %60 {strides = array<i32>} : memref<1x512x4xbf16, #tpu.memory_space<vmem>>, vector<1x128x4xbf16>,
    %c512_i32_35 = arith.constant 512 : i32
    %61 = arith.muli %arg1, %c512_i32_35 : i32
    %c128_i32 = arith.constant 128 : i32
    %62 = arith.addi %61, %c128_i32 : i32
    %63 = tpu.assume_multiple %62, 128 : i32
    %c0_36 = arith.constant 0 : index
    %64 = arith.index_cast %63 : i32 to index
    %c0_37 = arith.constant 0 : index
    %65 = vector.load %arg2[%c0_36, %64, %c0_37] : memref<1x608x4xbf16, #tpu.memory_space<vmem>>, vector<1x208x4xbf16>
    %66 = vector.shape_cast %65 : vector<1x208x4xbf16> to vector<208x4xbf16>
    %cst_38 = arith.constant 0.000000e+00 : f32
    %67 = vector.broadcast %cst_38 : f32 to vector<128x4xf32>
    %68 = vector.extract_strided_slice %66 {offsets = [0, 0], sizes = [128, 4], strides = [1, 1]} : vector<208x4xbf16> to vector<128x4xbf16>
    %c0_39 = arith.constant 0 : index
    %c0_40 = arith.constant 0 : index
    %c0_41 = arith.constant 0 : index
    %69 = vector.load %arg3[%c0_39, %c0_40, %c0_41] : memref<9x4x4xbf16, #tpu.memory_space<vmem>>, vector<1x4x4xbf16>
    %70 = vector.shape_cast %69 : vector<1x4x4xbf16> to vector<4x4xbf16>
    %cst_42 = arith.constant dense<0.000000e+00> : vector<128x4xf32>
    %71 = tpu.matmul %68, %70, %cst_42 {dimension_numbers = #tpu.dot_dimension_numbers<[1], [0], [0], [1], [0, 0, 1, 1], [], []>} : vector<128x4xbf16>, vector<4x4xbf16>, vector<128x4xf32> -> vector<128x4xf32>
    %72 = arith.addf %67, %71 : vector<128x4xf32>
    %73 = vector.extract_strided_slice %66 {offsets = [1, 0], sizes = [128, 4], strides = [1, 1]} : vector<208x4xbf16> to vector<128x4xbf16>
    %c1_43 = arith.constant 1 : index
    %c0_44 = arith.constant 0 : index
    %c0_45 = arith.constant 0 : index
    %74 = vector.load %arg3[%c1_43, %c0_44, %c0_45] : memref<9x4x4xbf16, #tpu.memory_space<vmem>>, vector<1x4x4xbf16>
    %75 = vector.shape_cast %74 : vector<1x4x4xbf16> to vector<4x4xbf16>
    %cst_46 = arith.constant dense<0.000000e+00> : vector<128x4xf32>
    %76 = tpu.matmul %73, %75, %cst_46 {dimension_numbers = #tpu.dot_dimension_numbers<[1], [0], [0], [1], [0, 0, 1, 1], [], []>} : vector<128x4xbf16>, vector<4x4xbf16>, vector<128x4xf32> -> vector<128x4xf32>
    %77 = arith.addf %72, %76 : vector<128x4xf32>
    %78 = vector.extract_strided_slice %66 {offsets = [2, 0], sizes = [128, 4], strides = [1, 1]} : vector<208x4xbf16> to vector<128x4xbf16>
    %c2_47 = arith.constant 2 : index
    %c0_48 = arith.constant 0 : index
    %c0_49 = arith.constant 0 : index
    %79 = vector.load %arg3[%c2_47, %c0_48, %c0_49] : memref<9x4x4xbf16, #tpu.memory_space<vmem>>, vector<1x4x4xbf16>
    %80 = vector.shape_cast %79 : vector<1x4x4xbf16> to vector<4x4xbf16>
    %cst_50 = arith.constant dense<0.000000e+00> : vector<128x4xf32>
    %81 = tpu.matmul %78, %80, %cst_50 {dimension_numbers = #tpu.dot_dimension_numbers<[1], [0], [0], [1], [0, 0, 1, 1], [], []>} : vector<128x4xbf16>, vector<4x4xbf16>, vector<128x4xf32> -> vector<128x4xf32>
    %82 = arith.addf %77, %81 : vector<128x4xf32>
    %83 = vector.extract_strided_slice %66 {offsets = [32, 0], sizes = [128, 4], strides = [1, 1]} : vector<208x4xbf16> to vector<128x4xbf16>
    %c3_51 = arith.constant 3 : index
    %c0_52 = arith.constant 0 : index
    %c0_53 = arith.constant 0 : index
    %84 = vector.load %arg3[%c3_51, %c0_52, %c0_53] : memref<9x4x4xbf16, #tpu.memory_space<vmem>>, vector<1x4x4xbf16>
    %85 = vector.shape_cast %84 : vector<1x4x4xbf16> to vector<4x4xbf16>
    %cst_54 = arith.constant dense<0.000000e+00> : vector<128x4xf32>
    %86 = tpu.matmul %83, %85, %cst_54 {dimension_numbers = #tpu.dot_dimension_numbers<[1], [0], [0], [1], [0, 0, 1, 1], [], []>} : vector<128x4xbf16>, vector<4x4xbf16>, vector<128x4xf32> -> vector<128x4xf32>
    %87 = arith.addf %82, %86 : vector<128x4xf32>
    %88 = vector.extract_strided_slice %66 {offsets = [33, 0], sizes = [128, 4], strides = [1, 1]} : vector<208x4xbf16> to vector<128x4xbf16>
    %c4_55 = arith.constant 4 : index
    %c0_56 = arith.constant 0 : index
    %c0_57 = arith.constant 0 : index
    %89 = vector.load %arg3[%c4_55, %c0_56, %c0_57] : memref<9x4x4xbf16, #tpu.memory_space<vmem>>, vector<1x4x4xbf16>
    %90 = vector.shape_cast %89 : vector<1x4x4xbf16> to vector<4x4xbf16>
    %cst_58 = arith.constant dense<0.000000e+00> : vector<128x4xf32>
    %91 = tpu.matmul %88, %90, %cst_58 {dimension_numbers = #tpu.dot_dimension_numbers<[1], [0], [0], [1], [0, 0, 1, 1], [], []>} : vector<128x4xbf16>, vector<4x4xbf16>, vector<128x4xf32> -> vector<128x4xf32>
    %92 = arith.addf %87, %91 : vector<128x4xf32>
    %93 = vector.extract_strided_slice %66 {offsets = [34, 0], sizes = [128, 4], strides = [1, 1]} : vector<208x4xbf16> to vector<128x4xbf16>
    %c5_59 = arith.constant 5 : index
    %c0_60 = arith.constant 0 : index
    %c0_61 = arith.constant 0 : index
    %94 = vector.load %arg3[%c5_59, %c0_60, %c0_61] : memref<9x4x4xbf16, #tpu.memory_space<vmem>>, vector<1x4x4xbf16>
    %95 = vector.shape_cast %94 : vector<1x4x4xbf16> to vector<4x4xbf16>
    %cst_62 = arith.constant dense<0.000000e+00> : vector<128x4xf32>
    %96 = tpu.matmul %93, %95, %cst_62 {dimension_numbers = #tpu.dot_dimension_numbers<[1], [0], [0], [1], [0, 0, 1, 1], [], []>} : vector<128x4xbf16>, vector<4x4xbf16>, vector<128x4xf32> -> vector<128x4xf32>
    %97 = arith.addf %92, %96 : vector<128x4xf32>
    %98 = vector.extract_strided_slice %66 {offsets = [64, 0], sizes = [128, 4], strides = [1, 1]} : vector<208x4xbf16> to vector<128x4xbf16>
    %c6_63 = arith.constant 6 : index
    %c0_64 = arith.constant 0 : index
    %c0_65 = arith.constant 0 : index
    %99 = vector.load %arg3[%c6_63, %c0_64, %c0_65] : memref<9x4x4xbf16, #tpu.memory_space<vmem>>, vector<1x4x4xbf16>
    %100 = vector.shape_cast %99 : vector<1x4x4xbf16> to vector<4x4xbf16>
    %cst_66 = arith.constant dense<0.000000e+00> : vector<128x4xf32>
    %101 = tpu.matmul %98, %100, %cst_66 {dimension_numbers = #tpu.dot_dimension_numbers<[1], [0], [0], [1], [0, 0, 1, 1], [], []>} : vector<128x4xbf16>, vector<4x4xbf16>, vector<128x4xf32> -> vector<128x4xf32>
    %102 = arith.addf %97, %101 : vector<128x4xf32>
    %103 = vector.extract_strided_slice %66 {offsets = [65, 0], sizes = [128, 4], strides = [1, 1]} : vector<208x4xbf16> to vector<128x4xbf16>
    %c7_67 = arith.constant 7 : index
    %c0_68 = arith.constant 0 : index
    %c0_69 = arith.constant 0 : index
    %104 = vector.load %arg3[%c7_67, %c0_68, %c0_69] : memref<9x4x4xbf16, #tpu.memory_space<vmem>>, vector<1x4x4xbf16>
    %105 = vector.shape_cast %104 : vector<1x4x4xbf16> to vector<4x4xbf16>
    %cst_70 = arith.constant dense<0.000000e+00> : vector<128x4xf32>
    %106 = tpu.matmul %103, %105, %cst_70 {dimension_numbers = #tpu.dot_dimension_numbers<[1], [0], [0], [1], [0, 0, 1, 1], [], []>} : vector<128x4xbf16>, vector<4x4xbf16>, vector<128x4xf32> -> vector<128x4xf32>
    %107 = arith.addf %102, %106 : vector<128x4xf32>
    %108 = vector.extract_strided_slice %66 {offsets = [66, 0], sizes = [128, 4], strides = [1, 1]} : vector<208x4xbf16> to vector<128x4xbf16>
    %c8_71 = arith.constant 8 : index
    %c0_72 = arith.constant 0 : index
    %c0_73 = arith.constant 0 : index
    %109 = vector.load %arg3[%c8_71, %c0_72, %c0_73] : memref<9x4x4xbf16, #tpu.memory_space<vmem>>, vector<1x4x4xbf16>
    %110 = vector.shape_cast %109 : vector<1x4x4xbf16> to vector<4x4xbf16>
    %cst_74 = arith.constant dense<0.000000e+00> : vector<128x4xf32>
    %111 = tpu.matmul %108, %110, %cst_74 {dimension_numbers = #tpu.dot_dimension_numbers<[1], [0], [0], [1], [0, 0, 1, 1], [], []>} : vector<128x4xbf16>, vector<4x4xbf16>, vector<128x4xf32> -> vector<128x4xf32>
    %112 = arith.addf %107, %111 : vector<128x4xf32>
    %c0_75 = arith.constant 0 : index
    %c0_76 = arith.constant 0 : index
    %113 = vector.load %arg4[%c0_75, %c0_76] : memref<1x4xf32, #tpu.memory_space<vmem>>, vector<1x4xf32>
    %114 = vector.broadcast %113 : vector<1x4xf32> to vector<128x4xf32>
    %115 = arith.addf %112, %114 : vector<128x4xf32>
    %cst_77 = arith.constant 0.000000e+00 : f32
    %116 = vector.broadcast %cst_77 : f32 to vector<128x4xf32>
    %117 = arith.maximumf %115, %116 : vector<128x4xf32>
    %118 = arith.truncf %117 : vector<128x4xf32> to vector<128x4xbf16>
    %c0_78 = arith.constant 0 : index
    %c128 = arith.constant 128 : index
    %c0_79 = arith.constant 0 : index
    %119 = vector.load %arg5[%c0_78, %c128, %c0_79] : memref<1x512x4xbf16, #tpu.memory_space<vmem>>, vector<1x128x4xbf16>
    %120 = vector.shape_cast %119 : vector<1x128x4xbf16> to vector<128x4xbf16>
    %121 = vector.shape_cast %118 : vector<128x4xbf16> to vector<1x128x4xbf16>
    tpu.vector_store %arg5[%c0_78, %c128, %c0_79], %121 {strides = array<i32>} : memref<1x512x4xbf16, #tpu.memory_space<vmem>>, vector<1x128x4xbf16>,
    %c512_i32_80 = arith.constant 512 : i32
    %122 = arith.muli %arg1, %c512_i32_80 : i32
    %c256_i32 = arith.constant 256 : i32
    %123 = arith.addi %122, %c256_i32 : i32
    %124 = tpu.assume_multiple %123, 128 : i32
    %c0_81 = arith.constant 0 : index
    %125 = arith.index_cast %124 : i32 to index
    %c0_82 = arith.constant 0 : index
    %126 = vector.load %arg2[%c0_81, %125, %c0_82] : memref<1x608x4xbf16, #tpu.memory_space<vmem>>, vector<1x208x4xbf16>
    %127 = vector.shape_cast %126 : vector<1x208x4xbf16> to vector<208x4xbf16>
    %cst_83 = arith.constant 0.000000e+00 : f32
    %128 = vector.broadcast %cst_83 : f32 to vector<128x4xf32>
    %129 = vector.extract_strided_slice %127 {offsets = [0, 0], sizes = [128, 4], strides = [1, 1]} : vector<208x4xbf16> to vector<128x4xbf16>
    %c0_84 = arith.constant 0 : index
    %c0_85 = arith.constant 0 : index
    %c0_86 = arith.constant 0 : index
    %130 = vector.load %arg3[%c0_84, %c0_85, %c0_86] : memref<9x4x4xbf16, #tpu.memory_space<vmem>>, vector<1x4x4xbf16>
    %131 = vector.shape_cast %130 : vector<1x4x4xbf16> to vector<4x4xbf16>
    %cst_87 = arith.constant dense<0.000000e+00> : vector<128x4xf32>
    %132 = tpu.matmul %129, %131, %cst_87 {dimension_numbers = #tpu.dot_dimension_numbers<[1], [0], [0], [1], [0, 0, 1, 1], [], []>} : vector<128x4xbf16>, vector<4x4xbf16>, vector<128x4xf32> -> vector<128x4xf32>
    %133 = arith.addf %128, %132 : vector<128x4xf32>
    %134 = vector.extract_strided_slice %127 {offsets = [1, 0], sizes = [128, 4], strides = [1, 1]} : vector<208x4xbf16> to vector<128x4xbf16>
    %c1_88 = arith.constant 1 : index
    %c0_89 = arith.constant 0 : index
    %c0_90 = arith.constant 0 : index
    %135 = vector.load %arg3[%c1_88, %c0_89, %c0_90] : memref<9x4x4xbf16, #tpu.memory_space<vmem>>, vector<1x4x4xbf16>
    %136 = vector.shape_cast %135 : vector<1x4x4xbf16> to vector<4x4xbf16>
    %cst_91 = arith.constant dense<0.000000e+00> : vector<128x4xf32>
    %137 = tpu.matmul %134, %136, %cst_91 {dimension_numbers = #tpu.dot_dimension_numbers<[1], [0], [0], [1], [0, 0, 1, 1], [], []>} : vector<128x4xbf16>, vector<4x4xbf16>, vector<128x4xf32> -> vector<128x4xf32>
    %138 = arith.addf %133, %137 : vector<128x4xf32>
    %139 = vector.extract_strided_slice %127 {offsets = [2, 0], sizes = [128, 4], strides = [1, 1]} : vector<208x4xbf16> to vector<128x4xbf16>
    %c2_92 = arith.constant 2 : index
    %c0_93 = arith.constant 0 : index
    %c0_94 = arith.constant 0 : index
    %140 = vector.load %arg3[%c2_92, %c0_93, %c0_94] : memref<9x4x4xbf16, #tpu.memory_space<vmem>>, vector<1x4x4xbf16>
    %141 = vector.shape_cast %140 : vector<1x4x4xbf16> to vector<4x4xbf16>
    %cst_95 = arith.constant dense<0.000000e+00> : vector<128x4xf32>
    %142 = tpu.matmul %139, %141, %cst_95 {dimension_numbers = #tpu.dot_dimension_numbers<[1], [0], [0], [1], [0, 0, 1, 1], [], []>} : vector<128x4xbf16>, vector<4x4xbf16>, vector<128x4xf32> -> vector<128x4xf32>
    %143 = arith.addf %138, %142 : vector<128x4xf32>
    %144 = vector.extract_strided_slice %127 {offsets = [32, 0], sizes = [128, 4], strides = [1, 1]} : vector<208x4xbf16> to vector<128x4xbf16>
    %c3_96 = arith.constant 3 : index
    %c0_97 = arith.constant 0 : index
    %c0_98 = arith.constant 0 : index
    %145 = vector.load %arg3[%c3_96, %c0_97, %c0_98] : memref<9x4x4xbf16, #tpu.memory_space<vmem>>, vector<1x4x4xbf16>
    %146 = vector.shape_cast %145 : vector<1x4x4xbf16> to vector<4x4xbf16>
    %cst_99 = arith.constant dense<0.000000e+00> : vector<128x4xf32>
    %147 = tpu.matmul %144, %146, %cst_99 {dimension_numbers = #tpu.dot_dimension_numbers<[1], [0], [0], [1], [0, 0, 1, 1], [], []>} : vector<128x4xbf16>, vector<4x4xbf16>, vector<128x4xf32> -> vector<128x4xf32>
    %148 = arith.addf %143, %147 : vector<128x4xf32>
    %149 = vector.extract_strided_slice %127 {offsets = [33, 0], sizes = [128, 4], strides = [1, 1]} : vector<208x4xbf16> to vector<128x4xbf16>
    %c4_100 = arith.constant 4 : index
    %c0_101 = arith.constant 0 : index
    %c0_102 = arith.constant 0 : index
    %150 = vector.load %arg3[%c4_100, %c0_101, %c0_102] : memref<9x4x4xbf16, #tpu.memory_space<vmem>>, vector<1x4x4xbf16>
    %151 = vector.shape_cast %150 : vector<1x4x4xbf16> to vector<4x4xbf16>
    %cst_103 = arith.constant dense<0.000000e+00> : vector<128x4xf32>
    %152 = tpu.matmul %149, %151, %cst_103 {dimension_numbers = #tpu.dot_dimension_numbers<[1], [0], [0], [1], [0, 0, 1, 1], [], []>} : vector<128x4xbf16>, vector<4x4xbf16>, vector<128x4xf32> -> vector<128x4xf32>
    %153 = arith.addf %148, %152 : vector<128x4xf32>
    %154 = vector.extract_strided_slice %127 {offsets = [34, 0], sizes = [128, 4], strides = [1, 1]} : vector<208x4xbf16> to vector<128x4xbf16>
    %c5_104 = arith.constant 5 : index
    %c0_105 = arith.constant 0 : index
    %c0_106 = arith.constant 0 : index
    %155 = vector.load %arg3[%c5_104, %c0_105, %c0_106] : memref<9x4x4xbf16, #tpu.memory_space<vmem>>, vector<1x4x4xbf16>
    %156 = vector.shape_cast %155 : vector<1x4x4xbf16> to vector<4x4xbf16>
    %cst_107 = arith.constant dense<0.000000e+00> : vector<128x4xf32>
    %157 = tpu.matmul %154, %156, %cst_107 {dimension_numbers = #tpu.dot_dimension_numbers<[1], [0], [0], [1], [0, 0, 1, 1], [], []>} : vector<128x4xbf16>, vector<4x4xbf16>, vector<128x4xf32> -> vector<128x4xf32>
    %158 = arith.addf %153, %157 : vector<128x4xf32>
    %159 = vector.extract_strided_slice %127 {offsets = [64, 0], sizes = [128, 4], strides = [1, 1]} : vector<208x4xbf16> to vector<128x4xbf16>
    %c6_108 = arith.constant 6 : index
    %c0_109 = arith.constant 0 : index
    %c0_110 = arith.constant 0 : index
    %160 = vector.load %arg3[%c6_108, %c0_109, %c0_110] : memref<9x4x4xbf16, #tpu.memory_space<vmem>>, vector<1x4x4xbf16>
    %161 = vector.shape_cast %160 : vector<1x4x4xbf16> to vector<4x4xbf16>
    %cst_111 = arith.constant dense<0.000000e+00> : vector<128x4xf32>
    %162 = tpu.matmul %159, %161, %cst_111 {dimension_numbers = #tpu.dot_dimension_numbers<[1], [0], [0], [1], [0, 0, 1, 1], [], []>} : vector<128x4xbf16>, vector<4x4xbf16>, vector<128x4xf32> -> vector<128x4xf32>
    %163 = arith.addf %158, %162 : vector<128x4xf32>
    %164 = vector.extract_strided_slice %127 {offsets = [65, 0], sizes = [128, 4], strides = [1, 1]} : vector<208x4xbf16> to vector<128x4xbf16>
    %c7_112 = arith.constant 7 : index
    %c0_113 = arith.constant 0 : index
    %c0_114 = arith.constant 0 : index
    %165 = vector.load %arg3[%c7_112, %c0_113, %c0_114] : memref<9x4x4xbf16, #tpu.memory_space<vmem>>, vector<1x4x4xbf16>
    %166 = vector.shape_cast %165 : vector<1x4x4xbf16> to vector<4x4xbf16>
    %cst_115 = arith.constant dense<0.000000e+00> : vector<128x4xf32>
    %167 = tpu.matmul %164, %166, %cst_115 {dimension_numbers = #tpu.dot_dimension_numbers<[1], [0], [0], [1], [0, 0, 1, 1], [], []>} : vector<128x4xbf16>, vector<4x4xbf16>, vector<128x4xf32> -> vector<128x4xf32>
    %168 = arith.addf %163, %167 : vector<128x4xf32>
    %169 = vector.extract_strided_slice %127 {offsets = [66, 0], sizes = [128, 4], strides = [1, 1]} : vector<208x4xbf16> to vector<128x4xbf16>
    %c8_116 = arith.constant 8 : index
    %c0_117 = arith.constant 0 : index
    %c0_118 = arith.constant 0 : index
    %170 = vector.load %arg3[%c8_116, %c0_117, %c0_118] : memref<9x4x4xbf16, #tpu.memory_space<vmem>>, vector<1x4x4xbf16>
    %171 = vector.shape_cast %170 : vector<1x4x4xbf16> to vector<4x4xbf16>
    %cst_119 = arith.constant dense<0.000000e+00> : vector<128x4xf32>
    %172 = tpu.matmul %169, %171, %cst_119 {dimension_numbers = #tpu.dot_dimension_numbers<[1], [0], [0], [1], [0, 0, 1, 1], [], []>} : vector<128x4xbf16>, vector<4x4xbf16>, vector<128x4xf32> -> vector<128x4xf32>
    %173 = arith.addf %168, %172 : vector<128x4xf32>
    %c0_120 = arith.constant 0 : index
    %c0_121 = arith.constant 0 : index
    %174 = vector.load %arg4[%c0_120, %c0_121] : memref<1x4xf32, #tpu.memory_space<vmem>>, vector<1x4xf32>
    %175 = vector.broadcast %174 : vector<1x4xf32> to vector<128x4xf32>
    %176 = arith.addf %173, %175 : vector<128x4xf32>
    %cst_122 = arith.constant 0.000000e+00 : f32
    %177 = vector.broadcast %cst_122 : f32 to vector<128x4xf32>
    %178 = arith.maximumf %176, %177 : vector<128x4xf32>
    %179 = arith.truncf %178 : vector<128x4xf32> to vector<128x4xbf16>
    %c0_123 = arith.constant 0 : index
    %c256 = arith.constant 256 : index
    %c0_124 = arith.constant 0 : index
    %180 = vector.load %arg5[%c0_123, %c256, %c0_124] : memref<1x512x4xbf16, #tpu.memory_space<vmem>>, vector<1x128x4xbf16>
    %181 = vector.shape_cast %180 : vector<1x128x4xbf16> to vector<128x4xbf16>
    %182 = vector.shape_cast %179 : vector<128x4xbf16> to vector<1x128x4xbf16>
    tpu.vector_store %arg5[%c0_123, %c256, %c0_124], %182 {strides = array<i32>} : memref<1x512x4xbf16, #tpu.memory_space<vmem>>, vector<1x128x4xbf16>,
    %c512_i32_125 = arith.constant 512 : i32
    %183 = arith.muli %arg1, %c512_i32_125 : i32
    %c384_i32 = arith.constant 384 : i32
    %184 = arith.addi %183, %c384_i32 : i32
    %185 = tpu.assume_multiple %184, 128 : i32
    %c0_126 = arith.constant 0 : index
    %186 = arith.index_cast %185 : i32 to index
    %c0_127 = arith.constant 0 : index
    %187 = vector.load %arg2[%c0_126, %186, %c0_127] : memref<1x608x4xbf16, #tpu.memory_space<vmem>>, vector<1x208x4xbf16>
    %188 = vector.shape_cast %187 : vector<1x208x4xbf16> to vector<208x4xbf16>
    %cst_128 = arith.constant 0.000000e+00 : f32
    %189 = vector.broadcast %cst_128 : f32 to vector<128x4xf32>
    %190 = vector.extract_strided_slice %188 {offsets = [0, 0], sizes = [128, 4], strides = [1, 1]} : vector<208x4xbf16> to vector<128x4xbf16>
    %c0_129 = arith.constant 0 : index
    %c0_130 = arith.constant 0 : index
    %c0_131 = arith.constant 0 : index
    %191 = vector.load %arg3[%c0_129, %c0_130, %c0_131] : memref<9x4x4xbf16, #tpu.memory_space<vmem>>, vector<1x4x4xbf16>
    %192 = vector.shape_cast %191 : vector<1x4x4xbf16> to vector<4x4xbf16>
    %cst_132 = arith.constant dense<0.000000e+00> : vector<128x4xf32>
    %193 = tpu.matmul %190, %192, %cst_132 {dimension_numbers = #tpu.dot_dimension_numbers<[1], [0], [0], [1], [0, 0, 1, 1], [], []>} : vector<128x4xbf16>, vector<4x4xbf16>, vector<128x4xf32> -> vector<128x4xf32>
    %194 = arith.addf %189, %193 : vector<128x4xf32>
    %195 = vector.extract_strided_slice %188 {offsets = [1, 0], sizes = [128, 4], strides = [1, 1]} : vector<208x4xbf16> to vector<128x4xbf16>
    %c1_133 = arith.constant 1 : index
    %c0_134 = arith.constant 0 : index
    %c0_135 = arith.constant 0 : index
    %196 = vector.load %arg3[%c1_133, %c0_134, %c0_135] : memref<9x4x4xbf16, #tpu.memory_space<vmem>>, vector<1x4x4xbf16>
    %197 = vector.shape_cast %196 : vector<1x4x4xbf16> to vector<4x4xbf16>
    %cst_136 = arith.constant dense<0.000000e+00> : vector<128x4xf32>
    %198 = tpu.matmul %195, %197, %cst_136 {dimension_numbers = #tpu.dot_dimension_numbers<[1], [0], [0], [1], [0, 0, 1, 1], [], []>} : vector<128x4xbf16>, vector<4x4xbf16>, vector<128x4xf32> -> vector<128x4xf32>
    %199 = arith.addf %194, %198 : vector<128x4xf32>
    %200 = vector.extract_strided_slice %188 {offsets = [2, 0], sizes = [128, 4], strides = [1, 1]} : vector<208x4xbf16> to vector<128x4xbf16>
    %c2_137 = arith.constant 2 : index
    %c0_138 = arith.constant 0 : index
    %c0_139 = arith.constant 0 : index
    %201 = vector.load %arg3[%c2_137, %c0_138, %c0_139] : memref<9x4x4xbf16, #tpu.memory_space<vmem>>, vector<1x4x4xbf16>
    %202 = vector.shape_cast %201 : vector<1x4x4xbf16> to vector<4x4xbf16>
    %cst_140 = arith.constant dense<0.000000e+00> : vector<128x4xf32>
    %203 = tpu.matmul %200, %202, %cst_140 {dimension_numbers = #tpu.dot_dimension_numbers<[1], [0], [0], [1], [0, 0, 1, 1], [], []>} : vector<128x4xbf16>, vector<4x4xbf16>, vector<128x4xf32> -> vector<128x4xf32>
    %204 = arith.addf %199, %203 : vector<128x4xf32>
    %205 = vector.extract_strided_slice %188 {offsets = [32, 0], sizes = [128, 4], strides = [1, 1]} : vector<208x4xbf16> to vector<128x4xbf16>
    %c3_141 = arith.constant 3 : index
    %c0_142 = arith.constant 0 : index
    %c0_143 = arith.constant 0 : index
    %206 = vector.load %arg3[%c3_141, %c0_142, %c0_143] : memref<9x4x4xbf16, #tpu.memory_space<vmem>>, vector<1x4x4xbf16>
    %207 = vector.shape_cast %206 : vector<1x4x4xbf16> to vector<4x4xbf16>
    %cst_144 = arith.constant dense<0.000000e+00> : vector<128x4xf32>
    %208 = tpu.matmul %205, %207, %cst_144 {dimension_numbers = #tpu.dot_dimension_numbers<[1], [0], [0], [1], [0, 0, 1, 1], [], []>} : vector<128x4xbf16>, vector<4x4xbf16>, vector<128x4xf32> -> vector<128x4xf32>
    %209 = arith.addf %204, %208 : vector<128x4xf32>
    %210 = vector.extract_strided_slice %188 {offsets = [33, 0], sizes = [128, 4], strides = [1, 1]} : vector<208x4xbf16> to vector<128x4xbf16>
    %c4_145 = arith.constant 4 : index
    %c0_146 = arith.constant 0 : index
    %c0_147 = arith.constant 0 : index
    %211 = vector.load %arg3[%c4_145, %c0_146, %c0_147] : memref<9x4x4xbf16, #tpu.memory_space<vmem>>, vector<1x4x4xbf16>
    %212 = vector.shape_cast %211 : vector<1x4x4xbf16> to vector<4x4xbf16>
    %cst_148 = arith.constant dense<0.000000e+00> : vector<128x4xf32>
    %213 = tpu.matmul %210, %212, %cst_148 {dimension_numbers = #tpu.dot_dimension_numbers<[1], [0], [0], [1], [0, 0, 1, 1], [], []>} : vector<128x4xbf16>, vector<4x4xbf16>, vector<128x4xf32> -> vector<128x4xf32>
    %214 = arith.addf %209, %213 : vector<128x4xf32>
    %215 = vector.extract_strided_slice %188 {offsets = [34, 0], sizes = [128, 4], strides = [1, 1]} : vector<208x4xbf16> to vector<128x4xbf16>
    %c5_149 = arith.constant 5 : index
    %c0_150 = arith.constant 0 : index
    %c0_151 = arith.constant 0 : index
    %216 = vector.load %arg3[%c5_149, %c0_150, %c0_151] : memref<9x4x4xbf16, #tpu.memory_space<vmem>>, vector<1x4x4xbf16>
    %217 = vector.shape_cast %216 : vector<1x4x4xbf16> to vector<4x4xbf16>
    %cst_152 = arith.constant dense<0.000000e+00> : vector<128x4xf32>
    %218 = tpu.matmul %215, %217, %cst_152 {dimension_numbers = #tpu.dot_dimension_numbers<[1], [0], [0], [1], [0, 0, 1, 1], [], []>} : vector<128x4xbf16>, vector<4x4xbf16>, vector<128x4xf32> -> vector<128x4xf32>
    %219 = arith.addf %214, %218 : vector<128x4xf32>
    %220 = vector.extract_strided_slice %188 {offsets = [64, 0], sizes = [128, 4], strides = [1, 1]} : vector<208x4xbf16> to vector<128x4xbf16>
    %c6_153 = arith.constant 6 : index
    %c0_154 = arith.constant 0 : index
    %c0_155 = arith.constant 0 : index
    %221 = vector.load %arg3[%c6_153, %c0_154, %c0_155] : memref<9x4x4xbf16, #tpu.memory_space<vmem>>, vector<1x4x4xbf16>
    %222 = vector.shape_cast %221 : vector<1x4x4xbf16> to vector<4x4xbf16>
    %cst_156 = arith.constant dense<0.000000e+00> : vector<128x4xf32>
    %223 = tpu.matmul %220, %222, %cst_156 {dimension_numbers = #tpu.dot_dimension_numbers<[1], [0], [0], [1], [0, 0, 1, 1], [], []>} : vector<128x4xbf16>, vector<4x4xbf16>, vector<128x4xf32> -> vector<128x4xf32>
    %224 = arith.addf %219, %223 : vector<128x4xf32>
    %225 = vector.extract_strided_slice %188 {offsets = [65, 0], sizes = [128, 4], strides = [1, 1]} : vector<208x4xbf16> to vector<128x4xbf16>
    %c7_157 = arith.constant 7 : index
    %c0_158 = arith.constant 0 : index
    %c0_159 = arith.constant 0 : index
    %226 = vector.load %arg3[%c7_157, %c0_158, %c0_159] : memref<9x4x4xbf16, #tpu.memory_space<vmem>>, vector<1x4x4xbf16>
    %227 = vector.shape_cast %226 : vector<1x4x4xbf16> to vector<4x4xbf16>
    %cst_160 = arith.constant dense<0.000000e+00> : vector<128x4xf32>
    %228 = tpu.matmul %225, %227, %cst_160 {dimension_numbers = #tpu.dot_dimension_numbers<[1], [0], [0], [1], [0, 0, 1, 1], [], []>} : vector<128x4xbf16>, vector<4x4xbf16>, vector<128x4xf32> -> vector<128x4xf32>
    %229 = arith.addf %224, %228 : vector<128x4xf32>
    %230 = vector.extract_strided_slice %188 {offsets = [66, 0], sizes = [128, 4], strides = [1, 1]} : vector<208x4xbf16> to vector<128x4xbf16>
    %c8_161 = arith.constant 8 : index
    %c0_162 = arith.constant 0 : index
    %c0_163 = arith.constant 0 : index
    %231 = vector.load %arg3[%c8_161, %c0_162, %c0_163] : memref<9x4x4xbf16, #tpu.memory_space<vmem>>, vector<1x4x4xbf16>
    %232 = vector.shape_cast %231 : vector<1x4x4xbf16> to vector<4x4xbf16>
    %cst_164 = arith.constant dense<0.000000e+00> : vector<128x4xf32>
    %233 = tpu.matmul %230, %232, %cst_164 {dimension_numbers = #tpu.dot_dimension_numbers<[1], [0], [0], [1], [0, 0, 1, 1], [], []>} : vector<128x4xbf16>, vector<4x4xbf16>, vector<128x4xf32> -> vector<128x4xf32>
    %234 = arith.addf %229, %233 : vector<128x4xf32>
    %c0_165 = arith.constant 0 : index
    %c0_166 = arith.constant 0 : index
    %235 = vector.load %arg4[%c0_165, %c0_166] : memref<1x4xf32, #tpu.memory_space<vmem>>, vector<1x4xf32>
    %236 = vector.broadcast %235 : vector<1x4xf32> to vector<128x4xf32>
    %237 = arith.addf %234, %236 : vector<128x4xf32>
    %cst_167 = arith.constant 0.000000e+00 : f32
    %238 = vector.broadcast %cst_167 : f32 to vector<128x4xf32>
    %239 = arith.maximumf %237, %238 : vector<128x4xf32>
    %240 = arith.truncf %239 : vector<128x4xf32> to vector<128x4xbf16>
    %c0_168 = arith.constant 0 : index
    %c384 = arith.constant 384 : index
    %c0_169 = arith.constant 0 : index
    %241 = vector.load %arg5[%c0_168, %c384, %c0_169] : memref<1x512x4xbf16, #tpu.memory_space<vmem>>, vector<1x128x4xbf16>
    %242 = vector.shape_cast %241 : vector<1x128x4xbf16> to vector<128x4xbf16>
    %243 = vector.shape_cast %240 : vector<128x4xbf16> to vector<1x128x4xbf16>
    tpu.vector_store %arg5[%c0_168, %c384, %c0_169], %243 {strides = array<i32>} : memref<1x512x4xbf16, #tpu.memory_space<vmem>>, vector<1x128x4xbf16>,
    return
  }
  func.func @transform_0(%arg0: i32, %arg1: i32) -> (i32, i32, i32) {
    %c0_i32 = arith.constant 0 : i32
    %c0_i32_0 = arith.constant 0 : i32
    %c0_i32_1 = arith.constant 0 : i32
    return %arg0, %c0_i32, %c0_i32_0 : i32, i32, i32
  }
  func.func @transform_1(%arg0: i32, %arg1: i32) -> (i32, i32, i32) {
    %c0_i32 = arith.constant 0 : i32
    %c0_i32_0 = arith.constant 0 : i32
    %c0_i32_1 = arith.constant 0 : i32
    %c0_i32_2 = arith.constant 0 : i32
    return %c0_i32, %c0_i32_0, %c0_i32_1 : i32, i32, i32
  }
  func.func @transform_2(%arg0: i32, %arg1: i32) -> (i32, i32) {
    %c0_i32 = arith.constant 0 : i32
    %c0_i32_0 = arith.constant 0 : i32
    %c0_i32_1 = arith.constant 0 : i32
    return %c0_i32, %c0_i32_0 : i32, i32
  }
  func.func @transform_3(%arg0: i32, %arg1: i32) -> (i32, i32, i32) {
    %c0_i32 = arith.constant 0 : i32
    %c0_i32_0 = arith.constant 0 : i32
    return %arg0, %arg1, %c0_i32 : i32, i32, i32
  }
}

module attributes {stable_mosaic.version = 11 : i64} {
  func.func @_mm_bias_ds_kernel(%arg0: i32, %arg1: i32, %arg2: memref<512x4xbf16, #tpu.memory_space<vmem>>, %arg3: memref<4x16xbf16, #tpu.memory_space<vmem>>, %arg4: memref<1x16xf32, #tpu.memory_space<vmem>>, %arg5: memref<512x4xf32, #tpu.memory_space<vmem>>, %arg6: memref<4x16xbf16, #tpu.memory_space<vmem>>, %arg7: memref<512x16xf32, #tpu.memory_space<vmem>>, %arg8: memref<512x16xf32, #tpu.memory_space<vmem>>) attributes {dimension_semantics = [#tpu.dimension_semantics<parallel>, #tpu.dimension_semantics<arbitrary>], iteration_bounds = array<i64: 1, 1>, scalar_prefetch = 0 : i64, scratch_operands = 1 : i64, tpu.core_type = #tpu.core_type<tc>, window_params = [{transform_indices = @transform_0, window_bounds = array<i64: 512, 4>}, {transform_indices = @transform_1, window_bounds = array<i64: 4, 16>}, {pipeline_mode = #tpu.pipeline_mode<synchronous>, transform_indices = @transform_2, window_bounds = array<i64: 1, 16>}, {transform_indices = @transform_3, window_bounds = array<i64: 512, 4>}, {pipeline_mode = #tpu.pipeline_mode<synchronous>, transform_indices = @transform_4, window_bounds = array<i64: 4, 16>}, {transform_indices = @transform_5, window_bounds = array<i64: 512, 16>}]} {
    %c0_i32 = arith.constant 0 : i32
    %0 = arith.cmpi eq, %arg1, %c0_i32 : i32
    %1 = arith.extui %0 : i1 to i32
    %c0_i32_0 = arith.constant 0 : i32
    %2 = arith.cmpi ne, %1, %c0_i32_0 : i32
    scf.if %2 {
      %c0_10 = arith.constant 0 : index
      %c0_11 = arith.constant 0 : index
      %12 = vector.load %arg5[%c0_10, %c0_11] : memref<512x4xf32, #tpu.memory_space<vmem>>, vector<512x4xf32>
      %13 = arith.truncf %12 : vector<512x4xf32> to vector<512x4xbf16>
      %c0_12 = arith.constant 0 : index
      %c0_13 = arith.constant 0 : index
      %14 = vector.load %arg6[%c0_12, %c0_13] : memref<4x16xbf16, #tpu.memory_space<vmem>>, vector<4x16xbf16>
      %cst_14 = arith.constant dense<0.000000e+00> : vector<512x16xf32>
      %15 = tpu.matmul %13, %14, %cst_14 {dimension_numbers = #tpu.dot_dimension_numbers<[1], [0], [0], [1], [0, 0, 1, 1], [], []>} : vector<512x4xbf16>, vector<4x16xbf16>, vector<512x16xf32> -> vector<512x16xf32>
      %c0_15 = arith.constant 0 : index
      %c0_16 = arith.constant 0 : index
      %16 = vector.load %arg8[%c0_15, %c0_16] : memref<512x16xf32, #tpu.memory_space<vmem>>, vector<512x16xf32>
      tpu.vector_store %arg8[%c0_15, %c0_16], %15 {strides = array<i32>} : memref<512x16xf32, #tpu.memory_space<vmem>>, vector<512x16xf32>,
    } else {
    }
    %c0 = arith.constant 0 : index
    %c0_1 = arith.constant 0 : index
    %3 = vector.load %arg8[%c0, %c0_1] : memref<512x16xf32, #tpu.memory_space<vmem>>, vector<512x16xf32>
    %c0_2 = arith.constant 0 : index
    %c0_3 = arith.constant 0 : index
    %4 = vector.load %arg2[%c0_2, %c0_3] : memref<512x4xbf16, #tpu.memory_space<vmem>>, vector<512x4xbf16>
    %c0_4 = arith.constant 0 : index
    %c0_5 = arith.constant 0 : index
    %5 = vector.load %arg3[%c0_4, %c0_5] : memref<4x16xbf16, #tpu.memory_space<vmem>>, vector<4x16xbf16>
    %cst = arith.constant dense<0.000000e+00> : vector<512x16xf32>
    %6 = tpu.matmul %4, %5, %cst {dimension_numbers = #tpu.dot_dimension_numbers<[1], [0], [0], [1], [0, 0, 1, 1], [], []>} : vector<512x4xbf16>, vector<4x16xbf16>, vector<512x16xf32> -> vector<512x16xf32>
    %7 = arith.addf %3, %6 : vector<512x16xf32>
    %c0_6 = arith.constant 0 : index
    %c0_7 = arith.constant 0 : index
    %8 = vector.load %arg8[%c0_6, %c0_7] : memref<512x16xf32, #tpu.memory_space<vmem>>, vector<512x16xf32>
    tpu.vector_store %arg8[%c0_6, %c0_7], %7 {strides = array<i32>} : memref<512x16xf32, #tpu.memory_space<vmem>>, vector<512x16xf32>,
    %c0_i32_8 = arith.constant 0 : i32
    %9 = arith.cmpi eq, %arg1, %c0_i32_8 : i32
    %10 = arith.extui %9 : i1 to i32
    %c0_i32_9 = arith.constant 0 : i32
    %11 = arith.cmpi ne, %10, %c0_i32_9 : i32
    scf.if %11 {
      %c0_10 = arith.constant 0 : index
      %c0_11 = arith.constant 0 : index
      %12 = vector.load %arg8[%c0_10, %c0_11] : memref<512x16xf32, #tpu.memory_space<vmem>>, vector<512x16xf32>
      %c0_12 = arith.constant 0 : index
      %c0_13 = arith.constant 0 : index
      %13 = vector.load %arg4[%c0_12, %c0_13] : memref<1x16xf32, #tpu.memory_space<vmem>>, vector<1x16xf32>
      %14 = vector.broadcast %13 : vector<1x16xf32> to vector<512x16xf32>
      %15 = arith.addf %12, %14 : vector<512x16xf32>
      %cst_14 = arith.constant 0.000000e+00 : f32
      %16 = vector.broadcast %cst_14 : f32 to vector<512x16xf32>
      %17 = arith.maximumf %15, %16 : vector<512x16xf32>
      %c0_15 = arith.constant 0 : index
      %c0_16 = arith.constant 0 : index
      %18 = vector.load %arg7[%c0_15, %c0_16] : memref<512x16xf32, #tpu.memory_space<vmem>>, vector<512x16xf32>
      tpu.vector_store %arg7[%c0_15, %c0_16], %17 {strides = array<i32>} : memref<512x16xf32, #tpu.memory_space<vmem>>, vector<512x16xf32>,
    } else {
    }
    return
  }
  func.func @transform_0(%arg0: i32, %arg1: i32) -> (i32, i32) {
    %c0_i32 = arith.constant 0 : i32
    return %arg0, %arg1 : i32, i32
  }
  func.func @transform_1(%arg0: i32, %arg1: i32) -> (i32, i32) {
    %c0_i32 = arith.constant 0 : i32
    %c0_i32_0 = arith.constant 0 : i32
    return %arg1, %c0_i32 : i32, i32
  }
  func.func @transform_2(%arg0: i32, %arg1: i32) -> (i32, i32) {
    %c0_i32 = arith.constant 0 : i32
    %c0_i32_0 = arith.constant 0 : i32
    %c0_i32_1 = arith.constant 0 : i32
    return %c0_i32, %c0_i32_0 : i32, i32
  }
  func.func @transform_3(%arg0: i32, %arg1: i32) -> (i32, i32) {
    %c0_i32 = arith.constant 0 : i32
    %c0_i32_0 = arith.constant 0 : i32
    return %arg0, %c0_i32 : i32, i32
  }
  func.func @transform_4(%arg0: i32, %arg1: i32) -> (i32, i32) {
    %c0_i32 = arith.constant 0 : i32
    %c0_i32_0 = arith.constant 0 : i32
    %c0_i32_1 = arith.constant 0 : i32
    return %c0_i32, %c0_i32_0 : i32, i32
  }
  func.func @transform_5(%arg0: i32, %arg1: i32) -> (i32, i32) {
    %c0_i32 = arith.constant 0 : i32
    %c0_i32_0 = arith.constant 0 : i32
    return %arg0, %c0_i32 : i32, i32
  }
}

</mosaic_0001>

<llo_original>
// kernel: bottleneck_forward.3
$region0: #{bottleneck_forward.3}
  #allocation0 [shape = 'u32[]', space=smem, size = 0x4, offset = 0x4, fixed_abs, tag = 'smem constant byte address 0x4 - core index']
  #allocation1 [shape = 'u32[144,128]{1,0:T(1,128)}', space=vmem, size = 0x12000, scoped, tag = 'internal scratch']
  #allocation2 [shape = 'f32[512,4]{1,0:T(8,128)}', space=vmem, size = 0x40000, scoped, tag = 'scratch operand']
  %s0 = inlined_call_operand.vmem [shape: f32[512,4], index: 0, kind: input, shape index: {}]
  %s1 = inlined_call_operand.vmem [shape: bf16[4,4], index: 1, kind: input, shape index: {}]
  %s2 = inlined_call_operand.vmem [shape: f32[1,4], index: 2, kind: input, shape index: {}]
  %s3 = inlined_call_operand.vmem [shape: bf16[512,4], index: 3, kind: output, shape index: {}]
  %s4 = sld [smem:[#allocation0]]
  $region30: #{bottleneck_forward.3} parent=0
    _
  %s6 = ssub.s32 1, %s4
  %s7 = scalar_select 0, %s6, %s4
  // Predicated region
  $region2: #{bottleneck_forward.3} parent=0 // pred_check
    _
  $region3: #{bottleneck_forward.3} parent=0 // pred_check_branch
    %9 = sbr.rel (0) target = $region5
  $region4: #{bottleneck_forward.3} parent=0 // pred_region
    _
  $region5: #{bottleneck_forward.3} parent=0 // pred_fallthru
    _
  // Predicated region
  $region6: #{bottleneck_forward.3} parent=0 // pred_check
    _
  $region7: #{bottleneck_forward.3} parent=0 // pred_check_branch
    %11 = sbr.rel (0) target = $region9
  $region8: #{bottleneck_forward.3} parent=0 // pred_region
    _
  $region9: #{bottleneck_forward.3} parent=0 // pred_fallthru
    _
  // Predicated region
  $region10: #{bottleneck_forward.3} parent=0 // pred_check
    _
  $region11: #{bottleneck_forward.3} parent=0 // pred_check_branch
    %13 = sbr.rel (0) target = $region13
  $region12: #{bottleneck_forward.3} parent=0 // pred_region
    _
  $region13: #{bottleneck_forward.3} parent=0 // pred_fallthru
    _
  %p15 = scmp.eq.s32.totalorder 0, 0
  // Predicated region
  $region14: #{bottleneck_forward.3} parent=0 // pred_check
    %p16 = pneg %p15
  $region15: #{bottleneck_forward.3} parent=0 // pred_check_branch
    %18 = sbr.rel (%p16) target = $region17
  $region16: #{bottleneck_forward.3} parent=0 // pred_region
    %vm19 = vcmask 31744
    %20 = vst.msk [vmem:[#allocation2] sm:$0xff] %vm19, 0.0
    %21 = vst.msk [vmem:[#allocation2 + $0x8] sm:$0xff] %vm19, 0.0
    %22 = vst.msk [vmem:[#allocation2 + $0x10] sm:$0xff] %vm19, 0.0
    %23 = vst.msk [vmem:[#allocation2 + $0x18] sm:$0xff] %vm19, 0.0
    %24 = vst.msk [vmem:[#allocation2 + $0x20] sm:$0xff] %vm19, 0.0
    %25 = vst.msk [vmem:[#allocation2 + $0x28] sm:$0xff] %vm19, 0.0
    %26 = vst.msk [vmem:[#allocation2 + $0x30] sm:$0xff] %vm19, 0.0
    %27 = vst.msk [vmem:[#allocation2 + $0x38] sm:$0xff] %vm19, 0.0
    %28 = vst.msk [vmem:[#allocation2 + $0x40] sm:$0xff] %vm19, 0.0
    %29 = vst.msk [vmem:[#allocation2 + $0x48] sm:$0xff] %vm19, 0.0
    %30 = vst.msk [vmem:[#allocation2 + $0x50] sm:$0xff] %vm19, 0.0
    %31 = vst.msk [vmem:[#allocation2 + $0x58] sm:$0xff] %vm19, 0.0
    %32 = vst.msk [vmem:[#allocation2 + $0x60] sm:$0xff] %vm19, 0.0
    %33 = vst.msk [vmem:[#allocation2 + $0x68] sm:$0xff] %vm19, 0.0
    %34 = vst.msk [vmem:[#allocation2 + $0x70] sm:$0xff] %vm19, 0.0
    %35 = vst.msk [vmem:[#allocation2 + $0x78] sm:$0xff] %vm19, 0.0
    %36 = vst.msk [vmem:[#allocation2 + $0x80] sm:$0xff] %vm19, 0.0
    %37 = vst.msk [vmem:[#allocation2 + $0x88] sm:$0xff] %vm19, 0.0
    %38 = vst.msk [vmem:[#allocation2 + $0x90] sm:$0xff] %vm19, 0.0
    %39 = vst.msk [vmem:[#allocation2 + $0x98] sm:$0xff] %vm19, 0.0
    %40 = vst.msk [vmem:[#allocation2 + $0xa0] sm:$0xff] %vm19, 0.0
    %41 = vst.msk [vmem:[#allocation2 + $0xa8] sm:$0xff] %vm19, 0.0
    %42 = vst.msk [vmem:[#allocation2 + $0xb0] sm:$0xff] %vm19, 0.0
    %43 = vst.msk [vmem:[#allocation2 + $0xb8] sm:$0xff] %vm19, 0.0
    %44 = vst.msk [vmem:[#allocation2 + $0xc0] sm:$0xff] %vm19, 0.0
    %45 = vst.msk [vmem:[#allocation2 + $0xc8] sm:$0xff] %vm19, 0.0
    %46 = vst.msk [vmem:[#allocation2 + $0xd0] sm:$0xff] %vm19, 0.0
    %47 = vst.msk [vmem:[#allocation2 + $0xd8] sm:$0xff] %vm19, 0.0
    %48 = vst.msk [vmem:[#allocation2 + $0xe0] sm:$0xff] %vm19, 0.0
    %49 = vst.msk [vmem:[#allocation2 + $0xe8] sm:$0xff] %vm19, 0.0
    %50 = vst.msk [vmem:[#allocation2 + $0xf0] sm:$0xff] %vm19, 0.0
    %51 = vst.msk [vmem:[#allocation2 + $0xf8] sm:$0xff] %vm19, 0.0
    %52 = vst.msk [vmem:[#allocation2 + $0x100] sm:$0xff] %vm19, 0.0
    %53 = vst.msk [vmem:[#allocation2 + $0x108] sm:$0xff] %vm19, 0.0
    %54 = vst.msk [vmem:[#allocation2 + $0x110] sm:$0xff] %vm19, 0.0
    %55 = vst.msk [vmem:[#allocation2 + $0x118] sm:$0xff] %vm19, 0.0
    %56 = vst.msk [vmem:[#allocation2 + $0x120] sm:$0xff] %vm19, 0.0
    %57 = vst.msk [vmem:[#allocation2 + $0x128] sm:$0xff] %vm19, 0.0
    %58 = vst.msk [vmem:[#allocation2 + $0x130] sm:$0xff] %vm19, 0.0
    %59 = vst.msk [vmem:[#allocation2 + $0x138] sm:$0xff] %vm19, 0.0
    %60 = vst.msk [vmem:[#allocation2 + $0x140] sm:$0xff] %vm19, 0.0
    %61 = vst.msk [vmem:[#allocation2 + $0x148] sm:$0xff] %vm19, 0.0
    %62 = vst.msk [vmem:[#allocation2 + $0x150] sm:$0xff] %vm19, 0.0
    %63 = vst.msk [vmem:[#allocation2 + $0x158] sm:$0xff] %vm19, 0.0
    %64 = vst.msk [vmem:[#allocation2 + $0x160] sm:$0xff] %vm19, 0.0
    %65 = vst.msk [vmem:[#allocation2 + $0x168] sm:$0xff] %vm19, 0.0
    %66 = vst.msk [vmem:[#allocation2 + $0x170] sm:$0xff] %vm19, 0.0
    %67 = vst.msk [vmem:[#allocation2 + $0x178] sm:$0xff] %vm19, 0.0
    %68 = vst.msk [vmem:[#allocation2 + $0x180] sm:$0xff] %vm19, 0.0
    %69 = vst.msk [vmem:[#allocation2 + $0x188] sm:$0xff] %vm19, 0.0
    %70 = vst.msk [vmem:[#allocation2 + $0x190] sm:$0xff] %vm19, 0.0
    %71 = vst.msk [vmem:[#allocation2 + $0x198] sm:$0xff] %vm19, 0.0
    %72 = vst.msk [vmem:[#allocation2 + $0x1a0] sm:$0xff] %vm19, 0.0
    %73 = vst.msk [vmem:[#allocation2 + $0x1a8] sm:$0xff] %vm19, 0.0
    %74 = vst.msk [vmem:[#allocation2 + $0x1b0] sm:$0xff] %vm19, 0.0
    %75 = vst.msk [vmem:[#allocation2 + $0x1b8] sm:$0xff] %vm19, 0.0
    %76 = vst.msk [vmem:[#allocation2 + $0x1c0] sm:$0xff] %vm19, 0.0
    %77 = vst.msk [vmem:[#allocation2 + $0x1c8] sm:$0xff] %vm19, 0.0
    %78 = vst.msk [vmem:[#allocation2 + $0x1d0] sm:$0xff] %vm19, 0.0
    %79 = vst.msk [vmem:[#allocation2 + $0x1d8] sm:$0xff] %vm19, 0.0
    %80 = vst.msk [vmem:[#allocation2 + $0x1e0] sm:$0xff] %vm19, 0.0
    %81 = vst.msk [vmem:[#allocation2 + $0x1e8] sm:$0xff] %vm19, 0.0
    %82 = vst.msk [vmem:[#allocation2 + $0x1f0] sm:$0xff] %vm19, 0.0
    %83 = vst.msk [vmem:[#allocation2 + $0x1f8] sm:$0xff] %vm19, 0.0
  $region17: #{bottleneck_forward.3} parent=0 // pred_fallthru
    _
  %v84 = vld [vmem:[#allocation2] sm:$0xff]
  %v85 = vld [vmem:[#allocation2 + $0x8] sm:$0xff]
  %v86 = vld [vmem:[#allocation2 + $0x10] sm:$0xff]
  %v87 = vld [vmem:[#allocation2 + $0x18] sm:$0xff]
  %v88 = vld [vmem:[#allocation2 + $0x20] sm:$0xff]
  %v89 = vld [vmem:[#allocation2 + $0x28] sm:$0xff]
  %v90 = vld [vmem:[#allocation2 + $0x30] sm:$0xff]
  %v91 = vld [vmem:[#allocation2 + $0x38] sm:$0xff]
  %v92 = vld [vmem:[#allocation2 + $0x40] sm:$0xff]
  %v93 = vld [vmem:[#allocation2 + $0x48] sm:$0xff]
  %v94 = vld [vmem:[#allocation2 + $0x50] sm:$0xff]
  %v95 = vld [vmem:[#allocation2 + $0x58] sm:$0xff]
  %v96 = vld [vmem:[#allocation2 + $0x60] sm:$0xff]
  %v97 = vld [vmem:[#allocation2 + $0x68] sm:$0xff]
  %v98 = vld [vmem:[#allocation2 + $0x70] sm:$0xff]
  %v99 = vld [vmem:[#allocation2 + $0x78] sm:$0xff]
  %v100 = vld [vmem:[#allocation2 + $0x80] sm:$0xff]
  %v101 = vld [vmem:[#allocation2 + $0x88] sm:$0xff]
  %v102 = vld [vmem:[#allocation2 + $0x90] sm:$0xff]
  %v103 = vld [vmem:[#allocation2 + $0x98] sm:$0xff]
  %v104 = vld [vmem:[#allocation2 + $0xa0] sm:$0xff]
  %v105 = vld [vmem:[#allocation2 + $0xa8] sm:$0xff]
  %v106 = vld [vmem:[#allocation2 + $0xb0] sm:$0xff]
  %v107 = vld [vmem:[#allocation2 + $0xb8] sm:$0xff]
  %v108 = vld [vmem:[#allocation2 + $0xc0] sm:$0xff]
  %v109 = vld [vmem:[#allocation2 + $0xc8] sm:$0xff]
  %v110 = vld [vmem:[#allocation2 + $0xd0] sm:$0xff]
  %v111 = vld [vmem:[#allocation2 + $0xd8] sm:$0xff]
  %v112 = vld [vmem:[#allocation2 + $0xe0] sm:$0xff]
  %v113 = vld [vmem:[#allocation2 + $0xe8] sm:$0xff]
  %v114 = vld [vmem:[#allocation2 + $0xf0] sm:$0xff]
  %v115 = vld [vmem:[#allocation2 + $0xf8] sm:$0xff]
  %v116 = vld [vmem:[#allocation2 + $0x100] sm:$0xff]
  %v117 = vld [vmem:[#allocation2 + $0x108] sm:$0xff]
  %v118 = vld [vmem:[#allocation2 + $0x110] sm:$0xff]
  %v119 = vld [vmem:[#allocation2 + $0x118] sm:$0xff]
  %v120 = vld [vmem:[#allocation2 + $0x120] sm:$0xff]
  %v121 = vld [vmem:[#allocation2 + $0x128] sm:$0xff]
  %v122 = vld [vmem:[#allocation2 + $0x130] sm:$0xff]
  %v123 = vld [vmem:[#allocation2 + $0x138] sm:$0xff]
  %v124 = vld [vmem:[#allocation2 + $0x140] sm:$0xff]
  %v125 = vld [vmem:[#allocation2 + $0x148] sm:$0xff]
  %v126 = vld [vmem:[#allocation2 + $0x150] sm:$0xff]
  %v127 = vld [vmem:[#allocation2 + $0x158] sm:$0xff]
  %v128 = vld [vmem:[#allocation2 + $0x160] sm:$0xff]
  %v129 = vld [vmem:[#allocation2 + $0x168] sm:$0xff]
  %v130 = vld [vmem:[#allocation2 + $0x170] sm:$0xff]
  %v131 = vld [vmem:[#allocation2 + $0x178] sm:$0xff]
  %v132 = vld [vmem:[#allocation2 + $0x180] sm:$0xff]
  %v133 = vld [vmem:[#allocation2 + $0x188] sm:$0xff]
  %v134 = vld [vmem:[#allocation2 + $0x190] sm:$0xff]
  %v135 = vld [vmem:[#allocation2 + $0x198] sm:$0xff]
  %v136 = vld [vmem:[#allocation2 + $0x1a0] sm:$0xff]
  %v137 = vld [vmem:[#allocation2 + $0x1a8] sm:$0xff]
  %v138 = vld [vmem:[#allocation2 + $0x1b0] sm:$0xff]
  %v139 = vld [vmem:[#allocation2 + $0x1b8] sm:$0xff]
  %v140 = vld [vmem:[#allocation2 + $0x1c0] sm:$0xff]
  %v141 = vld [vmem:[#allocation2 + $0x1c8] sm:$0xff]
  %v142 = vld [vmem:[#allocation2 + $0x1d0] sm:$0xff]
  %v143 = vld [vmem:[#allocation2 + $0x1d8] sm:$0xff]
  %v144 = vld [vmem:[#allocation2 + $0x1e0] sm:$0xff]
  %v145 = vld [vmem:[#allocation2 + $0x1e8] sm:$0xff]
  %v146 = vld [vmem:[#allocation2 + $0x1f0] sm:$0xff]
  %v147 = vld [vmem:[#allocation2 + $0x1f8] sm:$0xff]
  %v148 = vld [vmem:[%s0] sm:$0xff]
  %v149 = vld [vmem:[%s0 + $0x8] sm:$0xff]
  %v150 = vld [vmem:[%s0 + $0x10] sm:$0xff]
  %v151 = vld [vmem:[%s0 + $0x18] sm:$0xff]
  %v152 = vld [vmem:[%s0 + $0x20] sm:$0xff]
  %v153 = vld [vmem:[%s0 + $0x28] sm:$0xff]
  %v154 = vld [vmem:[%s0 + $0x30] sm:$0xff]
  %v155 = vld [vmem:[%s0 + $0x38] sm:$0xff]
  %v156 = vld [vmem:[%s0 + $0x40] sm:$0xff]
  %v157 = vld [vmem:[%s0 + $0x48] sm:$0xff]
  %v158 = vld [vmem:[%s0 + $0x50] sm:$0xff]
  %v159 = vld [vmem:[%s0 + $0x58] sm:$0xff]
  %v160 = vld [vmem:[%s0 + $0x60] sm:$0xff]
  %v161 = vld [vmem:[%s0 + $0x68] sm:$0xff]
  %v162 = vld [vmem:[%s0 + $0x70] sm:$0xff]
  %v163 = vld [vmem:[%s0 + $0x78] sm:$0xff]
  %v164 = vld [vmem:[%s0 + $0x80] sm:$0xff]
  %v165 = vld [vmem:[%s0 + $0x88] sm:$0xff]
  %v166 = vld [vmem:[%s0 + $0x90] sm:$0xff]
  %v167 = vld [vmem:[%s0 + $0x98] sm:$0xff]
  %v168 = vld [vmem:[%s0 + $0xa0] sm:$0xff]
  %v169 = vld [vmem:[%s0 + $0xa8] sm:$0xff]
  %v170 = vld [vmem:[%s0 + $0xb0] sm:$0xff]
  %v171 = vld [vmem:[%s0 + $0xb8] sm:$0xff]
  %v172 = vld [vmem:[%s0 + $0xc0] sm:$0xff]
  %v173 = vld [vmem:[%s0 + $0xc8] sm:$0xff]
  %v174 = vld [vmem:[%s0 + $0xd0] sm:$0xff]
  %v175 = vld [vmem:[%s0 + $0xd8] sm:$0xff]
  %v176 = vld [vmem:[%s0 + $0xe0] sm:$0xff]
  %v177 = vld [vmem:[%s0 + $0xe8] sm:$0xff]
  %v178 = vld [vmem:[%s0 + $0xf0] sm:$0xff]
  %v179 = vld [vmem:[%s0 + $0xf8] sm:$0xff]
  %v180 = vld [vmem:[%s0 + $0x100] sm:$0xff]
  %v181 = vld [vmem:[%s0 + $0x108] sm:$0xff]
  %v182 = vld [vmem:[%s0 + $0x110] sm:$0xff]
  %v183 = vld [vmem:[%s0 + $0x118] sm:$0xff]
  %v184 = vld [vmem:[%s0 + $0x120] sm:$0xff]
  %v185 = vld [vmem:[%s0 + $0x128] sm:$0xff]
  %v186 = vld [vmem:[%s0 + $0x130] sm:$0xff]
  %v187 = vld [vmem:[%s0 + $0x138] sm:$0xff]
  %v188 = vld [vmem:[%s0 + $0x140] sm:$0xff]
  %v189 = vld [vmem:[%s0 + $0x148] sm:$0xff]
  %v190 = vld [vmem:[%s0 + $0x150] sm:$0xff]
  %v191 = vld [vmem:[%s0 + $0x158] sm:$0xff]
  %v192 = vld [vmem:[%s0 + $0x160] sm:$0xff]
  %v193 = vld [vmem:[%s0 + $0x168] sm:$0xff]
  %v194 = vld [vmem:[%s0 + $0x170] sm:$0xff]
  %v195 = vld [vmem:[%s0 + $0x178] sm:$0xff]
  %v196 = vld [vmem:[%s0 + $0x180] sm:$0xff]
  %v197 = vld [vmem:[%s0 + $0x188] sm:$0xff]
  %v198 = vld [vmem:[%s0 + $0x190] sm:$0xff]
  %v199 = vld [vmem:[%s0 + $0x198] sm:$0xff]
  %v200 = vld [vmem:[%s0 + $0x1a0] sm:$0xff]
  %v201 = vld [vmem:[%s0 + $0x1a8] sm:$0xff]
  %v202 = vld [vmem:[%s0 + $0x1b0] sm:$0xff]
  %v203 = vld [vmem:[%s0 + $0x1b8] sm:$0xff]
  %v204 = vld [vmem:[%s0 + $0x1c0] sm:$0xff]
  %v205 = vld [vmem:[%s0 + $0x1c8] sm:$0xff]
  %v206 = vld [vmem:[%s0 + $0x1d0] sm:$0xff]
  %v207 = vld [vmem:[%s0 + $0x1d8] sm:$0xff]
  %v208 = vld [vmem:[%s0 + $0x1e0] sm:$0xff]
  %v209 = vld [vmem:[%s0 + $0x1e8] sm:$0xff]
  %v210 = vld [vmem:[%s0 + $0x1f0] sm:$0xff]
  %v211 = vld [vmem:[%s0 + $0x1f8] sm:$0xff]
  %v212 = vpack.c.bf16 %v149, %v148
  %v213 = vpack.c.bf16 %v151, %v150
  %v214 = vpack.c.bf16 %v153, %v152
  %v215 = vpack.c.bf16 %v155, %v154
  %v216 = vpack.c.bf16 %v157, %v156
  %v217 = vpack.c.bf16 %v159, %v158
  %v218 = vpack.c.bf16 %v161, %v160
  %v219 = vpack.c.bf16 %v163, %v162
  %v220 = vpack.c.bf16 %v165, %v164
  %v221 = vpack.c.bf16 %v167, %v166
  %v222 = vpack.c.bf16 %v169, %v168
  %v223 = vpack.c.bf16 %v171, %v170
  %v224 = vpack.c.bf16 %v173, %v172
  %v225 = vpack.c.bf16 %v175, %v174
  %v226 = vpack.c.bf16 %v177, %v176
  %v227 = vpack.c.bf16 %v179, %v178
  %v228 = vpack.c.bf16 %v181, %v180
  %v229 = vpack.c.bf16 %v183, %v182
  %v230 = vpack.c.bf16 %v185, %v184
  %v231 = vpack.c.bf16 %v187, %v186
  %v232 = vpack.c.bf16 %v189, %v188
  %v233 = vpack.c.bf16 %v191, %v190
  %v234 = vpack.c.bf16 %v193, %v192
  %v235 = vpack.c.bf16 %v195, %v194
  %v236 = vpack.c.bf16 %v197, %v196
  %v237 = vpack.c.bf16 %v199, %v198
  %v238 = vpack.c.bf16 %v201, %v200
  %v239 = vpack.c.bf16 %v203, %v202
  %v240 = vpack.c.bf16 %v205, %v204
  %v241 = vpack.c.bf16 %v207, %v206
  %v242 = vpack.c.bf16 %v209, %v208
  %v243 = vpack.c.bf16 %v211, %v210
  %v244 = vld [vmem:[%s1] sm:$0x3]
  %vm245 = vcmask 31744
  %v247 = vsel %vm245, %v212, 0
  %v250 = vsel %vm245, %v213, 0
  %v253 = vsel %vm245, %v214, 0
  %v256 = vsel %vm245, %v215, 0
  %v259 = vsel %vm245, %v216, 0
  %v262 = vsel %vm245, %v217, 0
  %v265 = vsel %vm245, %v218, 0
  %v268 = vsel %vm245, %v219, 0
  %v271 = vsel %vm245, %v220, 0
  %v274 = vsel %vm245, %v221, 0
  %v277 = vsel %vm245, %v222, 0
  %v280 = vsel %vm245, %v223, 0
  %v283 = vsel %vm245, %v224, 0
  %v286 = vsel %vm245, %v225, 0
  %v289 = vsel %vm245, %v226, 0
  %v292 = vsel %vm245, %v227, 0
  %v295 = vsel %vm245, %v228, 0
  %v298 = vsel %vm245, %v229, 0
  %v301 = vsel %vm245, %v230, 0
  %v304 = vsel %vm245, %v231, 0
  %v307 = vsel %vm245, %v232, 0
  %v310 = vsel %vm245, %v233, 0
  %v313 = vsel %vm245, %v234, 0
  %v316 = vsel %vm245, %v235, 0
  %v319 = vsel %vm245, %v236, 0
  %v322 = vsel %vm245, %v237, 0
  %v325 = vsel %vm245, %v238, 0
  %v328 = vsel %vm245, %v239, 0
  %v331 = vsel %vm245, %v240, 0
  %v334 = vsel %vm245, %v241, 0
  %v337 = vsel %vm245, %v242, 0
  %v340 = vsel %vm245, %v243, 0
  %vm342 = vcmask 1041408
  %v344 = vsel %vm342, %v244, 0
  %346 = vmatprep.subr.bf16.mxu0 0
  %347 = vmatpush1.bf16.msra.mxu0 0
  %348 = vmatprep.subr.bf16.mxu0 0
  %349 = vmatpush1.bf16.msra.mxu0 0
  %350 = vmatprep.subr.bf16.mxu0 0
  %351 = vmatpush1.bf16.msra.mxu0 0
  %352 = vmatprep.subr.bf16.mxu0 0
  %353 = vmatpush1.bf16.msra.mxu0 0
  %354 = vmatprep.subr.bf16.mxu0 0
  %355 = vmatpush1.bf16.msra.mxu0 0
  %356 = vmatprep.subr.bf16.mxu0 0
  %357 = vmatpush1.bf16.msra.mxu0 0
  %358 = vmatprep.subr.bf16.mxu0 0
  %359 = vmatpush1.bf16.msra.mxu0 0
  %360 = vmatprep.subr.bf16.mxu0 0
  %361 = vmatpush1.bf16.msra.mxu0 %v344
  %362 = vmatprep.subr.bf16.mxu0 0
  %363 = vmatpush2.bf16.msra.mxu0 0
  %364 = vmatprep.subr.bf16.mxu0 0
  %365 = vmatpush2.bf16.msra.mxu0 0
  %366 = vmatprep.subr.bf16.mxu0 0
  %367 = vmatpush2.bf16.msra.mxu0 0
  %368 = vmatprep.subr.bf16.mxu0 0
  %369 = vmatpush2.bf16.msra.mxu0 0
  %370 = vmatprep.subr.bf16.mxu0 0
  %371 = vmatpush2.bf16.msra.mxu0 0
  %372 = vmatprep.subr.bf16.mxu0 0
  %373 = vmatpush2.bf16.msra.mxu0 0
  %374 = vmatprep.subr.bf16.mxu0 0
  %375 = vmatpush2.bf16.msra.mxu0 0
  %376 = vmatprep.subr.bf16.mxu0 0
  %377 = vmatpush2.bf16.msra.mxu0 0
  %378 = vmatprep.mubr.bf16.mxu0 0
  %379 = vmatmul.mubr.bf16.gmra.mxu0 %v247
  %v380 = vpop.f32.mrf.mxu0
  %v381 = vadd.f32 0.0, %v380
  %v382 = vpop.f32.mrf.mxu0
  %v383 = vpop.f32.mrf.mxu0
  %v384 = vadd.f32 0.0, %v383
  %v385 = vpop.f32.mrf.mxu0
  %386 = vmatprep.mubr.bf16.mxu0 0
  %387 = vmatmul.mubr.bf16.gmra.mxu0 %v250
  %v388 = vpop.f32.mrf.mxu0
  %v389 = vadd.f32 0.0, %v388
  %v390 = vpop.f32.mrf.mxu0
  %v391 = vpop.f32.mrf.mxu0
  %v392 = vadd.f32 0.0, %v391
  %v393 = vpop.f32.mrf.mxu0
  %394 = vmatprep.mubr.bf16.mxu0 0
  %395 = vmatmul.mubr.bf16.gmra.mxu0 %v253
  %v396 = vpop.f32.mrf.mxu0
  %v397 = vadd.f32 0.0, %v396
  %v398 = vpop.f32.mrf.mxu0
  %v399 = vpop.f32.mrf.mxu0
  %v400 = vadd.f32 0.0, %v399
  %v401 = vpop.f32.mrf.mxu0
  %402 = vmatprep.mubr.bf16.mxu0 0
  %403 = vmatmul.mubr.bf16.gmra.mxu0 %v256
  %v404 = vpop.f32.mrf.mxu0
  %v405 = vadd.f32 0.0, %v404
  %v406 = vpop.f32.mrf.mxu0
  %v407 = vpop.f32.mrf.mxu0
  %v408 = vadd.f32 0.0, %v407
  %v409 = vpop.f32.mrf.mxu0
  %410 = vmatprep.mubr.bf16.mxu0 0
  %411 = vmatmul.mubr.bf16.gmra.mxu0 %v259
  %v412 = vpop.f32.mrf.mxu0
  %v413 = vadd.f32 0.0, %v412
  %v414 = vpop.f32.mrf.mxu0
  %v415 = vpop.f32.mrf.mxu0
  %v416 = vadd.f32 0.0, %v415
  %v417 = vpop.f32.mrf.mxu0
  %418 = vmatprep.mubr.bf16.mxu0 0
  %419 = vmatmul.mubr.bf16.gmra.mxu0 %v262
  %v420 = vpop.f32.mrf.mxu0
  %v421 = vadd.f32 0.0, %v420
  %v422 = vpop.f32.mrf.mxu0
  %v423 = vpop.f32.mrf.mxu0
  %v424 = vadd.f32 0.0, %v423
  %v425 = vpop.f32.mrf.mxu0
  %426 = vmatprep.mubr.bf16.mxu0 0
  %427 = vmatmul.mubr.bf16.gmra.mxu0 %v265
  %v428 = vpop.f32.mrf.mxu0
  %v429 = vadd.f32 0.0, %v428
  %v430 = vpop.f32.mrf.mxu0
  %v431 = vpop.f32.mrf.mxu0
  %v432 = vadd.f32 0.0, %v431
  %v433 = vpop.f32.mrf.mxu0
  %434 = vmatprep.mubr.bf16.mxu0 0
  %435 = vmatmul.mubr.bf16.gmra.mxu0 %v268
  %v436 = vpop.f32.mrf.mxu0
  %v437 = vadd.f32 0.0, %v436
  %v438 = vpop.f32.mrf.mxu0
  %v439 = vpop.f32.mrf.mxu0
  %v440 = vadd.f32 0.0, %v439
  %v441 = vpop.f32.mrf.mxu0
  %442 = vmatprep.mubr.bf16.mxu0 0
  %443 = vmatmul.mubr.bf16.gmra.mxu0 %v271
  %v444 = vpop.f32.mrf.mxu0
  %v445 = vadd.f32 0.0, %v444
  %v446 = vpop.f32.mrf.mxu0
  %v447 = vpop.f32.mrf.mxu0
  %v448 = vadd.f32 0.0, %v447
  %v449 = vpop.f32.mrf.mxu0
  %450 = vmatprep.mubr.bf16.mxu0 0
  %451 = vmatmul.mubr.bf16.gmra.mxu0 %v274
  %v452 = vpop.f32.mrf.mxu0
  %v453 = vadd.f32 0.0, %v452
  %v454 = vpop.f32.mrf.mxu0
  %v455 = vpop.f32.mrf.mxu0
  %v456 = vadd.f32 0.0, %v455
  %v457 = vpop.f32.mrf.mxu0
  %458 = vmatprep.mubr.bf16.mxu0 0
  %459 = vmatmul.mubr.bf16.gmra.mxu0 %v277
  %v460 = vpop.f32.mrf.mxu0
  %v461 = vadd.f32 0.0, %v460
  %v462 = vpop.f32.mrf.mxu0
  %v463 = vpop.f32.mrf.mxu0
  %v464 = vadd.f32 0.0, %v463
  %v465 = vpop.f32.mrf.mxu0
  %466 = vmatprep.mubr.bf16.mxu0 0
  %467 = vmatmul.mubr.bf16.gmra.mxu0 %v280
  %v468 = vpop.f32.mrf.mxu0
  %v469 = vadd.f32 0.0, %v468
  %v470 = vpop.f32.mrf.mxu0
  %v471 = vpop.f32.mrf.mxu0
  %v472 = vadd.f32 0.0, %v471
  %v473 = vpop.f32.mrf.mxu0
  %474 = vmatprep.mubr.bf16.mxu0 0
  %475 = vmatmul.mubr.bf16.gmra.mxu0 %v283
  %v476 = vpop.f32.mrf.mxu0
  %v477 = vadd.f32 0.0, %v476
  %v478 = vpop.f32.mrf.mxu0
  %v479 = vpop.f32.mrf.mxu0
  %v480 = vadd.f32 0.0, %v479
  %v481 = vpop.f32.mrf.mxu0
  %482 = vmatprep.mubr.bf16.mxu0 0
  %483 = vmatmul.mubr.bf16.gmra.mxu0 %v286
  %v484 = vpop.f32.mrf.mxu0
  %v485 = vadd.f32 0.0, %v484
  %v486 = vpop.f32.mrf.mxu0
  %v487 = vpop.f32.mrf.mxu0
  %v488 = vadd.f32 0.0, %v487
  %v489 = vpop.f32.mrf.mxu0
  %490 = vmatprep.mubr.bf16.mxu0 0
  %491 = vmatmul.mubr.bf16.gmra.mxu0 %v289
  %v492 = vpop.f32.mrf.mxu0
  %v493 = vadd.f32 0.0, %v492
  %v494 = vpop.f32.mrf.mxu0
  %v495 = vpop.f32.mrf.mxu0
  %v496 = vadd.f32 0.0, %v495
  %v497 = vpop.f32.mrf.mxu0
  %498 = vmatprep.mubr.bf16.mxu0 0
  %499 = vmatmul.mubr.bf16.gmra.mxu0 %v292
  %v500 = vpop.f32.mrf.mxu0
  %v501 = vadd.f32 0.0, %v500
  %v502 = vpop.f32.mrf.mxu0
  %v503 = vpop.f32.mrf.mxu0
  %v504 = vadd.f32 0.0, %v503
  %v505 = vpop.f32.mrf.mxu0
  %506 = vmatprep.mubr.bf16.mxu0 0
  %507 = vmatmul.mubr.bf16.gmra.mxu0 %v295
  %v508 = vpop.f32.mrf.mxu0
  %v509 = vadd.f32 0.0, %v508
  %v510 = vpop.f32.mrf.mxu0
  %v511 = vpop.f32.mrf.mxu0
  %v512 = vadd.f32 0.0, %v511
  %v513 = vpop.f32.mrf.mxu0
  %514 = vmatprep.mubr.bf16.mxu0 0
  %515 = vmatmul.mubr.bf16.gmra.mxu0 %v298
  %v516 = vpop.f32.mrf.mxu0
  %v517 = vadd.f32 0.0, %v516
  %v518 = vpop.f32.mrf.mxu0
  %v519 = vpop.f32.mrf.mxu0
  %v520 = vadd.f32 0.0, %v519
  %v521 = vpop.f32.mrf.mxu0
  %522 = vmatprep.mubr.bf16.mxu0 0
  %523 = vmatmul.mubr.bf16.gmra.mxu0 %v301
  %v524 = vpop.f32.mrf.mxu0
  %v525 = vadd.f32 0.0, %v524
  %v526 = vpop.f32.mrf.mxu0
  %v527 = vpop.f32.mrf.mxu0
  %v528 = vadd.f32 0.0, %v527
  %v529 = vpop.f32.mrf.mxu0
  %530 = vmatprep.mubr.bf16.mxu0 0
  %531 = vmatmul.mubr.bf16.gmra.mxu0 %v304
  %v532 = vpop.f32.mrf.mxu0
  %v533 = vadd.f32 0.0, %v532
  %v534 = vpop.f32.mrf.mxu0
  %v535 = vpop.f32.mrf.mxu0
  %v536 = vadd.f32 0.0, %v535
  %v537 = vpop.f32.mrf.mxu0
  %538 = vmatprep.mubr.bf16.mxu0 0
  %539 = vmatmul.mubr.bf16.gmra.mxu0 %v307
  %v540 = vpop.f32.mrf.mxu0
  %v541 = vadd.f32 0.0, %v540
  %v542 = vpop.f32.mrf.mxu0
  %v543 = vpop.f32.mrf.mxu0
  %v544 = vadd.f32 0.0, %v543
  %v545 = vpop.f32.mrf.mxu0
  %546 = vmatprep.mubr.bf16.mxu0 0
  %547 = vmatmul.mubr.bf16.gmra.mxu0 %v310
  %v548 = vpop.f32.mrf.mxu0
  %v549 = vadd.f32 0.0, %v548
  %v550 = vpop.f32.mrf.mxu0
  %v551 = vpop.f32.mrf.mxu0
  %v552 = vadd.f32 0.0, %v551
  %v553 = vpop.f32.mrf.mxu0
  %554 = vmatprep.mubr.bf16.mxu0 0
  %555 = vmatmul.mubr.bf16.gmra.mxu0 %v313
  %v556 = vpop.f32.mrf.mxu0
  %v557 = vadd.f32 0.0, %v556
  %v558 = vpop.f32.mrf.mxu0
  %v559 = vpop.f32.mrf.mxu0
  %v560 = vadd.f32 0.0, %v559
  %v561 = vpop.f32.mrf.mxu0
  %562 = vmatprep.mubr.bf16.mxu0 0
  %563 = vmatmul.mubr.bf16.gmra.mxu0 %v316
  %v564 = vpop.f32.mrf.mxu0
  %v565 = vadd.f32 0.0, %v564
  %v566 = vpop.f32.mrf.mxu0
  %v567 = vpop.f32.mrf.mxu0
  %v568 = vadd.f32 0.0, %v567
  %v569 = vpop.f32.mrf.mxu0
  %570 = vmatprep.mubr.bf16.mxu0 0
  %571 = vmatmul.mubr.bf16.gmra.mxu0 %v319
  %v572 = vpop.f32.mrf.mxu0
  %v573 = vadd.f32 0.0, %v572
  %v574 = vpop.f32.mrf.mxu0
  %v575 = vpop.f32.mrf.mxu0
  %v576 = vadd.f32 0.0, %v575
  %v577 = vpop.f32.mrf.mxu0
  %578 = vmatprep.mubr.bf16.mxu0 0
  %579 = vmatmul.mubr.bf16.gmra.mxu0 %v322
  %v580 = vpop.f32.mrf.mxu0
  %v581 = vadd.f32 0.0, %v580
  %v582 = vpop.f32.mrf.mxu0
  %v583 = vpop.f32.mrf.mxu0
  %v584 = vadd.f32 0.0, %v583
  %v585 = vpop.f32.mrf.mxu0
  %586 = vmatprep.mubr.bf16.mxu0 0
  %587 = vmatmul.mubr.bf16.gmra.mxu0 %v325
  %v588 = vpop.f32.mrf.mxu0
  %v589 = vadd.f32 0.0, %v588
  %v590 = vpop.f32.mrf.mxu0
  %v591 = vpop.f32.mrf.mxu0
  %v592 = vadd.f32 0.0, %v591
  %v593 = vpop.f32.mrf.mxu0
  %594 = vmatprep.mubr.bf16.mxu0 0
  %595 = vmatmul.mubr.bf16.gmra.mxu0 %v328
  %v596 = vpop.f32.mrf.mxu0
  %v597 = vadd.f32 0.0, %v596
  %v598 = vpop.f32.mrf.mxu0
  %v599 = vpop.f32.mrf.mxu0
  %v600 = vadd.f32 0.0, %v599
  %v601 = vpop.f32.mrf.mxu0
  %602 = vmatprep.mubr.bf16.mxu0 0
  %603 = vmatmul.mubr.bf16.gmra.mxu0 %v331
  %v604 = vpop.f32.mrf.mxu0
  %v605 = vadd.f32 0.0, %v604
  %v606 = vpop.f32.mrf.mxu0
  %v607 = vpop.f32.mrf.mxu0
  %v608 = vadd.f32 0.0, %v607
  %v609 = vpop.f32.mrf.mxu0
  %610 = vmatprep.mubr.bf16.mxu0 0
  %611 = vmatmul.mubr.bf16.gmra.mxu0 %v334
  %v612 = vpop.f32.mrf.mxu0
  %v613 = vadd.f32 0.0, %v612
  %v614 = vpop.f32.mrf.mxu0
  %v615 = vpop.f32.mrf.mxu0
  %v616 = vadd.f32 0.0, %v615
  %v617 = vpop.f32.mrf.mxu0
  %618 = vmatprep.mubr.bf16.mxu0 0
  %619 = vmatmul.mubr.bf16.gmra.mxu0 %v337
  %v620 = vpop.f32.mrf.mxu0
  %v621 = vadd.f32 0.0, %v620
  %v622 = vpop.f32.mrf.mxu0
  %v623 = vpop.f32.mrf.mxu0
  %v624 = vadd.f32 0.0, %v623
  %v625 = vpop.f32.mrf.mxu0
  %626 = vmatprep.mubr.bf16.mxu0 0
  %627 = vmatmul.mubr.bf16.gmra.mxu0 %v340
  %v628 = vpop.f32.mrf.mxu0
  %v629 = vadd.f32 0.0, %v628
  %v630 = vpop.f32.mrf.mxu0
  %v631 = vpop.f32.mrf.mxu0
  %v632 = vadd.f32 0.0, %v631
  %v633 = vpop.f32.mrf.mxu0
  %634 = vdwg.mxu0
  %v635 = vadd.f32 %v84, %v381
  %v636 = vadd.f32 %v85, %v384
  %v637 = vadd.f32 %v86, %v389
  %v638 = vadd.f32 %v87, %v392
  %v639 = vadd.f32 %v88, %v397
  %v640 = vadd.f32 %v89, %v400
  %v641 = vadd.f32 %v90, %v405
  %v642 = vadd.f32 %v91, %v408
  %v643 = vadd.f32 %v92, %v413
  %v644 = vadd.f32 %v93, %v416
  %v645 = vadd.f32 %v94, %v421
  %v646 = vadd.f32 %v95, %v424
  %v647 = vadd.f32 %v96, %v429
  %v648 = vadd.f32 %v97, %v432
  %v649 = vadd.f32 %v98, %v437
  %v650 = vadd.f32 %v99, %v440
  %v651 = vadd.f32 %v100, %v445
  %v652 = vadd.f32 %v101, %v448
  %v653 = vadd.f32 %v102, %v453
  %v654 = vadd.f32 %v103, %v456
  %v655 = vadd.f32 %v104, %v461
  %v656 = vadd.f32 %v105, %v464
  %v657 = vadd.f32 %v106, %v469
  %v658 = vadd.f32 %v107, %v472
  %v659 = vadd.f32 %v108, %v477
  %v660 = vadd.f32 %v109, %v480
  %v661 = vadd.f32 %v110, %v485
  %v662 = vadd.f32 %v111, %v488
  %v663 = vadd.f32 %v112, %v493
  %v664 = vadd.f32 %v113, %v496
  %v665 = vadd.f32 %v114, %v501
  %v666 = vadd.f32 %v115, %v504
  %v667 = vadd.f32 %v116, %v509
  %v668 = vadd.f32 %v117, %v512
  %v669 = vadd.f32 %v118, %v517
  %v670 = vadd.f32 %v119, %v520
  %v671 = vadd.f32 %v120, %v525
  %v672 = vadd.f32 %v121, %v528
  %v673 = vadd.f32 %v122, %v533
  %v674 = vadd.f32 %v123, %v536
  %v675 = vadd.f32 %v124, %v541
  %v676 = vadd.f32 %v125, %v544
  %v677 = vadd.f32 %v126, %v549
  %v678 = vadd.f32 %v127, %v552
  %v679 = vadd.f32 %v128, %v557
  %v680 = vadd.f32 %v129, %v560
  %v681 = vadd.f32 %v130, %v565
  %v682 = vadd.f32 %v131, %v568
  %v683 = vadd.f32 %v132, %v573
  %v684 = vadd.f32 %v133, %v576
  %v685 = vadd.f32 %v134, %v581
  %v686 = vadd.f32 %v135, %v584
  %v687 = vadd.f32 %v136, %v589
  %v688 = vadd.f32 %v137, %v592
  %v689 = vadd.f32 %v138, %v597
  %v690 = vadd.f32 %v139, %v600
  %v691 = vadd.f32 %v140, %v605
  %v692 = vadd.f32 %v141, %v608
  %v693 = vadd.f32 %v142, %v613
  %v694 = vadd.f32 %v143, %v616
  %v695 = vadd.f32 %v144, %v621
  %v696 = vadd.f32 %v145, %v624
  %v697 = vadd.f32 %v146, %v629
  %v698 = vadd.f32 %v147, %v632
  %699 = vst.msk [vmem:[#allocation2] sm:$0xff] %vm245, %v635
  %700 = vst.msk [vmem:[#allocation2 + $0x8] sm:$0xff] %vm245, %v636
  %701 = vst.msk [vmem:[#allocation2 + $0x10] sm:$0xff] %vm245, %v637
  %702 = vst.msk [vmem:[#allocation2 + $0x18] sm:$0xff] %vm245, %v638
  %703 = vst.msk [vmem:[#allocation2 + $0x20] sm:$0xff] %vm245, %v639
  %704 = vst.msk [vmem:[#allocation2 + $0x28] sm:$0xff] %vm245, %v640
  %705 = vst.msk [vmem:[#allocation2 + $0x30] sm:$0xff] %vm245, %v641
  %706 = vst.msk [vmem:[#allocation2 + $0x38] sm:$0xff] %vm245, %v642
  %707 = vst.msk [vmem:[#allocation2 + $0x40] sm:$0xff] %vm245, %v643
  %708 = vst.msk [vmem:[#allocation2 + $0x48] sm:$0xff] %vm245, %v644
  %709 = vst.msk [vmem:[#allocation2 + $0x50] sm:$0xff] %vm245, %v645
  %710 = vst.msk [vmem:[#allocation2 + $0x58] sm:$0xff] %vm245, %v646
  %711 = vst.msk [vmem:[#allocation2 + $0x60] sm:$0xff] %vm245, %v647
  %712 = vst.msk [vmem:[#allocation2 + $0x68] sm:$0xff] %vm245, %v648
  %713 = vst.msk [vmem:[#allocation2 + $0x70] sm:$0xff] %vm245, %v649
  %714 = vst.msk [vmem:[#allocation2 + $0x78] sm:$0xff] %vm245, %v650
  %715 = vst.msk [vmem:[#allocation2 + $0x80] sm:$0xff] %vm245, %v651
  %716 = vst.msk [vmem:[#allocation2 + $0x88] sm:$0xff] %vm245, %v652
  %717 = vst.msk [vmem:[#allocation2 + $0x90] sm:$0xff] %vm245, %v653
  %718 = vst.msk [vmem:[#allocation2 + $0x98] sm:$0xff] %vm245, %v654
  %719 = vst.msk [vmem:[#allocation2 + $0xa0] sm:$0xff] %vm245, %v655
  %720 = vst.msk [vmem:[#allocation2 + $0xa8] sm:$0xff] %vm245, %v656
  %721 = vst.msk [vmem:[#allocation2 + $0xb0] sm:$0xff] %vm245, %v657
  %722 = vst.msk [vmem:[#allocation2 + $0xb8] sm:$0xff] %vm245, %v658
  %723 = vst.msk [vmem:[#allocation2 + $0xc0] sm:$0xff] %vm245, %v659
  %724 = vst.msk [vmem:[#allocation2 + $0xc8] sm:$0xff] %vm245, %v660
  %725 = vst.msk [vmem:[#allocation2 + $0xd0] sm:$0xff] %vm245, %v661
  %726 = vst.msk [vmem:[#allocation2 + $0xd8] sm:$0xff] %vm245, %v662
  %727 = vst.msk [vmem:[#allocation2 + $0xe0] sm:$0xff] %vm245, %v663
  %728 = vst.msk [vmem:[#allocation2 + $0xe8] sm:$0xff] %vm245, %v664
  %729 = vst.msk [vmem:[#allocation2 + $0xf0] sm:$0xff] %vm245, %v665
  %730 = vst.msk [vmem:[#allocation2 + $0xf8] sm:$0xff] %vm245, %v666
  %731 = vst.msk [vmem:[#allocation2 + $0x100] sm:$0xff] %vm245, %v667
  %732 = vst.msk [vmem:[#allocation2 + $0x108] sm:$0xff] %vm245, %v668
  %733 = vst.msk [vmem:[#allocation2 + $0x110] sm:$0xff] %vm245, %v669
  %734 = vst.msk [vmem:[#allocation2 + $0x118] sm:$0xff] %vm245, %v670
  %735 = vst.msk [vmem:[#allocation2 + $0x120] sm:$0xff] %vm245, %v671
  %736 = vst.msk [vmem:[#allocation2 + $0x128] sm:$0xff] %vm245, %v672
  %737 = vst.msk [vmem:[#allocation2 + $0x130] sm:$0xff] %vm245, %v673
  %738 = vst.msk [vmem:[#allocation2 + $0x138] sm:$0xff] %vm245, %v674
  %739 = vst.msk [vmem:[#allocation2 + $0x140] sm:$0xff] %vm245, %v675
  %740 = vst.msk [vmem:[#allocation2 + $0x148] sm:$0xff] %vm245, %v676
  %741 = vst.msk [vmem:[#allocation2 + $0x150] sm:$0xff] %vm245, %v677
  %742 = vst.msk [vmem:[#allocation2 + $0x158] sm:$0xff] %vm245, %v678
  %743 = vst.msk [vmem:[#allocation2 + $0x160] sm:$0xff] %vm245, %v679
  %744 = vst.msk [vmem:[#allocation2 + $0x168] sm:$0xff] %vm245, %v680
  %745 = vst.msk [vmem:[#allocation2 + $0x170] sm:$0xff] %vm245, %v681
  %746 = vst.msk [vmem:[#allocation2 + $0x178] sm:$0xff] %vm245, %v682
  %747 = vst.msk [vmem:[#allocation2 + $0x180] sm:$0xff] %vm245, %v683
  %748 = vst.msk [vmem:[#allocation2 + $0x188] sm:$0xff] %vm245, %v684
  %749 = vst.msk [vmem:[#allocation2 + $0x190] sm:$0xff] %vm245, %v685
  %750 = vst.msk [vmem:[#allocation2 + $0x198] sm:$0xff] %vm245, %v686
  %751 = vst.msk [vmem:[#allocation2 + $0x1a0] sm:$0xff] %vm245, %v687
  %752 = vst.msk [vmem:[#allocation2 + $0x1a8] sm:$0xff] %vm245, %v688
  %753 = vst.msk [vmem:[#allocation2 + $0x1b0] sm:$0xff] %vm245, %v689
  %754 = vst.msk [vmem:[#allocation2 + $0x1b8] sm:$0xff] %vm245, %v690
  %755 = vst.msk [vmem:[#allocation2 + $0x1c0] sm:$0xff] %vm245, %v691
  %756 = vst.msk [vmem:[#allocation2 + $0x1c8] sm:$0xff] %vm245, %v692
  %757 = vst.msk [vmem:[#allocation2 + $0x1d0] sm:$0xff] %vm245, %v693
  %758 = vst.msk [vmem:[#allocation2 + $0x1d8] sm:$0xff] %vm245, %v694
  %759 = vst.msk [vmem:[#allocation2 + $0x1e0] sm:$0xff] %vm245, %v695
  %760 = vst.msk [vmem:[#allocation2 + $0x1e8] sm:$0xff] %vm245, %v696
  %761 = vst.msk [vmem:[#allocation2 + $0x1f0] sm:$0xff] %vm245, %v697
  %762 = vst.msk [vmem:[#allocation2 + $0x1f8] sm:$0xff] %vm245, %v698
  // Predicated region
  $region18: #{bottleneck_forward.3} parent=0 // pred_check
    %p763 = pneg %p15
  $region19: #{bottleneck_forward.3} parent=0 // pred_check_branch
    %765 = sbr.rel (%p763) target = $region21
  $region20: #{bottleneck_forward.3} parent=0 // pred_region
    %v766 = vld [vmem:[#allocation2] sm:$0xff]
    %v767 = vld [vmem:[#allocation2 + $0x8] sm:$0xff]
    %v768 = vld [vmem:[#allocation2 + $0x10] sm:$0xff]
    %v769 = vld [vmem:[#allocation2 + $0x18] sm:$0xff]
    %v770 = vld [vmem:[#allocation2 + $0x20] sm:$0xff]
    %v771 = vld [vmem:[#allocation2 + $0x28] sm:$0xff]
    %v772 = vld [vmem:[#allocation2 + $0x30] sm:$0xff]
    %v773 = vld [vmem:[#allocation2 + $0x38] sm:$0xff]
    %v774 = vld [vmem:[#allocation2 + $0x40] sm:$0xff]
    %v775 = vld [vmem:[#allocation2 + $0x48] sm:$0xff]
    %v776 = vld [vmem:[#allocation2 + $0x50] sm:$0xff]
    %v777 = vld [vmem:[#allocation2 + $0x58] sm:$0xff]
    %v778 = vld [vmem:[#allocation2 + $0x60] sm:$0xff]
    %v779 = vld [vmem:[#allocation2 + $0x68] sm:$0xff]
    %v780 = vld [vmem:[#allocation2 + $0x70] sm:$0xff]
    %v781 = vld [vmem:[#allocation2 + $0x78] sm:$0xff]
    %v782 = vld [vmem:[#allocation2 + $0x80] sm:$0xff]
    %v783 = vld [vmem:[#allocation2 + $0x88] sm:$0xff]
    %v784 = vld [vmem:[#allocation2 + $0x90] sm:$0xff]
    %v785 = vld [vmem:[#allocation2 + $0x98] sm:$0xff]
    %v786 = vld [vmem:[#allocation2 + $0xa0] sm:$0xff]
    %v787 = vld [vmem:[#allocation2 + $0xa8] sm:$0xff]
    %v788 = vld [vmem:[#allocation2 + $0xb0] sm:$0xff]
    %v789 = vld [vmem:[#allocation2 + $0xb8] sm:$0xff]
    %v790 = vld [vmem:[#allocation2 + $0xc0] sm:$0xff]
    %v791 = vld [vmem:[#allocation2 + $0xc8] sm:$0xff]
    %v792 = vld [vmem:[#allocation2 + $0xd0] sm:$0xff]
    %v793 = vld [vmem:[#allocation2 + $0xd8] sm:$0xff]
    %v794 = vld [vmem:[#allocation2 + $0xe0] sm:$0xff]
    %v795 = vld [vmem:[#allocation2 + $0xe8] sm:$0xff]
    %v796 = vld [vmem:[#allocation2 + $0xf0] sm:$0xff]
    %v797 = vld [vmem:[#allocation2 + $0xf8] sm:$0xff]
    %v798 = vld [vmem:[#allocation2 + $0x100] sm:$0xff]
    %v799 = vld [vmem:[#allocation2 + $0x108] sm:$0xff]
    %v800 = vld [vmem:[#allocation2 + $0x110] sm:$0xff]
    %v801 = vld [vmem:[#allocation2 + $0x118] sm:$0xff]
    %v802 = vld [vmem:[#allocation2 + $0x120] sm:$0xff]
    %v803 = vld [vmem:[#allocation2 + $0x128] sm:$0xff]
    %v804 = vld [vmem:[#allocation2 + $0x130] sm:$0xff]
    %v805 = vld [vmem:[#allocation2 + $0x138] sm:$0xff]
    %v806 = vld [vmem:[#allocation2 + $0x140] sm:$0xff]
    %v807 = vld [vmem:[#allocation2 + $0x148] sm:$0xff]
    %v808 = vld [vmem:[#allocation2 + $0x150] sm:$0xff]
    %v809 = vld [vmem:[#allocation2 + $0x158] sm:$0xff]
    %v810 = vld [vmem:[#allocation2 + $0x160] sm:$0xff]
    %v811 = vld [vmem:[#allocation2 + $0x168] sm:$0xff]
    %v812 = vld [vmem:[#allocation2 + $0x170] sm:$0xff]
    %v813 = vld [vmem:[#allocation2 + $0x178] sm:$0xff]
    %v814 = vld [vmem:[#allocation2 + $0x180] sm:$0xff]
    %v815 = vld [vmem:[#allocation2 + $0x188] sm:$0xff]
    %v816 = vld [vmem:[#allocation2 + $0x190] sm:$0xff]
    %v817 = vld [vmem:[#allocation2 + $0x198] sm:$0xff]
    %v818 = vld [vmem:[#allocation2 + $0x1a0] sm:$0xff]
    %v819 = vld [vmem:[#allocation2 + $0x1a8] sm:$0xff]
    %v820 = vld [vmem:[#allocation2 + $0x1b0] sm:$0xff]
    %v821 = vld [vmem:[#allocation2 + $0x1b8] sm:$0xff]
    %v822 = vld [vmem:[#allocation2 + $0x1c0] sm:$0xff]
    %v823 = vld [vmem:[#allocation2 + $0x1c8] sm:$0xff]
    %v824 = vld [vmem:[#allocation2 + $0x1d0] sm:$0xff]
    %v825 = vld [vmem:[#allocation2 + $0x1d8] sm:$0xff]
    %v826 = vld [vmem:[#allocation2 + $0x1e0] sm:$0xff]
    %v827 = vld [vmem:[#allocation2 + $0x1e8] sm:$0xff]
    %v828 = vld [vmem:[#allocation2 + $0x1f0] sm:$0xff]
    %v829 = vld [vmem:[#allocation2 + $0x1f8] sm:$0xff]
    %v830 = vld [vmem:[%s2] sm:$0x1]
    %v832 = vlaneseq
    %v833 = vshrl.u32 %v832, 7
    %v834 = vsub.s32 0, %v833
    %v835 = vrot.slane %v830, %v834
    %v837 = vadd.f32 %v766, %v835
    %v838 = vadd.f32 %v767, %v835
    %v839 = vadd.f32 %v768, %v835
    %v840 = vadd.f32 %v769, %v835
    %v841 = vadd.f32 %v770, %v835
    %v842 = vadd.f32 %v771, %v835
    %v843 = vadd.f32 %v772, %v835
    %v844 = vadd.f32 %v773, %v835
    %v845 = vadd.f32 %v774, %v835
    %v846 = vadd.f32 %v775, %v835
    %v847 = vadd.f32 %v776, %v835
    %v848 = vadd.f32 %v777, %v835
    %v849 = vadd.f32 %v778, %v835
    %v850 = vadd.f32 %v779, %v835
    %v851 = vadd.f32 %v780, %v835
    %v852 = vadd.f32 %v781, %v835
    %v853 = vadd.f32 %v782, %v835
    %v854 = vadd.f32 %v783, %v835
    %v855 = vadd.f32 %v784, %v835
    %v856 = vadd.f32 %v785, %v835
    %v857 = vadd.f32 %v786, %v835
    %v858 = vadd.f32 %v787, %v835
    %v859 = vadd.f32 %v788, %v835
    %v860 = vadd.f32 %v789, %v835
    %v861 = vadd.f32 %v790, %v835
    %v862 = vadd.f32 %v791, %v835
    %v863 = vadd.f32 %v792, %v835
    %v864 = vadd.f32 %v793, %v835
    %v865 = vadd.f32 %v794, %v835
    %v866 = vadd.f32 %v795, %v835
    %v867 = vadd.f32 %v796, %v835
    %v868 = vadd.f32 %v797, %v835
    %v869 = vadd.f32 %v798, %v835
    %v870 = vadd.f32 %v799, %v835
    %v871 = vadd.f32 %v800, %v835
    %v872 = vadd.f32 %v801, %v835
    %v873 = vadd.f32 %v802, %v835
    %v874 = vadd.f32 %v803, %v835
    %v875 = vadd.f32 %v804, %v835
    %v876 = vadd.f32 %v805, %v835
    %v877 = vadd.f32 %v806, %v835
    %v878 = vadd.f32 %v807, %v835
    %v879 = vadd.f32 %v808, %v835
    %v880 = vadd.f32 %v809, %v835
    %v881 = vadd.f32 %v810, %v835
    %v882 = vadd.f32 %v811, %v835
    %v883 = vadd.f32 %v812, %v835
    %v884 = vadd.f32 %v813, %v835
    %v885 = vadd.f32 %v814, %v835
    %v886 = vadd.f32 %v815, %v835
    %v887 = vadd.f32 %v816, %v835
    %v888 = vadd.f32 %v817, %v835
    %v889 = vadd.f32 %v818, %v835
    %v890 = vadd.f32 %v819, %v835
    %v891 = vadd.f32 %v820, %v835
    %v892 = vadd.f32 %v821, %v835
    %v893 = vadd.f32 %v822, %v835
    %v894 = vadd.f32 %v823, %v835
    %v895 = vadd.f32 %v824, %v835
    %v896 = vadd.f32 %v825, %v835
    %v897 = vadd.f32 %v826, %v835
    %v898 = vadd.f32 %v827, %v835
    %v899 = vadd.f32 %v828, %v835
    %v900 = vadd.f32 %v829, %v835
    %v901 = vmax.f32 %v837, 0.0
    %v902 = vmax.f32 %v838, 0.0
    %v903 = vmax.f32 %v839, 0.0
    %v904 = vmax.f32 %v840, 0.0
    %v905 = vmax.f32 %v841, 0.0
    %v906 = vmax.f32 %v842, 0.0
    %v907 = vmax.f32 %v843, 0.0
    %v908 = vmax.f32 %v844, 0.0
    %v909 = vmax.f32 %v845, 0.0
    %v910 = vmax.f32 %v846, 0.0
    %v911 = vmax.f32 %v847, 0.0
    %v912 = vmax.f32 %v848, 0.0
    %v913 = vmax.f32 %v849, 0.0
    %v914 = vmax.f32 %v850, 0.0
    %v915 = vmax.f32 %v851, 0.0
    %v916 = vmax.f32 %v852, 0.0
    %v917 = vmax.f32 %v853, 0.0
    %v918 = vmax.f32 %v854, 0.0
    %v919 = vmax.f32 %v855, 0.0
    %v920 = vmax.f32 %v856, 0.0
    %v921 = vmax.f32 %v857, 0.0
    %v922 = vmax.f32 %v858, 0.0
    %v923 = vmax.f32 %v859, 0.0
    %v924 = vmax.f32 %v860, 0.0
    %v925 = vmax.f32 %v861, 0.0
    %v926 = vmax.f32 %v862, 0.0
    %v927 = vmax.f32 %v863, 0.0
    %v928 = vmax.f32 %v864, 0.0
    %v929 = vmax.f32 %v865, 0.0
    %v930 = vmax.f32 %v866, 0.0
    %v931 = vmax.f32 %v867, 0.0
    %v932 = vmax.f32 %v868, 0.0
    %v933 = vmax.f32 %v869, 0.0
    %v934 = vmax.f32 %v870, 0.0
    %v935 = vmax.f32 %v871, 0.0
    %v936 = vmax.f32 %v872, 0.0
    %v937 = vmax.f32 %v873, 0.0
    %v938 = vmax.f32 %v874, 0.0
    %v939 = vmax.f32 %v875, 0.0
    %v940 = vmax.f32 %v876, 0.0
    %v941 = vmax.f32 %v877, 0.0
    %v942 = vmax.f32 %v878, 0.0
    %v943 = vmax.f32 %v879, 0.0
    %v944 = vmax.f32 %v880, 0.0
    %v945 = vmax.f32 %v881, 0.0
    %v946 = vmax.f32 %v882, 0.0
    %v947 = vmax.f32 %v883, 0.0
    %v948 = vmax.f32 %v884, 0.0
    %v949 = vmax.f32 %v885, 0.0
    %v950 = vmax.f32 %v886, 0.0
    %v951 = vmax.f32 %v887, 0.0
    %v952 = vmax.f32 %v888, 0.0
    %v953 = vmax.f32 %v889, 0.0
    %v954 = vmax.f32 %v890, 0.0
    %v955 = vmax.f32 %v891, 0.0
    %v956 = vmax.f32 %v892, 0.0
    %v957 = vmax.f32 %v893, 0.0
    %v958 = vmax.f32 %v894, 0.0
    %v959 = vmax.f32 %v895, 0.0
    %v960 = vmax.f32 %v896, 0.0
    %v961 = vmax.f32 %v897, 0.0
    %v962 = vmax.f32 %v898, 0.0
    %v963 = vmax.f32 %v899, 0.0
    %v964 = vmax.f32 %v900, 0.0
    %v965 = vpack.c.bf16 %v902, %v901
    %v966 = vpack.c.bf16 %v904, %v903
    %v967 = vpack.c.bf16 %v906, %v905
    %v968 = vpack.c.bf16 %v908, %v907
    %v969 = vpack.c.bf16 %v910, %v909
    %v970 = vpack.c.bf16 %v912, %v911
    %v971 = vpack.c.bf16 %v914, %v913
    %v972 = vpack.c.bf16 %v916, %v915
    %v973 = vpack.c.bf16 %v918, %v917
    %v974 = vpack.c.bf16 %v920, %v919
    %v975 = vpack.c.bf16 %v922, %v921
    %v976 = vpack.c.bf16 %v924, %v923
    %v977 = vpack.c.bf16 %v926, %v925
    %v978 = vpack.c.bf16 %v928, %v927
    %v979 = vpack.c.bf16 %v930, %v929
    %v980 = vpack.c.bf16 %v932, %v931
    %v981 = vpack.c.bf16 %v934, %v933
    %v982 = vpack.c.bf16 %v936, %v935
    %v983 = vpack.c.bf16 %v938, %v937
    %v984 = vpack.c.bf16 %v940, %v939
    %v985 = vpack.c.bf16 %v942, %v941
    %v986 = vpack.c.bf16 %v944, %v943
    %v987 = vpack.c.bf16 %v946, %v945
    %v988 = vpack.c.bf16 %v948, %v947
    %v989 = vpack.c.bf16 %v950, %v949
    %v990 = vpack.c.bf16 %v952, %v951
    %v991 = vpack.c.bf16 %v954, %v953
    %v992 = vpack.c.bf16 %v956, %v955
    %v993 = vpack.c.bf16 %v958, %v957
    %v994 = vpack.c.bf16 %v960, %v959
    %v995 = vpack.c.bf16 %v962, %v961
    %v996 = vpack.c.bf16 %v964, %v963
    %v1029 = vunpack.c.l.b16 %v965
    %v1030 = vunpack.c.h.b16 %v965
    %v1031 = vunpack.c.l.b16 %v966
    %v1032 = vunpack.c.h.b16 %v966
    %v1033 = vunpack.c.l.b16 %v967
    %v1034 = vunpack.c.h.b16 %v967
    %v1035 = vunpack.c.l.b16 %v968
    %v1036 = vunpack.c.h.b16 %v968
    %v1037 = vunpack.c.l.b16 %v969
    %v1038 = vunpack.c.h.b16 %v969
    %v1039 = vunpack.c.l.b16 %v970
    %v1040 = vunpack.c.h.b16 %v970
    %v1041 = vunpack.c.l.b16 %v971
    %v1042 = vunpack.c.h.b16 %v971
    %v1043 = vunpack.c.l.b16 %v972
    %v1044 = vunpack.c.h.b16 %v972
    %v1045 = vunpack.c.l.b16 %v973
    %v1046 = vunpack.c.h.b16 %v973
    %v1047 = vunpack.c.l.b16 %v974
    %v1048 = vunpack.c.h.b16 %v974
    %v1049 = vunpack.c.l.b16 %v975
    %v1050 = vunpack.c.h.b16 %v975
    %v1051 = vunpack.c.l.b16 %v976
    %v1052 = vunpack.c.h.b16 %v976
    %v1053 = vunpack.c.l.b16 %v977
    %v1054 = vunpack.c.h.b16 %v977
    %v1055 = vunpack.c.l.b16 %v978
    %v1056 = vunpack.c.h.b16 %v978
    %v1057 = vunpack.c.l.b16 %v979
    %v1058 = vunpack.c.h.b16 %v979
    %v1059 = vunpack.c.l.b16 %v980
    %v1060 = vunpack.c.h.b16 %v980
    %v1061 = vunpack.c.l.b16 %v981
    %v1062 = vunpack.c.h.b16 %v981
    %v1063 = vunpack.c.l.b16 %v982
    %v1064 = vunpack.c.h.b16 %v982
    %v1065 = vunpack.c.l.b16 %v983
    %v1066 = vunpack.c.h.b16 %v983
    %v1067 = vunpack.c.l.b16 %v984
    %v1068 = vunpack.c.h.b16 %v984
    %v1069 = vunpack.c.l.b16 %v985
    %v1070 = vunpack.c.h.b16 %v985
    %v1071 = vunpack.c.l.b16 %v986
    %v1072 = vunpack.c.h.b16 %v986
    %v1073 = vunpack.c.l.b16 %v987
    %v1074 = vunpack.c.h.b16 %v987
    %v1075 = vunpack.c.l.b16 %v988
    %v1076 = vunpack.c.h.b16 %v988
    %v1077 = vunpack.c.l.b16 %v989
    %v1078 = vunpack.c.h.b16 %v989
    %v1079 = vunpack.c.l.b16 %v990
    %v1080 = vunpack.c.h.b16 %v990
    %v1081 = vunpack.c.l.b16 %v991
    %v1082 = vunpack.c.h.b16 %v991
    %v1083 = vunpack.c.l.b16 %v992
    %v1084 = vunpack.c.h.b16 %v992
    %v1085 = vunpack.c.l.b16 %v993
    %v1086 = vunpack.c.h.b16 %v993
    %v1087 = vunpack.c.l.b16 %v994
    %v1088 = vunpack.c.h.b16 %v994
    %v1089 = vunpack.c.l.b16 %v995
    %v1090 = vunpack.c.h.b16 %v995
    %v1091 = vunpack.c.l.b16 %v996
    %v1092 = vunpack.c.h.b16 %v996
    %v1093 = vpack.c.b16 %v1029, %v1029
    %v1094 = vpack.c.b16 %v1030, %v1030
    %v1095 = vpack.c.b16 %v1031, %v1031
    %v1096 = vpack.c.b16 %v1032, %v1032
    %v1097 = vpack.c.b16 %v1033, %v1033
    %v1098 = vpack.c.b16 %v1034, %v1034
    %v1099 = vpack.c.b16 %v1035, %v1035
    %v1100 = vpack.c.b16 %v1036, %v1036
    %v1101 = vpack.c.b16 %v1037, %v1037
    %v1102 = vpack.c.b16 %v1038, %v1038
    %v1103 = vpack.c.b16 %v1039, %v1039
    %v1104 = vpack.c.b16 %v1040, %v1040
    %v1105 = vpack.c.b16 %v1041, %v1041
    %v1106 = vpack.c.b16 %v1042, %v1042
    %v1107 = vpack.c.b16 %v1043, %v1043
    %v1108 = vpack.c.b16 %v1044, %v1044
    %v1109 = vpack.c.b16 %v1045, %v1045
    %v1110 = vpack.c.b16 %v1046, %v1046
    %v1111 = vpack.c.b16 %v1047, %v1047
    %v1112 = vpack.c.b16 %v1048, %v1048
    %v1113 = vpack.c.b16 %v1049, %v1049
    %v1114 = vpack.c.b16 %v1050, %v1050
    %v1115 = vpack.c.b16 %v1051, %v1051
    %v1116 = vpack.c.b16 %v1052, %v1052
    %v1117 = vpack.c.b16 %v1053, %v1053
    %v1118 = vpack.c.b16 %v1054, %v1054
    %v1119 = vpack.c.b16 %v1055, %v1055
    %v1120 = vpack.c.b16 %v1056, %v1056
    %v1121 = vpack.c.b16 %v1057, %v1057
    %v1122 = vpack.c.b16 %v1058, %v1058
    %v1123 = vpack.c.b16 %v1059, %v1059
    %v1124 = vpack.c.b16 %v1060, %v1060
    %v1125 = vpack.c.b16 %v1061, %v1061
    %v1126 = vpack.c.b16 %v1062, %v1062
    %v1127 = vpack.c.b16 %v1063, %v1063
    %v1128 = vpack.c.b16 %v1064, %v1064
    %v1129 = vpack.c.b16 %v1065, %v1065
    %v1130 = vpack.c.b16 %v1066, %v1066
    %v1131 = vpack.c.b16 %v1067, %v1067
    %v1132 = vpack.c.b16 %v1068, %v1068
    %v1133 = vpack.c.b16 %v1069, %v1069
    %v1134 = vpack.c.b16 %v1070, %v1070
    %v1135 = vpack.c.b16 %v1071, %v1071
    %v1136 = vpack.c.b16 %v1072, %v1072
    %v1137 = vpack.c.b16 %v1073, %v1073
    %v1138 = vpack.c.b16 %v1074, %v1074
    %v1139 = vpack.c.b16 %v1075, %v1075
    %v1140 = vpack.c.b16 %v1076, %v1076
    %v1141 = vpack.c.b16 %v1077, %v1077
    %v1142 = vpack.c.b16 %v1078, %v1078
    %v1143 = vpack.c.b16 %v1079, %v1079
    %v1144 = vpack.c.b16 %v1080, %v1080
    %v1145 = vpack.c.b16 %v1081, %v1081
    %v1146 = vpack.c.b16 %v1082, %v1082
    %v1147 = vpack.c.b16 %v1083, %v1083
    %v1148 = vpack.c.b16 %v1084, %v1084
    %v1149 = vpack.c.b16 %v1085, %v1085
    %v1150 = vpack.c.b16 %v1086, %v1086
    %v1151 = vpack.c.b16 %v1087, %v1087
    %v1152 = vpack.c.b16 %v1088, %v1088
    %v1153 = vpack.c.b16 %v1089, %v1089
    %v1154 = vpack.c.b16 %v1090, %v1090
    %v1155 = vpack.c.b16 %v1091, %v1091
    %v1156 = vpack.c.b16 %v1092, %v1092
    %vm1221 = vcmask 27648
    %1222 = vst.msk [vmem:[%s3] sm:$0xf] %vm1221, %v1093
    %1223 = vst.msk [vmem:[%s3 + $0x4] sm:$0xf] %vm1221, %v1094
    %1224 = vst.msk [vmem:[%s3 + $0x8] sm:$0xf] %vm1221, %v1095
    %1225 = vst.msk [vmem:[%s3 + $0xc] sm:$0xf] %vm1221, %v1096
    %1226 = vst.msk [vmem:[%s3 + $0x10] sm:$0xf] %vm1221, %v1097
    %1227 = vst.msk [vmem:[%s3 + $0x14] sm:$0xf] %vm1221, %v1098
    %1228 = vst.msk [vmem:[%s3 + $0x18] sm:$0xf] %vm1221, %v1099
    %1229 = vst.msk [vmem:[%s3 + $0x1c] sm:$0xf] %vm1221, %v1100
    %1230 = vst.msk [vmem:[%s3 + $0x20] sm:$0xf] %vm1221, %v1101
    %1231 = vst.msk [vmem:[%s3 + $0x24] sm:$0xf] %vm1221, %v1102
    %1232 = vst.msk [vmem:[%s3 + $0x28] sm:$0xf] %vm1221, %v1103
    %1233 = vst.msk [vmem:[%s3 + $0x2c] sm:$0xf] %vm1221, %v1104
    %1234 = vst.msk [vmem:[%s3 + $0x30] sm:$0xf] %vm1221, %v1105
    %1235 = vst.msk [vmem:[%s3 + $0x34] sm:$0xf] %vm1221, %v1106
    %1236 = vst.msk [vmem:[%s3 + $0x38] sm:$0xf] %vm1221, %v1107
    %1237 = vst.msk [vmem:[%s3 + $0x3c] sm:$0xf] %vm1221, %v1108
    %1238 = vst.msk [vmem:[%s3 + $0x40] sm:$0xf] %vm1221, %v1109
    %1239 = vst.msk [vmem:[%s3 + $0x44] sm:$0xf] %vm1221, %v1110
    %1240 = vst.msk [vmem:[%s3 + $0x48] sm:$0xf] %vm1221, %v1111
    %1241 = vst.msk [vmem:[%s3 + $0x4c] sm:$0xf] %vm1221, %v1112
    %1242 = vst.msk [vmem:[%s3 + $0x50] sm:$0xf] %vm1221, %v1113
    %1243 = vst.msk [vmem:[%s3 + $0x54] sm:$0xf] %vm1221, %v1114
    %1244 = vst.msk [vmem:[%s3 + $0x58] sm:$0xf] %vm1221, %v1115
    %1245 = vst.msk [vmem:[%s3 + $0x5c] sm:$0xf] %vm1221, %v1116
    %1246 = vst.msk [vmem:[%s3 + $0x60] sm:$0xf] %vm1221, %v1117
    %1247 = vst.msk [vmem:[%s3 + $0x64] sm:$0xf] %vm1221, %v1118
    %1248 = vst.msk [vmem:[%s3 + $0x68] sm:$0xf] %vm1221, %v1119
    %1249 = vst.msk [vmem:[%s3 + $0x6c] sm:$0xf] %vm1221, %v1120
    %1250 = vst.msk [vmem:[%s3 + $0x70] sm:$0xf] %vm1221, %v1121
    %1251 = vst.msk [vmem:[%s3 + $0x74] sm:$0xf] %vm1221, %v1122
    %1252 = vst.msk [vmem:[%s3 + $0x78] sm:$0xf] %vm1221, %v1123
    %1253 = vst.msk [vmem:[%s3 + $0x7c] sm:$0xf] %vm1221, %v1124
    %1254 = vst.msk [vmem:[%s3 + $0x80] sm:$0xf] %vm1221, %v1125
    %1255 = vst.msk [vmem:[%s3 + $0x84] sm:$0xf] %vm1221, %v1126
    %1256 = vst.msk [vmem:[%s3 + $0x88] sm:$0xf] %vm1221, %v1127
    %1257 = vst.msk [vmem:[%s3 + $0x8c] sm:$0xf] %vm1221, %v1128
    %1258 = vst.msk [vmem:[%s3 + $0x90] sm:$0xf] %vm1221, %v1129
    %1259 = vst.msk [vmem:[%s3 + $0x94] sm:$0xf] %vm1221, %v1130
    %1260 = vst.msk [vmem:[%s3 + $0x98] sm:$0xf] %vm1221, %v1131
    %1261 = vst.msk [vmem:[%s3 + $0x9c] sm:$0xf] %vm1221, %v1132
    %1262 = vst.msk [vmem:[%s3 + $0xa0] sm:$0xf] %vm1221, %v1133
    %1263 = vst.msk [vmem:[%s3 + $0xa4] sm:$0xf] %vm1221, %v1134
    %1264 = vst.msk [vmem:[%s3 + $0xa8] sm:$0xf] %vm1221, %v1135
    %1265 = vst.msk [vmem:[%s3 + $0xac] sm:$0xf] %vm1221, %v1136
    %1266 = vst.msk [vmem:[%s3 + $0xb0] sm:$0xf] %vm1221, %v1137
    %1267 = vst.msk [vmem:[%s3 + $0xb4] sm:$0xf] %vm1221, %v1138
    %1268 = vst.msk [vmem:[%s3 + $0xb8] sm:$0xf] %vm1221, %v1139
    %1269 = vst.msk [vmem:[%s3 + $0xbc] sm:$0xf] %vm1221, %v1140
    %1270 = vst.msk [vmem:[%s3 + $0xc0] sm:$0xf] %vm1221, %v1141
    %1271 = vst.msk [vmem:[%s3 + $0xc4] sm:$0xf] %vm1221, %v1142
    %1272 = vst.msk [vmem:[%s3 + $0xc8] sm:$0xf] %vm1221, %v1143
    %1273 = vst.msk [vmem:[%s3 + $0xcc] sm:$0xf] %vm1221, %v1144
    %1274 = vst.msk [vmem:[%s3 + $0xd0] sm:$0xf] %vm1221, %v1145
    %1275 = vst.msk [vmem:[%s3 + $0xd4] sm:$0xf] %vm1221, %v1146
    %1276 = vst.msk [vmem:[%s3 + $0xd8] sm:$0xf] %vm1221, %v1147
    %1277 = vst.msk [vmem:[%s3 + $0xdc] sm:$0xf] %vm1221, %v1148
    %1278 = vst.msk [vmem:[%s3 + $0xe0] sm:$0xf] %vm1221, %v1149
    %1279 = vst.msk [vmem:[%s3 + $0xe4] sm:$0xf] %vm1221, %v1150
    %1280 = vst.msk [vmem:[%s3 + $0xe8] sm:$0xf] %vm1221, %v1151
    %1281 = vst.msk [vmem:[%s3 + $0xec] sm:$0xf] %vm1221, %v1152
    %1282 = vst.msk [vmem:[%s3 + $0xf0] sm:$0xf] %vm1221, %v1153
    %1283 = vst.msk [vmem:[%s3 + $0xf4] sm:$0xf] %vm1221, %v1154
    %1284 = vst.msk [vmem:[%s3 + $0xf8] sm:$0xf] %vm1221, %v1155
    %1285 = vst.msk [vmem:[%s3 + $0xfc] sm:$0xf] %vm1221, %v1156
  $region21: #{bottleneck_forward.3} parent=0 // pred_fallthru
    _
  // Predicated region
  $region22: #{bottleneck_forward.3} parent=0 // pred_check
    _
  $region23: #{bottleneck_forward.3} parent=0 // pred_check_branch
    %1287 = sbr.rel (0) target = $region25
  $region24: #{bottleneck_forward.3} parent=0 // pred_region
    _
  $region25: #{bottleneck_forward.3} parent=0 // pred_fallthru
    _
  // Predicated region
  $region26: #{bottleneck_forward.3} parent=0 // pred_check
    _
  $region27: #{bottleneck_forward.3} parent=0 // pred_check_branch
    %1289 = sbr.rel (0) target = $region29
  $region28: #{bottleneck_forward.3} parent=0 // pred_region
    _
  $region29: #{bottleneck_forward.3} parent=0 // pred_fallthru
    _

// kernel: bottleneck_forward.5
$region0: #{bottleneck_forward.5}
  #allocation0 [shape = 'u32[]', space=smem, size = 0x4, offset = 0x4, fixed_abs, tag = 'smem constant byte address 0x4 - core index']
  #allocation1 [shape = 'u32[144,128]{1,0:T(1,128)}', space=vmem, size = 0x12000, scoped, tag = 'internal scratch']
  #allocation2 [shape = 'f32[512,16]{1,0:T(8,128)}', space=vmem, size = 0x40000, scoped, tag = 'scratch operand']
  %s0 = inlined_call_operand.vmem [shape: bf16[512,4], index: 0, kind: input, shape index: {}]
  %s1 = inlined_call_operand.vmem [shape: bf16[4,16], index: 1, kind: input, shape index: {}]
  %s2 = inlined_call_operand.vmem [shape: f32[1,16], index: 2, kind: input, shape index: {}]
  %s3 = inlined_call_operand.vmem [shape: f32[512,4], index: 3, kind: input, shape index: {}]
  %s4 = inlined_call_operand.vmem [shape: bf16[4,16], index: 4, kind: input, shape index: {}]
  %s5 = inlined_call_operand.vmem [shape: f32[512,16], index: 5, kind: output, shape index: {}]
  %s6 = sld [smem:[#allocation0]]
  $region38: #{bottleneck_forward.5} parent=0
    _
  %s8 = ssub.s32 1, %s6
  %s9 = scalar_select 0, %s8, %s6
  // Predicated region
  $region2: #{bottleneck_forward.5} parent=0 // pred_check
    _
  $region3: #{bottleneck_forward.5} parent=0 // pred_check_branch
    %11 = sbr.rel (0) target = $region5
  $region4: #{bottleneck_forward.5} parent=0 // pred_region
    _
  $region5: #{bottleneck_forward.5} parent=0 // pred_fallthru
    _
  // Predicated region
  $region6: #{bottleneck_forward.5} parent=0 // pred_check
    _
  $region7: #{bottleneck_forward.5} parent=0 // pred_check_branch
    %13 = sbr.rel (0) target = $region9
  $region8: #{bottleneck_forward.5} parent=0 // pred_region
    _
  $region9: #{bottleneck_forward.5} parent=0 // pred_fallthru
    _
  // Predicated region
  $region10: #{bottleneck_forward.5} parent=0 // pred_check
    _
  $region11: #{bottleneck_forward.5} parent=0 // pred_check_branch
    %15 = sbr.rel (0) target = $region13
  $region12: #{bottleneck_forward.5} parent=0 // pred_region
    _
  $region13: #{bottleneck_forward.5} parent=0 // pred_fallthru
    _
  // Predicated region
  $region14: #{bottleneck_forward.5} parent=0 // pred_check
    _
  $region15: #{bottleneck_forward.5} parent=0 // pred_check_branch
    %17 = sbr.rel (0) target = $region17
  $region16: #{bottleneck_forward.5} parent=0 // pred_region
    _
  $region17: #{bottleneck_forward.5} parent=0 // pred_fallthru
    _
  // Predicated region
  $region18: #{bottleneck_forward.5} parent=0 // pred_check
    _
  $region19: #{bottleneck_forward.5} parent=0 // pred_check_branch
    %19 = sbr.rel (0) target = $region21
  $region20: #{bottleneck_forward.5} parent=0 // pred_region
    _
  $region21: #{bottleneck_forward.5} parent=0 // pred_fallthru
    _
  %p21 = scmp.eq.s32.totalorder 0, 0
  // Predicated region
  $region22: #{bottleneck_forward.5} parent=0 // pred_check
    %p22 = pneg %p21
  $region23: #{bottleneck_forward.5} parent=0 // pred_check_branch
    %24 = sbr.rel (%p22) target = $region25
  $region24: #{bottleneck_forward.5} parent=0 // pred_region
    %v25 = vld [vmem:[%s3] sm:$0xff]
    %v26 = vld [vmem:[%s3 + $0x8] sm:$0xff]
    %v27 = vld [vmem:[%s3 + $0x10] sm:$0xff]
    %v28 = vld [vmem:[%s3 + $0x18] sm:$0xff]
    %v29 = vld [vmem:[%s3 + $0x20] sm:$0xff]
    %v30 = vld [vmem:[%s3 + $0x28] sm:$0xff]
    %v31 = vld [vmem:[%s3 + $0x30] sm:$0xff]
    %v32 = vld [vmem:[%s3 + $0x38] sm:$0xff]
    %v33 = vld [vmem:[%s3 + $0x40] sm:$0xff]
    %v34 = vld [vmem:[%s3 + $0x48] sm:$0xff]
    %v35 = vld [vmem:[%s3 + $0x50] sm:$0xff]
    %v36 = vld [vmem:[%s3 + $0x58] sm:$0xff]
    %v37 = vld [vmem:[%s3 + $0x60] sm:$0xff]
    %v38 = vld [vmem:[%s3 + $0x68] sm:$0xff]
    %v39 = vld [vmem:[%s3 + $0x70] sm:$0xff]
    %v40 = vld [vmem:[%s3 + $0x78] sm:$0xff]
    %v41 = vld [vmem:[%s3 + $0x80] sm:$0xff]
    %v42 = vld [vmem:[%s3 + $0x88] sm:$0xff]
    %v43 = vld [vmem:[%s3 + $0x90] sm:$0xff]
    %v44 = vld [vmem:[%s3 + $0x98] sm:$0xff]
    %v45 = vld [vmem:[%s3 + $0xa0] sm:$0xff]
    %v46 = vld [vmem:[%s3 + $0xa8] sm:$0xff]
    %v47 = vld [vmem:[%s3 + $0xb0] sm:$0xff]
    %v48 = vld [vmem:[%s3 + $0xb8] sm:$0xff]
    %v49 = vld [vmem:[%s3 + $0xc0] sm:$0xff]
    %v50 = vld [vmem:[%s3 + $0xc8] sm:$0xff]
    %v51 = vld [vmem:[%s3 + $0xd0] sm:$0xff]
    %v52 = vld [vmem:[%s3 + $0xd8] sm:$0xff]
    %v53 = vld [vmem:[%s3 + $0xe0] sm:$0xff]
    %v54 = vld [vmem:[%s3 + $0xe8] sm:$0xff]
    %v55 = vld [vmem:[%s3 + $0xf0] sm:$0xff]
    %v56 = vld [vmem:[%s3 + $0xf8] sm:$0xff]
    %v57 = vld [vmem:[%s3 + $0x100] sm:$0xff]
    %v58 = vld [vmem:[%s3 + $0x108] sm:$0xff]
    %v59 = vld [vmem:[%s3 + $0x110] sm:$0xff]
    %v60 = vld [vmem:[%s3 + $0x118] sm:$0xff]
    %v61 = vld [vmem:[%s3 + $0x120] sm:$0xff]
    %v62 = vld [vmem:[%s3 + $0x128] sm:$0xff]
    %v63 = vld [vmem:[%s3 + $0x130] sm:$0xff]
    %v64 = vld [vmem:[%s3 + $0x138] sm:$0xff]
    %v65 = vld [vmem:[%s3 + $0x140] sm:$0xff]
    %v66 = vld [vmem:[%s3 + $0x148] sm:$0xff]
    %v67 = vld [vmem:[%s3 + $0x150] sm:$0xff]
    %v68 = vld [vmem:[%s3 + $0x158] sm:$0xff]
    %v69 = vld [vmem:[%s3 + $0x160] sm:$0xff]
    %v70 = vld [vmem:[%s3 + $0x168] sm:$0xff]
    %v71 = vld [vmem:[%s3 + $0x170] sm:$0xff]
    %v72 = vld [vmem:[%s3 + $0x178] sm:$0xff]
    %v73 = vld [vmem:[%s3 + $0x180] sm:$0xff]
    %v74 = vld [vmem:[%s3 + $0x188] sm:$0xff]
    %v75 = vld [vmem:[%s3 + $0x190] sm:$0xff]
    %v76 = vld [vmem:[%s3 + $0x198] sm:$0xff]
    %v77 = vld [vmem:[%s3 + $0x1a0] sm:$0xff]
    %v78 = vld [vmem:[%s3 + $0x1a8] sm:$0xff]
    %v79 = vld [vmem:[%s3 + $0x1b0] sm:$0xff]
    %v80 = vld [vmem:[%s3 + $0x1b8] sm:$0xff]
    %v81 = vld [vmem:[%s3 + $0x1c0] sm:$0xff]
    %v82 = vld [vmem:[%s3 + $0x1c8] sm:$0xff]
    %v83 = vld [vmem:[%s3 + $0x1d0] sm:$0xff]
    %v84 = vld [vmem:[%s3 + $0x1d8] sm:$0xff]
    %v85 = vld [vmem:[%s3 + $0x1e0] sm:$0xff]
    %v86 = vld [vmem:[%s3 + $0x1e8] sm:$0xff]
    %v87 = vld [vmem:[%s3 + $0x1f0] sm:$0xff]
    %v88 = vld [vmem:[%s3 + $0x1f8] sm:$0xff]
    %v89 = vpack.c.bf16 %v26, %v25
    %v90 = vpack.c.bf16 %v28, %v27
    %v91 = vpack.c.bf16 %v30, %v29
    %v92 = vpack.c.bf16 %v32, %v31
    %v93 = vpack.c.bf16 %v34, %v33
    %v94 = vpack.c.bf16 %v36, %v35
    %v95 = vpack.c.bf16 %v38, %v37
    %v96 = vpack.c.bf16 %v40, %v39
    %v97 = vpack.c.bf16 %v42, %v41
    %v98 = vpack.c.bf16 %v44, %v43
    %v99 = vpack.c.bf16 %v46, %v45
    %v100 = vpack.c.bf16 %v48, %v47
    %v101 = vpack.c.bf16 %v50, %v49
    %v102 = vpack.c.bf16 %v52, %v51
    %v103 = vpack.c.bf16 %v54, %v53
    %v104 = vpack.c.bf16 %v56, %v55
    %v105 = vpack.c.bf16 %v58, %v57
    %v106 = vpack.c.bf16 %v60, %v59
    %v107 = vpack.c.bf16 %v62, %v61
    %v108 = vpack.c.bf16 %v64, %v63
    %v109 = vpack.c.bf16 %v66, %v65
    %v110 = vpack.c.bf16 %v68, %v67
    %v111 = vpack.c.bf16 %v70, %v69
    %v112 = vpack.c.bf16 %v72, %v71
    %v113 = vpack.c.bf16 %v74, %v73
    %v114 = vpack.c.bf16 %v76, %v75
    %v115 = vpack.c.bf16 %v78, %v77
    %v116 = vpack.c.bf16 %v80, %v79
    %v117 = vpack.c.bf16 %v82, %v81
    %v118 = vpack.c.bf16 %v84, %v83
    %v119 = vpack.c.bf16 %v86, %v85
    %v120 = vpack.c.bf16 %v88, %v87
    %v121 = vld [vmem:[%s4] sm:$0x3]
    %vm122 = vcmask 31744
    %v124 = vsel %vm122, %v89, 0
    %v127 = vsel %vm122, %v90, 0
    %v130 = vsel %vm122, %v91, 0
    %v133 = vsel %vm122, %v92, 0
    %v136 = vsel %vm122, %v93, 0
    %v139 = vsel %vm122, %v94, 0
    %v142 = vsel %vm122, %v95, 0
    %v145 = vsel %vm122, %v96, 0
    %v148 = vsel %vm122, %v97, 0
    %v151 = vsel %vm122, %v98, 0
    %v154 = vsel %vm122, %v99, 0
    %v157 = vsel %vm122, %v100, 0
    %v160 = vsel %vm122, %v101, 0
    %v163 = vsel %vm122, %v102, 0
    %v166 = vsel %vm122, %v103, 0
    %v169 = vsel %vm122, %v104, 0
    %v172 = vsel %vm122, %v105, 0
    %v175 = vsel %vm122, %v106, 0
    %v178 = vsel %vm122, %v107, 0
    %v181 = vsel %vm122, %v108, 0
    %v184 = vsel %vm122, %v109, 0
    %v187 = vsel %vm122, %v110, 0
    %v190 = vsel %vm122, %v111, 0
    %v193 = vsel %vm122, %v112, 0
    %v196 = vsel %vm122, %v113, 0
    %v199 = vsel %vm122, %v114, 0
    %v202 = vsel %vm122, %v115, 0
    %v205 = vsel %vm122, %v116, 0
    %v208 = vsel %vm122, %v117, 0
    %v211 = vsel %vm122, %v118, 0
    %v214 = vsel %vm122, %v119, 0
    %v217 = vsel %vm122, %v120, 0
    %vm219 = vcmask 1041408
    %v221 = vsel %vm219, %v121, 0
    %223 = vmatprep.subr.bf16.mxu0 0
    %224 = vmatpush1.bf16.msra.mxu0 0
    %225 = vmatprep.subr.bf16.mxu0 0
    %226 = vmatpush1.bf16.msra.mxu0 0
    %227 = vmatprep.subr.bf16.mxu0 0
    %228 = vmatpush1.bf16.msra.mxu0 0
    %229 = vmatprep.subr.bf16.mxu0 0
    %230 = vmatpush1.bf16.msra.mxu0 0
    %231 = vmatprep.subr.bf16.mxu0 0
    %232 = vmatpush1.bf16.msra.mxu0 0
    %233 = vmatprep.subr.bf16.mxu0 0
    %234 = vmatpush1.bf16.msra.mxu0 0
    %235 = vmatprep.subr.bf16.mxu0 0
    %236 = vmatpush1.bf16.msra.mxu0 0
    %237 = vmatprep.subr.bf16.mxu0 0
    %238 = vmatpush1.bf16.msra.mxu0 %v221
    %239 = vmatprep.subr.bf16.mxu0 0
    %240 = vmatpush2.bf16.msra.mxu0 0
    %241 = vmatprep.subr.bf16.mxu0 0
    %242 = vmatpush2.bf16.msra.mxu0 0
    %243 = vmatprep.subr.bf16.mxu0 0
    %244 = vmatpush2.bf16.msra.mxu0 0
    %245 = vmatprep.subr.bf16.mxu0 0
    %246 = vmatpush2.bf16.msra.mxu0 0
    %247 = vmatprep.subr.bf16.mxu0 0
    %248 = vmatpush2.bf16.msra.mxu0 0
    %249 = vmatprep.subr.bf16.mxu0 0
    %250 = vmatpush2.bf16.msra.mxu0 0
    %251 = vmatprep.subr.bf16.mxu0 0
    %252 = vmatpush2.bf16.msra.mxu0 0
    %253 = vmatprep.subr.bf16.mxu0 0
    %254 = vmatpush2.bf16.msra.mxu0 0
    %255 = vmatprep.mubr.bf16.mxu0 0
    %256 = vmatmul.mubr.bf16.gmra.mxu0 %v124
    %v257 = vpop.f32.mrf.mxu0
    %v258 = vadd.f32 0.0, %v257
    %v259 = vpop.f32.mrf.mxu0
    %v260 = vpop.f32.mrf.mxu0
    %v261 = vadd.f32 0.0, %v260
    %v262 = vpop.f32.mrf.mxu0
    %263 = vmatprep.mubr.bf16.mxu0 0
    %264 = vmatmul.mubr.bf16.gmra.mxu0 %v127
    %v265 = vpop.f32.mrf.mxu0
    %v266 = vadd.f32 0.0, %v265
    %v267 = vpop.f32.mrf.mxu0
    %v268 = vpop.f32.mrf.mxu0
    %v269 = vadd.f32 0.0, %v268
    %v270 = vpop.f32.mrf.mxu0
    %271 = vmatprep.mubr.bf16.mxu0 0
    %272 = vmatmul.mubr.bf16.gmra.mxu0 %v130
    %v273 = vpop.f32.mrf.mxu0
    %v274 = vadd.f32 0.0, %v273
    %v275 = vpop.f32.mrf.mxu0
    %v276 = vpop.f32.mrf.mxu0
    %v277 = vadd.f32 0.0, %v276
    %v278 = vpop.f32.mrf.mxu0
    %279 = vmatprep.mubr.bf16.mxu0 0
    %280 = vmatmul.mubr.bf16.gmra.mxu0 %v133
    %v281 = vpop.f32.mrf.mxu0
    %v282 = vadd.f32 0.0, %v281
    %v283 = vpop.f32.mrf.mxu0
    %v284 = vpop.f32.mrf.mxu0
    %v285 = vadd.f32 0.0, %v284
    %v286 = vpop.f32.mrf.mxu0
    %287 = vmatprep.mubr.bf16.mxu0 0
    %288 = vmatmul.mubr.bf16.gmra.mxu0 %v136
    %v289 = vpop.f32.mrf.mxu0
    %v290 = vadd.f32 0.0, %v289
    %v291 = vpop.f32.mrf.mxu0
    %v292 = vpop.f32.mrf.mxu0
    %v293 = vadd.f32 0.0, %v292
    %v294 = vpop.f32.mrf.mxu0
    %295 = vmatprep.mubr.bf16.mxu0 0
    %296 = vmatmul.mubr.bf16.gmra.mxu0 %v139
    %v297 = vpop.f32.mrf.mxu0
    %v298 = vadd.f32 0.0, %v297
    %v299 = vpop.f32.mrf.mxu0
    %v300 = vpop.f32.mrf.mxu0
    %v301 = vadd.f32 0.0, %v300
    %v302 = vpop.f32.mrf.mxu0
    %303 = vmatprep.mubr.bf16.mxu0 0
    %304 = vmatmul.mubr.bf16.gmra.mxu0 %v142
    %v305 = vpop.f32.mrf.mxu0
    %v306 = vadd.f32 0.0, %v305
    %v307 = vpop.f32.mrf.mxu0
    %v308 = vpop.f32.mrf.mxu0
    %v309 = vadd.f32 0.0, %v308
    %v310 = vpop.f32.mrf.mxu0
    %311 = vmatprep.mubr.bf16.mxu0 0
    %312 = vmatmul.mubr.bf16.gmra.mxu0 %v145
    %v313 = vpop.f32.mrf.mxu0
    %v314 = vadd.f32 0.0, %v313
    %v315 = vpop.f32.mrf.mxu0
    %v316 = vpop.f32.mrf.mxu0
    %v317 = vadd.f32 0.0, %v316
    %v318 = vpop.f32.mrf.mxu0
    %319 = vmatprep.mubr.bf16.mxu0 0
    %320 = vmatmul.mubr.bf16.gmra.mxu0 %v148
    %v321 = vpop.f32.mrf.mxu0
    %v322 = vadd.f32 0.0, %v321
    %v323 = vpop.f32.mrf.mxu0
    %v324 = vpop.f32.mrf.mxu0
    %v325 = vadd.f32 0.0, %v324
    %v326 = vpop.f32.mrf.mxu0
    %327 = vmatprep.mubr.bf16.mxu0 0
    %328 = vmatmul.mubr.bf16.gmra.mxu0 %v151
    %v329 = vpop.f32.mrf.mxu0
    %v330 = vadd.f32 0.0, %v329
    %v331 = vpop.f32.mrf.mxu0
    %v332 = vpop.f32.mrf.mxu0
    %v333 = vadd.f32 0.0, %v332
    %v334 = vpop.f32.mrf.mxu0
    %335 = vmatprep.mubr.bf16.mxu0 0
    %336 = vmatmul.mubr.bf16.gmra.mxu0 %v154
    %v337 = vpop.f32.mrf.mxu0
    %v338 = vadd.f32 0.0, %v337
    %v339 = vpop.f32.mrf.mxu0
    %v340 = vpop.f32.mrf.mxu0
    %v341 = vadd.f32 0.0, %v340
    %v342 = vpop.f32.mrf.mxu0
    %343 = vmatprep.mubr.bf16.mxu0 0
    %344 = vmatmul.mubr.bf16.gmra.mxu0 %v157
    %v345 = vpop.f32.mrf.mxu0
    %v346 = vadd.f32 0.0, %v345
    %v347 = vpop.f32.mrf.mxu0
    %v348 = vpop.f32.mrf.mxu0
    %v349 = vadd.f32 0.0, %v348
    %v350 = vpop.f32.mrf.mxu0
    %351 = vmatprep.mubr.bf16.mxu0 0
    %352 = vmatmul.mubr.bf16.gmra.mxu0 %v160
    %v353 = vpop.f32.mrf.mxu0
    %v354 = vadd.f32 0.0, %v353
    %v355 = vpop.f32.mrf.mxu0
    %v356 = vpop.f32.mrf.mxu0
    %v357 = vadd.f32 0.0, %v356
    %v358 = vpop.f32.mrf.mxu0
    %359 = vmatprep.mubr.bf16.mxu0 0
    %360 = vmatmul.mubr.bf16.gmra.mxu0 %v163
    %v361 = vpop.f32.mrf.mxu0
    %v362 = vadd.f32 0.0, %v361
    %v363 = vpop.f32.mrf.mxu0
    %v364 = vpop.f32.mrf.mxu0
    %v365 = vadd.f32 0.0, %v364
    %v366 = vpop.f32.mrf.mxu0
    %367 = vmatprep.mubr.bf16.mxu0 0
    %368 = vmatmul.mubr.bf16.gmra.mxu0 %v166
    %v369 = vpop.f32.mrf.mxu0
    %v370 = vadd.f32 0.0, %v369
    %v371 = vpop.f32.mrf.mxu0
    %v372 = vpop.f32.mrf.mxu0
    %v373 = vadd.f32 0.0, %v372
    %v374 = vpop.f32.mrf.mxu0
    %375 = vmatprep.mubr.bf16.mxu0 0
    %376 = vmatmul.mubr.bf16.gmra.mxu0 %v169
    %v377 = vpop.f32.mrf.mxu0
    %v378 = vadd.f32 0.0, %v377
    %v379 = vpop.f32.mrf.mxu0
    %v380 = vpop.f32.mrf.mxu0
    %v381 = vadd.f32 0.0, %v380
    %v382 = vpop.f32.mrf.mxu0
    %383 = vmatprep.mubr.bf16.mxu0 0
    %384 = vmatmul.mubr.bf16.gmra.mxu0 %v172
    %v385 = vpop.f32.mrf.mxu0
    %v386 = vadd.f32 0.0, %v385
    %v387 = vpop.f32.mrf.mxu0
    %v388 = vpop.f32.mrf.mxu0
    %v389 = vadd.f32 0.0, %v388
    %v390 = vpop.f32.mrf.mxu0
    %391 = vmatprep.mubr.bf16.mxu0 0
    %392 = vmatmul.mubr.bf16.gmra.mxu0 %v175
    %v393 = vpop.f32.mrf.mxu0
    %v394 = vadd.f32 0.0, %v393
    %v395 = vpop.f32.mrf.mxu0
    %v396 = vpop.f32.mrf.mxu0
    %v397 = vadd.f32 0.0, %v396
    %v398 = vpop.f32.mrf.mxu0
    %399 = vmatprep.mubr.bf16.mxu0 0
    %400 = vmatmul.mubr.bf16.gmra.mxu0 %v178
    %v401 = vpop.f32.mrf.mxu0
    %v402 = vadd.f32 0.0, %v401
    %v403 = vpop.f32.mrf.mxu0
    %v404 = vpop.f32.mrf.mxu0
    %v405 = vadd.f32 0.0, %v404
    %v406 = vpop.f32.mrf.mxu0
    %407 = vmatprep.mubr.bf16.mxu0 0
    %408 = vmatmul.mubr.bf16.gmra.mxu0 %v181
    %v409 = vpop.f32.mrf.mxu0
    %v410 = vadd.f32 0.0, %v409
    %v411 = vpop.f32.mrf.mxu0
    %v412 = vpop.f32.mrf.mxu0
    %v413 = vadd.f32 0.0, %v412
    %v414 = vpop.f32.mrf.mxu0
    %415 = vmatprep.mubr.bf16.mxu0 0
    %416 = vmatmul.mubr.bf16.gmra.mxu0 %v184
    %v417 = vpop.f32.mrf.mxu0
    %v418 = vadd.f32 0.0, %v417
    %v419 = vpop.f32.mrf.mxu0
    %v420 = vpop.f32.mrf.mxu0
    %v421 = vadd.f32 0.0, %v420
    %v422 = vpop.f32.mrf.mxu0
    %423 = vmatprep.mubr.bf16.mxu0 0
    %424 = vmatmul.mubr.bf16.gmra.mxu0 %v187
    %v425 = vpop.f32.mrf.mxu0
    %v426 = vadd.f32 0.0, %v425
    %v427 = vpop.f32.mrf.mxu0
    %v428 = vpop.f32.mrf.mxu0
    %v429 = vadd.f32 0.0, %v428
    %v430 = vpop.f32.mrf.mxu0
    %431 = vmatprep.mubr.bf16.mxu0 0
    %432 = vmatmul.mubr.bf16.gmra.mxu0 %v190
    %v433 = vpop.f32.mrf.mxu0
    %v434 = vadd.f32 0.0, %v433
    %v435 = vpop.f32.mrf.mxu0
    %v436 = vpop.f32.mrf.mxu0
    %v437 = vadd.f32 0.0, %v436
    %v438 = vpop.f32.mrf.mxu0
    %439 = vmatprep.mubr.bf16.mxu0 0
    %440 = vmatmul.mubr.bf16.gmra.mxu0 %v193
    %v441 = vpop.f32.mrf.mxu0
    %v442 = vadd.f32 0.0, %v441
    %v443 = vpop.f32.mrf.mxu0
    %v444 = vpop.f32.mrf.mxu0
    %v445 = vadd.f32 0.0, %v444
    %v446 = vpop.f32.mrf.mxu0
    %447 = vmatprep.mubr.bf16.mxu0 0
    %448 = vmatmul.mubr.bf16.gmra.mxu0 %v196
    %v449 = vpop.f32.mrf.mxu0
    %v450 = vadd.f32 0.0, %v449
    %v451 = vpop.f32.mrf.mxu0
    %v452 = vpop.f32.mrf.mxu0
    %v453 = vadd.f32 0.0, %v452
    %v454 = vpop.f32.mrf.mxu0
    %455 = vmatprep.mubr.bf16.mxu0 0
    %456 = vmatmul.mubr.bf16.gmra.mxu0 %v199
    %v457 = vpop.f32.mrf.mxu0
    %v458 = vadd.f32 0.0, %v457
    %v459 = vpop.f32.mrf.mxu0
    %v460 = vpop.f32.mrf.mxu0
    %v461 = vadd.f32 0.0, %v460
    %v462 = vpop.f32.mrf.mxu0
    %463 = vmatprep.mubr.bf16.mxu0 0
    %464 = vmatmul.mubr.bf16.gmra.mxu0 %v202
    %v465 = vpop.f32.mrf.mxu0
    %v466 = vadd.f32 0.0, %v465
    %v467 = vpop.f32.mrf.mxu0
    %v468 = vpop.f32.mrf.mxu0
    %v469 = vadd.f32 0.0, %v468
    %v470 = vpop.f32.mrf.mxu0
    %471 = vmatprep.mubr.bf16.mxu0 0
    %472 = vmatmul.mubr.bf16.gmra.mxu0 %v205
    %v473 = vpop.f32.mrf.mxu0
    %v474 = vadd.f32 0.0, %v473
    %v475 = vpop.f32.mrf.mxu0
    %v476 = vpop.f32.mrf.mxu0
    %v477 = vadd.f32 0.0, %v476
    %v478 = vpop.f32.mrf.mxu0
    %479 = vmatprep.mubr.bf16.mxu0 0
    %480 = vmatmul.mubr.bf16.gmra.mxu0 %v208
    %v481 = vpop.f32.mrf.mxu0
    %v482 = vadd.f32 0.0, %v481
    %v483 = vpop.f32.mrf.mxu0
    %v484 = vpop.f32.mrf.mxu0
    %v485 = vadd.f32 0.0, %v484
    %v486 = vpop.f32.mrf.mxu0
    %487 = vmatprep.mubr.bf16.mxu0 0
    %488 = vmatmul.mubr.bf16.gmra.mxu0 %v211
    %v489 = vpop.f32.mrf.mxu0
    %v490 = vadd.f32 0.0, %v489
    %v491 = vpop.f32.mrf.mxu0
    %v492 = vpop.f32.mrf.mxu0
    %v493 = vadd.f32 0.0, %v492
    %v494 = vpop.f32.mrf.mxu0
    %495 = vmatprep.mubr.bf16.mxu0 0
    %496 = vmatmul.mubr.bf16.gmra.mxu0 %v214
    %v497 = vpop.f32.mrf.mxu0
    %v498 = vadd.f32 0.0, %v497
    %v499 = vpop.f32.mrf.mxu0
    %v500 = vpop.f32.mrf.mxu0
    %v501 = vadd.f32 0.0, %v500
    %v502 = vpop.f32.mrf.mxu0
    %503 = vmatprep.mubr.bf16.mxu0 0
    %504 = vmatmul.mubr.bf16.gmra.mxu0 %v217
    %v505 = vpop.f32.mrf.mxu0
    %v506 = vadd.f32 0.0, %v505
    %v507 = vpop.f32.mrf.mxu0
    %v508 = vpop.f32.mrf.mxu0
    %v509 = vadd.f32 0.0, %v508
    %v510 = vpop.f32.mrf.mxu0
    %511 = vdwg.mxu0
    %vm512 = vcmask 130048
    %513 = vst.msk [vmem:[#allocation2] sm:$0xff] %vm512, %v258
    %514 = vst.msk [vmem:[#allocation2 + $0x8] sm:$0xff] %vm512, %v261
    %515 = vst.msk [vmem:[#allocation2 + $0x10] sm:$0xff] %vm512, %v266
    %516 = vst.msk [vmem:[#allocation2 + $0x18] sm:$0xff] %vm512, %v269
    %517 = vst.msk [vmem:[#allocation2 + $0x20] sm:$0xff] %vm512, %v274
    %518 = vst.msk [vmem:[#allocation2 + $0x28] sm:$0xff] %vm512, %v277
    %519 = vst.msk [vmem:[#allocation2 + $0x30] sm:$0xff] %vm512, %v282
    %520 = vst.msk [vmem:[#allocation2 + $0x38] sm:$0xff] %vm512, %v285
    %521 = vst.msk [vmem:[#allocation2 + $0x40] sm:$0xff] %vm512, %v290
    %522 = vst.msk [vmem:[#allocation2 + $0x48] sm:$0xff] %vm512, %v293
    %523 = vst.msk [vmem:[#allocation2 + $0x50] sm:$0xff] %vm512, %v298
    %524 = vst.msk [vmem:[#allocation2 + $0x58] sm:$0xff] %vm512, %v301
    %525 = vst.msk [vmem:[#allocation2 + $0x60] sm:$0xff] %vm512, %v306
    %526 = vst.msk [vmem:[#allocation2 + $0x68] sm:$0xff] %vm512, %v309
    %527 = vst.msk [vmem:[#allocation2 + $0x70] sm:$0xff] %vm512, %v314
    %528 = vst.msk [vmem:[#allocation2 + $0x78] sm:$0xff] %vm512, %v317
    %529 = vst.msk [vmem:[#allocation2 + $0x80] sm:$0xff] %vm512, %v322
    %530 = vst.msk [vmem:[#allocation2 + $0x88] sm:$0xff] %vm512, %v325
    %531 = vst.msk [vmem:[#allocation2 + $0x90] sm:$0xff] %vm512, %v330
    %532 = vst.msk [vmem:[#allocation2 + $0x98] sm:$0xff] %vm512, %v333
    %533 = vst.msk [vmem:[#allocation2 + $0xa0] sm:$0xff] %vm512, %v338
    %534 = vst.msk [vmem:[#allocation2 + $0xa8] sm:$0xff] %vm512, %v341
    %535 = vst.msk [vmem:[#allocation2 + $0xb0] sm:$0xff] %vm512, %v346
    %536 = vst.msk [vmem:[#allocation2 + $0xb8] sm:$0xff] %vm512, %v349
    %537 = vst.msk [vmem:[#allocation2 + $0xc0] sm:$0xff] %vm512, %v354
    %538 = vst.msk [vmem:[#allocation2 + $0xc8] sm:$0xff] %vm512, %v357
    %539 = vst.msk [vmem:[#allocation2 + $0xd0] sm:$0xff] %vm512, %v362
    %540 = vst.msk [vmem:[#allocation2 + $0xd8] sm:$0xff] %vm512, %v365
    %541 = vst.msk [vmem:[#allocation2 + $0xe0] sm:$0xff] %vm512, %v370
    %542 = vst.msk [vmem:[#allocation2 + $0xe8] sm:$0xff] %vm512, %v373
    %543 = vst.msk [vmem:[#allocation2 + $0xf0] sm:$0xff] %vm512, %v378
    %544 = vst.msk [vmem:[#allocation2 + $0xf8] sm:$0xff] %vm512, %v381
    %545 = vst.msk [vmem:[#allocation2 + $0x100] sm:$0xff] %vm512, %v386
    %546 = vst.msk [vmem:[#allocation2 + $0x108] sm:$0xff] %vm512, %v389
    %547 = vst.msk [vmem:[#allocation2 + $0x110] sm:$0xff] %vm512, %v394
    %548 = vst.msk [vmem:[#allocation2 + $0x118] sm:$0xff] %vm512, %v397
    %549 = vst.msk [vmem:[#allocation2 + $0x120] sm:$0xff] %vm512, %v402
    %550 = vst.msk [vmem:[#allocation2 + $0x128] sm:$0xff] %vm512, %v405
    %551 = vst.msk [vmem:[#allocation2 + $0x130] sm:$0xff] %vm512, %v410
    %552 = vst.msk [vmem:[#allocation2 + $0x138] sm:$0xff] %vm512, %v413
    %553 = vst.msk [vmem:[#allocation2 + $0x140] sm:$0xff] %vm512, %v418
    %554 = vst.msk [vmem:[#allocation2 + $0x148] sm:$0xff] %vm512, %v421
    %555 = vst.msk [vmem:[#allocation2 + $0x150] sm:$0xff] %vm512, %v426
    %556 = vst.msk [vmem:[#allocation2 + $0x158] sm:$0xff] %vm512, %v429
    %557 = vst.msk [vmem:[#allocation2 + $0x160] sm:$0xff] %vm512, %v434
    %558 = vst.msk [vmem:[#allocation2 + $0x168] sm:$0xff] %vm512, %v437
    %559 = vst.msk [vmem:[#allocation2 + $0x170] sm:$0xff] %vm512, %v442
    %560 = vst.msk [vmem:[#allocation2 + $0x178] sm:$0xff] %vm512, %v445
    %561 = vst.msk [vmem:[#allocation2 + $0x180] sm:$0xff] %vm512, %v450
    %562 = vst.msk [vmem:[#allocation2 + $0x188] sm:$0xff] %vm512, %v453
    %563 = vst.msk [vmem:[#allocation2 + $0x190] sm:$0xff] %vm512, %v458
    %564 = vst.msk [vmem:[#allocation2 + $0x198] sm:$0xff] %vm512, %v461
    %565 = vst.msk [vmem:[#allocation2 + $0x1a0] sm:$0xff] %vm512, %v466
    %566 = vst.msk [vmem:[#allocation2 + $0x1a8] sm:$0xff] %vm512, %v469
    %567 = vst.msk [vmem:[#allocation2 + $0x1b0] sm:$0xff] %vm512, %v474
    %568 = vst.msk [vmem:[#allocation2 + $0x1b8] sm:$0xff] %vm512, %v477
    %569 = vst.msk [vmem:[#allocation2 + $0x1c0] sm:$0xff] %vm512, %v482
    %570 = vst.msk [vmem:[#allocation2 + $0x1c8] sm:$0xff] %vm512, %v485
    %571 = vst.msk [vmem:[#allocation2 + $0x1d0] sm:$0xff] %vm512, %v490
    %572 = vst.msk [vmem:[#allocation2 + $0x1d8] sm:$0xff] %vm512, %v493
    %573 = vst.msk [vmem:[#allocation2 + $0x1e0] sm:$0xff] %vm512, %v498
    %574 = vst.msk [vmem:[#allocation2 + $0x1e8] sm:$0xff] %vm512, %v501
    %575 = vst.msk [vmem:[#allocation2 + $0x1f0] sm:$0xff] %vm512, %v506
    %576 = vst.msk [vmem:[#allocation2 + $0x1f8] sm:$0xff] %vm512, %v509
  $region25: #{bottleneck_forward.5} parent=0 // pred_fallthru
    _
  %v577 = vld [vmem:[#allocation2] sm:$0xff]
  %v578 = vld [vmem:[#allocation2 + $0x8] sm:$0xff]
  %v579 = vld [vmem:[#allocation2 + $0x10] sm:$0xff]
  %v580 = vld [vmem:[#allocation2 + $0x18] sm:$0xff]
  %v581 = vld [vmem:[#allocation2 + $0x20] sm:$0xff]
  %v582 = vld [vmem:[#allocation2 + $0x28] sm:$0xff]
  %v583 = vld [vmem:[#allocation2 + $0x30] sm:$0xff]
  %v584 = vld [vmem:[#allocation2 + $0x38] sm:$0xff]
  %v585 = vld [vmem:[#allocation2 + $0x40] sm:$0xff]
  %v586 = vld [vmem:[#allocation2 + $0x48] sm:$0xff]
  %v587 = vld [vmem:[#allocation2 + $0x50] sm:$0xff]
  %v588 = vld [vmem:[#allocation2 + $0x58] sm:$0xff]
  %v589 = vld [vmem:[#allocation2 + $0x60] sm:$0xff]
  %v590 = vld [vmem:[#allocation2 + $0x68] sm:$0xff]
  %v591 = vld [vmem:[#allocation2 + $0x70] sm:$0xff]
  %v592 = vld [vmem:[#allocation2 + $0x78] sm:$0xff]
  %v593 = vld [vmem:[#allocation2 + $0x80] sm:$0xff]
  %v594 = vld [vmem:[#allocation2 + $0x88] sm:$0xff]
  %v595 = vld [vmem:[#allocation2 + $0x90] sm:$0xff]
  %v596 = vld [vmem:[#allocation2 + $0x98] sm:$0xff]
  %v597 = vld [vmem:[#allocation2 + $0xa0] sm:$0xff]
  %v598 = vld [vmem:[#allocation2 + $0xa8] sm:$0xff]
  %v599 = vld [vmem:[#allocation2 + $0xb0] sm:$0xff]
  %v600 = vld [vmem:[#allocation2 + $0xb8] sm:$0xff]
  %v601 = vld [vmem:[#allocation2 + $0xc0] sm:$0xff]
  %v602 = vld [vmem:[#allocation2 + $0xc8] sm:$0xff]
  %v603 = vld [vmem:[#allocation2 + $0xd0] sm:$0xff]
  %v604 = vld [vmem:[#allocation2 + $0xd8] sm:$0xff]
  %v605 = vld [vmem:[#allocation2 + $0xe0] sm:$0xff]
  %v606 = vld [vmem:[#allocation2 + $0xe8] sm:$0xff]
  %v607 = vld [vmem:[#allocation2 + $0xf0] sm:$0xff]
  %v608 = vld [vmem:[#allocation2 + $0xf8] sm:$0xff]
  %v609 = vld [vmem:[#allocation2 + $0x100] sm:$0xff]
  %v610 = vld [vmem:[#allocation2 + $0x108] sm:$0xff]
  %v611 = vld [vmem:[#allocation2 + $0x110] sm:$0xff]
  %v612 = vld [vmem:[#allocation2 + $0x118] sm:$0xff]
  %v613 = vld [vmem:[#allocation2 + $0x120] sm:$0xff]
  %v614 = vld [vmem:[#allocation2 + $0x128] sm:$0xff]
  %v615 = vld [vmem:[#allocation2 + $0x130] sm:$0xff]
  %v616 = vld [vmem:[#allocation2 + $0x138] sm:$0xff]
  %v617 = vld [vmem:[#allocation2 + $0x140] sm:$0xff]
  %v618 = vld [vmem:[#allocation2 + $0x148] sm:$0xff]
  %v619 = vld [vmem:[#allocation2 + $0x150] sm:$0xff]
  %v620 = vld [vmem:[#allocation2 + $0x158] sm:$0xff]
  %v621 = vld [vmem:[#allocation2 + $0x160] sm:$0xff]
  %v622 = vld [vmem:[#allocation2 + $0x168] sm:$0xff]
  %v623 = vld [vmem:[#allocation2 + $0x170] sm:$0xff]
  %v624 = vld [vmem:[#allocation2 + $0x178] sm:$0xff]
  %v625 = vld [vmem:[#allocation2 + $0x180] sm:$0xff]
  %v626 = vld [vmem:[#allocation2 + $0x188] sm:$0xff]
  %v627 = vld [vmem:[#allocation2 + $0x190] sm:$0xff]
  %v628 = vld [vmem:[#allocation2 + $0x198] sm:$0xff]
  %v629 = vld [vmem:[#allocation2 + $0x1a0] sm:$0xff]
  %v630 = vld [vmem:[#allocation2 + $0x1a8] sm:$0xff]
  %v631 = vld [vmem:[#allocation2 + $0x1b0] sm:$0xff]
  %v632 = vld [vmem:[#allocation2 + $0x1b8] sm:$0xff]
  %v633 = vld [vmem:[#allocation2 + $0x1c0] sm:$0xff]
  %v634 = vld [vmem:[#allocation2 + $0x1c8] sm:$0xff]
  %v635 = vld [vmem:[#allocation2 + $0x1d0] sm:$0xff]
  %v636 = vld [vmem:[#allocation2 + $0x1d8] sm:$0xff]
  %v637 = vld [vmem:[#allocation2 + $0x1e0] sm:$0xff]
  %v638 = vld [vmem:[#allocation2 + $0x1e8] sm:$0xff]
  %v639 = vld [vmem:[#allocation2 + $0x1f0] sm:$0xff]
  %v640 = vld [vmem:[#allocation2 + $0x1f8] sm:$0xff]
  %v641 = vld [vmem:[%s0] sm:$0xf]
  %v642 = vld [vmem:[%s0 + $0x4] sm:$0xf]
  %v643 = vld [vmem:[%s0 + $0x8] sm:$0xf]
  %v644 = vld [vmem:[%s0 + $0xc] sm:$0xf]
  %v645 = vld [vmem:[%s0 + $0x10] sm:$0xf]
  %v646 = vld [vmem:[%s0 + $0x14] sm:$0xf]
  %v647 = vld [vmem:[%s0 + $0x18] sm:$0xf]
  %v648 = vld [vmem:[%s0 + $0x1c] sm:$0xf]
  %v649 = vld [vmem:[%s0 + $0x20] sm:$0xf]
  %v650 = vld [vmem:[%s0 + $0x24] sm:$0xf]
  %v651 = vld [vmem:[%s0 + $0x28] sm:$0xf]
  %v652 = vld [vmem:[%s0 + $0x2c] sm:$0xf]
  %v653 = vld [vmem:[%s0 + $0x30] sm:$0xf]
  %v654 = vld [vmem:[%s0 + $0x34] sm:$0xf]
  %v655 = vld [vmem:[%s0 + $0x38] sm:$0xf]
  %v656 = vld [vmem:[%s0 + $0x3c] sm:$0xf]
  %v657 = vld [vmem:[%s0 + $0x40] sm:$0xf]
  %v658 = vld [vmem:[%s0 + $0x44] sm:$0xf]
  %v659 = vld [vmem:[%s0 + $0x48] sm:$0xf]
  %v660 = vld [vmem:[%s0 + $0x4c] sm:$0xf]
  %v661 = vld [vmem:[%s0 + $0x50] sm:$0xf]
  %v662 = vld [vmem:[%s0 + $0x54] sm:$0xf]
  %v663 = vld [vmem:[%s0 + $0x58] sm:$0xf]
  %v664 = vld [vmem:[%s0 + $0x5c] sm:$0xf]
  %v665 = vld [vmem:[%s0 + $0x60] sm:$0xf]
  %v666 = vld [vmem:[%s0 + $0x64] sm:$0xf]
  %v667 = vld [vmem:[%s0 + $0x68] sm:$0xf]
  %v668 = vld [vmem:[%s0 + $0x6c] sm:$0xf]
  %v669 = vld [vmem:[%s0 + $0x70] sm:$0xf]
  %v670 = vld [vmem:[%s0 + $0x74] sm:$0xf]
  %v671 = vld [vmem:[%s0 + $0x78] sm:$0xf]
  %v672 = vld [vmem:[%s0 + $0x7c] sm:$0xf]
  %v673 = vld [vmem:[%s0 + $0x80] sm:$0xf]
  %v674 = vld [vmem:[%s0 + $0x84] sm:$0xf]
  %v675 = vld [vmem:[%s0 + $0x88] sm:$0xf]
  %v676 = vld [vmem:[%s0 + $0x8c] sm:$0xf]
  %v677 = vld [vmem:[%s0 + $0x90] sm:$0xf]
  %v678 = vld [vmem:[%s0 + $0x94] sm:$0xf]
  %v679 = vld [vmem:[%s0 + $0x98] sm:$0xf]
  %v680 = vld [vmem:[%s0 + $0x9c] sm:$0xf]
  %v681 = vld [vmem:[%s0 + $0xa0] sm:$0xf]
  %v682 = vld [vmem:[%s0 + $0xa4] sm:$0xf]
  %v683 = vld [vmem:[%s0 + $0xa8] sm:$0xf]
  %v684 = vld [vmem:[%s0 + $0xac] sm:$0xf]
  %v685 = vld [vmem:[%s0 + $0xb0] sm:$0xf]
  %v686 = vld [vmem:[%s0 + $0xb4] sm:$0xf]
  %v687 = vld [vmem:[%s0 + $0xb8] sm:$0xf]
  %v688 = vld [vmem:[%s0 + $0xbc] sm:$0xf]
  %v689 = vld [vmem:[%s0 + $0xc0] sm:$0xf]
  %v690 = vld [vmem:[%s0 + $0xc4] sm:$0xf]
  %v691 = vld [vmem:[%s0 + $0xc8] sm:$0xf]
  %v692 = vld [vmem:[%s0 + $0xcc] sm:$0xf]
  %v693 = vld [vmem:[%s0 + $0xd0] sm:$0xf]
  %v694 = vld [vmem:[%s0 + $0xd4] sm:$0xf]
  %v695 = vld [vmem:[%s0 + $0xd8] sm:$0xf]
  %v696 = vld [vmem:[%s0 + $0xdc] sm:$0xf]
  %v697 = vld [vmem:[%s0 + $0xe0] sm:$0xf]
  %v698 = vld [vmem:[%s0 + $0xe4] sm:$0xf]
  %v699 = vld [vmem:[%s0 + $0xe8] sm:$0xf]
  %v700 = vld [vmem:[%s0 + $0xec] sm:$0xf]
  %v701 = vld [vmem:[%s0 + $0xf0] sm:$0xf]
  %v702 = vld [vmem:[%s0 + $0xf4] sm:$0xf]
  %v703 = vld [vmem:[%s0 + $0xf8] sm:$0xf]
  %v704 = vld [vmem:[%s0 + $0xfc] sm:$0xf]
  %v705 = vld [vmem:[%s1] sm:$0x3]
  %v770 = vunpack.c.l.b16 %v641
  %v771 = vunpack.c.l.b16 %v642
  %v772 = vunpack.c.l.b16 %v643
  %v773 = vunpack.c.l.b16 %v644
  %v774 = vunpack.c.l.b16 %v645
  %v775 = vunpack.c.l.b16 %v646
  %v776 = vunpack.c.l.b16 %v647
  %v777 = vunpack.c.l.b16 %v648
  %v778 = vunpack.c.l.b16 %v649
  %v779 = vunpack.c.l.b16 %v650
  %v780 = vunpack.c.l.b16 %v651
  %v781 = vunpack.c.l.b16 %v652
  %v782 = vunpack.c.l.b16 %v653
  %v783 = vunpack.c.l.b16 %v654
  %v784 = vunpack.c.l.b16 %v655
  %v785 = vunpack.c.l.b16 %v656
  %v786 = vunpack.c.l.b16 %v657
  %v787 = vunpack.c.l.b16 %v658
  %v788 = vunpack.c.l.b16 %v659
  %v789 = vunpack.c.l.b16 %v660
  %v790 = vunpack.c.l.b16 %v661
  %v791 = vunpack.c.l.b16 %v662
  %v792 = vunpack.c.l.b16 %v663
  %v793 = vunpack.c.l.b16 %v664
  %v794 = vunpack.c.l.b16 %v665
  %v795 = vunpack.c.l.b16 %v666
  %v796 = vunpack.c.l.b16 %v667
  %v797 = vunpack.c.l.b16 %v668
  %v798 = vunpack.c.l.b16 %v669
  %v799 = vunpack.c.l.b16 %v670
  %v800 = vunpack.c.l.b16 %v671
  %v801 = vunpack.c.l.b16 %v672
  %v802 = vunpack.c.l.b16 %v673
  %v803 = vunpack.c.l.b16 %v674
  %v804 = vunpack.c.l.b16 %v675
  %v805 = vunpack.c.l.b16 %v676
  %v806 = vunpack.c.l.b16 %v677
  %v807 = vunpack.c.l.b16 %v678
  %v808 = vunpack.c.l.b16 %v679
  %v809 = vunpack.c.l.b16 %v680
  %v810 = vunpack.c.l.b16 %v681
  %v811 = vunpack.c.l.b16 %v682
  %v812 = vunpack.c.l.b16 %v683
  %v813 = vunpack.c.l.b16 %v684
  %v814 = vunpack.c.l.b16 %v685
  %v815 = vunpack.c.l.b16 %v686
  %v816 = vunpack.c.l.b16 %v687
  %v817 = vunpack.c.l.b16 %v688
  %v818 = vunpack.c.l.b16 %v689
  %v819 = vunpack.c.l.b16 %v690
  %v820 = vunpack.c.l.b16 %v691
  %v821 = vunpack.c.l.b16 %v692
  %v822 = vunpack.c.l.b16 %v693
  %v823 = vunpack.c.l.b16 %v694
  %v824 = vunpack.c.l.b16 %v695
  %v825 = vunpack.c.l.b16 %v696
  %v826 = vunpack.c.l.b16 %v697
  %v827 = vunpack.c.l.b16 %v698
  %v828 = vunpack.c.l.b16 %v699
  %v829 = vunpack.c.l.b16 %v700
  %v830 = vunpack.c.l.b16 %v701
  %v831 = vunpack.c.l.b16 %v702
  %v832 = vunpack.c.l.b16 %v703
  %v833 = vunpack.c.l.b16 %v704
  %v834 = vpack.c.b16 %v771, %v770
  %v835 = vpack.c.b16 %v773, %v772
  %v836 = vpack.c.b16 %v775, %v774
  %v837 = vpack.c.b16 %v777, %v776
  %v838 = vpack.c.b16 %v779, %v778
  %v839 = vpack.c.b16 %v781, %v780
  %v840 = vpack.c.b16 %v783, %v782
  %v841 = vpack.c.b16 %v785, %v784
  %v842 = vpack.c.b16 %v787, %v786
  %v843 = vpack.c.b16 %v789, %v788
  %v844 = vpack.c.b16 %v791, %v790
  %v845 = vpack.c.b16 %v793, %v792
  %v846 = vpack.c.b16 %v795, %v794
  %v847 = vpack.c.b16 %v797, %v796
  %v848 = vpack.c.b16 %v799, %v798
  %v849 = vpack.c.b16 %v801, %v800
  %v850 = vpack.c.b16 %v803, %v802
  %v851 = vpack.c.b16 %v805, %v804
  %v852 = vpack.c.b16 %v807, %v806
  %v853 = vpack.c.b16 %v809, %v808
  %v854 = vpack.c.b16 %v811, %v810
  %v855 = vpack.c.b16 %v813, %v812
  %v856 = vpack.c.b16 %v815, %v814
  %v857 = vpack.c.b16 %v817, %v816
  %v858 = vpack.c.b16 %v819, %v818
  %v859 = vpack.c.b16 %v821, %v820
  %v860 = vpack.c.b16 %v823, %v822
  %v861 = vpack.c.b16 %v825, %v824
  %v862 = vpack.c.b16 %v827, %v826
  %v863 = vpack.c.b16 %v829, %v828
  %v864 = vpack.c.b16 %v831, %v830
  %v865 = vpack.c.b16 %v833, %v832
  %vm866 = vcmask 31744
  %v868 = vsel %vm866, %v834, 0
  %v871 = vsel %vm866, %v835, 0
  %v874 = vsel %vm866, %v836, 0
  %v877 = vsel %vm866, %v837, 0
  %v880 = vsel %vm866, %v838, 0
  %v883 = vsel %vm866, %v839, 0
  %v886 = vsel %vm866, %v840, 0
  %v889 = vsel %vm866, %v841, 0
  %v892 = vsel %vm866, %v842, 0
  %v895 = vsel %vm866, %v843, 0
  %v898 = vsel %vm866, %v844, 0
  %v901 = vsel %vm866, %v845, 0
  %v904 = vsel %vm866, %v846, 0
  %v907 = vsel %vm866, %v847, 0
  %v910 = vsel %vm866, %v848, 0
  %v913 = vsel %vm866, %v849, 0
  %v916 = vsel %vm866, %v850, 0
  %v919 = vsel %vm866, %v851, 0
  %v922 = vsel %vm866, %v852, 0
  %v925 = vsel %vm866, %v853, 0
  %v928 = vsel %vm866, %v854, 0
  %v931 = vsel %vm866, %v855, 0
  %v934 = vsel %vm866, %v856, 0
  %v937 = vsel %vm866, %v857, 0
  %v940 = vsel %vm866, %v858, 0
  %v943 = vsel %vm866, %v859, 0
  %v946 = vsel %vm866, %v860, 0
  %v949 = vsel %vm866, %v861, 0
  %v952 = vsel %vm866, %v862, 0
  %v955 = vsel %vm866, %v863, 0
  %v958 = vsel %vm866, %v864, 0
  %v961 = vsel %vm866, %v865, 0
  %vm963 = vcmask 1041408
  %v965 = vsel %vm963, %v705, 0
  %967 = vmatprep.subr.bf16.mxu0 0
  %968 = vmatpush1.bf16.msra.mxu0 0
  %969 = vmatprep.subr.bf16.mxu0 0
  %970 = vmatpush1.bf16.msra.mxu0 0
  %971 = vmatprep.subr.bf16.mxu0 0
  %972 = vmatpush1.bf16.msra.mxu0 0
  %973 = vmatprep.subr.bf16.mxu0 0
  %974 = vmatpush1.bf16.msra.mxu0 0
  %975 = vmatprep.subr.bf16.mxu0 0
  %976 = vmatpush1.bf16.msra.mxu0 0
  %977 = vmatprep.subr.bf16.mxu0 0
  %978 = vmatpush1.bf16.msra.mxu0 0
  %979 = vmatprep.subr.bf16.mxu0 0
  %980 = vmatpush1.bf16.msra.mxu0 0
  %981 = vmatprep.subr.bf16.mxu0 0
  %982 = vmatpush1.bf16.msra.mxu0 %v965
  %983 = vmatprep.subr.bf16.mxu0 0
  %984 = vmatpush2.bf16.msra.mxu0 0
  %985 = vmatprep.subr.bf16.mxu0 0
  %986 = vmatpush2.bf16.msra.mxu0 0
  %987 = vmatprep.subr.bf16.mxu0 0
  %988 = vmatpush2.bf16.msra.mxu0 0
  %989 = vmatprep.subr.bf16.mxu0 0
  %990 = vmatpush2.bf16.msra.mxu0 0
  %991 = vmatprep.subr.bf16.mxu0 0
  %992 = vmatpush2.bf16.msra.mxu0 0
  %993 = vmatprep.subr.bf16.mxu0 0
  %994 = vmatpush2.bf16.msra.mxu0 0
  %995 = vmatprep.subr.bf16.mxu0 0
  %996 = vmatpush2.bf16.msra.mxu0 0
  %997 = vmatprep.subr.bf16.mxu0 0
  %998 = vmatpush2.bf16.msra.mxu0 0
  %999 = vmatprep.mubr.bf16.mxu0 0
  %1000 = vmatmul.mubr.bf16.gmra.mxu0 %v868
  %v1001 = vpop.f32.mrf.mxu0
  %v1002 = vadd.f32 0.0, %v1001
  %v1003 = vpop.f32.mrf.mxu0
  %v1004 = vpop.f32.mrf.mxu0
  %v1005 = vadd.f32 0.0, %v1004
  %v1006 = vpop.f32.mrf.mxu0
  %1007 = vmatprep.mubr.bf16.mxu0 0
  %1008 = vmatmul.mubr.bf16.gmra.mxu0 %v871
  %v1009 = vpop.f32.mrf.mxu0
  %v1010 = vadd.f32 0.0, %v1009
  %v1011 = vpop.f32.mrf.mxu0
  %v1012 = vpop.f32.mrf.mxu0
  %v1013 = vadd.f32 0.0, %v1012
  %v1014 = vpop.f32.mrf.mxu0
  %1015 = vmatprep.mubr.bf16.mxu0 0
  %1016 = vmatmul.mubr.bf16.gmra.mxu0 %v874
  %v1017 = vpop.f32.mrf.mxu0
  %v1018 = vadd.f32 0.0, %v1017
  %v1019 = vpop.f32.mrf.mxu0
  %v1020 = vpop.f32.mrf.mxu0
  %v1021 = vadd.f32 0.0, %v1020
  %v1022 = vpop.f32.mrf.mxu0
  %1023 = vmatprep.mubr.bf16.mxu0 0
  %1024 = vmatmul.mubr.bf16.gmra.mxu0 %v877
  %v1025 = vpop.f32.mrf.mxu0
  %v1026 = vadd.f32 0.0, %v1025
  %v1027 = vpop.f32.mrf.mxu0
  %v1028 = vpop.f32.mrf.mxu0
  %v1029 = vadd.f32 0.0, %v1028
  %v1030 = vpop.f32.mrf.mxu0
  %1031 = vmatprep.mubr.bf16.mxu0 0
  %1032 = vmatmul.mubr.bf16.gmra.mxu0 %v880
  %v1033 = vpop.f32.mrf.mxu0
  %v1034 = vadd.f32 0.0, %v1033
  %v1035 = vpop.f32.mrf.mxu0
  %v1036 = vpop.f32.mrf.mxu0
  %v1037 = vadd.f32 0.0, %v1036
  %v1038 = vpop.f32.mrf.mxu0
  %1039 = vmatprep.mubr.bf16.mxu0 0
  %1040 = vmatmul.mubr.bf16.gmra.mxu0 %v883
  %v1041 = vpop.f32.mrf.mxu0
  %v1042 = vadd.f32 0.0, %v1041
  %v1043 = vpop.f32.mrf.mxu0
  %v1044 = vpop.f32.mrf.mxu0
  %v1045 = vadd.f32 0.0, %v1044
  %v1046 = vpop.f32.mrf.mxu0
  %1047 = vmatprep.mubr.bf16.mxu0 0
  %1048 = vmatmul.mubr.bf16.gmra.mxu0 %v886
  %v1049 = vpop.f32.mrf.mxu0
  %v1050 = vadd.f32 0.0, %v1049
  %v1051 = vpop.f32.mrf.mxu0
  %v1052 = vpop.f32.mrf.mxu0
  %v1053 = vadd.f32 0.0, %v1052
  %v1054 = vpop.f32.mrf.mxu0
  %1055 = vmatprep.mubr.bf16.mxu0 0
  %1056 = vmatmul.mubr.bf16.gmra.mxu0 %v889
  %v1057 = vpop.f32.mrf.mxu0
  %v1058 = vadd.f32 0.0, %v1057
  %v1059 = vpop.f32.mrf.mxu0
  %v1060 = vpop.f32.mrf.mxu0
  %v1061 = vadd.f32 0.0, %v1060
  %v1062 = vpop.f32.mrf.mxu0
  %1063 = vmatprep.mubr.bf16.mxu0 0
  %1064 = vmatmul.mubr.bf16.gmra.mxu0 %v892
  %v1065 = vpop.f32.mrf.mxu0
  %v1066 = vadd.f32 0.0, %v1065
  %v1067 = vpop.f32.mrf.mxu0
  %v1068 = vpop.f32.mrf.mxu0
  %v1069 = vadd.f32 0.0, %v1068
  %v1070 = vpop.f32.mrf.mxu0
  %1071 = vmatprep.mubr.bf16.mxu0 0
  %1072 = vmatmul.mubr.bf16.gmra.mxu0 %v895
  %v1073 = vpop.f32.mrf.mxu0
  %v1074 = vadd.f32 0.0, %v1073
  %v1075 = vpop.f32.mrf.mxu0
  %v1076 = vpop.f32.mrf.mxu0
  %v1077 = vadd.f32 0.0, %v1076
  %v1078 = vpop.f32.mrf.mxu0
  %1079 = vmatprep.mubr.bf16.mxu0 0
  %1080 = vmatmul.mubr.bf16.gmra.mxu0 %v898
  %v1081 = vpop.f32.mrf.mxu0
  %v1082 = vadd.f32 0.0, %v1081
  %v1083 = vpop.f32.mrf.mxu0
  %v1084 = vpop.f32.mrf.mxu0
  %v1085 = vadd.f32 0.0, %v1084
  %v1086 = vpop.f32.mrf.mxu0
  %1087 = vmatprep.mubr.bf16.mxu0 0
  %1088 = vmatmul.mubr.bf16.gmra.mxu0 %v901
  %v1089 = vpop.f32.mrf.mxu0
  %v1090 = vadd.f32 0.0, %v1089
  %v1091 = vpop.f32.mrf.mxu0
  %v1092 = vpop.f32.mrf.mxu0
  %v1093 = vadd.f32 0.0, %v1092
  %v1094 = vpop.f32.mrf.mxu0
  %1095 = vmatprep.mubr.bf16.mxu0 0
  %1096 = vmatmul.mubr.bf16.gmra.mxu0 %v904
  %v1097 = vpop.f32.mrf.mxu0
  %v1098 = vadd.f32 0.0, %v1097
  %v1099 = vpop.f32.mrf.mxu0
  %v1100 = vpop.f32.mrf.mxu0
  %v1101 = vadd.f32 0.0, %v1100
  %v1102 = vpop.f32.mrf.mxu0
  %1103 = vmatprep.mubr.bf16.mxu0 0
  %1104 = vmatmul.mubr.bf16.gmra.mxu0 %v907
  %v1105 = vpop.f32.mrf.mxu0
  %v1106 = vadd.f32 0.0, %v1105
  %v1107 = vpop.f32.mrf.mxu0
  %v1108 = vpop.f32.mrf.mxu0
  %v1109 = vadd.f32 0.0, %v1108
  %v1110 = vpop.f32.mrf.mxu0
  %1111 = vmatprep.mubr.bf16.mxu0 0
  %1112 = vmatmul.mubr.bf16.gmra.mxu0 %v910
  %v1113 = vpop.f32.mrf.mxu0
  %v1114 = vadd.f32 0.0, %v1113
  %v1115 = vpop.f32.mrf.mxu0
  %v1116 = vpop.f32.mrf.mxu0
  %v1117 = vadd.f32 0.0, %v1116
  %v1118 = vpop.f32.mrf.mxu0
  %1119 = vmatprep.mubr.bf16.mxu0 0
  %1120 = vmatmul.mubr.bf16.gmra.mxu0 %v913
  %v1121 = vpop.f32.mrf.mxu0
  %v1122 = vadd.f32 0.0, %v1121
  %v1123 = vpop.f32.mrf.mxu0
  %v1124 = vpop.f32.mrf.mxu0
  %v1125 = vadd.f32 0.0, %v1124
  %v1126 = vpop.f32.mrf.mxu0
  %1127 = vmatprep.mubr.bf16.mxu0 0
  %1128 = vmatmul.mubr.bf16.gmra.mxu0 %v916
  %v1129 = vpop.f32.mrf.mxu0
  %v1130 = vadd.f32 0.0, %v1129
  %v1131 = vpop.f32.mrf.mxu0
  %v1132 = vpop.f32.mrf.mxu0
  %v1133 = vadd.f32 0.0, %v1132
  %v1134 = vpop.f32.mrf.mxu0
  %1135 = vmatprep.mubr.bf16.mxu0 0
  %1136 = vmatmul.mubr.bf16.gmra.mxu0 %v919
  %v1137 = vpop.f32.mrf.mxu0
  %v1138 = vadd.f32 0.0, %v1137
  %v1139 = vpop.f32.mrf.mxu0
  %v1140 = vpop.f32.mrf.mxu0
  %v1141 = vadd.f32 0.0, %v1140
  %v1142 = vpop.f32.mrf.mxu0
  %1143 = vmatprep.mubr.bf16.mxu0 0
  %1144 = vmatmul.mubr.bf16.gmra.mxu0 %v922
  %v1145 = vpop.f32.mrf.mxu0
  %v1146 = vadd.f32 0.0, %v1145
  %v1147 = vpop.f32.mrf.mxu0
  %v1148 = vpop.f32.mrf.mxu0
  %v1149 = vadd.f32 0.0, %v1148
  %v1150 = vpop.f32.mrf.mxu0
  %1151 = vmatprep.mubr.bf16.mxu0 0
  %1152 = vmatmul.mubr.bf16.gmra.mxu0 %v925
  %v1153 = vpop.f32.mrf.mxu0
  %v1154 = vadd.f32 0.0, %v1153
  %v1155 = vpop.f32.mrf.mxu0
  %v1156 = vpop.f32.mrf.mxu0
  %v1157 = vadd.f32 0.0, %v1156
  %v1158 = vpop.f32.mrf.mxu0
  %1159 = vmatprep.mubr.bf16.mxu0 0
  %1160 = vmatmul.mubr.bf16.gmra.mxu0 %v928
  %v1161 = vpop.f32.mrf.mxu0
  %v1162 = vadd.f32 0.0, %v1161
  %v1163 = vpop.f32.mrf.mxu0
  %v1164 = vpop.f32.mrf.mxu0
  %v1165 = vadd.f32 0.0, %v1164
  %v1166 = vpop.f32.mrf.mxu0
  %1167 = vmatprep.mubr.bf16.mxu0 0
  %1168 = vmatmul.mubr.bf16.gmra.mxu0 %v931
  %v1169 = vpop.f32.mrf.mxu0
  %v1170 = vadd.f32 0.0, %v1169
  %v1171 = vpop.f32.mrf.mxu0
  %v1172 = vpop.f32.mrf.mxu0
  %v1173 = vadd.f32 0.0, %v1172
  %v1174 = vpop.f32.mrf.mxu0
  %1175 = vmatprep.mubr.bf16.mxu0 0
  %1176 = vmatmul.mubr.bf16.gmra.mxu0 %v934
  %v1177 = vpop.f32.mrf.mxu0
  %v1178 = vadd.f32 0.0, %v1177
  %v1179 = vpop.f32.mrf.mxu0
  %v1180 = vpop.f32.mrf.mxu0
  %v1181 = vadd.f32 0.0, %v1180
  %v1182 = vpop.f32.mrf.mxu0
  %1183 = vmatprep.mubr.bf16.mxu0 0
  %1184 = vmatmul.mubr.bf16.gmra.mxu0 %v937
  %v1185 = vpop.f32.mrf.mxu0
  %v1186 = vadd.f32 0.0, %v1185
  %v1187 = vpop.f32.mrf.mxu0
  %v1188 = vpop.f32.mrf.mxu0
  %v1189 = vadd.f32 0.0, %v1188
  %v1190 = vpop.f32.mrf.mxu0
  %1191 = vmatprep.mubr.bf16.mxu0 0
  %1192 = vmatmul.mubr.bf16.gmra.mxu0 %v940
  %v1193 = vpop.f32.mrf.mxu0
  %v1194 = vadd.f32 0.0, %v1193
  %v1195 = vpop.f32.mrf.mxu0
  %v1196 = vpop.f32.mrf.mxu0
  %v1197 = vadd.f32 0.0, %v1196
  %v1198 = vpop.f32.mrf.mxu0
  %1199 = vmatprep.mubr.bf16.mxu0 0
  %1200 = vmatmul.mubr.bf16.gmra.mxu0 %v943
  %v1201 = vpop.f32.mrf.mxu0
  %v1202 = vadd.f32 0.0, %v1201
  %v1203 = vpop.f32.mrf.mxu0
  %v1204 = vpop.f32.mrf.mxu0
  %v1205 = vadd.f32 0.0, %v1204
  %v1206 = vpop.f32.mrf.mxu0
  %1207 = vmatprep.mubr.bf16.mxu0 0
  %1208 = vmatmul.mubr.bf16.gmra.mxu0 %v946
  %v1209 = vpop.f32.mrf.mxu0
  %v1210 = vadd.f32 0.0, %v1209
  %v1211 = vpop.f32.mrf.mxu0
  %v1212 = vpop.f32.mrf.mxu0
  %v1213 = vadd.f32 0.0, %v1212
  %v1214 = vpop.f32.mrf.mxu0
  %1215 = vmatprep.mubr.bf16.mxu0 0
  %1216 = vmatmul.mubr.bf16.gmra.mxu0 %v949
  %v1217 = vpop.f32.mrf.mxu0
  %v1218 = vadd.f32 0.0, %v1217
  %v1219 = vpop.f32.mrf.mxu0
  %v1220 = vpop.f32.mrf.mxu0
  %v1221 = vadd.f32 0.0, %v1220
  %v1222 = vpop.f32.mrf.mxu0
  %1223 = vmatprep.mubr.bf16.mxu0 0
  %1224 = vmatmul.mubr.bf16.gmra.mxu0 %v952
  %v1225 = vpop.f32.mrf.mxu0
  %v1226 = vadd.f32 0.0, %v1225
  %v1227 = vpop.f32.mrf.mxu0
  %v1228 = vpop.f32.mrf.mxu0
  %v1229 = vadd.f32 0.0, %v1228
  %v1230 = vpop.f32.mrf.mxu0
  %1231 = vmatprep.mubr.bf16.mxu0 0
  %1232 = vmatmul.mubr.bf16.gmra.mxu0 %v955
  %v1233 = vpop.f32.mrf.mxu0
  %v1234 = vadd.f32 0.0, %v1233
  %v1235 = vpop.f32.mrf.mxu0
  %v1236 = vpop.f32.mrf.mxu0
  %v1237 = vadd.f32 0.0, %v1236
  %v1238 = vpop.f32.mrf.mxu0
  %1239 = vmatprep.mubr.bf16.mxu0 0
  %1240 = vmatmul.mubr.bf16.gmra.mxu0 %v958
  %v1241 = vpop.f32.mrf.mxu0
  %v1242 = vadd.f32 0.0, %v1241
  %v1243 = vpop.f32.mrf.mxu0
  %v1244 = vpop.f32.mrf.mxu0
  %v1245 = vadd.f32 0.0, %v1244
  %v1246 = vpop.f32.mrf.mxu0
  %1247 = vmatprep.mubr.bf16.mxu0 0
  %1248 = vmatmul.mubr.bf16.gmra.mxu0 %v961
  %v1249 = vpop.f32.mrf.mxu0
  %v1250 = vadd.f32 0.0, %v1249
  %v1251 = vpop.f32.mrf.mxu0
  %v1252 = vpop.f32.mrf.mxu0
  %v1253 = vadd.f32 0.0, %v1252
  %v1254 = vpop.f32.mrf.mxu0
  %1255 = vdwg.mxu0
  %v1256 = vadd.f32 %v577, %v1002
  %v1257 = vadd.f32 %v578, %v1005
  %v1258 = vadd.f32 %v579, %v1010
  %v1259 = vadd.f32 %v580, %v1013
  %v1260 = vadd.f32 %v581, %v1018
  %v1261 = vadd.f32 %v582, %v1021
  %v1262 = vadd.f32 %v583, %v1026
  %v1263 = vadd.f32 %v584, %v1029
  %v1264 = vadd.f32 %v585, %v1034
  %v1265 = vadd.f32 %v586, %v1037
  %v1266 = vadd.f32 %v587, %v1042
  %v1267 = vadd.f32 %v588, %v1045
  %v1268 = vadd.f32 %v589, %v1050
  %v1269 = vadd.f32 %v590, %v1053
  %v1270 = vadd.f32 %v591, %v1058
  %v1271 = vadd.f32 %v592, %v1061
  %v1272 = vadd.f32 %v593, %v1066
  %v1273 = vadd.f32 %v594, %v1069
  %v1274 = vadd.f32 %v595, %v1074
  %v1275 = vadd.f32 %v596, %v1077
  %v1276 = vadd.f32 %v597, %v1082
  %v1277 = vadd.f32 %v598, %v1085
  %v1278 = vadd.f32 %v599, %v1090
  %v1279 = vadd.f32 %v600, %v1093
  %v1280 = vadd.f32 %v601, %v1098
  %v1281 = vadd.f32 %v602, %v1101
  %v1282 = vadd.f32 %v603, %v1106
  %v1283 = vadd.f32 %v604, %v1109
  %v1284 = vadd.f32 %v605, %v1114
  %v1285 = vadd.f32 %v606, %v1117
  %v1286 = vadd.f32 %v607, %v1122
  %v1287 = vadd.f32 %v608, %v1125
  %v1288 = vadd.f32 %v609, %v1130
  %v1289 = vadd.f32 %v610, %v1133
  %v1290 = vadd.f32 %v611, %v1138
  %v1291 = vadd.f32 %v612, %v1141
  %v1292 = vadd.f32 %v613, %v1146
  %v1293 = vadd.f32 %v614, %v1149
  %v1294 = vadd.f32 %v615, %v1154
  %v1295 = vadd.f32 %v616, %v1157
  %v1296 = vadd.f32 %v617, %v1162
  %v1297 = vadd.f32 %v618, %v1165
  %v1298 = vadd.f32 %v619, %v1170
  %v1299 = vadd.f32 %v620, %v1173
  %v1300 = vadd.f32 %v621, %v1178
  %v1301 = vadd.f32 %v622, %v1181
  %v1302 = vadd.f32 %v623, %v1186
  %v1303 = vadd.f32 %v624, %v1189
  %v1304 = vadd.f32 %v625, %v1194
  %v1305 = vadd.f32 %v626, %v1197
  %v1306 = vadd.f32 %v627, %v1202
  %v1307 = vadd.f32 %v628, %v1205
  %v1308 = vadd.f32 %v629, %v1210
  %v1309 = vadd.f32 %v630, %v1213
  %v1310 = vadd.f32 %v631, %v1218
  %v1311 = vadd.f32 %v632, %v1221
  %v1312 = vadd.f32 %v633, %v1226
  %v1313 = vadd.f32 %v634, %v1229
  %v1314 = vadd.f32 %v635, %v1234
  %v1315 = vadd.f32 %v636, %v1237
  %v1316 = vadd.f32 %v637, %v1242
  %v1317 = vadd.f32 %v638, %v1245
  %v1318 = vadd.f32 %v639, %v1250
  %v1319 = vadd.f32 %v640, %v1253
  %vm1320 = vcmask 130048
  %1321 = vst.msk [vmem:[#allocation2] sm:$0xff] %vm1320, %v1256
  %1322 = vst.msk [vmem:[#allocation2 + $0x8] sm:$0xff] %vm1320, %v1257
  %1323 = vst.msk [vmem:[#allocation2 + $0x10] sm:$0xff] %vm1320, %v1258
  %1324 = vst.msk [vmem:[#allocation2 + $0x18] sm:$0xff] %vm1320, %v1259
  %1325 = vst.msk [vmem:[#allocation2 + $0x20] sm:$0xff] %vm1320, %v1260
  %1326 = vst.msk [vmem:[#allocation2 + $0x28] sm:$0xff] %vm1320, %v1261
  %1327 = vst.msk [vmem:[#allocation2 + $0x30] sm:$0xff] %vm1320, %v1262
  %1328 = vst.msk [vmem:[#allocation2 + $0x38] sm:$0xff] %vm1320, %v1263
  %1329 = vst.msk [vmem:[#allocation2 + $0x40] sm:$0xff] %vm1320, %v1264
  %1330 = vst.msk [vmem:[#allocation2 + $0x48] sm:$0xff] %vm1320, %v1265
  %1331 = vst.msk [vmem:[#allocation2 + $0x50] sm:$0xff] %vm1320, %v1266
  %1332 = vst.msk [vmem:[#allocation2 + $0x58] sm:$0xff] %vm1320, %v1267
  %1333 = vst.msk [vmem:[#allocation2 + $0x60] sm:$0xff] %vm1320, %v1268
  %1334 = vst.msk [vmem:[#allocation2 + $0x68] sm:$0xff] %vm1320, %v1269
  %1335 = vst.msk [vmem:[#allocation2 + $0x70] sm:$0xff] %vm1320, %v1270
  %1336 = vst.msk [vmem:[#allocation2 + $0x78] sm:$0xff] %vm1320, %v1271
  %1337 = vst.msk [vmem:[#allocation2 + $0x80] sm:$0xff] %vm1320, %v1272
  %1338 = vst.msk [vmem:[#allocation2 + $0x88] sm:$0xff] %vm1320, %v1273
  %1339 = vst.msk [vmem:[#allocation2 + $0x90] sm:$0xff] %vm1320, %v1274
  %1340 = vst.msk [vmem:[#allocation2 + $0x98] sm:$0xff] %vm1320, %v1275
  %1341 = vst.msk [vmem:[#allocation2 + $0xa0] sm:$0xff] %vm1320, %v1276
  %1342 = vst.msk [vmem:[#allocation2 + $0xa8] sm:$0xff] %vm1320, %v1277
  %1343 = vst.msk [vmem:[#allocation2 + $0xb0] sm:$0xff] %vm1320, %v1278
  %1344 = vst.msk [vmem:[#allocation2 + $0xb8] sm:$0xff] %vm1320, %v1279
  %1345 = vst.msk [vmem:[#allocation2 + $0xc0] sm:$0xff] %vm1320, %v1280
  %1346 = vst.msk [vmem:[#allocation2 + $0xc8] sm:$0xff] %vm1320, %v1281
  %1347 = vst.msk [vmem:[#allocation2 + $0xd0] sm:$0xff] %vm1320, %v1282
  %1348 = vst.msk [vmem:[#allocation2 + $0xd8] sm:$0xff] %vm1320, %v1283
  %1349 = vst.msk [vmem:[#allocation2 + $0xe0] sm:$0xff] %vm1320, %v1284
  %1350 = vst.msk [vmem:[#allocation2 + $0xe8] sm:$0xff] %vm1320, %v1285
  %1351 = vst.msk [vmem:[#allocation2 + $0xf0] sm:$0xff] %vm1320, %v1286
  %1352 = vst.msk [vmem:[#allocation2 + $0xf8] sm:$0xff] %vm1320, %v1287
  %1353 = vst.msk [vmem:[#allocation2 + $0x100] sm:$0xff] %vm1320, %v1288
  %1354 = vst.msk [vmem:[#allocation2 + $0x108] sm:$0xff] %vm1320, %v1289
  %1355 = vst.msk [vmem:[#allocation2 + $0x110] sm:$0xff] %vm1320, %v1290
  %1356 = vst.msk [vmem:[#allocation2 + $0x118] sm:$0xff] %vm1320, %v1291
  %1357 = vst.msk [vmem:[#allocation2 + $0x120] sm:$0xff] %vm1320, %v1292
  %1358 = vst.msk [vmem:[#allocation2 + $0x128] sm:$0xff] %vm1320, %v1293
  %1359 = vst.msk [vmem:[#allocation2 + $0x130] sm:$0xff] %vm1320, %v1294
  %1360 = vst.msk [vmem:[#allocation2 + $0x138] sm:$0xff] %vm1320, %v1295
  %1361 = vst.msk [vmem:[#allocation2 + $0x140] sm:$0xff] %vm1320, %v1296
  %1362 = vst.msk [vmem:[#allocation2 + $0x148] sm:$0xff] %vm1320, %v1297
  %1363 = vst.msk [vmem:[#allocation2 + $0x150] sm:$0xff] %vm1320, %v1298
  %1364 = vst.msk [vmem:[#allocation2 + $0x158] sm:$0xff] %vm1320, %v1299
  %1365 = vst.msk [vmem:[#allocation2 + $0x160] sm:$0xff] %vm1320, %v1300
  %1366 = vst.msk [vmem:[#allocation2 + $0x168] sm:$0xff] %vm1320, %v1301
  %1367 = vst.msk [vmem:[#allocation2 + $0x170] sm:$0xff] %vm1320, %v1302
  %1368 = vst.msk [vmem:[#allocation2 + $0x178] sm:$0xff] %vm1320, %v1303
  %1369 = vst.msk [vmem:[#allocation2 + $0x180] sm:$0xff] %vm1320, %v1304
  %1370 = vst.msk [vmem:[#allocation2 + $0x188] sm:$0xff] %vm1320, %v1305
  %1371 = vst.msk [vmem:[#allocation2 + $0x190] sm:$0xff] %vm1320, %v1306
  %1372 = vst.msk [vmem:[#allocation2 + $0x198] sm:$0xff] %vm1320, %v1307
  %1373 = vst.msk [vmem:[#allocation2 + $0x1a0] sm:$0xff] %vm1320, %v1308
  %1374 = vst.msk [vmem:[#allocation2 + $0x1a8] sm:$0xff] %vm1320, %v1309
  %1375 = vst.msk [vmem:[#allocation2 + $0x1b0] sm:$0xff] %vm1320, %v1310
  %1376 = vst.msk [vmem:[#allocation2 + $0x1b8] sm:$0xff] %vm1320, %v1311
  %1377 = vst.msk [vmem:[#allocation2 + $0x1c0] sm:$0xff] %vm1320, %v1312
  %1378 = vst.msk [vmem:[#allocation2 + $0x1c8] sm:$0xff] %vm1320, %v1313
  %1379 = vst.msk [vmem:[#allocation2 + $0x1d0] sm:$0xff] %vm1320, %v1314
  %1380 = vst.msk [vmem:[#allocation2 + $0x1d8] sm:$0xff] %vm1320, %v1315
  %1381 = vst.msk [vmem:[#allocation2 + $0x1e0] sm:$0xff] %vm1320, %v1316
  %1382 = vst.msk [vmem:[#allocation2 + $0x1e8] sm:$0xff] %vm1320, %v1317
  %1383 = vst.msk [vmem:[#allocation2 + $0x1f0] sm:$0xff] %vm1320, %v1318
  %1384 = vst.msk [vmem:[#allocation2 + $0x1f8] sm:$0xff] %vm1320, %v1319
  // Predicated region
  $region26: #{bottleneck_forward.5} parent=0 // pred_check
    %p1385 = pneg %p21
  $region27: #{bottleneck_forward.5} parent=0 // pred_check_branch
    %1387 = sbr.rel (%p1385) target = $region29
  $region28: #{bottleneck_forward.5} parent=0 // pred_region
    %v1388 = vld [vmem:[#allocation2] sm:$0xff]
    %v1389 = vld [vmem:[#allocation2 + $0x8] sm:$0xff]
    %v1390 = vld [vmem:[#allocation2 + $0x10] sm:$0xff]
    %v1391 = vld [vmem:[#allocation2 + $0x18] sm:$0xff]
    %v1392 = vld [vmem:[#allocation2 + $0x20] sm:$0xff]
    %v1393 = vld [vmem:[#allocation2 + $0x28] sm:$0xff]
    %v1394 = vld [vmem:[#allocation2 + $0x30] sm:$0xff]
    %v1395 = vld [vmem:[#allocation2 + $0x38] sm:$0xff]
    %v1396 = vld [vmem:[#allocation2 + $0x40] sm:$0xff]
    %v1397 = vld [vmem:[#allocation2 + $0x48] sm:$0xff]
    %v1398 = vld [vmem:[#allocation2 + $0x50] sm:$0xff]
    %v1399 = vld [vmem:[#allocation2 + $0x58] sm:$0xff]
    %v1400 = vld [vmem:[#allocation2 + $0x60] sm:$0xff]
    %v1401 = vld [vmem:[#allocation2 + $0x68] sm:$0xff]
    %v1402 = vld [vmem:[#allocation2 + $0x70] sm:$0xff]
    %v1403 = vld [vmem:[#allocation2 + $0x78] sm:$0xff]
    %v1404 = vld [vmem:[#allocation2 + $0x80] sm:$0xff]
    %v1405 = vld [vmem:[#allocation2 + $0x88] sm:$0xff]
    %v1406 = vld [vmem:[#allocation2 + $0x90] sm:$0xff]
    %v1407 = vld [vmem:[#allocation2 + $0x98] sm:$0xff]
    %v1408 = vld [vmem:[#allocation2 + $0xa0] sm:$0xff]
    %v1409 = vld [vmem:[#allocation2 + $0xa8] sm:$0xff]
    %v1410 = vld [vmem:[#allocation2 + $0xb0] sm:$0xff]
    %v1411 = vld [vmem:[#allocation2 + $0xb8] sm:$0xff]
    %v1412 = vld [vmem:[#allocation2 + $0xc0] sm:$0xff]
    %v1413 = vld [vmem:[#allocation2 + $0xc8] sm:$0xff]
    %v1414 = vld [vmem:[#allocation2 + $0xd0] sm:$0xff]
    %v1415 = vld [vmem:[#allocation2 + $0xd8] sm:$0xff]
    %v1416 = vld [vmem:[#allocation2 + $0xe0] sm:$0xff]
    %v1417 = vld [vmem:[#allocation2 + $0xe8] sm:$0xff]
    %v1418 = vld [vmem:[#allocation2 + $0xf0] sm:$0xff]
    %v1419 = vld [vmem:[#allocation2 + $0xf8] sm:$0xff]
    %v1420 = vld [vmem:[#allocation2 + $0x100] sm:$0xff]
    %v1421 = vld [vmem:[#allocation2 + $0x108] sm:$0xff]
    %v1422 = vld [vmem:[#allocation2 + $0x110] sm:$0xff]
    %v1423 = vld [vmem:[#allocation2 + $0x118] sm:$0xff]
    %v1424 = vld [vmem:[#allocation2 + $0x120] sm:$0xff]
    %v1425 = vld [vmem:[#allocation2 + $0x128] sm:$0xff]
    %v1426 = vld [vmem:[#allocation2 + $0x130] sm:$0xff]
    %v1427 = vld [vmem:[#allocation2 + $0x138] sm:$0xff]
    %v1428 = vld [vmem:[#allocation2 + $0x140] sm:$0xff]
    %v1429 = vld [vmem:[#allocation2 + $0x148] sm:$0xff]
    %v1430 = vld [vmem:[#allocation2 + $0x150] sm:$0xff]
    %v1431 = vld [vmem:[#allocation2 + $0x158] sm:$0xff]
    %v1432 = vld [vmem:[#allocation2 + $0x160] sm:$0xff]
    %v1433 = vld [vmem:[#allocation2 + $0x168] sm:$0xff]
    %v1434 = vld [vmem:[#allocation2 + $0x170] sm:$0xff]
    %v1435 = vld [vmem:[#allocation2 + $0x178] sm:$0xff]
    %v1436 = vld [vmem:[#allocation2 + $0x180] sm:$0xff]
    %v1437 = vld [vmem:[#allocation2 + $0x188] sm:$0xff]
    %v1438 = vld [vmem:[#allocation2 + $0x190] sm:$0xff]
    %v1439 = vld [vmem:[#allocation2 + $0x198] sm:$0xff]
    %v1440 = vld [vmem:[#allocation2 + $0x1a0] sm:$0xff]
    %v1441 = vld [vmem:[#allocation2 + $0x1a8] sm:$0xff]
    %v1442 = vld [vmem:[#allocation2 + $0x1b0] sm:$0xff]
    %v1443 = vld [vmem:[#allocation2 + $0x1b8] sm:$0xff]
    %v1444 = vld [vmem:[#allocation2 + $0x1c0] sm:$0xff]
    %v1445 = vld [vmem:[#allocation2 + $0x1c8] sm:$0xff]
    %v1446 = vld [vmem:[#allocation2 + $0x1d0] sm:$0xff]
    %v1447 = vld [vmem:[#allocation2 + $0x1d8] sm:$0xff]
    %v1448 = vld [vmem:[#allocation2 + $0x1e0] sm:$0xff]
    %v1449 = vld [vmem:[#allocation2 + $0x1e8] sm:$0xff]
    %v1450 = vld [vmem:[#allocation2 + $0x1f0] sm:$0xff]
    %v1451 = vld [vmem:[#allocation2 + $0x1f8] sm:$0xff]
    %v1452 = vld [vmem:[%s2] sm:$0x1]
    %v1454 = vlaneseq
    %v1455 = vshrl.u32 %v1454, 7
    %v1456 = vsub.s32 0, %v1455
    %v1457 = vrot.slane %v1452, %v1456
    %v1459 = vadd.f32 %v1388, %v1457
    %v1460 = vadd.f32 %v1389, %v1457
    %v1461 = vadd.f32 %v1390, %v1457
    %v1462 = vadd.f32 %v1391, %v1457
    %v1463 = vadd.f32 %v1392, %v1457
    %v1464 = vadd.f32 %v1393, %v1457
    %v1465 = vadd.f32 %v1394, %v1457
    %v1466 = vadd.f32 %v1395, %v1457
    %v1467 = vadd.f32 %v1396, %v1457
    %v1468 = vadd.f32 %v1397, %v1457
    %v1469 = vadd.f32 %v1398, %v1457
    %v1470 = vadd.f32 %v1399, %v1457
    %v1471 = vadd.f32 %v1400, %v1457
    %v1472 = vadd.f32 %v1401, %v1457
    %v1473 = vadd.f32 %v1402, %v1457
    %v1474 = vadd.f32 %v1403, %v1457
    %v1475 = vadd.f32 %v1404, %v1457
    %v1476 = vadd.f32 %v1405, %v1457
    %v1477 = vadd.f32 %v1406, %v1457
    %v1478 = vadd.f32 %v1407, %v1457
    %v1479 = vadd.f32 %v1408, %v1457
    %v1480 = vadd.f32 %v1409, %v1457
    %v1481 = vadd.f32 %v1410, %v1457
    %v1482 = vadd.f32 %v1411, %v1457
    %v1483 = vadd.f32 %v1412, %v1457
    %v1484 = vadd.f32 %v1413, %v1457
    %v1485 = vadd.f32 %v1414, %v1457
    %v1486 = vadd.f32 %v1415, %v1457
    %v1487 = vadd.f32 %v1416, %v1457
    %v1488 = vadd.f32 %v1417, %v1457
    %v1489 = vadd.f32 %v1418, %v1457
    %v1490 = vadd.f32 %v1419, %v1457
    %v1491 = vadd.f32 %v1420, %v1457
    %v1492 = vadd.f32 %v1421, %v1457
    %v1493 = vadd.f32 %v1422, %v1457
    %v1494 = vadd.f32 %v1423, %v1457
    %v1495 = vadd.f32 %v1424, %v1457
    %v1496 = vadd.f32 %v1425, %v1457
    %v1497 = vadd.f32 %v1426, %v1457
    %v1498 = vadd.f32 %v1427, %v1457
    %v1499 = vadd.f32 %v1428, %v1457
    %v1500 = vadd.f32 %v1429, %v1457
    %v1501 = vadd.f32 %v1430, %v1457
    %v1502 = vadd.f32 %v1431, %v1457
    %v1503 = vadd.f32 %v1432, %v1457
    %v1504 = vadd.f32 %v1433, %v1457
    %v1505 = vadd.f32 %v1434, %v1457
    %v1506 = vadd.f32 %v1435, %v1457
    %v1507 = vadd.f32 %v1436, %v1457
    %v1508 = vadd.f32 %v1437, %v1457
    %v1509 = vadd.f32 %v1438, %v1457
    %v1510 = vadd.f32 %v1439, %v1457
    %v1511 = vadd.f32 %v1440, %v1457
    %v1512 = vadd.f32 %v1441, %v1457
    %v1513 = vadd.f32 %v1442, %v1457
    %v1514 = vadd.f32 %v1443, %v1457
    %v1515 = vadd.f32 %v1444, %v1457
    %v1516 = vadd.f32 %v1445, %v1457
    %v1517 = vadd.f32 %v1446, %v1457
    %v1518 = vadd.f32 %v1447, %v1457
    %v1519 = vadd.f32 %v1448, %v1457
    %v1520 = vadd.f32 %v1449, %v1457
    %v1521 = vadd.f32 %v1450, %v1457
    %v1522 = vadd.f32 %v1451, %v1457
    %v1523 = vmax.f32 %v1459, 0.0
    %v1524 = vmax.f32 %v1460, 0.0
    %v1525 = vmax.f32 %v1461, 0.0
    %v1526 = vmax.f32 %v1462, 0.0
    %v1527 = vmax.f32 %v1463, 0.0
    %v1528 = vmax.f32 %v1464, 0.0
    %v1529 = vmax.f32 %v1465, 0.0
    %v1530 = vmax.f32 %v1466, 0.0
    %v1531 = vmax.f32 %v1467, 0.0
    %v1532 = vmax.f32 %v1468, 0.0
    %v1533 = vmax.f32 %v1469, 0.0
    %v1534 = vmax.f32 %v1470, 0.0
    %v1535 = vmax.f32 %v1471, 0.0
    %v1536 = vmax.f32 %v1472, 0.0
    %v1537 = vmax.f32 %v1473, 0.0
    %v1538 = vmax.f32 %v1474, 0.0
    %v1539 = vmax.f32 %v1475, 0.0
    %v1540 = vmax.f32 %v1476, 0.0
    %v1541 = vmax.f32 %v1477, 0.0
    %v1542 = vmax.f32 %v1478, 0.0
    %v1543 = vmax.f32 %v1479, 0.0
    %v1544 = vmax.f32 %v1480, 0.0
    %v1545 = vmax.f32 %v1481, 0.0
    %v1546 = vmax.f32 %v1482, 0.0
    %v1547 = vmax.f32 %v1483, 0.0
    %v1548 = vmax.f32 %v1484, 0.0
    %v1549 = vmax.f32 %v1485, 0.0
    %v1550 = vmax.f32 %v1486, 0.0
    %v1551 = vmax.f32 %v1487, 0.0
    %v1552 = vmax.f32 %v1488, 0.0
    %v1553 = vmax.f32 %v1489, 0.0
    %v1554 = vmax.f32 %v1490, 0.0
    %v1555 = vmax.f32 %v1491, 0.0
    %v1556 = vmax.f32 %v1492, 0.0
    %v1557 = vmax.f32 %v1493, 0.0
    %v1558 = vmax.f32 %v1494, 0.0
    %v1559 = vmax.f32 %v1495, 0.0
    %v1560 = vmax.f32 %v1496, 0.0
    %v1561 = vmax.f32 %v1497, 0.0
    %v1562 = vmax.f32 %v1498, 0.0
    %v1563 = vmax.f32 %v1499, 0.0
    %v1564 = vmax.f32 %v1500, 0.0
    %v1565 = vmax.f32 %v1501, 0.0
    %v1566 = vmax.f32 %v1502, 0.0
    %v1567 = vmax.f32 %v1503, 0.0
    %v1568 = vmax.f32 %v1504, 0.0
    %v1569 = vmax.f32 %v1505, 0.0
    %v1570 = vmax.f32 %v1506, 0.0
    %v1571 = vmax.f32 %v1507, 0.0
    %v1572 = vmax.f32 %v1508, 0.0
    %v1573 = vmax.f32 %v1509, 0.0
    %v1574 = vmax.f32 %v1510, 0.0
    %v1575 = vmax.f32 %v1511, 0.0
    %v1576 = vmax.f32 %v1512, 0.0
    %v1577 = vmax.f32 %v1513, 0.0
    %v1578 = vmax.f32 %v1514, 0.0
    %v1579 = vmax.f32 %v1515, 0.0
    %v1580 = vmax.f32 %v1516, 0.0
    %v1581 = vmax.f32 %v1517, 0.0
    %v1582 = vmax.f32 %v1518, 0.0
    %v1583 = vmax.f32 %v1519, 0.0
    %v1584 = vmax.f32 %v1520, 0.0
    %v1585 = vmax.f32 %v1521, 0.0
    %v1586 = vmax.f32 %v1522, 0.0
    %1587 = vst.msk [vmem:[%s5] sm:$0xff] %vm1320, %v1523
    %1588 = vst.msk [vmem:[%s5 + $0x8] sm:$0xff] %vm1320, %v1524
    %1589 = vst.msk [vmem:[%s5 + $0x10] sm:$0xff] %vm1320, %v1525
    %1590 = vst.msk [vmem:[%s5 + $0x18] sm:$0xff] %vm1320, %v1526
    %1591 = vst.msk [vmem:[%s5 + $0x20] sm:$0xff] %vm1320, %v1527
    %1592 = vst.msk [vmem:[%s5 + $0x28] sm:$0xff] %vm1320, %v1528
    %1593 = vst.msk [vmem:[%s5 + $0x30] sm:$0xff] %vm1320, %v1529
    %1594 = vst.msk [vmem:[%s5 + $0x38] sm:$0xff] %vm1320, %v1530
    %1595 = vst.msk [vmem:[%s5 + $0x40] sm:$0xff] %vm1320, %v1531
    %1596 = vst.msk [vmem:[%s5 + $0x48] sm:$0xff] %vm1320, %v1532
    %1597 = vst.msk [vmem:[%s5 + $0x50] sm:$0xff] %vm1320, %v1533
    %1598 = vst.msk [vmem:[%s5 + $0x58] sm:$0xff] %vm1320, %v1534
    %1599 = vst.msk [vmem:[%s5 + $0x60] sm:$0xff] %vm1320, %v1535
    %1600 = vst.msk [vmem:[%s5 + $0x68] sm:$0xff] %vm1320, %v1536
    %1601 = vst.msk [vmem:[%s5 + $0x70] sm:$0xff] %vm1320, %v1537
    %1602 = vst.msk [vmem:[%s5 + $0x78] sm:$0xff] %vm1320, %v1538
    %1603 = vst.msk [vmem:[%s5 + $0x80] sm:$0xff] %vm1320, %v1539
    %1604 = vst.msk [vmem:[%s5 + $0x88] sm:$0xff] %vm1320, %v1540
    %1605 = vst.msk [vmem:[%s5 + $0x90] sm:$0xff] %vm1320, %v1541
    %1606 = vst.msk [vmem:[%s5 + $0x98] sm:$0xff] %vm1320, %v1542
    %1607 = vst.msk [vmem:[%s5 + $0xa0] sm:$0xff] %vm1320, %v1543
    %1608 = vst.msk [vmem:[%s5 + $0xa8] sm:$0xff] %vm1320, %v1544
    %1609 = vst.msk [vmem:[%s5 + $0xb0] sm:$0xff] %vm1320, %v1545
    %1610 = vst.msk [vmem:[%s5 + $0xb8] sm:$0xff] %vm1320, %v1546
    %1611 = vst.msk [vmem:[%s5 + $0xc0] sm:$0xff] %vm1320, %v1547
    %1612 = vst.msk [vmem:[%s5 + $0xc8] sm:$0xff] %vm1320, %v1548
    %1613 = vst.msk [vmem:[%s5 + $0xd0] sm:$0xff] %vm1320, %v1549
    %1614 = vst.msk [vmem:[%s5 + $0xd8] sm:$0xff] %vm1320, %v1550
    %1615 = vst.msk [vmem:[%s5 + $0xe0] sm:$0xff] %vm1320, %v1551
    %1616 = vst.msk [vmem:[%s5 + $0xe8] sm:$0xff] %vm1320, %v1552
    %1617 = vst.msk [vmem:[%s5 + $0xf0] sm:$0xff] %vm1320, %v1553
    %1618 = vst.msk [vmem:[%s5 + $0xf8] sm:$0xff] %vm1320, %v1554
    %1619 = vst.msk [vmem:[%s5 + $0x100] sm:$0xff] %vm1320, %v1555
    %1620 = vst.msk [vmem:[%s5 + $0x108] sm:$0xff] %vm1320, %v1556
    %1621 = vst.msk [vmem:[%s5 + $0x110] sm:$0xff] %vm1320, %v1557
    %1622 = vst.msk [vmem:[%s5 + $0x118] sm:$0xff] %vm1320, %v1558
    %1623 = vst.msk [vmem:[%s5 + $0x120] sm:$0xff] %vm1320, %v1559
    %1624 = vst.msk [vmem:[%s5 + $0x128] sm:$0xff] %vm1320, %v1560
    %1625 = vst.msk [vmem:[%s5 + $0x130] sm:$0xff] %vm1320, %v1561
    %1626 = vst.msk [vmem:[%s5 + $0x138] sm:$0xff] %vm1320, %v1562
    %1627 = vst.msk [vmem:[%s5 + $0x140] sm:$0xff] %vm1320, %v1563
    %1628 = vst.msk [vmem:[%s5 + $0x148] sm:$0xff] %vm1320, %v1564
    %1629 = vst.msk [vmem:[%s5 + $0x150] sm:$0xff] %vm1320, %v1565
    %1630 = vst.msk [vmem:[%s5 + $0x158] sm:$0xff] %vm1320, %v1566
    %1631 = vst.msk [vmem:[%s5 + $0x160] sm:$0xff] %vm1320, %v1567
    %1632 = vst.msk [vmem:[%s5 + $0x168] sm:$0xff] %vm1320, %v1568
    %1633 = vst.msk [vmem:[%s5 + $0x170] sm:$0xff] %vm1320, %v1569
    %1634 = vst.msk [vmem:[%s5 + $0x178] sm:$0xff] %vm1320, %v1570
    %1635 = vst.msk [vmem:[%s5 + $0x180] sm:$0xff] %vm1320, %v1571
    %1636 = vst.msk [vmem:[%s5 + $0x188] sm:$0xff] %vm1320, %v1572
    %1637 = vst.msk [vmem:[%s5 + $0x190] sm:$0xff] %vm1320, %v1573
    %1638 = vst.msk [vmem:[%s5 + $0x198] sm:$0xff] %vm1320, %v1574
    %1639 = vst.msk [vmem:[%s5 + $0x1a0] sm:$0xff] %vm1320, %v1575
    %1640 = vst.msk [vmem:[%s5 + $0x1a8] sm:$0xff] %vm1320, %v1576
    %1641 = vst.msk [vmem:[%s5 + $0x1b0] sm:$0xff] %vm1320, %v1577
    %1642 = vst.msk [vmem:[%s5 + $0x1b8] sm:$0xff] %vm1320, %v1578
    %1643 = vst.msk [vmem:[%s5 + $0x1c0] sm:$0xff] %vm1320, %v1579
    %1644 = vst.msk [vmem:[%s5 + $0x1c8] sm:$0xff] %vm1320, %v1580
    %1645 = vst.msk [vmem:[%s5 + $0x1d0] sm:$0xff] %vm1320, %v1581
    %1646 = vst.msk [vmem:[%s5 + $0x1d8] sm:$0xff] %vm1320, %v1582
    %1647 = vst.msk [vmem:[%s5 + $0x1e0] sm:$0xff] %vm1320, %v1583
    %1648 = vst.msk [vmem:[%s5 + $0x1e8] sm:$0xff] %vm1320, %v1584
    %1649 = vst.msk [vmem:[%s5 + $0x1f0] sm:$0xff] %vm1320, %v1585
    %1650 = vst.msk [vmem:[%s5 + $0x1f8] sm:$0xff] %vm1320, %v1586
  $region29: #{bottleneck_forward.5} parent=0 // pred_fallthru
    _
  // Predicated region
  $region30: #{bottleneck_forward.5} parent=0 // pred_check
    _
  $region31: #{bottleneck_forward.5} parent=0 // pred_check_branch
    %1652 = sbr.rel (0) target = $region33
  $region32: #{bottleneck_forward.5} parent=0 // pred_region
    _
  $region33: #{bottleneck_forward.5} parent=0 // pred_fallthru
    _
  // Predicated region
  $region34: #{bottleneck_forward.5} parent=0 // pred_check
    _
  $region35: #{bottleneck_forward.5} parent=0 // pred_check_branch
    %1654 = sbr.rel (0) target = $region37
  $region36: #{bottleneck_forward.5} parent=0 // pred_region
    _
  $region37: #{bottleneck_forward.5} parent=0 // pred_fallthru
    _

// kernel: bottleneck_forward.4
$region0: #{bottleneck_forward.4}
  #allocation0 [shape = 'u32[]', space=smem, size = 0x4, offset = 0x4, fixed_abs, tag = 'smem constant byte address 0x4 - core index']
  #allocation1 [shape = 'u32[144,128]{1,0:T(1,128)}', space=vmem, size = 0x12000, scoped, tag = 'internal scratch']
  %s0 = inlined_call_operand.vmem [shape: bf16[2,608,4], index: 0, kind: input, shape index: {}]
  %s1 = inlined_call_operand.vmem [shape: bf16[9,4,4], index: 1, kind: input, shape index: {}]
  %s2 = inlined_call_operand.vmem [shape: f32[1,4], index: 2, kind: input, shape index: {}]
  %s3 = inlined_call_operand.vmem [shape: bf16[2,512,4], index: 3, kind: output, shape index: {}]
  %s4 = sld [smem:[#allocation0]]
  $region45: #{bottleneck_forward.4} parent=0
    _
  %s6 = ssub.s32 1, %s4
  %s7 = scalar_select 0, %s6, %s4
  loop: start=0, step=1, limit=4
  $region2: #{bottleneck_forward.4} parent=0 // loop_pre_header
    _
  $region3: #{bottleneck_forward.4} parent=0 // loop_header
    %s9 = sphi 0, %s13
    %p10 = scmp.ge.s32.totalorder %s9, 4
    %s16 = sphi 0, %s28
    %s17 = sphi 0, %s24
    %s18 = sphi 0, %s16
    %s19 = sphi 0, %s17
    %s20 = sphi 0, %s18
    %s21 = sphi 0, %s19
    %s31 = sphi 0, %s33
    %s34 = sphi 0, %s31
    %s35 = sphi 0, %s34
    %s51 = sphi 0, %s35
    %s55 = sphi 0, %s55
    %s57 = sphi 0, %s55
    %s58 = sphi 0, %s57
    %s72 = sphi 0, %s58
    %s76 = sphi 0, %s76
    %s78 = sphi 0, %s76
    %s79 = sphi 0, %s78
    %s93 = sphi 0, %s79
    %s101 = sphi 0, %s103
    %s104 = sphi 0, %s101
    %s105 = sphi 0, %s104
    %s121 = sphi 0, %s105
  $region4: #{bottleneck_forward.4} parent=0 // loop_header_branch
    %12 = sbr.rel (%p10) target = $region8
  $region5: #{bottleneck_forward.4} parent=0 // loop_body
    %s14 = ssub.s32 %s9, 1
    %s15 = ssub.s32 %s9, 2
    %s22 = sadd.s32 1, %s17
    %p23 = scmp.ge.s32.totalorder %s22, 1
    %s24 = scalar_select %p23, 0, %s22
    %s25 = sadd.s32 1, %s16
    %s26 = scalar_select %p23, %s25, %s16
    %p27 = scmp.ge.s32.totalorder %s26, 2
    %s28 = scalar_select %p27, 0, %s26
    %s29 = ssub.s32 %s16, %s28
    %p30 = scmp.eq.s32.totalorder %s29, 0
    %s32 = sadd.s32 %s31, 1
    %s33 = scalar_select %p30, %s31, %s32
    %p36 = pneg %p30
    %p37 = scmp.eq.s32.totalorder %s9, 1
    %p38 = por %p36, %p37
    %p39 = scmp.ne.s32.totalorder %s31, %s34
    %p40 = scmp.eq.s32.totalorder %s9, 0
    %p41 = por %p39, %p40
    %p42 = scmp.ne.s32.totalorder %s31, %s34
    %p43 = scmp.eq.s32.totalorder %s14, 1
    %p44 = por %p42, %p43
    %p45 = scmp.ne.s32.totalorder %s34, %s35
    %p46 = scmp.eq.s32.totalorder %s14, 0
    %p47 = por %p45, %p46
    %p48 = scmp.ne.s32.totalorder %s34, %s35
    %p49 = scmp.eq.s32.totalorder %s15, 1
    %p50 = por %p48, %p49
    %p52 = scmp.ne.s32.totalorder %s35, %s51
    %p53 = scmp.eq.s32.totalorder %s15, 0
    %p54 = por %p52, %p53
    %s56 = sadd.s32 %s55, 1
    %p59 = scmp.eq.s32.totalorder %s9, 1
    %p60 = scmp.ne.s32.totalorder %s55, %s57
    %p61 = scmp.eq.s32.totalorder %s9, 0
    %p62 = por %p60, %p61
    %p63 = scmp.ne.s32.totalorder %s55, %s57
    %p64 = scmp.eq.s32.totalorder %s14, 1
    %p65 = por %p63, %p64
    %p66 = scmp.ne.s32.totalorder %s57, %s58
    %p67 = scmp.eq.s32.totalorder %s14, 0
    %p68 = por %p66, %p67
    %p69 = scmp.ne.s32.totalorder %s57, %s58
    %p70 = scmp.eq.s32.totalorder %s15, 1
    %p71 = por %p69, %p70
    %p73 = scmp.ne.s32.totalorder %s58, %s72
    %p74 = scmp.eq.s32.totalorder %s15, 0
    %p75 = por %p73, %p74
    %s77 = sadd.s32 %s76, 1
    %p80 = scmp.eq.s32.totalorder %s9, 1
    %p81 = scmp.ne.s32.totalorder %s76, %s78
    %p82 = scmp.eq.s32.totalorder %s9, 0
    %p83 = por %p81, %p82
    %p84 = scmp.ne.s32.totalorder %s76, %s78
    %p85 = scmp.eq.s32.totalorder %s14, 1
    %p86 = por %p84, %p85
    %p87 = scmp.ne.s32.totalorder %s78, %s79
    %p88 = scmp.eq.s32.totalorder %s14, 0
    %p89 = por %p87, %p88
    %p90 = scmp.ne.s32.totalorder %s78, %s79
    %p91 = scmp.eq.s32.totalorder %s15, 1
    %p92 = por %p90, %p91
    %p94 = scmp.ne.s32.totalorder %s79, %s93
    %p95 = scmp.eq.s32.totalorder %s15, 0
    %p96 = por %p94, %p95
    %s97 = ssub.s32 %s16, %s28
    %s98 = ssub.s32 %s17, %s24
    %s99 = sor.u32 %s97, %s98
    %p100 = scmp.eq.s32.totalorder %s99, 0
    %s102 = sadd.s32 %s101, 1
    %s103 = scalar_select %p100, %s101, %s102
    %p106 = pneg %p100
    %p107 = scmp.eq.s32.totalorder %s9, 1
    %p108 = por %p106, %p107
    %p109 = scmp.ne.s32.totalorder %s101, %s104
    %p110 = scmp.eq.s32.totalorder %s9, 0
    %p111 = por %p109, %p110
    %p112 = scmp.ne.s32.totalorder %s101, %s104
    %p113 = scmp.eq.s32.totalorder %s14, 1
    %p114 = por %p112, %p113
    %p115 = scmp.ne.s32.totalorder %s104, %s105
    %p116 = scmp.eq.s32.totalorder %s14, 0
    %p117 = por %p115, %p116
    %p118 = scmp.ne.s32.totalorder %s104, %s105
    %p119 = scmp.eq.s32.totalorder %s15, 1
    %p120 = por %p118, %p119
    %p122 = scmp.ne.s32.totalorder %s105, %s121
    %p123 = scmp.eq.s32.totalorder %s15, 0
    %p124 = por %p122, %p123
    %p125 = scmp.le.s32.totalorder 1, %s9
    %p126 = scmp.lt.s32.totalorder %s9, 3
    %p127 = pnand %p125, %p126
    %p128 = pneg %p127
    // Predicated region
    $region9: #{bottleneck_forward.4} parent=5 // pred_check
      _
    $region10: #{bottleneck_forward.4} parent=5 // pred_check_branch
      %130 = sbr.rel (%p127) target = $region12
    $region11: #{bottleneck_forward.4} parent=5 // pred_region
      %s131 = ssub.s32 %s9, 1
      // Predicated region
      $region13: #{bottleneck_forward.4} parent=11 // pred_check
        %p132 = pneg %p68
      $region14: #{bottleneck_forward.4} parent=11 // pred_check_branch
        %134 = sbr.rel (%p132) target = $region16
      $region15: #{bottleneck_forward.4} parent=11 // pred_region
        _
      $region16: #{bottleneck_forward.4} parent=11 // pred_fallthru
        _
      // Predicated region
      $region17: #{bottleneck_forward.4} parent=11 // pred_check
        %p135 = pneg %p89
      $region18: #{bottleneck_forward.4} parent=11 // pred_check_branch
        %137 = sbr.rel (%p135) target = $region20
      $region19: #{bottleneck_forward.4} parent=11 // pred_region
        _
      $region20: #{bottleneck_forward.4} parent=11 // pred_fallthru
        _
    $region12: #{bottleneck_forward.4} parent=5 // pred_fallthru
      _
    %p138 = scmp.lt.s32.totalorder %s9, 2
    // Predicated region
    $region21: #{bottleneck_forward.4} parent=5 // pred_check
      %p139 = pneg %p138
    $region22: #{bottleneck_forward.4} parent=5 // pred_check_branch
      %141 = sbr.rel (%p139) target = $region24
    $region23: #{bottleneck_forward.4} parent=5 // pred_region
      // Predicated region
      $region25: #{bottleneck_forward.4} parent=23 // pred_check
        %p142 = pneg %p41
      $region26: #{bottleneck_forward.4} parent=23 // pred_check_branch
        %144 = sbr.rel (%p142) target = $region28
      $region27: #{bottleneck_forward.4} parent=23 // pred_region
        %p145 = scmp.lt.s32.totalorder %s16, 1
        %s146 = scalar_select %p145, %s16, 1
        %s147 = smul.addr %s146, 76
        %s148 = smul.addr %s147, 4
        %s149 = scalar_lea.vmem %s0, %s148
      $region28: #{bottleneck_forward.4} parent=23 // pred_fallthru
        _
    $region24: #{bottleneck_forward.4} parent=5 // pred_fallthru
      _
    %p150 = scmp.le.s32.totalorder 1, %s9
    %p151 = scmp.lt.s32.totalorder %s9, 3
    %p152 = pnand %p150, %p151
    %p153 = pneg %p152
    // Predicated region
    $region29: #{bottleneck_forward.4} parent=5 // pred_check
      _
    $region30: #{bottleneck_forward.4} parent=5 // pred_check_branch
      %155 = sbr.rel (%p152) target = $region32
    $region31: #{bottleneck_forward.4} parent=5 // pred_region
      %s156 = ssub.s32 %s9, 1
      %p157 = scmp.lt.s32.totalorder %s18, 1
      %s158 = scalar_select %p157, %s18, 1
      %s159 = smul.addr %s158, 76
      %s160 = smul.addr %s159, 4
      %s161 = scalar_lea.vmem %s0, %s160
      %p162 = pneg %p47
      %p163 = pneg %p44
      %p164 = pneg %p68
      %p165 = pneg %p65
      %p166 = pneg %p89
      %p167 = pneg %p86
      %p168 = pneg %p117
      %p169 = pneg %p114
      %s170 = smul.u32 64, %s19
      %p171 = scmp.lt.s32.totalorder %s18, 1
      %s172 = scalar_select %p171, %s18, 1
      %p173 = scmp.lt.s32.totalorder %s170, 63
      %s174 = scalar_select %p173, %s170, 63
      %s175 = smul.addr %s172, 64
      %s176 = sadd.s32 %s174, %s175
      %s177 = smul.addr %s176, 4
      %s178 = scalar_lea.vmem %s3, %s177
      %p179 = scmp.lt.s32.totalorder %s18, 1
      %s180 = scalar_select %p179, %s18, 1
      %s181 = smul.addr %s180, 76
      %s182 = smul.addr %s181, 4
      %s183 = scalar_lea.vmem %s0, %s182
      %s184 = smul.u32 64, %s19
      %p185 = scmp.lt.s32.totalorder %s18, 1
      %s186 = scalar_select %p185, %s18, 1
      %p187 = scmp.lt.s32.totalorder %s184, 63
      %s188 = scalar_select %p187, %s184, 63
      %s189 = smul.addr %s186, 64
      %s190 = sadd.s32 %s188, %s189
      %s191 = smul.addr %s190, 4
      %s192 = scalar_lea.vmem %s3, %s191
      %s193 = smul.u32 64, %s19
      %s195 = smul.u32 %s19, 512
      %s196 = sshra.s32 %s195, 3
      %s197 = sand.u32 %s195, 7
      %s198 = smul.addr %s196, 4
      %s199 = scalar_lea.vmem %s183, %s198
      %v200 = vld [vmem:[%s199] sm:$0xf]
      %v201 = vld [vmem:[%s199 + $0x4] sm:$0xf]
      %v202 = vld [vmem:[%s199 + $0x8] sm:$0xf]
      %v203 = vld [vmem:[%s199 + $0xc] sm:$0xf]
      %v204 = vld [vmem:[%s199 + $0x10] sm:$0xf]
      %v205 = vld [vmem:[%s199 + $0x14] sm:$0xf]
      %v206 = vld [vmem:[%s199 + $0x18] sm:$0xf]
      %v207 = vld [vmem:[%s199 + $0x1c] sm:$0xf]
      %v208 = vld [vmem:[%s199 + $0x20] sm:$0xf]
      %v209 = vld [vmem:[%s199 + $0x24] sm:$0xf]
      %v210 = vld [vmem:[%s199 + $0x28] sm:$0xf]
      %v211 = vld [vmem:[%s199 + $0x2c] sm:$0xf]
      %v212 = vld [vmem:[%s199 + $0x30] sm:$0xf]
      %v213 = vld [vmem:[%s199 + $0x34] sm:$0xf]
      %v214 = vld [vmem:[%s199 + $0x38] sm:$0xf]
      %v215 = vld [vmem:[%s199 + $0x3c] sm:$0xf]
      %v216 = vld [vmem:[%s199 + $0x40] sm:$0xf]
      %v217 = vld [vmem:[%s199 + $0x44] sm:$0xf]
      %v218 = vld [vmem:[%s199 + $0x48] sm:$0xf]
      %v219 = vld [vmem:[%s199 + $0x4c] sm:$0xf]
      %v220 = vld [vmem:[%s199 + $0x50] sm:$0xf]
      %v221 = vld [vmem:[%s199 + $0x54] sm:$0xf]
      %v222 = vld [vmem:[%s199 + $0x58] sm:$0xf]
      %v223 = vld [vmem:[%s199 + $0x5c] sm:$0xf]
      %v224 = vld [vmem:[%s199 + $0x60] sm:$0xf]
      %v225 = vld [vmem:[%s1] sm:$0x3]
      %s226 = scalar_lea.vmem %s1, 2
      %v227 = vld [vmem:[%s226] sm:$0x3]
      %v245 = vunpack.c.l.b16 %v200
      %v246 = vunpack.c.l.b16 %v201
      %v247 = vunpack.c.l.b16 %v202
      %v248 = vunpack.c.l.b16 %v203
      %v249 = vunpack.c.l.b16 %v204
      %v250 = vunpack.c.l.b16 %v205
      %v251 = vunpack.c.l.b16 %v206
      %v252 = vunpack.c.l.b16 %v207
      %v253 = vunpack.c.l.b16 %v208
      %v254 = vunpack.c.l.b16 %v209
      %v255 = vunpack.c.l.b16 %v210
      %v256 = vunpack.c.l.b16 %v211
      %v257 = vunpack.c.l.b16 %v212
      %v258 = vunpack.c.l.b16 %v213
      %v259 = vunpack.c.l.b16 %v214
      %v260 = vunpack.c.l.b16 %v215
      %v261 = vunpack.c.l.b16 %v216
      %v262 = vpack.c.b16 %v246, %v245
      %v263 = vpack.c.b16 %v248, %v247
      %v264 = vpack.c.b16 %v250, %v249
      %v265 = vpack.c.b16 %v252, %v251
      %v266 = vpack.c.b16 %v254, %v253
      %v267 = vpack.c.b16 %v256, %v255
      %v268 = vpack.c.b16 %v258, %v257
      %v269 = vpack.c.b16 %v260, %v259
      %v270 = vpack.c.b16 %v261, %v261
      %vm271 = vsmask.f32 7424
      %v273 = vshrl.u32 %v262, 16
      %v275 = vshll.u32 %v262, 16
      %v277 = vrot.slane %v275, 1
      %v278 = vor.u32 %v273, %v277
      %v280 = vshll.u32 %v263, 16
      %v282 = vrot.slane %v280, 1
      %v283 = vsel %vm271, %v278, %v282
      %v284 = vshrl.u32 %v263, 16
      %v286 = vor.u32 %v284, %v282
      %v288 = vshll.u32 %v264, 16
      %v290 = vrot.slane %v288, 1
      %v291 = vsel %vm271, %v286, %v290
      %v292 = vshrl.u32 %v264, 16
      %v294 = vor.u32 %v292, %v290
      %v296 = vshll.u32 %v265, 16
      %v298 = vrot.slane %v296, 1
      %v299 = vsel %vm271, %v294, %v298
      %v300 = vshrl.u32 %v265, 16
      %v302 = vor.u32 %v300, %v298
      %v304 = vshll.u32 %v266, 16
      %v306 = vrot.slane %v304, 1
      %v307 = vsel %vm271, %v302, %v306
      %v308 = vshrl.u32 %v266, 16
      %v310 = vor.u32 %v308, %v306
      %v312 = vshll.u32 %v267, 16
      %v314 = vrot.slane %v312, 1
      %v315 = vsel %vm271, %v310, %v314
      %v316 = vshrl.u32 %v267, 16
      %v318 = vor.u32 %v316, %v314
      %v320 = vshll.u32 %v268, 16
      %v322 = vrot.slane %v320, 1
      %v323 = vsel %vm271, %v318, %v322
      %v324 = vshrl.u32 %v268, 16
      %v326 = vor.u32 %v324, %v322
      %v328 = vshll.u32 %v269, 16
      %v330 = vrot.slane %v328, 1
      %v331 = vsel %vm271, %v326, %v330
      %v332 = vshrl.u32 %v269, 16
      %v334 = vor.u32 %v332, %v330
      %v336 = vshll.u32 %v270, 16
      %v338 = vrot.slane %v336, 1
      %v339 = vsel %vm271, %v334, %v338
      %vm340 = vcmask 31744
      %v342 = vsel %vm340, %v283, 0
      %v345 = vsel %vm340, %v291, 0
      %v348 = vsel %vm340, %v299, 0
      %v351 = vsel %vm340, %v307, 0
      %v354 = vsel %vm340, %v315, 0
      %v357 = vsel %vm340, %v323, 0
      %v360 = vsel %vm340, %v331, 0
      %v363 = vsel %vm340, %v339, 0
      %vm365 = vcmask 1041408
      %v367 = vsel %vm365, %v227, 0
      %369 = vmatprep.subr.bf16.mxu0 0
      %370 = vmatpush1.bf16.msra.mxu0 0
      %371 = vmatprep.subr.bf16.mxu0 0
      %372 = vmatpush1.bf16.msra.mxu0 0
      %373 = vmatprep.subr.bf16.mxu0 0
      %374 = vmatpush1.bf16.msra.mxu0 0
      %375 = vmatprep.subr.bf16.mxu0 0
      %376 = vmatpush1.bf16.msra.mxu0 0
      %377 = vmatprep.subr.bf16.mxu0 0
      %378 = vmatpush1.bf16.msra.mxu0 0
      %379 = vmatprep.subr.bf16.mxu0 0
      %380 = vmatpush1.bf16.msra.mxu0 0
      %381 = vmatprep.subr.bf16.mxu0 0
      %382 = vmatpush1.bf16.msra.mxu0 0
      %383 = vmatprep.subr.bf16.mxu0 0
      %384 = vmatpush1.bf16.msra.mxu0 %v367
      %385 = vmatprep.subr.bf16.mxu0 0
      %386 = vmatpush2.bf16.msra.mxu0 0
      %387 = vmatprep.subr.bf16.mxu0 0
      %388 = vmatpush2.bf16.msra.mxu0 0
      %389 = vmatprep.subr.bf16.mxu0 0
      %390 = vmatpush2.bf16.msra.mxu0 0
      %391 = vmatprep.subr.bf16.mxu0 0
      %392 = vmatpush2.bf16.msra.mxu0 0
      %393 = vmatprep.subr.bf16.mxu0 0
      %394 = vmatpush2.bf16.msra.mxu0 0
      %395 = vmatprep.subr.bf16.mxu0 0
      %396 = vmatpush2.bf16.msra.mxu0 0
      %397 = vmatprep.subr.bf16.mxu0 0
      %398 = vmatpush2.bf16.msra.mxu0 0
      %399 = vmatprep.subr.bf16.mxu0 0
      %400 = vmatpush2.bf16.msra.mxu0 0
      %401 = vmatprep.mubr.bf16.mxu0 0
      %402 = vmatmul.mubr.bf16.gmra.mxu0 %v342
      %v403 = vpop.f32.mrf.mxu0
      %v404 = vadd.f32 0.0, %v403
      %v405 = vpop.f32.mrf.mxu0
      %v406 = vpop.f32.mrf.mxu0
      %v407 = vadd.f32 0.0, %v406
      %v408 = vpop.f32.mrf.mxu0
      %409 = vmatprep.mubr.bf16.mxu0 0
      %410 = vmatmul.mubr.bf16.gmra.mxu0 %v345
      %v411 = vpop.f32.mrf.mxu0
      %v412 = vadd.f32 0.0, %v411
      %v413 = vpop.f32.mrf.mxu0
      %v414 = vpop.f32.mrf.mxu0
      %v415 = vadd.f32 0.0, %v414
      %v416 = vpop.f32.mrf.mxu0
      %417 = vmatprep.mubr.bf16.mxu0 0
      %418 = vmatmul.mubr.bf16.gmra.mxu0 %v348
      %v419 = vpop.f32.mrf.mxu0
      %v420 = vadd.f32 0.0, %v419
      %v421 = vpop.f32.mrf.mxu0
      %v422 = vpop.f32.mrf.mxu0
      %v423 = vadd.f32 0.0, %v422
      %v424 = vpop.f32.mrf.mxu0
      %425 = vmatprep.mubr.bf16.mxu0 0
      %426 = vmatmul.mubr.bf16.gmra.mxu0 %v351
      %v427 = vpop.f32.mrf.mxu0
      %v428 = vadd.f32 0.0, %v427
      %v429 = vpop.f32.mrf.mxu0
      %v430 = vpop.f32.mrf.mxu0
      %v431 = vadd.f32 0.0, %v430
      %v432 = vpop.f32.mrf.mxu0
      %433 = vmatprep.mubr.bf16.mxu0 0
      %434 = vmatmul.mubr.bf16.gmra.mxu0 %v354
      %v435 = vpop.f32.mrf.mxu0
      %v436 = vadd.f32 0.0, %v435
      %v437 = vpop.f32.mrf.mxu0
      %v438 = vpop.f32.mrf.mxu0
      %v439 = vadd.f32 0.0, %v438
      %v440 = vpop.f32.mrf.mxu0
      %441 = vmatprep.mubr.bf16.mxu0 0
      %442 = vmatmul.mubr.bf16.gmra.mxu0 %v357
      %v443 = vpop.f32.mrf.mxu0
      %v444 = vadd.f32 0.0, %v443
      %v445 = vpop.f32.mrf.mxu0
      %v446 = vpop.f32.mrf.mxu0
      %v447 = vadd.f32 0.0, %v446
      %v448 = vpop.f32.mrf.mxu0
      %449 = vmatprep.mubr.bf16.mxu0 0
      %450 = vmatmul.mubr.bf16.gmra.mxu0 %v360
      %v451 = vpop.f32.mrf.mxu0
      %v452 = vadd.f32 0.0, %v451
      %v453 = vpop.f32.mrf.mxu0
      %v454 = vpop.f32.mrf.mxu0
      %v455 = vadd.f32 0.0, %v454
      %v456 = vpop.f32.mrf.mxu0
      %457 = vmatprep.mubr.bf16.mxu0 0
      %458 = vmatmul.mubr.bf16.gmra.mxu0 %v363
      %v459 = vpop.f32.mrf.mxu0
      %v460 = vadd.f32 0.0, %v459
      %v461 = vpop.f32.mrf.mxu0
      %v462 = vpop.f32.mrf.mxu0
      %v463 = vadd.f32 0.0, %v462
      %v464 = vpop.f32.mrf.mxu0
      %465 = vdwg.mxu0
      %v466 = vsel %vm340, %v262, 0
      %v468 = vsel %vm340, %v263, 0
      %v470 = vsel %vm340, %v264, 0
      %v472 = vsel %vm340, %v265, 0
      %v474 = vsel %vm340, %v266, 0
      %v476 = vsel %vm340, %v267, 0
      %v478 = vsel %vm340, %v268, 0
      %v480 = vsel %vm340, %v269, 0
      %v483 = vsel %vm365, %v225, 0
      %485 = vmatprep.subr.bf16.mxu0 0
      %486 = vmatpush1.bf16.msra.mxu0 0
      %487 = vmatprep.subr.bf16.mxu0 0
      %488 = vmatpush1.bf16.msra.mxu0 0
      %489 = vmatprep.subr.bf16.mxu0 0
      %490 = vmatpush1.bf16.msra.mxu0 0
      %491 = vmatprep.subr.bf16.mxu0 0
      %492 = vmatpush1.bf16.msra.mxu0 0
      %493 = vmatprep.subr.bf16.mxu0 0
      %494 = vmatpush1.bf16.msra.mxu0 0
      %495 = vmatprep.subr.bf16.mxu0 0
      %496 = vmatpush1.bf16.msra.mxu0 0
      %497 = vmatprep.subr.bf16.mxu0 0
      %498 = vmatpush1.bf16.msra.mxu0 0
      %499 = vmatprep.subr.bf16.mxu0 0
      %500 = vmatpush1.bf16.msra.mxu0 %v483
      %501 = vmatprep.subr.bf16.mxu0 0
      %502 = vmatpush2.bf16.msra.mxu0 0
      %503 = vmatprep.subr.bf16.mxu0 0
      %504 = vmatpush2.bf16.msra.mxu0 0
      %505 = vmatprep.subr.bf16.mxu0 0
      %506 = vmatpush2.bf16.msra.mxu0 0
      %507 = vmatprep.subr.bf16.mxu0 0
      %508 = vmatpush2.bf16.msra.mxu0 0
      %509 = vmatprep.subr.bf16.mxu0 0
      %510 = vmatpush2.bf16.msra.mxu0 0
      %511 = vmatprep.subr.bf16.mxu0 0
      %512 = vmatpush2.bf16.msra.mxu0 0
      %513 = vmatprep.subr.bf16.mxu0 0
      %514 = vmatpush2.bf16.msra.mxu0 0
      %515 = vmatprep.subr.bf16.mxu0 0
      %516 = vmatpush2.bf16.msra.mxu0 0
      %517 = vmatprep.mubr.bf16.mxu0 0
      %518 = vmatmul.mubr.bf16.gmra.mxu0 %v466
      %v519 = vpop.f32.mrf.mxu0
      %v520 = vadd.f32 %v404, %v519
      %v521 = vpop.f32.mrf.mxu0
      %v522 = vpop.f32.mrf.mxu0
      %v523 = vadd.f32 %v407, %v522
      %v524 = vpop.f32.mrf.mxu0
      %525 = vmatprep.mubr.bf16.mxu0 0
      %526 = vmatmul.mubr.bf16.gmra.mxu0 %v468
      %v527 = vpop.f32.mrf.mxu0
      %v528 = vadd.f32 %v412, %v527
      %v529 = vpop.f32.mrf.mxu0
      %v530 = vpop.f32.mrf.mxu0
      %v531 = vadd.f32 %v415, %v530
      %v532 = vpop.f32.mrf.mxu0
      %533 = vmatprep.mubr.bf16.mxu0 0
      %534 = vmatmul.mubr.bf16.gmra.mxu0 %v470
      %v535 = vpop.f32.mrf.mxu0
      %v536 = vadd.f32 %v420, %v535
      %v537 = vpop.f32.mrf.mxu0
      %v538 = vpop.f32.mrf.mxu0
      %v539 = vadd.f32 %v423, %v538
      %v540 = vpop.f32.mrf.mxu0
      %541 = vmatprep.mubr.bf16.mxu0 0
      %542 = vmatmul.mubr.bf16.gmra.mxu0 %v472
      %v543 = vpop.f32.mrf.mxu0
      %v544 = vadd.f32 %v428, %v543
      %v545 = vpop.f32.mrf.mxu0
      %v546 = vpop.f32.mrf.mxu0
      %v547 = vadd.f32 %v431, %v546
      %v548 = vpop.f32.mrf.mxu0
      %549 = vmatprep.mubr.bf16.mxu0 0
      %550 = vmatmul.mubr.bf16.gmra.mxu0 %v474
      %v551 = vpop.f32.mrf.mxu0
      %v552 = vadd.f32 %v436, %v551
      %v553 = vpop.f32.mrf.mxu0
      %v554 = vpop.f32.mrf.mxu0
      %v555 = vadd.f32 %v439, %v554
      %v556 = vpop.f32.mrf.mxu0
      %557 = vmatprep.mubr.bf16.mxu0 0
      %558 = vmatmul.mubr.bf16.gmra.mxu0 %v476
      %v559 = vpop.f32.mrf.mxu0
      %v560 = vadd.f32 %v444, %v559
      %v561 = vpop.f32.mrf.mxu0
      %v562 = vpop.f32.mrf.mxu0
      %v563 = vadd.f32 %v447, %v562
      %v564 = vpop.f32.mrf.mxu0
      %565 = vmatprep.mubr.bf16.mxu0 0
      %566 = vmatmul.mubr.bf16.gmra.mxu0 %v478
      %v567 = vpop.f32.mrf.mxu0
      %v568 = vadd.f32 %v452, %v567
      %v569 = vpop.f32.mrf.mxu0
      %v570 = vpop.f32.mrf.mxu0
      %v571 = vadd.f32 %v455, %v570
      %v572 = vpop.f32.mrf.mxu0
      %573 = vmatprep.mubr.bf16.mxu0 0
      %574 = vmatmul.mubr.bf16.gmra.mxu0 %v480
      %v575 = vpop.f32.mrf.mxu0
      %v576 = vadd.f32 %v460, %v575
      %v577 = vpop.f32.mrf.mxu0
      %v578 = vpop.f32.mrf.mxu0
      %v579 = vadd.f32 %v463, %v578
      %v580 = vpop.f32.mrf.mxu0
      %581 = vdwg.mxu0
      %s582 = scalar_lea.vmem %s1, 4
      %v583 = vld [vmem:[%s582] sm:$0x3]
      %vm584 = vcmask 1046528
      %v585 = vrot.slane %v262, 1
      %v586 = vrot.slane %v263, 1
      %v587 = vsel %vm584, %v585, %v586
      %v588 = vrot.slane %v264, 1
      %v589 = vsel %vm584, %v586, %v588
      %v590 = vrot.slane %v265, 1
      %v591 = vsel %vm584, %v588, %v590
      %v592 = vrot.slane %v266, 1
      %v593 = vsel %vm584, %v590, %v592
      %v594 = vrot.slane %v267, 1
      %v595 = vsel %vm584, %v592, %v594
      %v596 = vrot.slane %v268, 1
      %v597 = vsel %vm584, %v594, %v596
      %v598 = vrot.slane %v269, 1
      %v599 = vsel %vm584, %v596, %v598
      %v600 = vrot.slane %v270, 1
      %v601 = vsel %vm584, %v598, %v600
      %v603 = vsel %vm340, %v587, 0
      %v606 = vsel %vm340, %v589, 0
      %v609 = vsel %vm340, %v591, 0
      %v612 = vsel %vm340, %v593, 0
      %v615 = vsel %vm340, %v595, 0
      %v618 = vsel %vm340, %v597, 0
      %v621 = vsel %vm340, %v599, 0
      %v624 = vsel %vm340, %v601, 0
      %v627 = vsel %vm365, %v583, 0
      %629 = vmatprep.subr.bf16.mxu0 0
      %630 = vmatpush1.bf16.msra.mxu0 0
      %631 = vmatprep.subr.bf16.mxu0 0
      %632 = vmatpush1.bf16.msra.mxu0 0
      %633 = vmatprep.subr.bf16.mxu0 0
      %634 = vmatpush1.bf16.msra.mxu0 0
      %635 = vmatprep.subr.bf16.mxu0 0
      %636 = vmatpush1.bf16.msra.mxu0 0
      %637 = vmatprep.subr.bf16.mxu0 0
      %638 = vmatpush1.bf16.msra.mxu0 0
      %639 = vmatprep.subr.bf16.mxu0 0
      %640 = vmatpush1.bf16.msra.mxu0 0
      %641 = vmatprep.subr.bf16.mxu0 0
      %642 = vmatpush1.bf16.msra.mxu0 0
      %643 = vmatprep.subr.bf16.mxu0 0
      %644 = vmatpush1.bf16.msra.mxu0 %v627
      %645 = vmatprep.subr.bf16.mxu0 0
      %646 = vmatpush2.bf16.msra.mxu0 0
      %647 = vmatprep.subr.bf16.mxu0 0
      %648 = vmatpush2.bf16.msra.mxu0 0
      %649 = vmatprep.subr.bf16.mxu0 0
      %650 = vmatpush2.bf16.msra.mxu0 0
      %651 = vmatprep.subr.bf16.mxu0 0
      %652 = vmatpush2.bf16.msra.mxu0 0
      %653 = vmatprep.subr.bf16.mxu0 0
      %654 = vmatpush2.bf16.msra.mxu0 0
      %655 = vmatprep.subr.bf16.mxu0 0
      %656 = vmatpush2.bf16.msra.mxu0 0
      %657 = vmatprep.subr.bf16.mxu0 0
      %658 = vmatpush2.bf16.msra.mxu0 0
      %659 = vmatprep.subr.bf16.mxu0 0
      %660 = vmatpush2.bf16.msra.mxu0 0
      %661 = vmatprep.mubr.bf16.mxu0 0
      %662 = vmatmul.mubr.bf16.gmra.mxu0 %v603
      %v663 = vpop.f32.mrf.mxu0
      %v664 = vadd.f32 0.0, %v663
      %v665 = vpop.f32.mrf.mxu0
      %v666 = vpop.f32.mrf.mxu0
      %v667 = vadd.f32 0.0, %v666
      %v668 = vpop.f32.mrf.mxu0
      %669 = vmatprep.mubr.bf16.mxu0 0
      %670 = vmatmul.mubr.bf16.gmra.mxu0 %v606
      %v671 = vpop.f32.mrf.mxu0
      %v672 = vadd.f32 0.0, %v671
      %v673 = vpop.f32.mrf.mxu0
      %v674 = vpop.f32.mrf.mxu0
      %v675 = vadd.f32 0.0, %v674
      %v676 = vpop.f32.mrf.mxu0
      %677 = vmatprep.mubr.bf16.mxu0 0
      %678 = vmatmul.mubr.bf16.gmra.mxu0 %v609
      %v679 = vpop.f32.mrf.mxu0
      %v680 = vadd.f32 0.0, %v679
      %v681 = vpop.f32.mrf.mxu0
      %v682 = vpop.f32.mrf.mxu0
      %v683 = vadd.f32 0.0, %v682
      %v684 = vpop.f32.mrf.mxu0
      %685 = vmatprep.mubr.bf16.mxu0 0
      %686 = vmatmul.mubr.bf16.gmra.mxu0 %v612
      %v687 = vpop.f32.mrf.mxu0
      %v688 = vadd.f32 0.0, %v687
      %v689 = vpop.f32.mrf.mxu0
      %v690 = vpop.f32.mrf.mxu0
      %v691 = vadd.f32 0.0, %v690
      %v692 = vpop.f32.mrf.mxu0
      %693 = vmatprep.mubr.bf16.mxu0 0
      %694 = vmatmul.mubr.bf16.gmra.mxu0 %v615
      %v695 = vpop.f32.mrf.mxu0
      %v696 = vadd.f32 0.0, %v695
      %v697 = vpop.f32.mrf.mxu0
      %v698 = vpop.f32.mrf.mxu0
      %v699 = vadd.f32 0.0, %v698
      %v700 = vpop.f32.mrf.mxu0
      %701 = vmatprep.mubr.bf16.mxu0 0
      %702 = vmatmul.mubr.bf16.gmra.mxu0 %v618
      %v703 = vpop.f32.mrf.mxu0
      %v704 = vadd.f32 0.0, %v703
      %v705 = vpop.f32.mrf.mxu0
      %v706 = vpop.f32.mrf.mxu0
      %v707 = vadd.f32 0.0, %v706
      %v708 = vpop.f32.mrf.mxu0
      %709 = vmatprep.mubr.bf16.mxu0 0
      %710 = vmatmul.mubr.bf16.gmra.mxu0 %v621
      %v711 = vpop.f32.mrf.mxu0
      %v712 = vadd.f32 0.0, %v711
      %v713 = vpop.f32.mrf.mxu0
      %v714 = vpop.f32.mrf.mxu0
      %v715 = vadd.f32 0.0, %v714
      %v716 = vpop.f32.mrf.mxu0
      %717 = vmatprep.mubr.bf16.mxu0 0
      %718 = vmatmul.mubr.bf16.gmra.mxu0 %v624
      %v719 = vpop.f32.mrf.mxu0
      %v720 = vadd.f32 0.0, %v719
      %v721 = vpop.f32.mrf.mxu0
      %v722 = vpop.f32.mrf.mxu0
      %v723 = vadd.f32 0.0, %v722
      %v724 = vpop.f32.mrf.mxu0
      %725 = vdwg.mxu0
      %v726 = vadd.f32 %v520, %v664
      %v727 = vadd.f32 %v523, %v667
      %v728 = vadd.f32 %v528, %v672
      %v729 = vadd.f32 %v531, %v675
      %v730 = vadd.f32 %v536, %v680
      %v731 = vadd.f32 %v539, %v683
      %v732 = vadd.f32 %v544, %v688
      %v733 = vadd.f32 %v547, %v691
      %v734 = vadd.f32 %v552, %v696
      %v735 = vadd.f32 %v555, %v699
      %v736 = vadd.f32 %v560, %v704
      %v737 = vadd.f32 %v563, %v707
      %v738 = vadd.f32 %v568, %v712
      %v739 = vadd.f32 %v571, %v715
      %v740 = vadd.f32 %v576, %v720
      %v741 = vadd.f32 %v579, %v723
      %s742 = scalar_lea.vmem %s1, 6
      %v743 = vld [vmem:[%s742] sm:$0x3]
      %v747 = vunpack.c.l.b16 %v217
      %v748 = vunpack.c.l.b16 %v218
      %v749 = vunpack.c.l.b16 %v219
      %v750 = vpack.c.b16 %v747, %v261
      %v751 = vpack.c.b16 %v749, %v748
      %v753 = vsel %vm340, %v750, 0
      %v756 = vsel %vm340, %v751, 0
      %v759 = vsel %vm365, %v743, 0
      %761 = vmatprep.subr.bf16.mxu0 0
      %762 = vmatpush1.bf16.msra.mxu0 0
      %763 = vmatprep.subr.bf16.mxu0 0
      %764 = vmatpush1.bf16.msra.mxu0 0
      %765 = vmatprep.subr.bf16.mxu0 0
      %766 = vmatpush1.bf16.msra.mxu0 0
      %767 = vmatprep.subr.bf16.mxu0 0
      %768 = vmatpush1.bf16.msra.mxu0 0
      %769 = vmatprep.subr.bf16.mxu0 0
      %770 = vmatpush1.bf16.msra.mxu0 0
      %771 = vmatprep.subr.bf16.mxu0 0
      %772 = vmatpush1.bf16.msra.mxu0 0
      %773 = vmatprep.subr.bf16.mxu0 0
      %774 = vmatpush1.bf16.msra.mxu0 0
      %775 = vmatprep.subr.bf16.mxu0 0
      %776 = vmatpush1.bf16.msra.mxu0 %v759
      %777 = vmatprep.subr.bf16.mxu0 0
      %778 = vmatpush2.bf16.msra.mxu0 0
      %779 = vmatprep.subr.bf16.mxu0 0
      %780 = vmatpush2.bf16.msra.mxu0 0
      %781 = vmatprep.subr.bf16.mxu0 0
      %782 = vmatpush2.bf16.msra.mxu0 0
      %783 = vmatprep.subr.bf16.mxu0 0
      %784 = vmatpush2.bf16.msra.mxu0 0
      %785 = vmatprep.subr.bf16.mxu0 0
      %786 = vmatpush2.bf16.msra.mxu0 0
      %787 = vmatprep.subr.bf16.mxu0 0
      %788 = vmatpush2.bf16.msra.mxu0 0
      %789 = vmatprep.subr.bf16.mxu0 0
      %790 = vmatpush2.bf16.msra.mxu0 0
      %791 = vmatprep.subr.bf16.mxu0 0
      %792 = vmatpush2.bf16.msra.mxu0 0
      %793 = vmatprep.mubr.bf16.mxu0 0
      %794 = vmatmul.mubr.bf16.gmra.mxu0 %v470
      %v795 = vpop.f32.mrf.mxu0
      %v796 = vadd.f32 0.0, %v795
      %v797 = vpop.f32.mrf.mxu0
      %v798 = vpop.f32.mrf.mxu0
      %v799 = vadd.f32 0.0, %v798
      %v800 = vpop.f32.mrf.mxu0
      %801 = vmatprep.mubr.bf16.mxu0 0
      %802 = vmatmul.mubr.bf16.gmra.mxu0 %v472
      %v803 = vpop.f32.mrf.mxu0
      %v804 = vadd.f32 0.0, %v803
      %v805 = vpop.f32.mrf.mxu0
      %v806 = vpop.f32.mrf.mxu0
      %v807 = vadd.f32 0.0, %v806
      %v808 = vpop.f32.mrf.mxu0
      %809 = vmatprep.mubr.bf16.mxu0 0
      %810 = vmatmul.mubr.bf16.gmra.mxu0 %v474
      %v811 = vpop.f32.mrf.mxu0
      %v812 = vadd.f32 0.0, %v811
      %v813 = vpop.f32.mrf.mxu0
      %v814 = vpop.f32.mrf.mxu0
      %v815 = vadd.f32 0.0, %v814
      %v816 = vpop.f32.mrf.mxu0
      %817 = vmatprep.mubr.bf16.mxu0 0
      %818 = vmatmul.mubr.bf16.gmra.mxu0 %v476
      %v819 = vpop.f32.mrf.mxu0
      %v820 = vadd.f32 0.0, %v819
      %v821 = vpop.f32.mrf.mxu0
      %v822 = vpop.f32.mrf.mxu0
      %v823 = vadd.f32 0.0, %v822
      %v824 = vpop.f32.mrf.mxu0
      %825 = vmatprep.mubr.bf16.mxu0 0
      %826 = vmatmul.mubr.bf16.gmra.mxu0 %v478
      %v827 = vpop.f32.mrf.mxu0
      %v828 = vadd.f32 0.0, %v827
      %v829 = vpop.f32.mrf.mxu0
      %v830 = vpop.f32.mrf.mxu0
      %v831 = vadd.f32 0.0, %v830
      %v832 = vpop.f32.mrf.mxu0
      %833 = vmatprep.mubr.bf16.mxu0 0
      %834 = vmatmul.mubr.bf16.gmra.mxu0 %v480
      %v835 = vpop.f32.mrf.mxu0
      %v836 = vadd.f32 0.0, %v835
      %v837 = vpop.f32.mrf.mxu0
      %v838 = vpop.f32.mrf.mxu0
      %v839 = vadd.f32 0.0, %v838
      %v840 = vpop.f32.mrf.mxu0
      %841 = vmatprep.mubr.bf16.mxu0 0
      %842 = vmatmul.mubr.bf16.gmra.mxu0 %v753
      %v843 = vpop.f32.mrf.mxu0
      %v844 = vadd.f32 0.0, %v843
      %v845 = vpop.f32.mrf.mxu0
      %v846 = vpop.f32.mrf.mxu0
      %v847 = vadd.f32 0.0, %v846
      %v848 = vpop.f32.mrf.mxu0
      %849 = vmatprep.mubr.bf16.mxu0 0
      %850 = vmatmul.mubr.bf16.gmra.mxu0 %v756
      %v851 = vpop.f32.mrf.mxu0
      %v852 = vadd.f32 0.0, %v851
      %v853 = vpop.f32.mrf.mxu0
      %v854 = vpop.f32.mrf.mxu0
      %v855 = vadd.f32 0.0, %v854
      %v856 = vpop.f32.mrf.mxu0
      %857 = vdwg.mxu0
      %v858 = vadd.f32 %v726, %v796
      %v859 = vadd.f32 %v727, %v799
      %v860 = vadd.f32 %v728, %v804
      %v861 = vadd.f32 %v729, %v807
      %v862 = vadd.f32 %v730, %v812
      %v863 = vadd.f32 %v731, %v815
      %v864 = vadd.f32 %v732, %v820
      %v865 = vadd.f32 %v733, %v823
      %v866 = vadd.f32 %v734, %v828
      %v867 = vadd.f32 %v735, %v831
      %v868 = vadd.f32 %v736, %v836
      %v869 = vadd.f32 %v737, %v839
      %v870 = vadd.f32 %v738, %v844
      %v871 = vadd.f32 %v739, %v847
      %v872 = vadd.f32 %v740, %v852
      %v873 = vadd.f32 %v741, %v855
      %s874 = scalar_lea.vmem %s1, 8
      %v875 = vld [vmem:[%s874] sm:$0x3]
      %v877 = vunpack.c.l.b16 %v220
      %v878 = vpack.c.b16 %v877, %v877
      %v879 = vshll.u32 %v750, 16
      %v881 = vrot.slane %v879, 1
      %v882 = vsel %vm271, %v334, %v881
      %v883 = vshrl.u32 %v750, 16
      %v885 = vor.u32 %v883, %v881
      %v886 = vshll.u32 %v751, 16
      %v888 = vrot.slane %v886, 1
      %v889 = vsel %vm271, %v885, %v888
      %v890 = vshrl.u32 %v751, 16
      %v892 = vor.u32 %v890, %v888
      %v894 = vshll.u32 %v878, 16
      %v896 = vrot.slane %v894, 1
      %v897 = vsel %vm271, %v892, %v896
      %v899 = vsel %vm340, %v882, 0
      %v902 = vsel %vm340, %v889, 0
      %v905 = vsel %vm340, %v897, 0
      %v908 = vsel %vm365, %v875, 0
      %910 = vmatprep.subr.bf16.mxu0 0
      %911 = vmatpush1.bf16.msra.mxu0 0
      %912 = vmatprep.subr.bf16.mxu0 0
      %913 = vmatpush1.bf16.msra.mxu0 0
      %914 = vmatprep.subr.bf16.mxu0 0
      %915 = vmatpush1.bf16.msra.mxu0 0
      %916 = vmatprep.subr.bf16.mxu0 0
      %917 = vmatpush1.bf16.msra.mxu0 0
      %918 = vmatprep.subr.bf16.mxu0 0
      %919 = vmatpush1.bf16.msra.mxu0 0
      %920 = vmatprep.subr.bf16.mxu0 0
      %921 = vmatpush1.bf16.msra.mxu0 0
      %922 = vmatprep.subr.bf16.mxu0 0
      %923 = vmatpush1.bf16.msra.mxu0 0
      %924 = vmatprep.subr.bf16.mxu0 0
      %925 = vmatpush1.bf16.msra.mxu0 %v908
      %926 = vmatprep.subr.bf16.mxu0 0
      %927 = vmatpush2.bf16.msra.mxu0 0
      %928 = vmatprep.subr.bf16.mxu0 0
      %929 = vmatpush2.bf16.msra.mxu0 0
      %930 = vmatprep.subr.bf16.mxu0 0
      %931 = vmatpush2.bf16.msra.mxu0 0
      %932 = vmatprep.subr.bf16.mxu0 0
      %933 = vmatpush2.bf16.msra.mxu0 0
      %934 = vmatprep.subr.bf16.mxu0 0
      %935 = vmatpush2.bf16.msra.mxu0 0
      %936 = vmatprep.subr.bf16.mxu0 0
      %937 = vmatpush2.bf16.msra.mxu0 0
      %938 = vmatprep.subr.bf16.mxu0 0
      %939 = vmatpush2.bf16.msra.mxu0 0
      %940 = vmatprep.subr.bf16.mxu0 0
      %941 = vmatpush2.bf16.msra.mxu0 0
      %942 = vmatprep.mubr.bf16.mxu0 0
      %943 = vmatmul.mubr.bf16.gmra.mxu0 %v348
      %v944 = vpop.f32.mrf.mxu0
      %v945 = vadd.f32 0.0, %v944
      %v946 = vpop.f32.mrf.mxu0
      %v947 = vpop.f32.mrf.mxu0
      %v948 = vadd.f32 0.0, %v947
      %v949 = vpop.f32.mrf.mxu0
      %950 = vmatprep.mubr.bf16.mxu0 0
      %951 = vmatmul.mubr.bf16.gmra.mxu0 %v351
      %v952 = vpop.f32.mrf.mxu0
      %v953 = vadd.f32 0.0, %v952
      %v954 = vpop.f32.mrf.mxu0
      %v955 = vpop.f32.mrf.mxu0
      %v956 = vadd.f32 0.0, %v955
      %v957 = vpop.f32.mrf.mxu0
      %958 = vmatprep.mubr.bf16.mxu0 0
      %959 = vmatmul.mubr.bf16.gmra.mxu0 %v354
      %v960 = vpop.f32.mrf.mxu0
      %v961 = vadd.f32 0.0, %v960
      %v962 = vpop.f32.mrf.mxu0
      %v963 = vpop.f32.mrf.mxu0
      %v964 = vadd.f32 0.0, %v963
      %v965 = vpop.f32.mrf.mxu0
      %966 = vmatprep.mubr.bf16.mxu0 0
      %967 = vmatmul.mubr.bf16.gmra.mxu0 %v357
      %v968 = vpop.f32.mrf.mxu0
      %v969 = vadd.f32 0.0, %v968
      %v970 = vpop.f32.mrf.mxu0
      %v971 = vpop.f32.mrf.mxu0
      %v972 = vadd.f32 0.0, %v971
      %v973 = vpop.f32.mrf.mxu0
      %974 = vmatprep.mubr.bf16.mxu0 0
      %975 = vmatmul.mubr.bf16.gmra.mxu0 %v360
      %v976 = vpop.f32.mrf.mxu0
      %v977 = vadd.f32 0.0, %v976
      %v978 = vpop.f32.mrf.mxu0
      %v979 = vpop.f32.mrf.mxu0
      %v980 = vadd.f32 0.0, %v979
      %v981 = vpop.f32.mrf.mxu0
      %982 = vmatprep.mubr.bf16.mxu0 0
      %983 = vmatmul.mubr.bf16.gmra.mxu0 %v899
      %v984 = vpop.f32.mrf.mxu0
      %v985 = vadd.f32 0.0, %v984
      %v986 = vpop.f32.mrf.mxu0
      %v987 = vpop.f32.mrf.mxu0
      %v988 = vadd.f32 0.0, %v987
      %v989 = vpop.f32.mrf.mxu0
      %990 = vmatprep.mubr.bf16.mxu0 0
      %991 = vmatmul.mubr.bf16.gmra.mxu0 %v902
      %v992 = vpop.f32.mrf.mxu0
      %v993 = vadd.f32 0.0, %v992
      %v994 = vpop.f32.mrf.mxu0
      %v995 = vpop.f32.mrf.mxu0
      %v996 = vadd.f32 0.0, %v995
      %v997 = vpop.f32.mrf.mxu0
      %998 = vmatprep.mubr.bf16.mxu0 0
      %999 = vmatmul.mubr.bf16.gmra.mxu0 %v905
      %v1000 = vpop.f32.mrf.mxu0
      %v1001 = vadd.f32 0.0, %v1000
      %v1002 = vpop.f32.mrf.mxu0
      %v1003 = vpop.f32.mrf.mxu0
      %v1004 = vadd.f32 0.0, %v1003
      %v1005 = vpop.f32.mrf.mxu0
      %1006 = vdwg.mxu0
      %v1007 = vadd.f32 %v858, %v945
      %v1008 = vadd.f32 %v859, %v948
      %v1009 = vadd.f32 %v860, %v953
      %v1010 = vadd.f32 %v861, %v956
      %v1011 = vadd.f32 %v862, %v961
      %v1012 = vadd.f32 %v863, %v964
      %v1013 = vadd.f32 %v864, %v969
      %v1014 = vadd.f32 %v865, %v972
      %v1015 = vadd.f32 %v866, %v977
      %v1016 = vadd.f32 %v867, %v980
      %v1017 = vadd.f32 %v868, %v985
      %v1018 = vadd.f32 %v869, %v988
      %v1019 = vadd.f32 %v870, %v993
      %v1020 = vadd.f32 %v871, %v996
      %v1021 = vadd.f32 %v872, %v1001
      %v1022 = vadd.f32 %v873, %v1004
      %s1023 = scalar_lea.vmem %s1, 10
      %v1024 = vld [vmem:[%s1023] sm:$0x3]
      %v1025 = vrot.slane %v750, 1
      %v1026 = vsel %vm584, %v598, %v1025
      %v1027 = vrot.slane %v751, 1
      %v1028 = vsel %vm584, %v1025, %v1027
      %v1029 = vrot.slane %v878, 1
      %v1030 = vsel %vm584, %v1027, %v1029
      %v1032 = vsel %vm340, %v1026, 0
      %v1035 = vsel %vm340, %v1028, 0
      %v1038 = vsel %vm340, %v1030, 0
      %v1041 = vsel %vm365, %v1024, 0
      %1043 = vmatprep.subr.bf16.mxu0 0
      %1044 = vmatpush1.bf16.msra.mxu0 0
      %1045 = vmatprep.subr.bf16.mxu0 0
      %1046 = vmatpush1.bf16.msra.mxu0 0
      %1047 = vmatprep.subr.bf16.mxu0 0
      %1048 = vmatpush1.bf16.msra.mxu0 0
      %1049 = vmatprep.subr.bf16.mxu0 0
      %1050 = vmatpush1.bf16.msra.mxu0 0
      %1051 = vmatprep.subr.bf16.mxu0 0
      %1052 = vmatpush1.bf16.msra.mxu0 0
      %1053 = vmatprep.subr.bf16.mxu0 0
      %1054 = vmatpush1.bf16.msra.mxu0 0
      %1055 = vmatprep.subr.bf16.mxu0 0
      %1056 = vmatpush1.bf16.msra.mxu0 0
      %1057 = vmatprep.subr.bf16.mxu0 0
      %1058 = vmatpush1.bf16.msra.mxu0 %v1041
      %1059 = vmatprep.subr.bf16.mxu0 0
      %1060 = vmatpush2.bf16.msra.mxu0 0
      %1061 = vmatprep.subr.bf16.mxu0 0
      %1062 = vmatpush2.bf16.msra.mxu0 0
      %1063 = vmatprep.subr.bf16.mxu0 0
      %1064 = vmatpush2.bf16.msra.mxu0 0
      %1065 = vmatprep.subr.bf16.mxu0 0
      %1066 = vmatpush2.bf16.msra.mxu0 0
      %1067 = vmatprep.subr.bf16.mxu0 0
      %1068 = vmatpush2.bf16.msra.mxu0 0
      %1069 = vmatprep.subr.bf16.mxu0 0
      %1070 = vmatpush2.bf16.msra.mxu0 0
      %1071 = vmatprep.subr.bf16.mxu0 0
      %1072 = vmatpush2.bf16.msra.mxu0 0
      %1073 = vmatprep.subr.bf16.mxu0 0
      %1074 = vmatpush2.bf16.msra.mxu0 0
      %1075 = vmatprep.mubr.bf16.mxu0 0
      %1076 = vmatmul.mubr.bf16.gmra.mxu0 %v609
      %v1077 = vpop.f32.mrf.mxu0
      %v1078 = vadd.f32 0.0, %v1077
      %v1079 = vpop.f32.mrf.mxu0
      %v1080 = vpop.f32.mrf.mxu0
      %v1081 = vadd.f32 0.0, %v1080
      %v1082 = vpop.f32.mrf.mxu0
      %1083 = vmatprep.mubr.bf16.mxu0 0
      %1084 = vmatmul.mubr.bf16.gmra.mxu0 %v612
      %v1085 = vpop.f32.mrf.mxu0
      %v1086 = vadd.f32 0.0, %v1085
      %v1087 = vpop.f32.mrf.mxu0
      %v1088 = vpop.f32.mrf.mxu0
      %v1089 = vadd.f32 0.0, %v1088
      %v1090 = vpop.f32.mrf.mxu0
      %1091 = vmatprep.mubr.bf16.mxu0 0
      %1092 = vmatmul.mubr.bf16.gmra.mxu0 %v615
      %v1093 = vpop.f32.mrf.mxu0
      %v1094 = vadd.f32 0.0, %v1093
      %v1095 = vpop.f32.mrf.mxu0
      %v1096 = vpop.f32.mrf.mxu0
      %v1097 = vadd.f32 0.0, %v1096
      %v1098 = vpop.f32.mrf.mxu0
      %1099 = vmatprep.mubr.bf16.mxu0 0
      %1100 = vmatmul.mubr.bf16.gmra.mxu0 %v618
      %v1101 = vpop.f32.mrf.mxu0
      %v1102 = vadd.f32 0.0, %v1101
      %v1103 = vpop.f32.mrf.mxu0
      %v1104 = vpop.f32.mrf.mxu0
      %v1105 = vadd.f32 0.0, %v1104
      %v1106 = vpop.f32.mrf.mxu0
      %1107 = vmatprep.mubr.bf16.mxu0 0
      %1108 = vmatmul.mubr.bf16.gmra.mxu0 %v621
      %v1109 = vpop.f32.mrf.mxu0
      %v1110 = vadd.f32 0.0, %v1109
      %v1111 = vpop.f32.mrf.mxu0
      %v1112 = vpop.f32.mrf.mxu0
      %v1113 = vadd.f32 0.0, %v1112
      %v1114 = vpop.f32.mrf.mxu0
      %1115 = vmatprep.mubr.bf16.mxu0 0
      %1116 = vmatmul.mubr.bf16.gmra.mxu0 %v1032
      %v1117 = vpop.f32.mrf.mxu0
      %v1118 = vadd.f32 0.0, %v1117
      %v1119 = vpop.f32.mrf.mxu0
      %v1120 = vpop.f32.mrf.mxu0
      %v1121 = vadd.f32 0.0, %v1120
      %v1122 = vpop.f32.mrf.mxu0
      %1123 = vmatprep.mubr.bf16.mxu0 0
      %1124 = vmatmul.mubr.bf16.gmra.mxu0 %v1035
      %v1125 = vpop.f32.mrf.mxu0
      %v1126 = vadd.f32 0.0, %v1125
      %v1127 = vpop.f32.mrf.mxu0
      %v1128 = vpop.f32.mrf.mxu0
      %v1129 = vadd.f32 0.0, %v1128
      %v1130 = vpop.f32.mrf.mxu0
      %1131 = vmatprep.mubr.bf16.mxu0 0
      %1132 = vmatmul.mubr.bf16.gmra.mxu0 %v1038
      %v1133 = vpop.f32.mrf.mxu0
      %v1134 = vadd.f32 0.0, %v1133
      %v1135 = vpop.f32.mrf.mxu0
      %v1136 = vpop.f32.mrf.mxu0
      %v1137 = vadd.f32 0.0, %v1136
      %v1138 = vpop.f32.mrf.mxu0
      %1139 = vdwg.mxu0
      %v1140 = vadd.f32 %v1007, %v1078
      %v1141 = vadd.f32 %v1008, %v1081
      %v1142 = vadd.f32 %v1009, %v1086
      %v1143 = vadd.f32 %v1010, %v1089
      %v1144 = vadd.f32 %v1011, %v1094
      %v1145 = vadd.f32 %v1012, %v1097
      %v1146 = vadd.f32 %v1013, %v1102
      %v1147 = vadd.f32 %v1014, %v1105
      %v1148 = vadd.f32 %v1015, %v1110
      %v1149 = vadd.f32 %v1016, %v1113
      %v1150 = vadd.f32 %v1017, %v1118
      %v1151 = vadd.f32 %v1018, %v1121
      %v1152 = vadd.f32 %v1019, %v1126
      %v1153 = vadd.f32 %v1020, %v1129
      %v1154 = vadd.f32 %v1021, %v1134
      %v1155 = vadd.f32 %v1022, %v1137
      %s1156 = scalar_lea.vmem %s1, 12
      %v1157 = vld [vmem:[%s1156] sm:$0x3]
      %v1161 = vunpack.c.l.b16 %v221
      %v1162 = vunpack.c.l.b16 %v222
      %v1163 = vunpack.c.l.b16 %v223
      %v1164 = vpack.c.b16 %v1161, %v877
      %v1165 = vpack.c.b16 %v1163, %v1162
      %v1167 = vsel %vm340, %v1164, 0
      %v1170 = vsel %vm340, %v1165, 0
      %v1173 = vsel %vm365, %v1157, 0
      %1175 = vmatprep.subr.bf16.mxu0 0
      %1176 = vmatpush1.bf16.msra.mxu0 0
      %1177 = vmatprep.subr.bf16.mxu0 0
      %1178 = vmatpush1.bf16.msra.mxu0 0
      %1179 = vmatprep.subr.bf16.mxu0 0
      %1180 = vmatpush1.bf16.msra.mxu0 0
      %1181 = vmatprep.subr.bf16.mxu0 0
      %1182 = vmatpush1.bf16.msra.mxu0 0
      %1183 = vmatprep.subr.bf16.mxu0 0
      %1184 = vmatpush1.bf16.msra.mxu0 0
      %1185 = vmatprep.subr.bf16.mxu0 0
      %1186 = vmatpush1.bf16.msra.mxu0 0
      %1187 = vmatprep.subr.bf16.mxu0 0
      %1188 = vmatpush1.bf16.msra.mxu0 0
      %1189 = vmatprep.subr.bf16.mxu0 0
      %1190 = vmatpush1.bf16.msra.mxu0 %v1173
      %1191 = vmatprep.subr.bf16.mxu0 0
      %1192 = vmatpush2.bf16.msra.mxu0 0
      %1193 = vmatprep.subr.bf16.mxu0 0
      %1194 = vmatpush2.bf16.msra.mxu0 0
      %1195 = vmatprep.subr.bf16.mxu0 0
      %1196 = vmatpush2.bf16.msra.mxu0 0
      %1197 = vmatprep.subr.bf16.mxu0 0
      %1198 = vmatpush2.bf16.msra.mxu0 0
      %1199 = vmatprep.subr.bf16.mxu0 0
      %1200 = vmatpush2.bf16.msra.mxu0 0
      %1201 = vmatprep.subr.bf16.mxu0 0
      %1202 = vmatpush2.bf16.msra.mxu0 0
      %1203 = vmatprep.subr.bf16.mxu0 0
      %1204 = vmatpush2.bf16.msra.mxu0 0
      %1205 = vmatprep.subr.bf16.mxu0 0
      %1206 = vmatpush2.bf16.msra.mxu0 0
      %1207 = vmatprep.mubr.bf16.mxu0 0
      %1208 = vmatmul.mubr.bf16.gmra.mxu0 %v474
      %v1209 = vpop.f32.mrf.mxu0
      %v1210 = vadd.f32 0.0, %v1209
      %v1211 = vpop.f32.mrf.mxu0
      %v1212 = vpop.f32.mrf.mxu0
      %v1213 = vadd.f32 0.0, %v1212
      %v1214 = vpop.f32.mrf.mxu0
      %1215 = vmatprep.mubr.bf16.mxu0 0
      %1216 = vmatmul.mubr.bf16.gmra.mxu0 %v476
      %v1217 = vpop.f32.mrf.mxu0
      %v1218 = vadd.f32 0.0, %v1217
      %v1219 = vpop.f32.mrf.mxu0
      %v1220 = vpop.f32.mrf.mxu0
      %v1221 = vadd.f32 0.0, %v1220
      %v1222 = vpop.f32.mrf.mxu0
      %1223 = vmatprep.mubr.bf16.mxu0 0
      %1224 = vmatmul.mubr.bf16.gmra.mxu0 %v478
      %v1225 = vpop.f32.mrf.mxu0
      %v1226 = vadd.f32 0.0, %v1225
      %v1227 = vpop.f32.mrf.mxu0
      %v1228 = vpop.f32.mrf.mxu0
      %v1229 = vadd.f32 0.0, %v1228
      %v1230 = vpop.f32.mrf.mxu0
      %1231 = vmatprep.mubr.bf16.mxu0 0
      %1232 = vmatmul.mubr.bf16.gmra.mxu0 %v480
      %v1233 = vpop.f32.mrf.mxu0
      %v1234 = vadd.f32 0.0, %v1233
      %v1235 = vpop.f32.mrf.mxu0
      %v1236 = vpop.f32.mrf.mxu0
      %v1237 = vadd.f32 0.0, %v1236
      %v1238 = vpop.f32.mrf.mxu0
      %1239 = vmatprep.mubr.bf16.mxu0 0
      %1240 = vmatmul.mubr.bf16.gmra.mxu0 %v753
      %v1241 = vpop.f32.mrf.mxu0
      %v1242 = vadd.f32 0.0, %v1241
      %v1243 = vpop.f32.mrf.mxu0
      %v1244 = vpop.f32.mrf.mxu0
      %v1245 = vadd.f32 0.0, %v1244
      %v1246 = vpop.f32.mrf.mxu0
      %1247 = vmatprep.mubr.bf16.mxu0 0
      %1248 = vmatmul.mubr.bf16.gmra.mxu0 %v756
      %v1249 = vpop.f32.mrf.mxu0
      %v1250 = vadd.f32 0.0, %v1249
      %v1251 = vpop.f32.mrf.mxu0
      %v1252 = vpop.f32.mrf.mxu0
      %v1253 = vadd.f32 0.0, %v1252
      %v1254 = vpop.f32.mrf.mxu0
      %1255 = vmatprep.mubr.bf16.mxu0 0
      %1256 = vmatmul.mubr.bf16.gmra.mxu0 %v1167
      %v1257 = vpop.f32.mrf.mxu0
      %v1258 = vadd.f32 0.0, %v1257
      %v1259 = vpop.f32.mrf.mxu0
      %v1260 = vpop.f32.mrf.mxu0
      %v1261 = vadd.f32 0.0, %v1260
      %v1262 = vpop.f32.mrf.mxu0
      %1263 = vmatprep.mubr.bf16.mxu0 0
      %1264 = vmatmul.mubr.bf16.gmra.mxu0 %v1170
      %v1265 = vpop.f32.mrf.mxu0
      %v1266 = vadd.f32 0.0, %v1265
      %v1267 = vpop.f32.mrf.mxu0
      %v1268 = vpop.f32.mrf.mxu0
      %v1269 = vadd.f32 0.0, %v1268
      %v1270 = vpop.f32.mrf.mxu0
      %1271 = vdwg.mxu0
      %v1272 = vadd.f32 %v1140, %v1210
      %v1273 = vadd.f32 %v1141, %v1213
      %v1274 = vadd.f32 %v1142, %v1218
      %v1275 = vadd.f32 %v1143, %v1221
      %v1276 = vadd.f32 %v1144, %v1226
      %v1277 = vadd.f32 %v1145, %v1229
      %v1278 = vadd.f32 %v1146, %v1234
      %v1279 = vadd.f32 %v1147, %v1237
      %v1280 = vadd.f32 %v1148, %v1242
      %v1281 = vadd.f32 %v1149, %v1245
      %v1282 = vadd.f32 %v1150, %v1250
      %v1283 = vadd.f32 %v1151, %v1253
      %v1284 = vadd.f32 %v1152, %v1258
      %v1285 = vadd.f32 %v1153, %v1261
      %v1286 = vadd.f32 %v1154, %v1266
      %v1287 = vadd.f32 %v1155, %v1269
      %s1288 = scalar_lea.vmem %s1, 14
      %v1289 = vld [vmem:[%s1288] sm:$0x3]
      %v1291 = vunpack.c.l.b16 %v224
      %v1292 = vpack.c.b16 %v1291, %v1291
      %v1293 = vshll.u32 %v1164, 16
      %v1295 = vrot.slane %v1293, 1
      %v1296 = vsel %vm271, %v892, %v1295
      %v1297 = vshrl.u32 %v1164, 16
      %v1299 = vor.u32 %v1297, %v1295
      %v1300 = vshll.u32 %v1165, 16
      %v1302 = vrot.slane %v1300, 1
      %v1303 = vsel %vm271, %v1299, %v1302
      %v1304 = vshrl.u32 %v1165, 16
      %v1306 = vor.u32 %v1304, %v1302
      %v1308 = vshll.u32 %v1292, 16
      %v1310 = vrot.slane %v1308, 1
      %v1311 = vsel %vm271, %v1306, %v1310
      %v1313 = vsel %vm340, %v1296, 0
      %v1316 = vsel %vm340, %v1303, 0
      %v1319 = vsel %vm340, %v1311, 0
      %v1322 = vsel %vm365, %v1289, 0
      %1324 = vmatprep.subr.bf16.mxu0 0
      %1325 = vmatpush1.bf16.msra.mxu0 0
      %1326 = vmatprep.subr.bf16.mxu0 0
      %1327 = vmatpush1.bf16.msra.mxu0 0
      %1328 = vmatprep.subr.bf16.mxu0 0
      %1329 = vmatpush1.bf16.msra.mxu0 0
      %1330 = vmatprep.subr.bf16.mxu0 0
      %1331 = vmatpush1.bf16.msra.mxu0 0
      %1332 = vmatprep.subr.bf16.mxu0 0
      %1333 = vmatpush1.bf16.msra.mxu0 0
      %1334 = vmatprep.subr.bf16.mxu0 0
      %1335 = vmatpush1.bf16.msra.mxu0 0
      %1336 = vmatprep.subr.bf16.mxu0 0
      %1337 = vmatpush1.bf16.msra.mxu0 0
      %1338 = vmatprep.subr.bf16.mxu0 0
      %1339 = vmatpush1.bf16.msra.mxu0 %v1322
      %1340 = vmatprep.subr.bf16.mxu0 0
      %1341 = vmatpush2.bf16.msra.mxu0 0
      %1342 = vmatprep.subr.bf16.mxu0 0
      %1343 = vmatpush2.bf16.msra.mxu0 0
      %1344 = vmatprep.subr.bf16.mxu0 0
      %1345 = vmatpush2.bf16.msra.mxu0 0
      %1346 = vmatprep.subr.bf16.mxu0 0
      %1347 = vmatpush2.bf16.msra.mxu0 0
      %1348 = vmatprep.subr.bf16.mxu0 0
      %1349 = vmatpush2.bf16.msra.mxu0 0
      %1350 = vmatprep.subr.bf16.mxu0 0
      %1351 = vmatpush2.bf16.msra.mxu0 0
      %1352 = vmatprep.subr.bf16.mxu0 0
      %1353 = vmatpush2.bf16.msra.mxu0 0
      %1354 = vmatprep.subr.bf16.mxu0 0
      %1355 = vmatpush2.bf16.msra.mxu0 0
      %1356 = vmatprep.mubr.bf16.mxu0 0
      %1357 = vmatmul.mubr.bf16.gmra.mxu0 %v354
      %v1358 = vpop.f32.mrf.mxu0
      %v1359 = vadd.f32 0.0, %v1358
      %v1360 = vpop.f32.mrf.mxu0
      %v1361 = vpop.f32.mrf.mxu0
      %v1362 = vadd.f32 0.0, %v1361
      %v1363 = vpop.f32.mrf.mxu0
      %1364 = vmatprep.mubr.bf16.mxu0 0
      %1365 = vmatmul.mubr.bf16.gmra.mxu0 %v357
      %v1366 = vpop.f32.mrf.mxu0
      %v1367 = vadd.f32 0.0, %v1366
      %v1368 = vpop.f32.mrf.mxu0
      %v1369 = vpop.f32.mrf.mxu0
      %v1370 = vadd.f32 0.0, %v1369
      %v1371 = vpop.f32.mrf.mxu0
      %1372 = vmatprep.mubr.bf16.mxu0 0
      %1373 = vmatmul.mubr.bf16.gmra.mxu0 %v360
      %v1374 = vpop.f32.mrf.mxu0
      %v1375 = vadd.f32 0.0, %v1374
      %v1376 = vpop.f32.mrf.mxu0
      %v1377 = vpop.f32.mrf.mxu0
      %v1378 = vadd.f32 0.0, %v1377
      %v1379 = vpop.f32.mrf.mxu0
      %1380 = vmatprep.mubr.bf16.mxu0 0
      %1381 = vmatmul.mubr.bf16.gmra.mxu0 %v899
      %v1382 = vpop.f32.mrf.mxu0
      %v1383 = vadd.f32 0.0, %v1382
      %v1384 = vpop.f32.mrf.mxu0
      %v1385 = vpop.f32.mrf.mxu0
      %v1386 = vadd.f32 0.0, %v1385
      %v1387 = vpop.f32.mrf.mxu0
      %1388 = vmatprep.mubr.bf16.mxu0 0
      %1389 = vmatmul.mubr.bf16.gmra.mxu0 %v902
      %v1390 = vpop.f32.mrf.mxu0
      %v1391 = vadd.f32 0.0, %v1390
      %v1392 = vpop.f32.mrf.mxu0
      %v1393 = vpop.f32.mrf.mxu0
      %v1394 = vadd.f32 0.0, %v1393
      %v1395 = vpop.f32.mrf.mxu0
      %1396 = vmatprep.mubr.bf16.mxu0 0
      %1397 = vmatmul.mubr.bf16.gmra.mxu0 %v1313
      %v1398 = vpop.f32.mrf.mxu0
      %v1399 = vadd.f32 0.0, %v1398
      %v1400 = vpop.f32.mrf.mxu0
      %v1401 = vpop.f32.mrf.mxu0
      %v1402 = vadd.f32 0.0, %v1401
      %v1403 = vpop.f32.mrf.mxu0
      %1404 = vmatprep.mubr.bf16.mxu0 0
      %1405 = vmatmul.mubr.bf16.gmra.mxu0 %v1316
      %v1406 = vpop.f32.mrf.mxu0
      %v1407 = vadd.f32 0.0, %v1406
      %v1408 = vpop.f32.mrf.mxu0
      %v1409 = vpop.f32.mrf.mxu0
      %v1410 = vadd.f32 0.0, %v1409
      %v1411 = vpop.f32.mrf.mxu0
      %1412 = vmatprep.mubr.bf16.mxu0 0
      %1413 = vmatmul.mubr.bf16.gmra.mxu0 %v1319
      %v1414 = vpop.f32.mrf.mxu0
      %v1415 = vadd.f32 0.0, %v1414
      %v1416 = vpop.f32.mrf.mxu0
      %v1417 = vpop.f32.mrf.mxu0
      %v1418 = vadd.f32 0.0, %v1417
      %v1419 = vpop.f32.mrf.mxu0
      %1420 = vdwg.mxu0
      %v1421 = vadd.f32 %v1272, %v1359
      %v1422 = vadd.f32 %v1273, %v1362
      %v1423 = vadd.f32 %v1274, %v1367
      %v1424 = vadd.f32 %v1275, %v1370
      %v1425 = vadd.f32 %v1276, %v1375
      %v1426 = vadd.f32 %v1277, %v1378
      %v1427 = vadd.f32 %v1278, %v1383
      %v1428 = vadd.f32 %v1279, %v1386
      %v1429 = vadd.f32 %v1280, %v1391
      %v1430 = vadd.f32 %v1281, %v1394
      %v1431 = vadd.f32 %v1282, %v1399
      %v1432 = vadd.f32 %v1283, %v1402
      %v1433 = vadd.f32 %v1284, %v1407
      %v1434 = vadd.f32 %v1285, %v1410
      %v1435 = vadd.f32 %v1286, %v1415
      %v1436 = vadd.f32 %v1287, %v1418
      %s1437 = scalar_lea.vmem %s1, 16
      %v1438 = vld [vmem:[%s1437] sm:$0x3]
      %v1439 = vrot.slane %v1164, 1
      %v1440 = vsel %vm584, %v1027, %v1439
      %v1441 = vrot.slane %v1165, 1
      %v1442 = vsel %vm584, %v1439, %v1441
      %v1443 = vrot.slane %v1292, 1
      %v1444 = vsel %vm584, %v1441, %v1443
      %v1446 = vsel %vm340, %v1440, 0
      %v1449 = vsel %vm340, %v1442, 0
      %v1452 = vsel %vm340, %v1444, 0
      %v1455 = vsel %vm365, %v1438, 0
      %1457 = vmatprep.subr.bf16.mxu0 0
      %1458 = vmatpush1.bf16.msra.mxu0 0
      %1459 = vmatprep.subr.bf16.mxu0 0
      %1460 = vmatpush1.bf16.msra.mxu0 0
      %1461 = vmatprep.subr.bf16.mxu0 0
      %1462 = vmatpush1.bf16.msra.mxu0 0
      %1463 = vmatprep.subr.bf16.mxu0 0
      %1464 = vmatpush1.bf16.msra.mxu0 0
      %1465 = vmatprep.subr.bf16.mxu0 0
      %1466 = vmatpush1.bf16.msra.mxu0 0
      %1467 = vmatprep.subr.bf16.mxu0 0
      %1468 = vmatpush1.bf16.msra.mxu0 0
      %1469 = vmatprep.subr.bf16.mxu0 0
      %1470 = vmatpush1.bf16.msra.mxu0 0
      %1471 = vmatprep.subr.bf16.mxu0 0
      %1472 = vmatpush1.bf16.msra.mxu0 %v1455
      %1473 = vmatprep.subr.bf16.mxu0 0
      %1474 = vmatpush2.bf16.msra.mxu0 0
      %1475 = vmatprep.subr.bf16.mxu0 0
      %1476 = vmatpush2.bf16.msra.mxu0 0
      %1477 = vmatprep.subr.bf16.mxu0 0
      %1478 = vmatpush2.bf16.msra.mxu0 0
      %1479 = vmatprep.subr.bf16.mxu0 0
      %1480 = vmatpush2.bf16.msra.mxu0 0
      %1481 = vmatprep.subr.bf16.mxu0 0
      %1482 = vmatpush2.bf16.msra.mxu0 0
      %1483 = vmatprep.subr.bf16.mxu0 0
      %1484 = vmatpush2.bf16.msra.mxu0 0
      %1485 = vmatprep.subr.bf16.mxu0 0
      %1486 = vmatpush2.bf16.msra.mxu0 0
      %1487 = vmatprep.subr.bf16.mxu0 0
      %1488 = vmatpush2.bf16.msra.mxu0 0
      %1489 = vmatprep.mubr.bf16.mxu0 0
      %1490 = vmatmul.mubr.bf16.gmra.mxu0 %v615
      %v1491 = vpop.f32.mrf.mxu0
      %v1492 = vadd.f32 0.0, %v1491
      %v1493 = vpop.f32.mrf.mxu0
      %v1494 = vpop.f32.mrf.mxu0
      %v1495 = vadd.f32 0.0, %v1494
      %v1496 = vpop.f32.mrf.mxu0
      %1497 = vmatprep.mubr.bf16.mxu0 0
      %1498 = vmatmul.mubr.bf16.gmra.mxu0 %v618
      %v1499 = vpop.f32.mrf.mxu0
      %v1500 = vadd.f32 0.0, %v1499
      %v1501 = vpop.f32.mrf.mxu0
      %v1502 = vpop.f32.mrf.mxu0
      %v1503 = vadd.f32 0.0, %v1502
      %v1504 = vpop.f32.mrf.mxu0
      %1505 = vmatprep.mubr.bf16.mxu0 0
      %1506 = vmatmul.mubr.bf16.gmra.mxu0 %v621
      %v1507 = vpop.f32.mrf.mxu0
      %v1508 = vadd.f32 0.0, %v1507
      %v1509 = vpop.f32.mrf.mxu0
      %v1510 = vpop.f32.mrf.mxu0
      %v1511 = vadd.f32 0.0, %v1510
      %v1512 = vpop.f32.mrf.mxu0
      %1513 = vmatprep.mubr.bf16.mxu0 0
      %1514 = vmatmul.mubr.bf16.gmra.mxu0 %v1032
      %v1515 = vpop.f32.mrf.mxu0
      %v1516 = vadd.f32 0.0, %v1515
      %v1517 = vpop.f32.mrf.mxu0
      %v1518 = vpop.f32.mrf.mxu0
      %v1519 = vadd.f32 0.0, %v1518
      %v1520 = vpop.f32.mrf.mxu0
      %1521 = vmatprep.mubr.bf16.mxu0 0
      %1522 = vmatmul.mubr.bf16.gmra.mxu0 %v1035
      %v1523 = vpop.f32.mrf.mxu0
      %v1524 = vadd.f32 0.0, %v1523
      %v1525 = vpop.f32.mrf.mxu0
      %v1526 = vpop.f32.mrf.mxu0
      %v1527 = vadd.f32 0.0, %v1526
      %v1528 = vpop.f32.mrf.mxu0
      %1529 = vmatprep.mubr.bf16.mxu0 0
      %1530 = vmatmul.mubr.bf16.gmra.mxu0 %v1446
      %v1531 = vpop.f32.mrf.mxu0
      %v1532 = vadd.f32 0.0, %v1531
      %v1533 = vpop.f32.mrf.mxu0
      %v1534 = vpop.f32.mrf.mxu0
      %v1535 = vadd.f32 0.0, %v1534
      %v1536 = vpop.f32.mrf.mxu0
      %1537 = vmatprep.mubr.bf16.mxu0 0
      %1538 = vmatmul.mubr.bf16.gmra.mxu0 %v1449
      %v1539 = vpop.f32.mrf.mxu0
      %v1540 = vadd.f32 0.0, %v1539
      %v1541 = vpop.f32.mrf.mxu0
      %v1542 = vpop.f32.mrf.mxu0
      %v1543 = vadd.f32 0.0, %v1542
      %v1544 = vpop.f32.mrf.mxu0
      %1545 = vmatprep.mubr.bf16.mxu0 0
      %1546 = vmatmul.mubr.bf16.gmra.mxu0 %v1452
      %v1547 = vpop.f32.mrf.mxu0
      %v1548 = vadd.f32 0.0, %v1547
      %v1549 = vpop.f32.mrf.mxu0
      %v1550 = vpop.f32.mrf.mxu0
      %v1551 = vadd.f32 0.0, %v1550
      %v1552 = vpop.f32.mrf.mxu0
      %1553 = vdwg.mxu0
      %v1554 = vadd.f32 %v1421, %v1492
      %v1555 = vadd.f32 %v1422, %v1495
      %v1556 = vadd.f32 %v1423, %v1500
      %v1557 = vadd.f32 %v1424, %v1503
      %v1558 = vadd.f32 %v1425, %v1508
      %v1559 = vadd.f32 %v1426, %v1511
      %v1560 = vadd.f32 %v1427, %v1516
      %v1561 = vadd.f32 %v1428, %v1519
      %v1562 = vadd.f32 %v1429, %v1524
      %v1563 = vadd.f32 %v1430, %v1527
      %v1564 = vadd.f32 %v1431, %v1532
      %v1565 = vadd.f32 %v1432, %v1535
      %v1566 = vadd.f32 %v1433, %v1540
      %v1567 = vadd.f32 %v1434, %v1543
      %v1568 = vadd.f32 %v1435, %v1548
      %v1569 = vadd.f32 %v1436, %v1551
      %v1570 = vld [vmem:[%s2] sm:$0x1]
      %v1572 = vlaneseq
      %v1573 = vshrl.u32 %v1572, 7
      %v1574 = vsub.s32 0, %v1573
      %v1575 = vrot.slane %v1570, %v1574
      %v1577 = vadd.f32 %v1554, %v1575
      %v1578 = vadd.f32 %v1555, %v1575
      %v1579 = vadd.f32 %v1556, %v1575
      %v1580 = vadd.f32 %v1557, %v1575
      %v1581 = vadd.f32 %v1558, %v1575
      %v1582 = vadd.f32 %v1559, %v1575
      %v1583 = vadd.f32 %v1560, %v1575
      %v1584 = vadd.f32 %v1561, %v1575
      %v1585 = vadd.f32 %v1562, %v1575
      %v1586 = vadd.f32 %v1563, %v1575
      %v1587 = vadd.f32 %v1564, %v1575
      %v1588 = vadd.f32 %v1565, %v1575
      %v1589 = vadd.f32 %v1566, %v1575
      %v1590 = vadd.f32 %v1567, %v1575
      %v1591 = vadd.f32 %v1568, %v1575
      %v1592 = vadd.f32 %v1569, %v1575
      %v1593 = vmax.f32 %v1577, 0.0
      %v1594 = vmax.f32 %v1578, 0.0
      %v1595 = vmax.f32 %v1579, 0.0
      %v1596 = vmax.f32 %v1580, 0.0
      %v1597 = vmax.f32 %v1581, 0.0
      %v1598 = vmax.f32 %v1582, 0.0
      %v1599 = vmax.f32 %v1583, 0.0
      %v1600 = vmax.f32 %v1584, 0.0
      %v1601 = vmax.f32 %v1585, 0.0
      %v1602 = vmax.f32 %v1586, 0.0
      %v1603 = vmax.f32 %v1587, 0.0
      %v1604 = vmax.f32 %v1588, 0.0
      %v1605 = vmax.f32 %v1589, 0.0
      %v1606 = vmax.f32 %v1590, 0.0
      %v1607 = vmax.f32 %v1591, 0.0
      %v1608 = vmax.f32 %v1592, 0.0
      %v1609 = vpack.c.bf16 %v1594, %v1593
      %v1610 = vpack.c.bf16 %v1596, %v1595
      %v1611 = vpack.c.bf16 %v1598, %v1597
      %v1612 = vpack.c.bf16 %v1600, %v1599
      %v1613 = vpack.c.bf16 %v1602, %v1601
      %v1614 = vpack.c.bf16 %v1604, %v1603
      %v1615 = vpack.c.bf16 %v1606, %v1605
      %v1616 = vpack.c.bf16 %v1608, %v1607
      %v1625 = vunpack.c.l.b16 %v1609
      %v1626 = vunpack.c.h.b16 %v1609
      %v1627 = vunpack.c.l.b16 %v1610
      %v1628 = vunpack.c.h.b16 %v1610
      %v1629 = vunpack.c.l.b16 %v1611
      %v1630 = vunpack.c.h.b16 %v1611
      %v1631 = vunpack.c.l.b16 %v1612
      %v1632 = vunpack.c.h.b16 %v1612
      %v1633 = vunpack.c.l.b16 %v1613
      %v1634 = vunpack.c.h.b16 %v1613
      %v1635 = vunpack.c.l.b16 %v1614
      %v1636 = vunpack.c.h.b16 %v1614
      %v1637 = vunpack.c.l.b16 %v1615
      %v1638 = vunpack.c.h.b16 %v1615
      %v1639 = vunpack.c.l.b16 %v1616
      %v1640 = vunpack.c.h.b16 %v1616
      %v1641 = vpack.c.b16 %v1625, %v1625
      %v1642 = vpack.c.b16 %v1626, %v1626
      %v1643 = vpack.c.b16 %v1627, %v1627
      %v1644 = vpack.c.b16 %v1628, %v1628
      %v1645 = vpack.c.b16 %v1629, %v1629
      %v1646 = vpack.c.b16 %v1630, %v1630
      %v1647 = vpack.c.b16 %v1631, %v1631
      %v1648 = vpack.c.b16 %v1632, %v1632
      %v1649 = vpack.c.b16 %v1633, %v1633
      %v1650 = vpack.c.b16 %v1634, %v1634
      %v1651 = vpack.c.b16 %v1635, %v1635
      %v1652 = vpack.c.b16 %v1636, %v1636
      %v1653 = vpack.c.b16 %v1637, %v1637
      %v1654 = vpack.c.b16 %v1638, %v1638
      %v1655 = vpack.c.b16 %v1639, %v1639
      %v1656 = vpack.c.b16 %v1640, %v1640
      %vm1673 = vcmask 27648
      %1674 = vst.msk [vmem:[%s192] sm:$0xf] %vm1673, %v1641
      %1675 = vst.msk [vmem:[%s192 + $0x4] sm:$0xf] %vm1673, %v1642
      %1676 = vst.msk [vmem:[%s192 + $0x8] sm:$0xf] %vm1673, %v1643
      %1677 = vst.msk [vmem:[%s192 + $0xc] sm:$0xf] %vm1673, %v1644
      %1678 = vst.msk [vmem:[%s192 + $0x10] sm:$0xf] %vm1673, %v1645
      %1679 = vst.msk [vmem:[%s192 + $0x14] sm:$0xf] %vm1673, %v1646
      %1680 = vst.msk [vmem:[%s192 + $0x18] sm:$0xf] %vm1673, %v1647
      %1681 = vst.msk [vmem:[%s192 + $0x1c] sm:$0xf] %vm1673, %v1648
      %1682 = vst.msk [vmem:[%s192 + $0x20] sm:$0xf] %vm1673, %v1649
      %1683 = vst.msk [vmem:[%s192 + $0x24] sm:$0xf] %vm1673, %v1650
      %1684 = vst.msk [vmem:[%s192 + $0x28] sm:$0xf] %vm1673, %v1651
      %1685 = vst.msk [vmem:[%s192 + $0x2c] sm:$0xf] %vm1673, %v1652
      %1686 = vst.msk [vmem:[%s192 + $0x30] sm:$0xf] %vm1673, %v1653
      %1687 = vst.msk [vmem:[%s192 + $0x34] sm:$0xf] %vm1673, %v1654
      %1688 = vst.msk [vmem:[%s192 + $0x38] sm:$0xf] %vm1673, %v1655
      %1689 = vst.msk [vmem:[%s192 + $0x3c] sm:$0xf] %vm1673, %v1656
      %s1690 = sadd.s32 %s195, 128
      %s1691 = sshra.s32 %s1690, 3
      %s1692 = sand.u32 %s1690, 7
      %s1693 = smul.addr %s1691, 4
      %s1694 = scalar_lea.vmem %s183, %s1693
      %v1695 = vld [vmem:[%s1694] sm:$0xf]
      %v1696 = vld [vmem:[%s1694 + $0x4] sm:$0xf]
      %v1697 = vld [vmem:[%s1694 + $0x8] sm:$0xf]
      %v1698 = vld [vmem:[%s1694 + $0xc] sm:$0xf]
      %v1699 = vld [vmem:[%s1694 + $0x10] sm:$0xf]
      %v1700 = vld [vmem:[%s1694 + $0x14] sm:$0xf]
      %v1701 = vld [vmem:[%s1694 + $0x18] sm:$0xf]
      %v1702 = vld [vmem:[%s1694 + $0x1c] sm:$0xf]
      %v1703 = vld [vmem:[%s1694 + $0x20] sm:$0xf]
      %v1704 = vld [vmem:[%s1694 + $0x24] sm:$0xf]
      %v1705 = vld [vmem:[%s1694 + $0x28] sm:$0xf]
      %v1706 = vld [vmem:[%s1694 + $0x2c] sm:$0xf]
      %v1707 = vld [vmem:[%s1694 + $0x30] sm:$0xf]
      %v1708 = vld [vmem:[%s1694 + $0x34] sm:$0xf]
      %v1709 = vld [vmem:[%s1694 + $0x38] sm:$0xf]
      %v1710 = vld [vmem:[%s1694 + $0x3c] sm:$0xf]
      %v1711 = vld [vmem:[%s1694 + $0x40] sm:$0xf]
      %v1712 = vld [vmem:[%s1694 + $0x44] sm:$0xf]
      %v1713 = vld [vmem:[%s1694 + $0x48] sm:$0xf]
      %v1714 = vld [vmem:[%s1694 + $0x4c] sm:$0xf]
      %v1715 = vld [vmem:[%s1694 + $0x50] sm:$0xf]
      %v1716 = vld [vmem:[%s1694 + $0x54] sm:$0xf]
      %v1717 = vld [vmem:[%s1694 + $0x58] sm:$0xf]
      %v1718 = vld [vmem:[%s1694 + $0x5c] sm:$0xf]
      %v1719 = vld [vmem:[%s1694 + $0x60] sm:$0xf]
      %v1720 = vld [vmem:[%s1] sm:$0x3]
      %v1721 = vld [vmem:[%s226] sm:$0x3]
      %v1739 = vunpack.c.l.b16 %v1695
      %v1740 = vunpack.c.l.b16 %v1696
      %v1741 = vunpack.c.l.b16 %v1697
      %v1742 = vunpack.c.l.b16 %v1698
      %v1743 = vunpack.c.l.b16 %v1699
      %v1744 = vunpack.c.l.b16 %v1700
      %v1745 = vunpack.c.l.b16 %v1701
      %v1746 = vunpack.c.l.b16 %v1702
      %v1747 = vunpack.c.l.b16 %v1703
      %v1748 = vunpack.c.l.b16 %v1704
      %v1749 = vunpack.c.l.b16 %v1705
      %v1750 = vunpack.c.l.b16 %v1706
      %v1751 = vunpack.c.l.b16 %v1707
      %v1752 = vunpack.c.l.b16 %v1708
      %v1753 = vunpack.c.l.b16 %v1709
      %v1754 = vunpack.c.l.b16 %v1710
      %v1755 = vunpack.c.l.b16 %v1711
      %v1756 = vpack.c.b16 %v1740, %v1739
      %v1757 = vpack.c.b16 %v1742, %v1741
      %v1758 = vpack.c.b16 %v1744, %v1743
      %v1759 = vpack.c.b16 %v1746, %v1745
      %v1760 = vpack.c.b16 %v1748, %v1747
      %v1761 = vpack.c.b16 %v1750, %v1749
      %v1762 = vpack.c.b16 %v1752, %v1751
      %v1763 = vpack.c.b16 %v1754, %v1753
      %v1764 = vpack.c.b16 %v1755, %v1755
      %v1766 = vshrl.u32 %v1756, 16
      %v1768 = vshll.u32 %v1756, 16
      %v1770 = vrot.slane %v1768, 1
      %v1771 = vor.u32 %v1766, %v1770
      %v1773 = vshll.u32 %v1757, 16
      %v1775 = vrot.slane %v1773, 1
      %v1776 = vsel %vm271, %v1771, %v1775
      %v1777 = vshrl.u32 %v1757, 16
      %v1779 = vor.u32 %v1777, %v1775
      %v1781 = vshll.u32 %v1758, 16
      %v1783 = vrot.slane %v1781, 1
      %v1784 = vsel %vm271, %v1779, %v1783
      %v1785 = vshrl.u32 %v1758, 16
      %v1787 = vor.u32 %v1785, %v1783
      %v1789 = vshll.u32 %v1759, 16
      %v1791 = vrot.slane %v1789, 1
      %v1792 = vsel %vm271, %v1787, %v1791
      %v1793 = vshrl.u32 %v1759, 16
      %v1795 = vor.u32 %v1793, %v1791
      %v1797 = vshll.u32 %v1760, 16
      %v1799 = vrot.slane %v1797, 1
      %v1800 = vsel %vm271, %v1795, %v1799
      %v1801 = vshrl.u32 %v1760, 16
      %v1803 = vor.u32 %v1801, %v1799
      %v1805 = vshll.u32 %v1761, 16
      %v1807 = vrot.slane %v1805, 1
      %v1808 = vsel %vm271, %v1803, %v1807
      %v1809 = vshrl.u32 %v1761, 16
      %v1811 = vor.u32 %v1809, %v1807
      %v1813 = vshll.u32 %v1762, 16
      %v1815 = vrot.slane %v1813, 1
      %v1816 = vsel %vm271, %v1811, %v1815
      %v1817 = vshrl.u32 %v1762, 16
      %v1819 = vor.u32 %v1817, %v1815
      %v1821 = vshll.u32 %v1763, 16
      %v1823 = vrot.slane %v1821, 1
      %v1824 = vsel %vm271, %v1819, %v1823
      %v1825 = vshrl.u32 %v1763, 16
      %v1827 = vor.u32 %v1825, %v1823
      %v1829 = vshll.u32 %v1764, 16
      %v1831 = vrot.slane %v1829, 1
      %v1832 = vsel %vm271, %v1827, %v1831
      %v1834 = vsel %vm340, %v1776, 0
      %v1837 = vsel %vm340, %v1784, 0
      %v1840 = vsel %vm340, %v1792, 0
      %v1843 = vsel %vm340, %v1800, 0
      %v1846 = vsel %vm340, %v1808, 0
      %v1849 = vsel %vm340, %v1816, 0
      %v1852 = vsel %vm340, %v1824, 0
      %v1855 = vsel %vm340, %v1832, 0
      %v1858 = vsel %vm365, %v1721, 0
      %1860 = vmatprep.subr.bf16.mxu0 0
      %1861 = vmatpush1.bf16.msra.mxu0 0
      %1862 = vmatprep.subr.bf16.mxu0 0
      %1863 = vmatpush1.bf16.msra.mxu0 0
      %1864 = vmatprep.subr.bf16.mxu0 0
      %1865 = vmatpush1.bf16.msra.mxu0 0
      %1866 = vmatprep.subr.bf16.mxu0 0
      %1867 = vmatpush1.bf16.msra.mxu0 0
      %1868 = vmatprep.subr.bf16.mxu0 0
      %1869 = vmatpush1.bf16.msra.mxu0 0
      %1870 = vmatprep.subr.bf16.mxu0 0
      %1871 = vmatpush1.bf16.msra.mxu0 0
      %1872 = vmatprep.subr.bf16.mxu0 0
      %1873 = vmatpush1.bf16.msra.mxu0 0
      %1874 = vmatprep.subr.bf16.mxu0 0
      %1875 = vmatpush1.bf16.msra.mxu0 %v1858
      %1876 = vmatprep.subr.bf16.mxu0 0
      %1877 = vmatpush2.bf16.msra.mxu0 0
      %1878 = vmatprep.subr.bf16.mxu0 0
      %1879 = vmatpush2.bf16.msra.mxu0 0
      %1880 = vmatprep.subr.bf16.mxu0 0
      %1881 = vmatpush2.bf16.msra.mxu0 0
      %1882 = vmatprep.subr.bf16.mxu0 0
      %1883 = vmatpush2.bf16.msra.mxu0 0
      %1884 = vmatprep.subr.bf16.mxu0 0
      %1885 = vmatpush2.bf16.msra.mxu0 0
      %1886 = vmatprep.subr.bf16.mxu0 0
      %1887 = vmatpush2.bf16.msra.mxu0 0
      %1888 = vmatprep.subr.bf16.mxu0 0
      %1889 = vmatpush2.bf16.msra.mxu0 0
      %1890 = vmatprep.subr.bf16.mxu0 0
      %1891 = vmatpush2.bf16.msra.mxu0 0
      %1892 = vmatprep.mubr.bf16.mxu0 0
      %1893 = vmatmul.mubr.bf16.gmra.mxu0 %v1834
      %v1894 = vpop.f32.mrf.mxu0
      %v1895 = vadd.f32 0.0, %v1894
      %v1896 = vpop.f32.mrf.mxu0
      %v1897 = vpop.f32.mrf.mxu0
      %v1898 = vadd.f32 0.0, %v1897
      %v1899 = vpop.f32.mrf.mxu0
      %1900 = vmatprep.mubr.bf16.mxu0 0
      %1901 = vmatmul.mubr.bf16.gmra.mxu0 %v1837
      %v1902 = vpop.f32.mrf.mxu0
      %v1903 = vadd.f32 0.0, %v1902
      %v1904 = vpop.f32.mrf.mxu0
      %v1905 = vpop.f32.mrf.mxu0
      %v1906 = vadd.f32 0.0, %v1905
      %v1907 = vpop.f32.mrf.mxu0
      %1908 = vmatprep.mubr.bf16.mxu0 0
      %1909 = vmatmul.mubr.bf16.gmra.mxu0 %v1840
      %v1910 = vpop.f32.mrf.mxu0
      %v1911 = vadd.f32 0.0, %v1910
      %v1912 = vpop.f32.mrf.mxu0
      %v1913 = vpop.f32.mrf.mxu0
      %v1914 = vadd.f32 0.0, %v1913
      %v1915 = vpop.f32.mrf.mxu0
      %1916 = vmatprep.mubr.bf16.mxu0 0
      %1917 = vmatmul.mubr.bf16.gmra.mxu0 %v1843
      %v1918 = vpop.f32.mrf.mxu0
      %v1919 = vadd.f32 0.0, %v1918
      %v1920 = vpop.f32.mrf.mxu0
      %v1921 = vpop.f32.mrf.mxu0
      %v1922 = vadd.f32 0.0, %v1921
      %v1923 = vpop.f32.mrf.mxu0
      %1924 = vmatprep.mubr.bf16.mxu0 0
      %1925 = vmatmul.mubr.bf16.gmra.mxu0 %v1846
      %v1926 = vpop.f32.mrf.mxu0
      %v1927 = vadd.f32 0.0, %v1926
      %v1928 = vpop.f32.mrf.mxu0
      %v1929 = vpop.f32.mrf.mxu0
      %v1930 = vadd.f32 0.0, %v1929
      %v1931 = vpop.f32.mrf.mxu0
      %1932 = vmatprep.mubr.bf16.mxu0 0
      %1933 = vmatmul.mubr.bf16.gmra.mxu0 %v1849
      %v1934 = vpop.f32.mrf.mxu0
      %v1935 = vadd.f32 0.0, %v1934
      %v1936 = vpop.f32.mrf.mxu0
      %v1937 = vpop.f32.mrf.mxu0
      %v1938 = vadd.f32 0.0, %v1937
      %v1939 = vpop.f32.mrf.mxu0
      %1940 = vmatprep.mubr.bf16.mxu0 0
      %1941 = vmatmul.mubr.bf16.gmra.mxu0 %v1852
      %v1942 = vpop.f32.mrf.mxu0
      %v1943 = vadd.f32 0.0, %v1942
      %v1944 = vpop.f32.mrf.mxu0
      %v1945 = vpop.f32.mrf.mxu0
      %v1946 = vadd.f32 0.0, %v1945
      %v1947 = vpop.f32.mrf.mxu0
      %1948 = vmatprep.mubr.bf16.mxu0 0
      %1949 = vmatmul.mubr.bf16.gmra.mxu0 %v1855
      %v1950 = vpop.f32.mrf.mxu0
      %v1951 = vadd.f32 0.0, %v1950
      %v1952 = vpop.f32.mrf.mxu0
      %v1953 = vpop.f32.mrf.mxu0
      %v1954 = vadd.f32 0.0, %v1953
      %v1955 = vpop.f32.mrf.mxu0
      %1956 = vdwg.mxu0
      %v1957 = vsel %vm340, %v1756, 0
      %v1959 = vsel %vm340, %v1757, 0
      %v1961 = vsel %vm340, %v1758, 0
      %v1963 = vsel %vm340, %v1759, 0
      %v1965 = vsel %vm340, %v1760, 0
      %v1967 = vsel %vm340, %v1761, 0
      %v1969 = vsel %vm340, %v1762, 0
      %v1971 = vsel %vm340, %v1763, 0
      %v1974 = vsel %vm365, %v1720, 0
      %1976 = vmatprep.subr.bf16.mxu0 0
      %1977 = vmatpush1.bf16.msra.mxu0 0
      %1978 = vmatprep.subr.bf16.mxu0 0
      %1979 = vmatpush1.bf16.msra.mxu0 0
      %1980 = vmatprep.subr.bf16.mxu0 0
      %1981 = vmatpush1.bf16.msra.mxu0 0
      %1982 = vmatprep.subr.bf16.mxu0 0
      %1983 = vmatpush1.bf16.msra.mxu0 0
      %1984 = vmatprep.subr.bf16.mxu0 0
      %1985 = vmatpush1.bf16.msra.mxu0 0
      %1986 = vmatprep.subr.bf16.mxu0 0
      %1987 = vmatpush1.bf16.msra.mxu0 0
      %1988 = vmatprep.subr.bf16.mxu0 0
      %1989 = vmatpush1.bf16.msra.mxu0 0
      %1990 = vmatprep.subr.bf16.mxu0 0
      %1991 = vmatpush1.bf16.msra.mxu0 %v1974
      %1992 = vmatprep.subr.bf16.mxu0 0
      %1993 = vmatpush2.bf16.msra.mxu0 0
      %1994 = vmatprep.subr.bf16.mxu0 0
      %1995 = vmatpush2.bf16.msra.mxu0 0
      %1996 = vmatprep.subr.bf16.mxu0 0
      %1997 = vmatpush2.bf16.msra.mxu0 0
      %1998 = vmatprep.subr.bf16.mxu0 0
      %1999 = vmatpush2.bf16.msra.mxu0 0
      %2000 = vmatprep.subr.bf16.mxu0 0
      %2001 = vmatpush2.bf16.msra.mxu0 0
      %2002 = vmatprep.subr.bf16.mxu0 0
      %2003 = vmatpush2.bf16.msra.mxu0 0
      %2004 = vmatprep.subr.bf16.mxu0 0
      %2005 = vmatpush2.bf16.msra.mxu0 0
      %2006 = vmatprep.subr.bf16.mxu0 0
      %2007 = vmatpush2.bf16.msra.mxu0 0
      %2008 = vmatprep.mubr.bf16.mxu0 0
      %2009 = vmatmul.mubr.bf16.gmra.mxu0 %v1957
      %v2010 = vpop.f32.mrf.mxu0
      %v2011 = vadd.f32 %v1895, %v2010
      %v2012 = vpop.f32.mrf.mxu0
      %v2013 = vpop.f32.mrf.mxu0
      %v2014 = vadd.f32 %v1898, %v2013
      %v2015 = vpop.f32.mrf.mxu0
      %2016 = vmatprep.mubr.bf16.mxu0 0
      %2017 = vmatmul.mubr.bf16.gmra.mxu0 %v1959
      %v2018 = vpop.f32.mrf.mxu0
      %v2019 = vadd.f32 %v1903, %v2018
      %v2020 = vpop.f32.mrf.mxu0
      %v2021 = vpop.f32.mrf.mxu0
      %v2022 = vadd.f32 %v1906, %v2021
      %v2023 = vpop.f32.mrf.mxu0
      %2024 = vmatprep.mubr.bf16.mxu0 0
      %2025 = vmatmul.mubr.bf16.gmra.mxu0 %v1961
      %v2026 = vpop.f32.mrf.mxu0
      %v2027 = vadd.f32 %v1911, %v2026
      %v2028 = vpop.f32.mrf.mxu0
      %v2029 = vpop.f32.mrf.mxu0
      %v2030 = vadd.f32 %v1914, %v2029
      %v2031 = vpop.f32.mrf.mxu0
      %2032 = vmatprep.mubr.bf16.mxu0 0
      %2033 = vmatmul.mubr.bf16.gmra.mxu0 %v1963
      %v2034 = vpop.f32.mrf.mxu0
      %v2035 = vadd.f32 %v1919, %v2034
      %v2036 = vpop.f32.mrf.mxu0
      %v2037 = vpop.f32.mrf.mxu0
      %v2038 = vadd.f32 %v1922, %v2037
      %v2039 = vpop.f32.mrf.mxu0
      %2040 = vmatprep.mubr.bf16.mxu0 0
      %2041 = vmatmul.mubr.bf16.gmra.mxu0 %v1965
      %v2042 = vpop.f32.mrf.mxu0
      %v2043 = vadd.f32 %v1927, %v2042
      %v2044 = vpop.f32.mrf.mxu0
      %v2045 = vpop.f32.mrf.mxu0
      %v2046 = vadd.f32 %v1930, %v2045
      %v2047 = vpop.f32.mrf.mxu0
      %2048 = vmatprep.mubr.bf16.mxu0 0
      %2049 = vmatmul.mubr.bf16.gmra.mxu0 %v1967
      %v2050 = vpop.f32.mrf.mxu0
      %v2051 = vadd.f32 %v1935, %v2050
      %v2052 = vpop.f32.mrf.mxu0
      %v2053 = vpop.f32.mrf.mxu0
      %v2054 = vadd.f32 %v1938, %v2053
      %v2055 = vpop.f32.mrf.mxu0
      %2056 = vmatprep.mubr.bf16.mxu0 0
      %2057 = vmatmul.mubr.bf16.gmra.mxu0 %v1969
      %v2058 = vpop.f32.mrf.mxu0
      %v2059 = vadd.f32 %v1943, %v2058
      %v2060 = vpop.f32.mrf.mxu0
      %v2061 = vpop.f32.mrf.mxu0
      %v2062 = vadd.f32 %v1946, %v2061
      %v2063 = vpop.f32.mrf.mxu0
      %2064 = vmatprep.mubr.bf16.mxu0 0
      %2065 = vmatmul.mubr.bf16.gmra.mxu0 %v1971
      %v2066 = vpop.f32.mrf.mxu0
      %v2067 = vadd.f32 %v1951, %v2066
      %v2068 = vpop.f32.mrf.mxu0
      %v2069 = vpop.f32.mrf.mxu0
      %v2070 = vadd.f32 %v1954, %v2069
      %v2071 = vpop.f32.mrf.mxu0
      %2072 = vdwg.mxu0
      %v2073 = vld [vmem:[%s582] sm:$0x3]
      %v2074 = vrot.slane %v1756, 1
      %v2075 = vrot.slane %v1757, 1
      %v2076 = vsel %vm584, %v2074, %v2075
      %v2077 = vrot.slane %v1758, 1
      %v2078 = vsel %vm584, %v2075, %v2077
      %v2079 = vrot.slane %v1759, 1
      %v2080 = vsel %vm584, %v2077, %v2079
      %v2081 = vrot.slane %v1760, 1
      %v2082 = vsel %vm584, %v2079, %v2081
      %v2083 = vrot.slane %v1761, 1
      %v2084 = vsel %vm584, %v2081, %v2083
      %v2085 = vrot.slane %v1762, 1
      %v2086 = vsel %vm584, %v2083, %v2085
      %v2087 = vrot.slane %v1763, 1
      %v2088 = vsel %vm584, %v2085, %v2087
      %v2089 = vrot.slane %v1764, 1
      %v2090 = vsel %vm584, %v2087, %v2089
      %v2092 = vsel %vm340, %v2076, 0
      %v2095 = vsel %vm340, %v2078, 0
      %v2098 = vsel %vm340, %v2080, 0
      %v2101 = vsel %vm340, %v2082, 0
      %v2104 = vsel %vm340, %v2084, 0
      %v2107 = vsel %vm340, %v2086, 0
      %v2110 = vsel %vm340, %v2088, 0
      %v2113 = vsel %vm340, %v2090, 0
      %v2116 = vsel %vm365, %v2073, 0
      %2118 = vmatprep.subr.bf16.mxu0 0
      %2119 = vmatpush1.bf16.msra.mxu0 0
      %2120 = vmatprep.subr.bf16.mxu0 0
      %2121 = vmatpush1.bf16.msra.mxu0 0
      %2122 = vmatprep.subr.bf16.mxu0 0
      %2123 = vmatpush1.bf16.msra.mxu0 0
      %2124 = vmatprep.subr.bf16.mxu0 0
      %2125 = vmatpush1.bf16.msra.mxu0 0
      %2126 = vmatprep.subr.bf16.mxu0 0
      %2127 = vmatpush1.bf16.msra.mxu0 0
      %2128 = vmatprep.subr.bf16.mxu0 0
      %2129 = vmatpush1.bf16.msra.mxu0 0
      %2130 = vmatprep.subr.bf16.mxu0 0
      %2131 = vmatpush1.bf16.msra.mxu0 0
      %2132 = vmatprep.subr.bf16.mxu0 0
      %2133 = vmatpush1.bf16.msra.mxu0 %v2116
      %2134 = vmatprep.subr.bf16.mxu0 0
      %2135 = vmatpush2.bf16.msra.mxu0 0
      %2136 = vmatprep.subr.bf16.mxu0 0
      %2137 = vmatpush2.bf16.msra.mxu0 0
      %2138 = vmatprep.subr.bf16.mxu0 0
      %2139 = vmatpush2.bf16.msra.mxu0 0
      %2140 = vmatprep.subr.bf16.mxu0 0
      %2141 = vmatpush2.bf16.msra.mxu0 0
      %2142 = vmatprep.subr.bf16.mxu0 0
      %2143 = vmatpush2.bf16.msra.mxu0 0
      %2144 = vmatprep.subr.bf16.mxu0 0
      %2145 = vmatpush2.bf16.msra.mxu0 0
      %2146 = vmatprep.subr.bf16.mxu0 0
      %2147 = vmatpush2.bf16.msra.mxu0 0
      %2148 = vmatprep.subr.bf16.mxu0 0
      %2149 = vmatpush2.bf16.msra.mxu0 0
      %2150 = vmatprep.mubr.bf16.mxu0 0
      %2151 = vmatmul.mubr.bf16.gmra.mxu0 %v2092
      %v2152 = vpop.f32.mrf.mxu0
      %v2153 = vadd.f32 0.0, %v2152
      %v2154 = vpop.f32.mrf.mxu0
      %v2155 = vpop.f32.mrf.mxu0
      %v2156 = vadd.f32 0.0, %v2155
      %v2157 = vpop.f32.mrf.mxu0
      %2158 = vmatprep.mubr.bf16.mxu0 0
      %2159 = vmatmul.mubr.bf16.gmra.mxu0 %v2095
      %v2160 = vpop.f32.mrf.mxu0
      %v2161 = vadd.f32 0.0, %v2160
      %v2162 = vpop.f32.mrf.mxu0
      %v2163 = vpop.f32.mrf.mxu0
      %v2164 = vadd.f32 0.0, %v2163
      %v2165 = vpop.f32.mrf.mxu0
      %2166 = vmatprep.mubr.bf16.mxu0 0
      %2167 = vmatmul.mubr.bf16.gmra.mxu0 %v2098
      %v2168 = vpop.f32.mrf.mxu0
      %v2169 = vadd.f32 0.0, %v2168
      %v2170 = vpop.f32.mrf.mxu0
      %v2171 = vpop.f32.mrf.mxu0
      %v2172 = vadd.f32 0.0, %v2171
      %v2173 = vpop.f32.mrf.mxu0
      %2174 = vmatprep.mubr.bf16.mxu0 0
      %2175 = vmatmul.mubr.bf16.gmra.mxu0 %v2101
      %v2176 = vpop.f32.mrf.mxu0
      %v2177 = vadd.f32 0.0, %v2176
      %v2178 = vpop.f32.mrf.mxu0
      %v2179 = vpop.f32.mrf.mxu0
      %v2180 = vadd.f32 0.0, %v2179
      %v2181 = vpop.f32.mrf.mxu0
      %2182 = vmatprep.mubr.bf16.mxu0 0
      %2183 = vmatmul.mubr.bf16.gmra.mxu0 %v2104
      %v2184 = vpop.f32.mrf.mxu0
      %v2185 = vadd.f32 0.0, %v2184
      %v2186 = vpop.f32.mrf.mxu0
      %v2187 = vpop.f32.mrf.mxu0
      %v2188 = vadd.f32 0.0, %v2187
      %v2189 = vpop.f32.mrf.mxu0
      %2190 = vmatprep.mubr.bf16.mxu0 0
      %2191 = vmatmul.mubr.bf16.gmra.mxu0 %v2107
      %v2192 = vpop.f32.mrf.mxu0
      %v2193 = vadd.f32 0.0, %v2192
      %v2194 = vpop.f32.mrf.mxu0
      %v2195 = vpop.f32.mrf.mxu0
      %v2196 = vadd.f32 0.0, %v2195
      %v2197 = vpop.f32.mrf.mxu0
      %2198 = vmatprep.mubr.bf16.mxu0 0
      %2199 = vmatmul.mubr.bf16.gmra.mxu0 %v2110
      %v2200 = vpop.f32.mrf.mxu0
      %v2201 = vadd.f32 0.0, %v2200
      %v2202 = vpop.f32.mrf.mxu0
      %v2203 = vpop.f32.mrf.mxu0
      %v2204 = vadd.f32 0.0, %v2203
      %v2205 = vpop.f32.mrf.mxu0
      %2206 = vmatprep.mubr.bf16.mxu0 0
      %2207 = vmatmul.mubr.bf16.gmra.mxu0 %v2113
      %v2208 = vpop.f32.mrf.mxu0
      %v2209 = vadd.f32 0.0, %v2208
      %v2210 = vpop.f32.mrf.mxu0
      %v2211 = vpop.f32.mrf.mxu0
      %v2212 = vadd.f32 0.0, %v2211
      %v2213 = vpop.f32.mrf.mxu0
      %2214 = vdwg.mxu0
      %v2215 = vadd.f32 %v2011, %v2153
      %v2216 = vadd.f32 %v2014, %v2156
      %v2217 = vadd.f32 %v2019, %v2161
      %v2218 = vadd.f32 %v2022, %v2164
      %v2219 = vadd.f32 %v2027, %v2169
      %v2220 = vadd.f32 %v2030, %v2172
      %v2221 = vadd.f32 %v2035, %v2177
      %v2222 = vadd.f32 %v2038, %v2180
      %v2223 = vadd.f32 %v2043, %v2185
      %v2224 = vadd.f32 %v2046, %v2188
      %v2225 = vadd.f32 %v2051, %v2193
      %v2226 = vadd.f32 %v2054, %v2196
      %v2227 = vadd.f32 %v2059, %v2201
      %v2228 = vadd.f32 %v2062, %v2204
      %v2229 = vadd.f32 %v2067, %v2209
      %v2230 = vadd.f32 %v2070, %v2212
      %v2231 = vld [vmem:[%s742] sm:$0x3]
      %v2235 = vunpack.c.l.b16 %v1712
      %v2236 = vunpack.c.l.b16 %v1713
      %v2237 = vunpack.c.l.b16 %v1714
      %v2238 = vpack.c.b16 %v2235, %v1755
      %v2239 = vpack.c.b16 %v2237, %v2236
      %v2241 = vsel %vm340, %v2238, 0
      %v2244 = vsel %vm340, %v2239, 0
      %v2247 = vsel %vm365, %v2231, 0
      %2249 = vmatprep.subr.bf16.mxu0 0
      %2250 = vmatpush1.bf16.msra.mxu0 0
      %2251 = vmatprep.subr.bf16.mxu0 0
      %2252 = vmatpush1.bf16.msra.mxu0 0
      %2253 = vmatprep.subr.bf16.mxu0 0
      %2254 = vmatpush1.bf16.msra.mxu0 0
      %2255 = vmatprep.subr.bf16.mxu0 0
      %2256 = vmatpush1.bf16.msra.mxu0 0
      %2257 = vmatprep.subr.bf16.mxu0 0
      %2258 = vmatpush1.bf16.msra.mxu0 0
      %2259 = vmatprep.subr.bf16.mxu0 0
      %2260 = vmatpush1.bf16.msra.mxu0 0
      %2261 = vmatprep.subr.bf16.mxu0 0
      %2262 = vmatpush1.bf16.msra.mxu0 0
      %2263 = vmatprep.subr.bf16.mxu0 0
      %2264 = vmatpush1.bf16.msra.mxu0 %v2247
      %2265 = vmatprep.subr.bf16.mxu0 0
      %2266 = vmatpush2.bf16.msra.mxu0 0
      %2267 = vmatprep.subr.bf16.mxu0 0
      %2268 = vmatpush2.bf16.msra.mxu0 0
      %2269 = vmatprep.subr.bf16.mxu0 0
      %2270 = vmatpush2.bf16.msra.mxu0 0
      %2271 = vmatprep.subr.bf16.mxu0 0
      %2272 = vmatpush2.bf16.msra.mxu0 0
      %2273 = vmatprep.subr.bf16.mxu0 0
      %2274 = vmatpush2.bf16.msra.mxu0 0
      %2275 = vmatprep.subr.bf16.mxu0 0
      %2276 = vmatpush2.bf16.msra.mxu0 0
      %2277 = vmatprep.subr.bf16.mxu0 0
      %2278 = vmatpush2.bf16.msra.mxu0 0
      %2279 = vmatprep.subr.bf16.mxu0 0
      %2280 = vmatpush2.bf16.msra.mxu0 0
      %2281 = vmatprep.mubr.bf16.mxu0 0
      %2282 = vmatmul.mubr.bf16.gmra.mxu0 %v1961
      %v2283 = vpop.f32.mrf.mxu0
      %v2284 = vadd.f32 0.0, %v2283
      %v2285 = vpop.f32.mrf.mxu0
      %v2286 = vpop.f32.mrf.mxu0
      %v2287 = vadd.f32 0.0, %v2286
      %v2288 = vpop.f32.mrf.mxu0
      %2289 = vmatprep.mubr.bf16.mxu0 0
      %2290 = vmatmul.mubr.bf16.gmra.mxu0 %v1963
      %v2291 = vpop.f32.mrf.mxu0
      %v2292 = vadd.f32 0.0, %v2291
      %v2293 = vpop.f32.mrf.mxu0
      %v2294 = vpop.f32.mrf.mxu0
      %v2295 = vadd.f32 0.0, %v2294
      %v2296 = vpop.f32.mrf.mxu0
      %2297 = vmatprep.mubr.bf16.mxu0 0
      %2298 = vmatmul.mubr.bf16.gmra.mxu0 %v1965
      %v2299 = vpop.f32.mrf.mxu0
      %v2300 = vadd.f32 0.0, %v2299
      %v2301 = vpop.f32.mrf.mxu0
      %v2302 = vpop.f32.mrf.mxu0
      %v2303 = vadd.f32 0.0, %v2302
      %v2304 = vpop.f32.mrf.mxu0
      %2305 = vmatprep.mubr.bf16.mxu0 0
      %2306 = vmatmul.mubr.bf16.gmra.mxu0 %v1967
      %v2307 = vpop.f32.mrf.mxu0
      %v2308 = vadd.f32 0.0, %v2307
      %v2309 = vpop.f32.mrf.mxu0
      %v2310 = vpop.f32.mrf.mxu0
      %v2311 = vadd.f32 0.0, %v2310
      %v2312 = vpop.f32.mrf.mxu0
      %2313 = vmatprep.mubr.bf16.mxu0 0
      %2314 = vmatmul.mubr.bf16.gmra.mxu0 %v1969
      %v2315 = vpop.f32.mrf.mxu0
      %v2316 = vadd.f32 0.0, %v2315
      %v2317 = vpop.f32.mrf.mxu0
      %v2318 = vpop.f32.mrf.mxu0
      %v2319 = vadd.f32 0.0, %v2318
      %v2320 = vpop.f32.mrf.mxu0
      %2321 = vmatprep.mubr.bf16.mxu0 0
      %2322 = vmatmul.mubr.bf16.gmra.mxu0 %v1971
      %v2323 = vpop.f32.mrf.mxu0
      %v2324 = vadd.f32 0.0, %v2323
      %v2325 = vpop.f32.mrf.mxu0
      %v2326 = vpop.f32.mrf.mxu0
      %v2327 = vadd.f32 0.0, %v2326
      %v2328 = vpop.f32.mrf.mxu0
      %2329 = vmatprep.mubr.bf16.mxu0 0
      %2330 = vmatmul.mubr.bf16.gmra.mxu0 %v2241
      %v2331 = vpop.f32.mrf.mxu0
      %v2332 = vadd.f32 0.0, %v2331
      %v2333 = vpop.f32.mrf.mxu0
      %v2334 = vpop.f32.mrf.mxu0
      %v2335 = vadd.f32 0.0, %v2334
      %v2336 = vpop.f32.mrf.mxu0
      %2337 = vmatprep.mubr.bf16.mxu0 0
      %2338 = vmatmul.mubr.bf16.gmra.mxu0 %v2244
      %v2339 = vpop.f32.mrf.mxu0
      %v2340 = vadd.f32 0.0, %v2339
      %v2341 = vpop.f32.mrf.mxu0
      %v2342 = vpop.f32.mrf.mxu0
      %v2343 = vadd.f32 0.0, %v2342
      %v2344 = vpop.f32.mrf.mxu0
      %2345 = vdwg.mxu0
      %v2346 = vadd.f32 %v2215, %v2284
      %v2347 = vadd.f32 %v2216, %v2287
      %v2348 = vadd.f32 %v2217, %v2292
      %v2349 = vadd.f32 %v2218, %v2295
      %v2350 = vadd.f32 %v2219, %v2300
      %v2351 = vadd.f32 %v2220, %v2303
      %v2352 = vadd.f32 %v2221, %v2308
      %v2353 = vadd.f32 %v2222, %v2311
      %v2354 = vadd.f32 %v2223, %v2316
      %v2355 = vadd.f32 %v2224, %v2319
      %v2356 = vadd.f32 %v2225, %v2324
      %v2357 = vadd.f32 %v2226, %v2327
      %v2358 = vadd.f32 %v2227, %v2332
      %v2359 = vadd.f32 %v2228, %v2335
      %v2360 = vadd.f32 %v2229, %v2340
      %v2361 = vadd.f32 %v2230, %v2343
      %v2362 = vld [vmem:[%s874] sm:$0x3]
      %v2364 = vunpack.c.l.b16 %v1715
      %v2365 = vpack.c.b16 %v2364, %v2364
      %v2366 = vshll.u32 %v2238, 16
      %v2368 = vrot.slane %v2366, 1
      %v2369 = vsel %vm271, %v1827, %v2368
      %v2370 = vshrl.u32 %v2238, 16
      %v2372 = vor.u32 %v2370, %v2368
      %v2373 = vshll.u32 %v2239, 16
      %v2375 = vrot.slane %v2373, 1
      %v2376 = vsel %vm271, %v2372, %v2375
      %v2377 = vshrl.u32 %v2239, 16
      %v2379 = vor.u32 %v2377, %v2375
      %v2381 = vshll.u32 %v2365, 16
      %v2383 = vrot.slane %v2381, 1
      %v2384 = vsel %vm271, %v2379, %v2383
      %v2386 = vsel %vm340, %v2369, 0
      %v2389 = vsel %vm340, %v2376, 0
      %v2392 = vsel %vm340, %v2384, 0
      %v2395 = vsel %vm365, %v2362, 0
      %2397 = vmatprep.subr.bf16.mxu0 0
      %2398 = vmatpush1.bf16.msra.mxu0 0
      %2399 = vmatprep.subr.bf16.mxu0 0
      %2400 = vmatpush1.bf16.msra.mxu0 0
      %2401 = vmatprep.subr.bf16.mxu0 0
      %2402 = vmatpush1.bf16.msra.mxu0 0
      %2403 = vmatprep.subr.bf16.mxu0 0
      %2404 = vmatpush1.bf16.msra.mxu0 0
      %2405 = vmatprep.subr.bf16.mxu0 0
      %2406 = vmatpush1.bf16.msra.mxu0 0
      %2407 = vmatprep.subr.bf16.mxu0 0
      %2408 = vmatpush1.bf16.msra.mxu0 0
      %2409 = vmatprep.subr.bf16.mxu0 0
      %2410 = vmatpush1.bf16.msra.mxu0 0
      %2411 = vmatprep.subr.bf16.mxu0 0
      %2412 = vmatpush1.bf16.msra.mxu0 %v2395
      %2413 = vmatprep.subr.bf16.mxu0 0
      %2414 = vmatpush2.bf16.msra.mxu0 0
      %2415 = vmatprep.subr.bf16.mxu0 0
      %2416 = vmatpush2.bf16.msra.mxu0 0
      %2417 = vmatprep.subr.bf16.mxu0 0
      %2418 = vmatpush2.bf16.msra.mxu0 0
      %2419 = vmatprep.subr.bf16.mxu0 0
      %2420 = vmatpush2.bf16.msra.mxu0 0
      %2421 = vmatprep.subr.bf16.mxu0 0
      %2422 = vmatpush2.bf16.msra.mxu0 0
      %2423 = vmatprep.subr.bf16.mxu0 0
      %2424 = vmatpush2.bf16.msra.mxu0 0
      %2425 = vmatprep.subr.bf16.mxu0 0
      %2426 = vmatpush2.bf16.msra.mxu0 0
      %2427 = vmatprep.subr.bf16.mxu0 0
      %2428 = vmatpush2.bf16.msra.mxu0 0
      %2429 = vmatprep.mubr.bf16.mxu0 0
      %2430 = vmatmul.mubr.bf16.gmra.mxu0 %v1840
      %v2431 = vpop.f32.mrf.mxu0
      %v2432 = vadd.f32 0.0, %v2431
      %v2433 = vpop.f32.mrf.mxu0
      %v2434 = vpop.f32.mrf.mxu0
      %v2435 = vadd.f32 0.0, %v2434
      %v2436 = vpop.f32.mrf.mxu0
      %2437 = vmatprep.mubr.bf16.mxu0 0
      %2438 = vmatmul.mubr.bf16.gmra.mxu0 %v1843
      %v2439 = vpop.f32.mrf.mxu0
      %v2440 = vadd.f32 0.0, %v2439
      %v2441 = vpop.f32.mrf.mxu0
      %v2442 = vpop.f32.mrf.mxu0
      %v2443 = vadd.f32 0.0, %v2442
      %v2444 = vpop.f32.mrf.mxu0
      %2445 = vmatprep.mubr.bf16.mxu0 0
      %2446 = vmatmul.mubr.bf16.gmra.mxu0 %v1846
      %v2447 = vpop.f32.mrf.mxu0
      %v2448 = vadd.f32 0.0, %v2447
      %v2449 = vpop.f32.mrf.mxu0
      %v2450 = vpop.f32.mrf.mxu0
      %v2451 = vadd.f32 0.0, %v2450
      %v2452 = vpop.f32.mrf.mxu0
      %2453 = vmatprep.mubr.bf16.mxu0 0
      %2454 = vmatmul.mubr.bf16.gmra.mxu0 %v1849
      %v2455 = vpop.f32.mrf.mxu0
      %v2456 = vadd.f32 0.0, %v2455
      %v2457 = vpop.f32.mrf.mxu0
      %v2458 = vpop.f32.mrf.mxu0
      %v2459 = vadd.f32 0.0, %v2458
      %v2460 = vpop.f32.mrf.mxu0
      %2461 = vmatprep.mubr.bf16.mxu0 0
      %2462 = vmatmul.mubr.bf16.gmra.mxu0 %v1852
      %v2463 = vpop.f32.mrf.mxu0
      %v2464 = vadd.f32 0.0, %v2463
      %v2465 = vpop.f32.mrf.mxu0
      %v2466 = vpop.f32.mrf.mxu0
      %v2467 = vadd.f32 0.0, %v2466
      %v2468 = vpop.f32.mrf.mxu0
      %2469 = vmatprep.mubr.bf16.mxu0 0
      %2470 = vmatmul.mubr.bf16.gmra.mxu0 %v2386
      %v2471 = vpop.f32.mrf.mxu0
      %v2472 = vadd.f32 0.0, %v2471
      %v2473 = vpop.f32.mrf.mxu0
      %v2474 = vpop.f32.mrf.mxu0
      %v2475 = vadd.f32 0.0, %v2474
      %v2476 = vpop.f32.mrf.mxu0
      %2477 = vmatprep.mubr.bf16.mxu0 0
      %2478 = vmatmul.mubr.bf16.gmra.mxu0 %v2389
      %v2479 = vpop.f32.mrf.mxu0
      %v2480 = vadd.f32 0.0, %v2479
      %v2481 = vpop.f32.mrf.mxu0
      %v2482 = vpop.f32.mrf.mxu0
      %v2483 = vadd.f32 0.0, %v2482
      %v2484 = vpop.f32.mrf.mxu0
      %2485 = vmatprep.mubr.bf16.mxu0 0
      %2486 = vmatmul.mubr.bf16.gmra.mxu0 %v2392
      %v2487 = vpop.f32.mrf.mxu0
      %v2488 = vadd.f32 0.0, %v2487
      %v2489 = vpop.f32.mrf.mxu0
      %v2490 = vpop.f32.mrf.mxu0
      %v2491 = vadd.f32 0.0, %v2490
      %v2492 = vpop.f32.mrf.mxu0
      %2493 = vdwg.mxu0
      %v2494 = vadd.f32 %v2346, %v2432
      %v2495 = vadd.f32 %v2347, %v2435
      %v2496 = vadd.f32 %v2348, %v2440
      %v2497 = vadd.f32 %v2349, %v2443
      %v2498 = vadd.f32 %v2350, %v2448
      %v2499 = vadd.f32 %v2351, %v2451
      %v2500 = vadd.f32 %v2352, %v2456
      %v2501 = vadd.f32 %v2353, %v2459
      %v2502 = vadd.f32 %v2354, %v2464
      %v2503 = vadd.f32 %v2355, %v2467
      %v2504 = vadd.f32 %v2356, %v2472
      %v2505 = vadd.f32 %v2357, %v2475
      %v2506 = vadd.f32 %v2358, %v2480
      %v2507 = vadd.f32 %v2359, %v2483
      %v2508 = vadd.f32 %v2360, %v2488
      %v2509 = vadd.f32 %v2361, %v2491
      %v2510 = vld [vmem:[%s1023] sm:$0x3]
      %v2511 = vrot.slane %v2238, 1
      %v2512 = vsel %vm584, %v2087, %v2511
      %v2513 = vrot.slane %v2239, 1
      %v2514 = vsel %vm584, %v2511, %v2513
      %v2515 = vrot.slane %v2365, 1
      %v2516 = vsel %vm584, %v2513, %v2515
      %v2518 = vsel %vm340, %v2512, 0
      %v2521 = vsel %vm340, %v2514, 0
      %v2524 = vsel %vm340, %v2516, 0
      %v2527 = vsel %vm365, %v2510, 0
      %2529 = vmatprep.subr.bf16.mxu0 0
      %2530 = vmatpush1.bf16.msra.mxu0 0
      %2531 = vmatprep.subr.bf16.mxu0 0
      %2532 = vmatpush1.bf16.msra.mxu0 0
      %2533 = vmatprep.subr.bf16.mxu0 0
      %2534 = vmatpush1.bf16.msra.mxu0 0
      %2535 = vmatprep.subr.bf16.mxu0 0
      %2536 = vmatpush1.bf16.msra.mxu0 0
      %2537 = vmatprep.subr.bf16.mxu0 0
      %2538 = vmatpush1.bf16.msra.mxu0 0
      %2539 = vmatprep.subr.bf16.mxu0 0
      %2540 = vmatpush1.bf16.msra.mxu0 0
      %2541 = vmatprep.subr.bf16.mxu0 0
      %2542 = vmatpush1.bf16.msra.mxu0 0
      %2543 = vmatprep.subr.bf16.mxu0 0
      %2544 = vmatpush1.bf16.msra.mxu0 %v2527
      %2545 = vmatprep.subr.bf16.mxu0 0
      %2546 = vmatpush2.bf16.msra.mxu0 0
      %2547 = vmatprep.subr.bf16.mxu0 0
      %2548 = vmatpush2.bf16.msra.mxu0 0
      %2549 = vmatprep.subr.bf16.mxu0 0
      %2550 = vmatpush2.bf16.msra.mxu0 0
      %2551 = vmatprep.subr.bf16.mxu0 0
      %2552 = vmatpush2.bf16.msra.mxu0 0
      %2553 = vmatprep.subr.bf16.mxu0 0
      %2554 = vmatpush2.bf16.msra.mxu0 0
      %2555 = vmatprep.subr.bf16.mxu0 0
      %2556 = vmatpush2.bf16.msra.mxu0 0
      %2557 = vmatprep.subr.bf16.mxu0 0
      %2558 = vmatpush2.bf16.msra.mxu0 0
      %2559 = vmatprep.subr.bf16.mxu0 0
      %2560 = vmatpush2.bf16.msra.mxu0 0
      %2561 = vmatprep.mubr.bf16.mxu0 0
      %2562 = vmatmul.mubr.bf16.gmra.mxu0 %v2098
      %v2563 = vpop.f32.mrf.mxu0
      %v2564 = vadd.f32 0.0, %v2563
      %v2565 = vpop.f32.mrf.mxu0
      %v2566 = vpop.f32.mrf.mxu0
      %v2567 = vadd.f32 0.0, %v2566
      %v2568 = vpop.f32.mrf.mxu0
      %2569 = vmatprep.mubr.bf16.mxu0 0
      %2570 = vmatmul.mubr.bf16.gmra.mxu0 %v2101
      %v2571 = vpop.f32.mrf.mxu0
      %v2572 = vadd.f32 0.0, %v2571
      %v2573 = vpop.f32.mrf.mxu0
      %v2574 = vpop.f32.mrf.mxu0
      %v2575 = vadd.f32 0.0, %v2574
      %v2576 = vpop.f32.mrf.mxu0
      %2577 = vmatprep.mubr.bf16.mxu0 0
      %2578 = vmatmul.mubr.bf16.gmra.mxu0 %v2104
      %v2579 = vpop.f32.mrf.mxu0
      %v2580 = vadd.f32 0.0, %v2579
      %v2581 = vpop.f32.mrf.mxu0
      %v2582 = vpop.f32.mrf.mxu0
      %v2583 = vadd.f32 0.0, %v2582
      %v2584 = vpop.f32.mrf.mxu0
      %2585 = vmatprep.mubr.bf16.mxu0 0
      %2586 = vmatmul.mubr.bf16.gmra.mxu0 %v2107
      %v2587 = vpop.f32.mrf.mxu0
      %v2588 = vadd.f32 0.0, %v2587
      %v2589 = vpop.f32.mrf.mxu0
      %v2590 = vpop.f32.mrf.mxu0
      %v2591 = vadd.f32 0.0, %v2590
      %v2592 = vpop.f32.mrf.mxu0
      %2593 = vmatprep.mubr.bf16.mxu0 0
      %2594 = vmatmul.mubr.bf16.gmra.mxu0 %v2110
      %v2595 = vpop.f32.mrf.mxu0
      %v2596 = vadd.f32 0.0, %v2595
      %v2597 = vpop.f32.mrf.mxu0
      %v2598 = vpop.f32.mrf.mxu0
      %v2599 = vadd.f32 0.0, %v2598
      %v2600 = vpop.f32.mrf.mxu0
      %2601 = vmatprep.mubr.bf16.mxu0 0
      %2602 = vmatmul.mubr.bf16.gmra.mxu0 %v2518
      %v2603 = vpop.f32.mrf.mxu0
      %v2604 = vadd.f32 0.0, %v2603
      %v2605 = vpop.f32.mrf.mxu0
      %v2606 = vpop.f32.mrf.mxu0
      %v2607 = vadd.f32 0.0, %v2606
      %v2608 = vpop.f32.mrf.mxu0
      %2609 = vmatprep.mubr.bf16.mxu0 0
      %2610 = vmatmul.mubr.bf16.gmra.mxu0 %v2521
      %v2611 = vpop.f32.mrf.mxu0
      %v2612 = vadd.f32 0.0, %v2611
      %v2613 = vpop.f32.mrf.mxu0
      %v2614 = vpop.f32.mrf.mxu0
      %v2615 = vadd.f32 0.0, %v2614
      %v2616 = vpop.f32.mrf.mxu0
      %2617 = vmatprep.mubr.bf16.mxu0 0
      %2618 = vmatmul.mubr.bf16.gmra.mxu0 %v2524
      %v2619 = vpop.f32.mrf.mxu0
      %v2620 = vadd.f32 0.0, %v2619
      %v2621 = vpop.f32.mrf.mxu0
      %v2622 = vpop.f32.mrf.mxu0
      %v2623 = vadd.f32 0.0, %v2622
      %v2624 = vpop.f32.mrf.mxu0
      %2625 = vdwg.mxu0
      %v2626 = vadd.f32 %v2494, %v2564
      %v2627 = vadd.f32 %v2495, %v2567
      %v2628 = vadd.f32 %v2496, %v2572
      %v2629 = vadd.f32 %v2497, %v2575
      %v2630 = vadd.f32 %v2498, %v2580
      %v2631 = vadd.f32 %v2499, %v2583
      %v2632 = vadd.f32 %v2500, %v2588
      %v2633 = vadd.f32 %v2501, %v2591
      %v2634 = vadd.f32 %v2502, %v2596
      %v2635 = vadd.f32 %v2503, %v2599
      %v2636 = vadd.f32 %v2504, %v2604
      %v2637 = vadd.f32 %v2505, %v2607
      %v2638 = vadd.f32 %v2506, %v2612
      %v2639 = vadd.f32 %v2507, %v2615
      %v2640 = vadd.f32 %v2508, %v2620
      %v2641 = vadd.f32 %v2509, %v2623
      %v2642 = vld [vmem:[%s1156] sm:$0x3]
      %v2646 = vunpack.c.l.b16 %v1716
      %v2647 = vunpack.c.l.b16 %v1717
      %v2648 = vunpack.c.l.b16 %v1718
      %v2649 = vpack.c.b16 %v2646, %v2364
      %v2650 = vpack.c.b16 %v2648, %v2647
      %v2652 = vsel %vm340, %v2649, 0
      %v2655 = vsel %vm340, %v2650, 0
      %v2658 = vsel %vm365, %v2642, 0
      %2660 = vmatprep.subr.bf16.mxu0 0
      %2661 = vmatpush1.bf16.msra.mxu0 0
      %2662 = vmatprep.subr.bf16.mxu0 0
      %2663 = vmatpush1.bf16.msra.mxu0 0
      %2664 = vmatprep.subr.bf16.mxu0 0
      %2665 = vmatpush1.bf16.msra.mxu0 0
      %2666 = vmatprep.subr.bf16.mxu0 0
      %2667 = vmatpush1.bf16.msra.mxu0 0
      %2668 = vmatprep.subr.bf16.mxu0 0
      %2669 = vmatpush1.bf16.msra.mxu0 0
      %2670 = vmatprep.subr.bf16.mxu0 0
      %2671 = vmatpush1.bf16.msra.mxu0 0
      %2672 = vmatprep.subr.bf16.mxu0 0
      %2673 = vmatpush1.bf16.msra.mxu0 0
      %2674 = vmatprep.subr.bf16.mxu0 0
      %2675 = vmatpush1.bf16.msra.mxu0 %v2658
      %2676 = vmatprep.subr.bf16.mxu0 0
      %2677 = vmatpush2.bf16.msra.mxu0 0
      %2678 = vmatprep.subr.bf16.mxu0 0
      %2679 = vmatpush2.bf16.msra.mxu0 0
      %2680 = vmatprep.subr.bf16.mxu0 0
      %2681 = vmatpush2.bf16.msra.mxu0 0
      %2682 = vmatprep.subr.bf16.mxu0 0
      %2683 = vmatpush2.bf16.msra.mxu0 0
      %2684 = vmatprep.subr.bf16.mxu0 0
      %2685 = vmatpush2.bf16.msra.mxu0 0
      %2686 = vmatprep.subr.bf16.mxu0 0
      %2687 = vmatpush2.bf16.msra.mxu0 0
      %2688 = vmatprep.subr.bf16.mxu0 0
      %2689 = vmatpush2.bf16.msra.mxu0 0
      %2690 = vmatprep.subr.bf16.mxu0 0
      %2691 = vmatpush2.bf16.msra.mxu0 0
      %2692 = vmatprep.mubr.bf16.mxu0 0
      %2693 = vmatmul.mubr.bf16.gmra.mxu0 %v1965
      %v2694 = vpop.f32.mrf.mxu0
      %v2695 = vadd.f32 0.0, %v2694
      %v2696 = vpop.f32.mrf.mxu0
      %v2697 = vpop.f32.mrf.mxu0
      %v2698 = vadd.f32 0.0, %v2697
      %v2699 = vpop.f32.mrf.mxu0
      %2700 = vmatprep.mubr.bf16.mxu0 0
      %2701 = vmatmul.mubr.bf16.gmra.mxu0 %v1967
      %v2702 = vpop.f32.mrf.mxu0
      %v2703 = vadd.f32 0.0, %v2702
      %v2704 = vpop.f32.mrf.mxu0
      %v2705 = vpop.f32.mrf.mxu0
      %v2706 = vadd.f32 0.0, %v2705
      %v2707 = vpop.f32.mrf.mxu0
      %2708 = vmatprep.mubr.bf16.mxu0 0
      %2709 = vmatmul.mubr.bf16.gmra.mxu0 %v1969
      %v2710 = vpop.f32.mrf.mxu0
      %v2711 = vadd.f32 0.0, %v2710
      %v2712 = vpop.f32.mrf.mxu0
      %v2713 = vpop.f32.mrf.mxu0
      %v2714 = vadd.f32 0.0, %v2713
      %v2715 = vpop.f32.mrf.mxu0
      %2716 = vmatprep.mubr.bf16.mxu0 0
      %2717 = vmatmul.mubr.bf16.gmra.mxu0 %v1971
      %v2718 = vpop.f32.mrf.mxu0
      %v2719 = vadd.f32 0.0, %v2718
      %v2720 = vpop.f32.mrf.mxu0
      %v2721 = vpop.f32.mrf.mxu0
      %v2722 = vadd.f32 0.0, %v2721
      %v2723 = vpop.f32.mrf.mxu0
      %2724 = vmatprep.mubr.bf16.mxu0 0
      %2725 = vmatmul.mubr.bf16.gmra.mxu0 %v2241
      %v2726 = vpop.f32.mrf.mxu0
      %v2727 = vadd.f32 0.0, %v2726
      %v2728 = vpop.f32.mrf.mxu0
      %v2729 = vpop.f32.mrf.mxu0
      %v2730 = vadd.f32 0.0, %v2729
      %v2731 = vpop.f32.mrf.mxu0
      %2732 = vmatprep.mubr.bf16.mxu0 0
      %2733 = vmatmul.mubr.bf16.gmra.mxu0 %v2244
      %v2734 = vpop.f32.mrf.mxu0
      %v2735 = vadd.f32 0.0, %v2734
      %v2736 = vpop.f32.mrf.mxu0
      %v2737 = vpop.f32.mrf.mxu0
      %v2738 = vadd.f32 0.0, %v2737
      %v2739 = vpop.f32.mrf.mxu0
      %2740 = vmatprep.mubr.bf16.mxu0 0
      %2741 = vmatmul.mubr.bf16.gmra.mxu0 %v2652
      %v2742 = vpop.f32.mrf.mxu0
      %v2743 = vadd.f32 0.0, %v2742
      %v2744 = vpop.f32.mrf.mxu0
      %v2745 = vpop.f32.mrf.mxu0
      %v2746 = vadd.f32 0.0, %v2745
      %v2747 = vpop.f32.mrf.mxu0
      %2748 = vmatprep.mubr.bf16.mxu0 0
      %2749 = vmatmul.mubr.bf16.gmra.mxu0 %v2655
      %v2750 = vpop.f32.mrf.mxu0
      %v2751 = vadd.f32 0.0, %v2750
      %v2752 = vpop.f32.mrf.mxu0
      %v2753 = vpop.f32.mrf.mxu0
      %v2754 = vadd.f32 0.0, %v2753
      %v2755 = vpop.f32.mrf.mxu0
      %2756 = vdwg.mxu0
      %v2757 = vadd.f32 %v2626, %v2695
      %v2758 = vadd.f32 %v2627, %v2698
      %v2759 = vadd.f32 %v2628, %v2703
      %v2760 = vadd.f32 %v2629, %v2706
      %v2761 = vadd.f32 %v2630, %v2711
      %v2762 = vadd.f32 %v2631, %v2714
      %v2763 = vadd.f32 %v2632, %v2719
      %v2764 = vadd.f32 %v2633, %v2722
      %v2765 = vadd.f32 %v2634, %v2727
      %v2766 = vadd.f32 %v2635, %v2730
      %v2767 = vadd.f32 %v2636, %v2735
      %v2768 = vadd.f32 %v2637, %v2738
      %v2769 = vadd.f32 %v2638, %v2743
      %v2770 = vadd.f32 %v2639, %v2746
      %v2771 = vadd.f32 %v2640, %v2751
      %v2772 = vadd.f32 %v2641, %v2754
      %v2773 = vld [vmem:[%s1288] sm:$0x3]
      %v2775 = vunpack.c.l.b16 %v1719
      %v2776 = vpack.c.b16 %v2775, %v2775
      %v2777 = vshll.u32 %v2649, 16
      %v2779 = vrot.slane %v2777, 1
      %v2780 = vsel %vm271, %v2379, %v2779
      %v2781 = vshrl.u32 %v2649, 16
      %v2783 = vor.u32 %v2781, %v2779
      %v2784 = vshll.u32 %v2650, 16
      %v2786 = vrot.slane %v2784, 1
      %v2787 = vsel %vm271, %v2783, %v2786
      %v2788 = vshrl.u32 %v2650, 16
      %v2790 = vor.u32 %v2788, %v2786
      %v2792 = vshll.u32 %v2776, 16
      %v2794 = vrot.slane %v2792, 1
      %v2795 = vsel %vm271, %v2790, %v2794
      %v2797 = vsel %vm340, %v2780, 0
      %v2800 = vsel %vm340, %v2787, 0
      %v2803 = vsel %vm340, %v2795, 0
      %v2806 = vsel %vm365, %v2773, 0
      %2808 = vmatprep.subr.bf16.mxu0 0
      %2809 = vmatpush1.bf16.msra.mxu0 0
      %2810 = vmatprep.subr.bf16.mxu0 0
      %2811 = vmatpush1.bf16.msra.mxu0 0
      %2812 = vmatprep.subr.bf16.mxu0 0
      %2813 = vmatpush1.bf16.msra.mxu0 0
      %2814 = vmatprep.subr.bf16.mxu0 0
      %2815 = vmatpush1.bf16.msra.mxu0 0
      %2816 = vmatprep.subr.bf16.mxu0 0
      %2817 = vmatpush1.bf16.msra.mxu0 0
      %2818 = vmatprep.subr.bf16.mxu0 0
      %2819 = vmatpush1.bf16.msra.mxu0 0
      %2820 = vmatprep.subr.bf16.mxu0 0
      %2821 = vmatpush1.bf16.msra.mxu0 0
      %2822 = vmatprep.subr.bf16.mxu0 0
      %2823 = vmatpush1.bf16.msra.mxu0 %v2806
      %2824 = vmatprep.subr.bf16.mxu0 0
      %2825 = vmatpush2.bf16.msra.mxu0 0
      %2826 = vmatprep.subr.bf16.mxu0 0
      %2827 = vmatpush2.bf16.msra.mxu0 0
      %2828 = vmatprep.subr.bf16.mxu0 0
      %2829 = vmatpush2.bf16.msra.mxu0 0
      %2830 = vmatprep.subr.bf16.mxu0 0
      %2831 = vmatpush2.bf16.msra.mxu0 0
      %2832 = vmatprep.subr.bf16.mxu0 0
      %2833 = vmatpush2.bf16.msra.mxu0 0
      %2834 = vmatprep.subr.bf16.mxu0 0
      %2835 = vmatpush2.bf16.msra.mxu0 0
      %2836 = vmatprep.subr.bf16.mxu0 0
      %2837 = vmatpush2.bf16.msra.mxu0 0
      %2838 = vmatprep.subr.bf16.mxu0 0
      %2839 = vmatpush2.bf16.msra.mxu0 0
      %2840 = vmatprep.mubr.bf16.mxu0 0
      %2841 = vmatmul.mubr.bf16.gmra.mxu0 %v1846
      %v2842 = vpop.f32.mrf.mxu0
      %v2843 = vadd.f32 0.0, %v2842
      %v2844 = vpop.f32.mrf.mxu0
      %v2845 = vpop.f32.mrf.mxu0
      %v2846 = vadd.f32 0.0, %v2845
      %v2847 = vpop.f32.mrf.mxu0
      %2848 = vmatprep.mubr.bf16.mxu0 0
      %2849 = vmatmul.mubr.bf16.gmra.mxu0 %v1849
      %v2850 = vpop.f32.mrf.mxu0
      %v2851 = vadd.f32 0.0, %v2850
      %v2852 = vpop.f32.mrf.mxu0
      %v2853 = vpop.f32.mrf.mxu0
      %v2854 = vadd.f32 0.0, %v2853
      %v2855 = vpop.f32.mrf.mxu0
      %2856 = vmatprep.mubr.bf16.mxu0 0
      %2857 = vmatmul.mubr.bf16.gmra.mxu0 %v1852
      %v2858 = vpop.f32.mrf.mxu0
      %v2859 = vadd.f32 0.0, %v2858
      %v2860 = vpop.f32.mrf.mxu0
      %v2861 = vpop.f32.mrf.mxu0
      %v2862 = vadd.f32 0.0, %v2861
      %v2863 = vpop.f32.mrf.mxu0
      %2864 = vmatprep.mubr.bf16.mxu0 0
      %2865 = vmatmul.mubr.bf16.gmra.mxu0 %v2386
      %v2866 = vpop.f32.mrf.mxu0
      %v2867 = vadd.f32 0.0, %v2866
      %v2868 = vpop.f32.mrf.mxu0
      %v2869 = vpop.f32.mrf.mxu0
      %v2870 = vadd.f32 0.0, %v2869
      %v2871 = vpop.f32.mrf.mxu0
      %2872 = vmatprep.mubr.bf16.mxu0 0
      %2873 = vmatmul.mubr.bf16.gmra.mxu0 %v2389
      %v2874 = vpop.f32.mrf.mxu0
      %v2875 = vadd.f32 0.0, %v2874
      %v2876 = vpop.f32.mrf.mxu0
      %v2877 = vpop.f32.mrf.mxu0
      %v2878 = vadd.f32 0.0, %v2877
      %v2879 = vpop.f32.mrf.mxu0
      %2880 = vmatprep.mubr.bf16.mxu0 0
      %2881 = vmatmul.mubr.bf16.gmra.mxu0 %v2797
      %v2882 = vpop.f32.mrf.mxu0
      %v2883 = vadd.f32 0.0, %v2882
      %v2884 = vpop.f32.mrf.mxu0
      %v2885 = vpop.f32.mrf.mxu0
      %v2886 = vadd.f32 0.0, %v2885
      %v2887 = vpop.f32.mrf.mxu0
      %2888 = vmatprep.mubr.bf16.mxu0 0
      %2889 = vmatmul.mubr.bf16.gmra.mxu0 %v2800
      %v2890 = vpop.f32.mrf.mxu0
      %v2891 = vadd.f32 0.0, %v2890
      %v2892 = vpop.f32.mrf.mxu0
      %v2893 = vpop.f32.mrf.mxu0
      %v2894 = vadd.f32 0.0, %v2893
      %v2895 = vpop.f32.mrf.mxu0
      %2896 = vmatprep.mubr.bf16.mxu0 0
      %2897 = vmatmul.mubr.bf16.gmra.mxu0 %v2803
      %v2898 = vpop.f32.mrf.mxu0
      %v2899 = vadd.f32 0.0, %v2898
      %v2900 = vpop.f32.mrf.mxu0
      %v2901 = vpop.f32.mrf.mxu0
      %v2902 = vadd.f32 0.0, %v2901
      %v2903 = vpop.f32.mrf.mxu0
      %2904 = vdwg.mxu0
      %v2905 = vadd.f32 %v2757, %v2843
      %v2906 = vadd.f32 %v2758, %v2846
      %v2907 = vadd.f32 %v2759, %v2851
      %v2908 = vadd.f32 %v2760, %v2854
      %v2909 = vadd.f32 %v2761, %v2859
      %v2910 = vadd.f32 %v2762, %v2862
      %v2911 = vadd.f32 %v2763, %v2867
      %v2912 = vadd.f32 %v2764, %v2870
      %v2913 = vadd.f32 %v2765, %v2875
      %v2914 = vadd.f32 %v2766, %v2878
      %v2915 = vadd.f32 %v2767, %v2883
      %v2916 = vadd.f32 %v2768, %v2886
      %v2917 = vadd.f32 %v2769, %v2891
      %v2918 = vadd.f32 %v2770, %v2894
      %v2919 = vadd.f32 %v2771, %v2899
      %v2920 = vadd.f32 %v2772, %v2902
      %v2921 = vld [vmem:[%s1437] sm:$0x3]
      %v2922 = vrot.slane %v2649, 1
      %v2923 = vsel %vm584, %v2513, %v2922
      %v2924 = vrot.slane %v2650, 1
      %v2925 = vsel %vm584, %v2922, %v2924
      %v2926 = vrot.slane %v2776, 1
      %v2927 = vsel %vm584, %v2924, %v2926
      %v2929 = vsel %vm340, %v2923, 0
      %v2932 = vsel %vm340, %v2925, 0
      %v2935 = vsel %vm340, %v2927, 0
      %v2938 = vsel %vm365, %v2921, 0
      %2940 = vmatprep.subr.bf16.mxu0 0
      %2941 = vmatpush1.bf16.msra.mxu0 0
      %2942 = vmatprep.subr.bf16.mxu0 0
      %2943 = vmatpush1.bf16.msra.mxu0 0
      %2944 = vmatprep.subr.bf16.mxu0 0
      %2945 = vmatpush1.bf16.msra.mxu0 0
      %2946 = vmatprep.subr.bf16.mxu0 0
      %2947 = vmatpush1.bf16.msra.mxu0 0
      %2948 = vmatprep.subr.bf16.mxu0 0
      %2949 = vmatpush1.bf16.msra.mxu0 0
      %2950 = vmatprep.subr.bf16.mxu0 0
      %2951 = vmatpush1.bf16.msra.mxu0 0
      %2952 = vmatprep.subr.bf16.mxu0 0
      %2953 = vmatpush1.bf16.msra.mxu0 0
      %2954 = vmatprep.subr.bf16.mxu0 0
      %2955 = vmatpush1.bf16.msra.mxu0 %v2938
      %2956 = vmatprep.subr.bf16.mxu0 0
      %2957 = vmatpush2.bf16.msra.mxu0 0
      %2958 = vmatprep.subr.bf16.mxu0 0
      %2959 = vmatpush2.bf16.msra.mxu0 0
      %2960 = vmatprep.subr.bf16.mxu0 0
      %2961 = vmatpush2.bf16.msra.mxu0 0
      %2962 = vmatprep.subr.bf16.mxu0 0
      %2963 = vmatpush2.bf16.msra.mxu0 0
      %2964 = vmatprep.subr.bf16.mxu0 0
      %2965 = vmatpush2.bf16.msra.mxu0 0
      %2966 = vmatprep.subr.bf16.mxu0 0
      %2967 = vmatpush2.bf16.msra.mxu0 0
      %2968 = vmatprep.subr.bf16.mxu0 0
      %2969 = vmatpush2.bf16.msra.mxu0 0
      %2970 = vmatprep.subr.bf16.mxu0 0
      %2971 = vmatpush2.bf16.msra.mxu0 0
      %2972 = vmatprep.mubr.bf16.mxu0 0
      %2973 = vmatmul.mubr.bf16.gmra.mxu0 %v2104
      %v2974 = vpop.f32.mrf.mxu0
      %v2975 = vadd.f32 0.0, %v2974
      %v2976 = vpop.f32.mrf.mxu0
      %v2977 = vpop.f32.mrf.mxu0
      %v2978 = vadd.f32 0.0, %v2977
      %v2979 = vpop.f32.mrf.mxu0
      %2980 = vmatprep.mubr.bf16.mxu0 0
      %2981 = vmatmul.mubr.bf16.gmra.mxu0 %v2107
      %v2982 = vpop.f32.mrf.mxu0
      %v2983 = vadd.f32 0.0, %v2982
      %v2984 = vpop.f32.mrf.mxu0
      %v2985 = vpop.f32.mrf.mxu0
      %v2986 = vadd.f32 0.0, %v2985
      %v2987 = vpop.f32.mrf.mxu0
      %2988 = vmatprep.mubr.bf16.mxu0 0
      %2989 = vmatmul.mubr.bf16.gmra.mxu0 %v2110
      %v2990 = vpop.f32.mrf.mxu0
      %v2991 = vadd.f32 0.0, %v2990
      %v2992 = vpop.f32.mrf.mxu0
      %v2993 = vpop.f32.mrf.mxu0
      %v2994 = vadd.f32 0.0, %v2993
      %v2995 = vpop.f32.mrf.mxu0
      %2996 = vmatprep.mubr.bf16.mxu0 0
      %2997 = vmatmul.mubr.bf16.gmra.mxu0 %v2518
      %v2998 = vpop.f32.mrf.mxu0
      %v2999 = vadd.f32 0.0, %v2998
      %v3000 = vpop.f32.mrf.mxu0
      %v3001 = vpop.f32.mrf.mxu0
      %v3002 = vadd.f32 0.0, %v3001
      %v3003 = vpop.f32.mrf.mxu0
      %3004 = vmatprep.mubr.bf16.mxu0 0
      %3005 = vmatmul.mubr.bf16.gmra.mxu0 %v2521
      %v3006 = vpop.f32.mrf.mxu0
      %v3007 = vadd.f32 0.0, %v3006
      %v3008 = vpop.f32.mrf.mxu0
      %v3009 = vpop.f32.mrf.mxu0
      %v3010 = vadd.f32 0.0, %v3009
      %v3011 = vpop.f32.mrf.mxu0
      %3012 = vmatprep.mubr.bf16.mxu0 0
      %3013 = vmatmul.mubr.bf16.gmra.mxu0 %v2929
      %v3014 = vpop.f32.mrf.mxu0
      %v3015 = vadd.f32 0.0, %v3014
      %v3016 = vpop.f32.mrf.mxu0
      %v3017 = vpop.f32.mrf.mxu0
      %v3018 = vadd.f32 0.0, %v3017
      %v3019 = vpop.f32.mrf.mxu0
      %3020 = vmatprep.mubr.bf16.mxu0 0
      %3021 = vmatmul.mubr.bf16.gmra.mxu0 %v2932
      %v3022 = vpop.f32.mrf.mxu0
      %v3023 = vadd.f32 0.0, %v3022
      %v3024 = vpop.f32.mrf.mxu0
      %v3025 = vpop.f32.mrf.mxu0
      %v3026 = vadd.f32 0.0, %v3025
      %v3027 = vpop.f32.mrf.mxu0
      %3028 = vmatprep.mubr.bf16.mxu0 0
      %3029 = vmatmul.mubr.bf16.gmra.mxu0 %v2935
      %v3030 = vpop.f32.mrf.mxu0
      %v3031 = vadd.f32 0.0, %v3030
      %v3032 = vpop.f32.mrf.mxu0
      %v3033 = vpop.f32.mrf.mxu0
      %v3034 = vadd.f32 0.0, %v3033
      %v3035 = vpop.f32.mrf.mxu0
      %3036 = vdwg.mxu0
      %v3037 = vadd.f32 %v2905, %v2975
      %v3038 = vadd.f32 %v2906, %v2978
      %v3039 = vadd.f32 %v2907, %v2983
      %v3040 = vadd.f32 %v2908, %v2986
      %v3041 = vadd.f32 %v2909, %v2991
      %v3042 = vadd.f32 %v2910, %v2994
      %v3043 = vadd.f32 %v2911, %v2999
      %v3044 = vadd.f32 %v2912, %v3002
      %v3045 = vadd.f32 %v2913, %v3007
      %v3046 = vadd.f32 %v2914, %v3010
      %v3047 = vadd.f32 %v2915, %v3015
      %v3048 = vadd.f32 %v2916, %v3018
      %v3049 = vadd.f32 %v2917, %v3023
      %v3050 = vadd.f32 %v2918, %v3026
      %v3051 = vadd.f32 %v2919, %v3031
      %v3052 = vadd.f32 %v2920, %v3034
      %v3053 = vld [vmem:[%s2] sm:$0x1]
      %v3055 = vlaneseq
      %v3056 = vshrl.u32 %v3055, 7
      %v3057 = vsub.s32 0, %v3056
      %v3058 = vrot.slane %v3053, %v3057
      %v3060 = vadd.f32 %v3037, %v3058
      %v3061 = vadd.f32 %v3038, %v3058
      %v3062 = vadd.f32 %v3039, %v3058
      %v3063 = vadd.f32 %v3040, %v3058
      %v3064 = vadd.f32 %v3041, %v3058
      %v3065 = vadd.f32 %v3042, %v3058
      %v3066 = vadd.f32 %v3043, %v3058
      %v3067 = vadd.f32 %v3044, %v3058
      %v3068 = vadd.f32 %v3045, %v3058
      %v3069 = vadd.f32 %v3046, %v3058
      %v3070 = vadd.f32 %v3047, %v3058
      %v3071 = vadd.f32 %v3048, %v3058
      %v3072 = vadd.f32 %v3049, %v3058
      %v3073 = vadd.f32 %v3050, %v3058
      %v3074 = vadd.f32 %v3051, %v3058
      %v3075 = vadd.f32 %v3052, %v3058
      %v3076 = vmax.f32 %v3060, 0.0
      %v3077 = vmax.f32 %v3061, 0.0
      %v3078 = vmax.f32 %v3062, 0.0
      %v3079 = vmax.f32 %v3063, 0.0
      %v3080 = vmax.f32 %v3064, 0.0
      %v3081 = vmax.f32 %v3065, 0.0
      %v3082 = vmax.f32 %v3066, 0.0
      %v3083 = vmax.f32 %v3067, 0.0
      %v3084 = vmax.f32 %v3068, 0.0
      %v3085 = vmax.f32 %v3069, 0.0
      %v3086 = vmax.f32 %v3070, 0.0
      %v3087 = vmax.f32 %v3071, 0.0
      %v3088 = vmax.f32 %v3072, 0.0
      %v3089 = vmax.f32 %v3073, 0.0
      %v3090 = vmax.f32 %v3074, 0.0
      %v3091 = vmax.f32 %v3075, 0.0
      %v3092 = vpack.c.bf16 %v3077, %v3076
      %v3093 = vpack.c.bf16 %v3079, %v3078
      %v3094 = vpack.c.bf16 %v3081, %v3080
      %v3095 = vpack.c.bf16 %v3083, %v3082
      %v3096 = vpack.c.bf16 %v3085, %v3084
      %v3097 = vpack.c.bf16 %v3087, %v3086
      %v3098 = vpack.c.bf16 %v3089, %v3088
      %v3099 = vpack.c.bf16 %v3091, %v3090
      %v3108 = vunpack.c.l.b16 %v3092
      %v3109 = vunpack.c.h.b16 %v3092
      %v3110 = vunpack.c.l.b16 %v3093
      %v3111 = vunpack.c.h.b16 %v3093
      %v3112 = vunpack.c.l.b16 %v3094
      %v3113 = vunpack.c.h.b16 %v3094
      %v3114 = vunpack.c.l.b16 %v3095
      %v3115 = vunpack.c.h.b16 %v3095
      %v3116 = vunpack.c.l.b16 %v3096
      %v3117 = vunpack.c.h.b16 %v3096
      %v3118 = vunpack.c.l.b16 %v3097
      %v3119 = vunpack.c.h.b16 %v3097
      %v3120 = vunpack.c.l.b16 %v3098
      %v3121 = vunpack.c.h.b16 %v3098
      %v3122 = vunpack.c.l.b16 %v3099
      %v3123 = vunpack.c.h.b16 %v3099
      %v3124 = vpack.c.b16 %v3108, %v3108
      %v3125 = vpack.c.b16 %v3109, %v3109
      %v3126 = vpack.c.b16 %v3110, %v3110
      %v3127 = vpack.c.b16 %v3111, %v3111
      %v3128 = vpack.c.b16 %v3112, %v3112
      %v3129 = vpack.c.b16 %v3113, %v3113
      %v3130 = vpack.c.b16 %v3114, %v3114
      %v3131 = vpack.c.b16 %v3115, %v3115
      %v3132 = vpack.c.b16 %v3116, %v3116
      %v3133 = vpack.c.b16 %v3117, %v3117
      %v3134 = vpack.c.b16 %v3118, %v3118
      %v3135 = vpack.c.b16 %v3119, %v3119
      %v3136 = vpack.c.b16 %v3120, %v3120
      %v3137 = vpack.c.b16 %v3121, %v3121
      %v3138 = vpack.c.b16 %v3122, %v3122
      %v3139 = vpack.c.b16 %v3123, %v3123
      %3156 = vst.msk [vmem:[%s192 + $0x40] sm:$0xf] %vm1673, %v3124
      %3157 = vst.msk [vmem:[%s192 + $0x44] sm:$0xf] %vm1673, %v3125
      %3158 = vst.msk [vmem:[%s192 + $0x48] sm:$0xf] %vm1673, %v3126
      %3159 = vst.msk [vmem:[%s192 + $0x4c] sm:$0xf] %vm1673, %v3127
      %3160 = vst.msk [vmem:[%s192 + $0x50] sm:$0xf] %vm1673, %v3128
      %3161 = vst.msk [vmem:[%s192 + $0x54] sm:$0xf] %vm1673, %v3129
      %3162 = vst.msk [vmem:[%s192 + $0x58] sm:$0xf] %vm1673, %v3130
      %3163 = vst.msk [vmem:[%s192 + $0x5c] sm:$0xf] %vm1673, %v3131
      %3164 = vst.msk [vmem:[%s192 + $0x60] sm:$0xf] %vm1673, %v3132
      %3165 = vst.msk [vmem:[%s192 + $0x64] sm:$0xf] %vm1673, %v3133
      %3166 = vst.msk [vmem:[%s192 + $0x68] sm:$0xf] %vm1673, %v3134
      %3167 = vst.msk [vmem:[%s192 + $0x6c] sm:$0xf] %vm1673, %v3135
      %3168 = vst.msk [vmem:[%s192 + $0x70] sm:$0xf] %vm1673, %v3136
      %3169 = vst.msk [vmem:[%s192 + $0x74] sm:$0xf] %vm1673, %v3137
      %3170 = vst.msk [vmem:[%s192 + $0x78] sm:$0xf] %vm1673, %v3138
      %3171 = vst.msk [vmem:[%s192 + $0x7c] sm:$0xf] %vm1673, %v3139
      %s3172 = sadd.s32 %s195, 256
      %s3173 = sshra.s32 %s3172, 3
      %s3174 = sand.u32 %s3172, 7
      %s3175 = smul.addr %s3173, 4
      %s3176 = scalar_lea.vmem %s183, %s3175
      %v3177 = vld [vmem:[%s3176] sm:$0xf]
      %v3178 = vld [vmem:[%s3176 + $0x4] sm:$0xf]
      %v3179 = vld [vmem:[%s3176 + $0x8] sm:$0xf]
      %v3180 = vld [vmem:[%s3176 + $0xc] sm:$0xf]
      %v3181 = vld [vmem:[%s3176 + $0x10] sm:$0xf]
      %v3182 = vld [vmem:[%s3176 + $0x14] sm:$0xf]
      %v3183 = vld [vmem:[%s3176 + $0x18] sm:$0xf]
      %v3184 = vld [vmem:[%s3176 + $0x1c] sm:$0xf]
      %v3185 = vld [vmem:[%s3176 + $0x20] sm:$0xf]
      %v3186 = vld [vmem:[%s3176 + $0x24] sm:$0xf]
      %v3187 = vld [vmem:[%s3176 + $0x28] sm:$0xf]
      %v3188 = vld [vmem:[%s3176 + $0x2c] sm:$0xf]
      %v3189 = vld [vmem:[%s3176 + $0x30] sm:$0xf]
      %v3190 = vld [vmem:[%s3176 + $0x34] sm:$0xf]
      %v3191 = vld [vmem:[%s3176 + $0x38] sm:$0xf]
      %v3192 = vld [vmem:[%s3176 + $0x3c] sm:$0xf]
      %v3193 = vld [vmem:[%s3176 + $0x40] sm:$0xf]
      %v3194 = vld [vmem:[%s3176 + $0x44] sm:$0xf]
      %v3195 = vld [vmem:[%s3176 + $0x48] sm:$0xf]
      %v3196 = vld [vmem:[%s3176 + $0x4c] sm:$0xf]
      %v3197 = vld [vmem:[%s3176 + $0x50] sm:$0xf]
      %v3198 = vld [vmem:[%s3176 + $0x54] sm:$0xf]
      %v3199 = vld [vmem:[%s3176 + $0x58] sm:$0xf]
      %v3200 = vld [vmem:[%s3176 + $0x5c] sm:$0xf]
      %v3201 = vld [vmem:[%s3176 + $0x60] sm:$0xf]
      %v3202 = vld [vmem:[%s1] sm:$0x3]
      %v3203 = vld [vmem:[%s226] sm:$0x3]
      %v3221 = vunpack.c.l.b16 %v3177
      %v3222 = vunpack.c.l.b16 %v3178
      %v3223 = vunpack.c.l.b16 %v3179
      %v3224 = vunpack.c.l.b16 %v3180
      %v3225 = vunpack.c.l.b16 %v3181
      %v3226 = vunpack.c.l.b16 %v3182
      %v3227 = vunpack.c.l.b16 %v3183
      %v3228 = vunpack.c.l.b16 %v3184
      %v3229 = vunpack.c.l.b16 %v3185
      %v3230 = vunpack.c.l.b16 %v3186
      %v3231 = vunpack.c.l.b16 %v3187
      %v3232 = vunpack.c.l.b16 %v3188
      %v3233 = vunpack.c.l.b16 %v3189
      %v3234 = vunpack.c.l.b16 %v3190
      %v3235 = vunpack.c.l.b16 %v3191
      %v3236 = vunpack.c.l.b16 %v3192
      %v3237 = vunpack.c.l.b16 %v3193
      %v3238 = vpack.c.b16 %v3222, %v3221
      %v3239 = vpack.c.b16 %v3224, %v3223
      %v3240 = vpack.c.b16 %v3226, %v3225
      %v3241 = vpack.c.b16 %v3228, %v3227
      %v3242 = vpack.c.b16 %v3230, %v3229
      %v3243 = vpack.c.b16 %v3232, %v3231
      %v3244 = vpack.c.b16 %v3234, %v3233
      %v3245 = vpack.c.b16 %v3236, %v3235
      %v3246 = vpack.c.b16 %v3237, %v3237
      %v3248 = vshrl.u32 %v3238, 16
      %v3250 = vshll.u32 %v3238, 16
      %v3252 = vrot.slane %v3250, 1
      %v3253 = vor.u32 %v3248, %v3252
      %v3255 = vshll.u32 %v3239, 16
      %v3257 = vrot.slane %v3255, 1
      %v3258 = vsel %vm271, %v3253, %v3257
      %v3259 = vshrl.u32 %v3239, 16
      %v3261 = vor.u32 %v3259, %v3257
      %v3263 = vshll.u32 %v3240, 16
      %v3265 = vrot.slane %v3263, 1
      %v3266 = vsel %vm271, %v3261, %v3265
      %v3267 = vshrl.u32 %v3240, 16
      %v3269 = vor.u32 %v3267, %v3265
      %v3271 = vshll.u32 %v3241, 16
      %v3273 = vrot.slane %v3271, 1
      %v3274 = vsel %vm271, %v3269, %v3273
      %v3275 = vshrl.u32 %v3241, 16
      %v3277 = vor.u32 %v3275, %v3273
      %v3279 = vshll.u32 %v3242, 16
      %v3281 = vrot.slane %v3279, 1
      %v3282 = vsel %vm271, %v3277, %v3281
      %v3283 = vshrl.u32 %v3242, 16
      %v3285 = vor.u32 %v3283, %v3281
      %v3287 = vshll.u32 %v3243, 16
      %v3289 = vrot.slane %v3287, 1
      %v3290 = vsel %vm271, %v3285, %v3289
      %v3291 = vshrl.u32 %v3243, 16
      %v3293 = vor.u32 %v3291, %v3289
      %v3295 = vshll.u32 %v3244, 16
      %v3297 = vrot.slane %v3295, 1
      %v3298 = vsel %vm271, %v3293, %v3297
      %v3299 = vshrl.u32 %v3244, 16
      %v3301 = vor.u32 %v3299, %v3297
      %v3303 = vshll.u32 %v3245, 16
      %v3305 = vrot.slane %v3303, 1
      %v3306 = vsel %vm271, %v3301, %v3305
      %v3307 = vshrl.u32 %v3245, 16
      %v3309 = vor.u32 %v3307, %v3305
      %v3311 = vshll.u32 %v3246, 16
      %v3313 = vrot.slane %v3311, 1
      %v3314 = vsel %vm271, %v3309, %v3313
      %v3316 = vsel %vm340, %v3258, 0
      %v3319 = vsel %vm340, %v3266, 0
      %v3322 = vsel %vm340, %v3274, 0
      %v3325 = vsel %vm340, %v3282, 0
      %v3328 = vsel %vm340, %v3290, 0
      %v3331 = vsel %vm340, %v3298, 0
      %v3334 = vsel %vm340, %v3306, 0
      %v3337 = vsel %vm340, %v3314, 0
      %v3340 = vsel %vm365, %v3203, 0
      %3342 = vmatprep.subr.bf16.mxu0 0
      %3343 = vmatpush1.bf16.msra.mxu0 0
      %3344 = vmatprep.subr.bf16.mxu0 0
      %3345 = vmatpush1.bf16.msra.mxu0 0
      %3346 = vmatprep.subr.bf16.mxu0 0
      %3347 = vmatpush1.bf16.msra.mxu0 0
      %3348 = vmatprep.subr.bf16.mxu0 0
      %3349 = vmatpush1.bf16.msra.mxu0 0
      %3350 = vmatprep.subr.bf16.mxu0 0
      %3351 = vmatpush1.bf16.msra.mxu0 0
      %3352 = vmatprep.subr.bf16.mxu0 0
      %3353 = vmatpush1.bf16.msra.mxu0 0
      %3354 = vmatprep.subr.bf16.mxu0 0
      %3355 = vmatpush1.bf16.msra.mxu0 0
      %3356 = vmatprep.subr.bf16.mxu0 0
      %3357 = vmatpush1.bf16.msra.mxu0 %v3340
      %3358 = vmatprep.subr.bf16.mxu0 0
      %3359 = vmatpush2.bf16.msra.mxu0 0
      %3360 = vmatprep.subr.bf16.mxu0 0
      %3361 = vmatpush2.bf16.msra.mxu0 0
      %3362 = vmatprep.subr.bf16.mxu0 0
      %3363 = vmatpush2.bf16.msra.mxu0 0
      %3364 = vmatprep.subr.bf16.mxu0 0
      %3365 = vmatpush2.bf16.msra.mxu0 0
      %3366 = vmatprep.subr.bf16.mxu0 0
      %3367 = vmatpush2.bf16.msra.mxu0 0
      %3368 = vmatprep.subr.bf16.mxu0 0
      %3369 = vmatpush2.bf16.msra.mxu0 0
      %3370 = vmatprep.subr.bf16.mxu0 0
      %3371 = vmatpush2.bf16.msra.mxu0 0
      %3372 = vmatprep.subr.bf16.mxu0 0
      %3373 = vmatpush2.bf16.msra.mxu0 0
      %3374 = vmatprep.mubr.bf16.mxu0 0
      %3375 = vmatmul.mubr.bf16.gmra.mxu0 %v3316
      %v3376 = vpop.f32.mrf.mxu0
      %v3377 = vadd.f32 0.0, %v3376
      %v3378 = vpop.f32.mrf.mxu0
      %v3379 = vpop.f32.mrf.mxu0
      %v3380 = vadd.f32 0.0, %v3379
      %v3381 = vpop.f32.mrf.mxu0
      %3382 = vmatprep.mubr.bf16.mxu0 0
      %3383 = vmatmul.mubr.bf16.gmra.mxu0 %v3319
      %v3384 = vpop.f32.mrf.mxu0
      %v3385 = vadd.f32 0.0, %v3384
      %v3386 = vpop.f32.mrf.mxu0
      %v3387 = vpop.f32.mrf.mxu0
      %v3388 = vadd.f32 0.0, %v3387
      %v3389 = vpop.f32.mrf.mxu0
      %3390 = vmatprep.mubr.bf16.mxu0 0
      %3391 = vmatmul.mubr.bf16.gmra.mxu0 %v3322
      %v3392 = vpop.f32.mrf.mxu0
      %v3393 = vadd.f32 0.0, %v3392
      %v3394 = vpop.f32.mrf.mxu0
      %v3395 = vpop.f32.mrf.mxu0
      %v3396 = vadd.f32 0.0, %v3395
      %v3397 = vpop.f32.mrf.mxu0
      %3398 = vmatprep.mubr.bf16.mxu0 0
      %3399 = vmatmul.mubr.bf16.gmra.mxu0 %v3325
      %v3400 = vpop.f32.mrf.mxu0
      %v3401 = vadd.f32 0.0, %v3400
      %v3402 = vpop.f32.mrf.mxu0
      %v3403 = vpop.f32.mrf.mxu0
      %v3404 = vadd.f32 0.0, %v3403
      %v3405 = vpop.f32.mrf.mxu0
      %3406 = vmatprep.mubr.bf16.mxu0 0
      %3407 = vmatmul.mubr.bf16.gmra.mxu0 %v3328
      %v3408 = vpop.f32.mrf.mxu0
      %v3409 = vadd.f32 0.0, %v3408
      %v3410 = vpop.f32.mrf.mxu0
      %v3411 = vpop.f32.mrf.mxu0
      %v3412 = vadd.f32 0.0, %v3411
      %v3413 = vpop.f32.mrf.mxu0
      %3414 = vmatprep.mubr.bf16.mxu0 0
      %3415 = vmatmul.mubr.bf16.gmra.mxu0 %v3331
      %v3416 = vpop.f32.mrf.mxu0
      %v3417 = vadd.f32 0.0, %v3416
      %v3418 = vpop.f32.mrf.mxu0
      %v3419 = vpop.f32.mrf.mxu0
      %v3420 = vadd.f32 0.0, %v3419
      %v3421 = vpop.f32.mrf.mxu0
      %3422 = vmatprep.mubr.bf16.mxu0 0
      %3423 = vmatmul.mubr.bf16.gmra.mxu0 %v3334
      %v3424 = vpop.f32.mrf.mxu0
      %v3425 = vadd.f32 0.0, %v3424
      %v3426 = vpop.f32.mrf.mxu0
      %v3427 = vpop.f32.mrf.mxu0
      %v3428 = vadd.f32 0.0, %v3427
      %v3429 = vpop.f32.mrf.mxu0
      %3430 = vmatprep.mubr.bf16.mxu0 0
      %3431 = vmatmul.mubr.bf16.gmra.mxu0 %v3337
      %v3432 = vpop.f32.mrf.mxu0
      %v3433 = vadd.f32 0.0, %v3432
      %v3434 = vpop.f32.mrf.mxu0
      %v3435 = vpop.f32.mrf.mxu0
      %v3436 = vadd.f32 0.0, %v3435
      %v3437 = vpop.f32.mrf.mxu0
      %3438 = vdwg.mxu0
      %v3439 = vsel %vm340, %v3238, 0
      %v3441 = vsel %vm340, %v3239, 0
      %v3443 = vsel %vm340, %v3240, 0
      %v3445 = vsel %vm340, %v3241, 0
      %v3447 = vsel %vm340, %v3242, 0
      %v3449 = vsel %vm340, %v3243, 0
      %v3451 = vsel %vm340, %v3244, 0
      %v3453 = vsel %vm340, %v3245, 0
      %v3456 = vsel %vm365, %v3202, 0
      %3458 = vmatprep.subr.bf16.mxu0 0
      %3459 = vmatpush1.bf16.msra.mxu0 0
      %3460 = vmatprep.subr.bf16.mxu0 0
      %3461 = vmatpush1.bf16.msra.mxu0 0
      %3462 = vmatprep.subr.bf16.mxu0 0
      %3463 = vmatpush1.bf16.msra.mxu0 0
      %3464 = vmatprep.subr.bf16.mxu0 0
      %3465 = vmatpush1.bf16.msra.mxu0 0
      %3466 = vmatprep.subr.bf16.mxu0 0
      %3467 = vmatpush1.bf16.msra.mxu0 0
      %3468 = vmatprep.subr.bf16.mxu0 0
      %3469 = vmatpush1.bf16.msra.mxu0 0
      %3470 = vmatprep.subr.bf16.mxu0 0
      %3471 = vmatpush1.bf16.msra.mxu0 0
      %3472 = vmatprep.subr.bf16.mxu0 0
      %3473 = vmatpush1.bf16.msra.mxu0 %v3456
      %3474 = vmatprep.subr.bf16.mxu0 0
      %3475 = vmatpush2.bf16.msra.mxu0 0
      %3476 = vmatprep.subr.bf16.mxu0 0
      %3477 = vmatpush2.bf16.msra.mxu0 0
      %3478 = vmatprep.subr.bf16.mxu0 0
      %3479 = vmatpush2.bf16.msra.mxu0 0
      %3480 = vmatprep.subr.bf16.mxu0 0
      %3481 = vmatpush2.bf16.msra.mxu0 0
      %3482 = vmatprep.subr.bf16.mxu0 0
      %3483 = vmatpush2.bf16.msra.mxu0 0
      %3484 = vmatprep.subr.bf16.mxu0 0
      %3485 = vmatpush2.bf16.msra.mxu0 0
      %3486 = vmatprep.subr.bf16.mxu0 0
      %3487 = vmatpush2.bf16.msra.mxu0 0
      %3488 = vmatprep.subr.bf16.mxu0 0
      %3489 = vmatpush2.bf16.msra.mxu0 0
      %3490 = vmatprep.mubr.bf16.mxu0 0
      %3491 = vmatmul.mubr.bf16.gmra.mxu0 %v3439
      %v3492 = vpop.f32.mrf.mxu0
      %v3493 = vadd.f32 %v3377, %v3492
      %v3494 = vpop.f32.mrf.mxu0
      %v3495 = vpop.f32.mrf.mxu0
      %v3496 = vadd.f32 %v3380, %v3495
      %v3497 = vpop.f32.mrf.mxu0
      %3498 = vmatprep.mubr.bf16.mxu0 0
      %3499 = vmatmul.mubr.bf16.gmra.mxu0 %v3441
      %v3500 = vpop.f32.mrf.mxu0
      %v3501 = vadd.f32 %v3385, %v3500
      %v3502 = vpop.f32.mrf.mxu0
      %v3503 = vpop.f32.mrf.mxu0
      %v3504 = vadd.f32 %v3388, %v3503
      %v3505 = vpop.f32.mrf.mxu0
      %3506 = vmatprep.mubr.bf16.mxu0 0
      %3507 = vmatmul.mubr.bf16.gmra.mxu0 %v3443
      %v3508 = vpop.f32.mrf.mxu0
      %v3509 = vadd.f32 %v3393, %v3508
      %v3510 = vpop.f32.mrf.mxu0
      %v3511 = vpop.f32.mrf.mxu0
      %v3512 = vadd.f32 %v3396, %v3511
      %v3513 = vpop.f32.mrf.mxu0
      %3514 = vmatprep.mubr.bf16.mxu0 0
      %3515 = vmatmul.mubr.bf16.gmra.mxu0 %v3445
      %v3516 = vpop.f32.mrf.mxu0
      %v3517 = vadd.f32 %v3401, %v3516
      %v3518 = vpop.f32.mrf.mxu0
      %v3519 = vpop.f32.mrf.mxu0
      %v3520 = vadd.f32 %v3404, %v3519
      %v3521 = vpop.f32.mrf.mxu0
      %3522 = vmatprep.mubr.bf16.mxu0 0
      %3523 = vmatmul.mubr.bf16.gmra.mxu0 %v3447
      %v3524 = vpop.f32.mrf.mxu0
      %v3525 = vadd.f32 %v3409, %v3524
      %v3526 = vpop.f32.mrf.mxu0
      %v3527 = vpop.f32.mrf.mxu0
      %v3528 = vadd.f32 %v3412, %v3527
      %v3529 = vpop.f32.mrf.mxu0
      %3530 = vmatprep.mubr.bf16.mxu0 0
      %3531 = vmatmul.mubr.bf16.gmra.mxu0 %v3449
      %v3532 = vpop.f32.mrf.mxu0
      %v3533 = vadd.f32 %v3417, %v3532
      %v3534 = vpop.f32.mrf.mxu0
      %v3535 = vpop.f32.mrf.mxu0
      %v3536 = vadd.f32 %v3420, %v3535
      %v3537 = vpop.f32.mrf.mxu0
      %3538 = vmatprep.mubr.bf16.mxu0 0
      %3539 = vmatmul.mubr.bf16.gmra.mxu0 %v3451
      %v3540 = vpop.f32.mrf.mxu0
      %v3541 = vadd.f32 %v3425, %v3540
      %v3542 = vpop.f32.mrf.mxu0
      %v3543 = vpop.f32.mrf.mxu0
      %v3544 = vadd.f32 %v3428, %v3543
      %v3545 = vpop.f32.mrf.mxu0
      %3546 = vmatprep.mubr.bf16.mxu0 0
      %3547 = vmatmul.mubr.bf16.gmra.mxu0 %v3453
      %v3548 = vpop.f32.mrf.mxu0
      %v3549 = vadd.f32 %v3433, %v3548
      %v3550 = vpop.f32.mrf.mxu0
      %v3551 = vpop.f32.mrf.mxu0
      %v3552 = vadd.f32 %v3436, %v3551
      %v3553 = vpop.f32.mrf.mxu0
      %3554 = vdwg.mxu0
      %v3555 = vld [vmem:[%s582] sm:$0x3]
      %v3556 = vrot.slane %v3238, 1
      %v3557 = vrot.slane %v3239, 1
      %v3558 = vsel %vm584, %v3556, %v3557
      %v3559 = vrot.slane %v3240, 1
      %v3560 = vsel %vm584, %v3557, %v3559
      %v3561 = vrot.slane %v3241, 1
      %v3562 = vsel %vm584, %v3559, %v3561
      %v3563 = vrot.slane %v3242, 1
      %v3564 = vsel %vm584, %v3561, %v3563
      %v3565 = vrot.slane %v3243, 1
      %v3566 = vsel %vm584, %v3563, %v3565
      %v3567 = vrot.slane %v3244, 1
      %v3568 = vsel %vm584, %v3565, %v3567
      %v3569 = vrot.slane %v3245, 1
      %v3570 = vsel %vm584, %v3567, %v3569
      %v3571 = vrot.slane %v3246, 1
      %v3572 = vsel %vm584, %v3569, %v3571
      %v3574 = vsel %vm340, %v3558, 0
      %v3577 = vsel %vm340, %v3560, 0
      %v3580 = vsel %vm340, %v3562, 0
      %v3583 = vsel %vm340, %v3564, 0
      %v3586 = vsel %vm340, %v3566, 0
      %v3589 = vsel %vm340, %v3568, 0
      %v3592 = vsel %vm340, %v3570, 0
      %v3595 = vsel %vm340, %v3572, 0
      %v3598 = vsel %vm365, %v3555, 0
      %3600 = vmatprep.subr.bf16.mxu0 0
      %3601 = vmatpush1.bf16.msra.mxu0 0
      %3602 = vmatprep.subr.bf16.mxu0 0
      %3603 = vmatpush1.bf16.msra.mxu0 0
      %3604 = vmatprep.subr.bf16.mxu0 0
      %3605 = vmatpush1.bf16.msra.mxu0 0
      %3606 = vmatprep.subr.bf16.mxu0 0
      %3607 = vmatpush1.bf16.msra.mxu0 0
      %3608 = vmatprep.subr.bf16.mxu0 0
      %3609 = vmatpush1.bf16.msra.mxu0 0
      %3610 = vmatprep.subr.bf16.mxu0 0
      %3611 = vmatpush1.bf16.msra.mxu0 0
      %3612 = vmatprep.subr.bf16.mxu0 0
      %3613 = vmatpush1.bf16.msra.mxu0 0
      %3614 = vmatprep.subr.bf16.mxu0 0
      %3615 = vmatpush1.bf16.msra.mxu0 %v3598
      %3616 = vmatprep.subr.bf16.mxu0 0
      %3617 = vmatpush2.bf16.msra.mxu0 0
      %3618 = vmatprep.subr.bf16.mxu0 0
      %3619 = vmatpush2.bf16.msra.mxu0 0
      %3620 = vmatprep.subr.bf16.mxu0 0
      %3621 = vmatpush2.bf16.msra.mxu0 0
      %3622 = vmatprep.subr.bf16.mxu0 0
      %3623 = vmatpush2.bf16.msra.mxu0 0
      %3624 = vmatprep.subr.bf16.mxu0 0
      %3625 = vmatpush2.bf16.msra.mxu0 0
      %3626 = vmatprep.subr.bf16.mxu0 0
      %3627 = vmatpush2.bf16.msra.mxu0 0
      %3628 = vmatprep.subr.bf16.mxu0 0
      %3629 = vmatpush2.bf16.msra.mxu0 0
      %3630 = vmatprep.subr.bf16.mxu0 0
      %3631 = vmatpush2.bf16.msra.mxu0 0
      %3632 = vmatprep.mubr.bf16.mxu0 0
      %3633 = vmatmul.mubr.bf16.gmra.mxu0 %v3574
      %v3634 = vpop.f32.mrf.mxu0
      %v3635 = vadd.f32 0.0, %v3634
      %v3636 = vpop.f32.mrf.mxu0
      %v3637 = vpop.f32.mrf.mxu0
      %v3638 = vadd.f32 0.0, %v3637
      %v3639 = vpop.f32.mrf.mxu0
      %3640 = vmatprep.mubr.bf16.mxu0 0
      %3641 = vmatmul.mubr.bf16.gmra.mxu0 %v3577
      %v3642 = vpop.f32.mrf.mxu0
      %v3643 = vadd.f32 0.0, %v3642
      %v3644 = vpop.f32.mrf.mxu0
      %v3645 = vpop.f32.mrf.mxu0
      %v3646 = vadd.f32 0.0, %v3645
      %v3647 = vpop.f32.mrf.mxu0
      %3648 = vmatprep.mubr.bf16.mxu0 0
      %3649 = vmatmul.mubr.bf16.gmra.mxu0 %v3580
      %v3650 = vpop.f32.mrf.mxu0
      %v3651 = vadd.f32 0.0, %v3650
      %v3652 = vpop.f32.mrf.mxu0
      %v3653 = vpop.f32.mrf.mxu0
      %v3654 = vadd.f32 0.0, %v3653
      %v3655 = vpop.f32.mrf.mxu0
      %3656 = vmatprep.mubr.bf16.mxu0 0
      %3657 = vmatmul.mubr.bf16.gmra.mxu0 %v3583
      %v3658 = vpop.f32.mrf.mxu0
      %v3659 = vadd.f32 0.0, %v3658
      %v3660 = vpop.f32.mrf.mxu0
      %v3661 = vpop.f32.mrf.mxu0
      %v3662 = vadd.f32 0.0, %v3661
      %v3663 = vpop.f32.mrf.mxu0
      %3664 = vmatprep.mubr.bf16.mxu0 0
      %3665 = vmatmul.mubr.bf16.gmra.mxu0 %v3586
      %v3666 = vpop.f32.mrf.mxu0
      %v3667 = vadd.f32 0.0, %v3666
      %v3668 = vpop.f32.mrf.mxu0
      %v3669 = vpop.f32.mrf.mxu0
      %v3670 = vadd.f32 0.0, %v3669
      %v3671 = vpop.f32.mrf.mxu0
      %3672 = vmatprep.mubr.bf16.mxu0 0
      %3673 = vmatmul.mubr.bf16.gmra.mxu0 %v3589
      %v3674 = vpop.f32.mrf.mxu0
      %v3675 = vadd.f32 0.0, %v3674
      %v3676 = vpop.f32.mrf.mxu0
      %v3677 = vpop.f32.mrf.mxu0
      %v3678 = vadd.f32 0.0, %v3677
      %v3679 = vpop.f32.mrf.mxu0
      %3680 = vmatprep.mubr.bf16.mxu0 0
      %3681 = vmatmul.mubr.bf16.gmra.mxu0 %v3592
      %v3682 = vpop.f32.mrf.mxu0
      %v3683 = vadd.f32 0.0, %v3682
      %v3684 = vpop.f32.mrf.mxu0
      %v3685 = vpop.f32.mrf.mxu0
      %v3686 = vadd.f32 0.0, %v3685
      %v3687 = vpop.f32.mrf.mxu0
      %3688 = vmatprep.mubr.bf16.mxu0 0
      %3689 = vmatmul.mubr.bf16.gmra.mxu0 %v3595
      %v3690 = vpop.f32.mrf.mxu0
      %v3691 = vadd.f32 0.0, %v3690
      %v3692 = vpop.f32.mrf.mxu0
      %v3693 = vpop.f32.mrf.mxu0
      %v3694 = vadd.f32 0.0, %v3693
      %v3695 = vpop.f32.mrf.mxu0
      %3696 = vdwg.mxu0
      %v3697 = vadd.f32 %v3493, %v3635
      %v3698 = vadd.f32 %v3496, %v3638
      %v3699 = vadd.f32 %v3501, %v3643
      %v3700 = vadd.f32 %v3504, %v3646
      %v3701 = vadd.f32 %v3509, %v3651
      %v3702 = vadd.f32 %v3512, %v3654
      %v3703 = vadd.f32 %v3517, %v3659
      %v3704 = vadd.f32 %v3520, %v3662
      %v3705 = vadd.f32 %v3525, %v3667
      %v3706 = vadd.f32 %v3528, %v3670
      %v3707 = vadd.f32 %v3533, %v3675
      %v3708 = vadd.f32 %v3536, %v3678
      %v3709 = vadd.f32 %v3541, %v3683
      %v3710 = vadd.f32 %v3544, %v3686
      %v3711 = vadd.f32 %v3549, %v3691
      %v3712 = vadd.f32 %v3552, %v3694
      %v3713 = vld [vmem:[%s742] sm:$0x3]
      %v3717 = vunpack.c.l.b16 %v3194
      %v3718 = vunpack.c.l.b16 %v3195
      %v3719 = vunpack.c.l.b16 %v3196
      %v3720 = vpack.c.b16 %v3717, %v3237
      %v3721 = vpack.c.b16 %v3719, %v3718
      %v3723 = vsel %vm340, %v3720, 0
      %v3726 = vsel %vm340, %v3721, 0
      %v3729 = vsel %vm365, %v3713, 0
      %3731 = vmatprep.subr.bf16.mxu0 0
      %3732 = vmatpush1.bf16.msra.mxu0 0
      %3733 = vmatprep.subr.bf16.mxu0 0
      %3734 = vmatpush1.bf16.msra.mxu0 0
      %3735 = vmatprep.subr.bf16.mxu0 0
      %3736 = vmatpush1.bf16.msra.mxu0 0
      %3737 = vmatprep.subr.bf16.mxu0 0
      %3738 = vmatpush1.bf16.msra.mxu0 0
      %3739 = vmatprep.subr.bf16.mxu0 0
      %3740 = vmatpush1.bf16.msra.mxu0 0
      %3741 = vmatprep.subr.bf16.mxu0 0
      %3742 = vmatpush1.bf16.msra.mxu0 0
      %3743 = vmatprep.subr.bf16.mxu0 0
      %3744 = vmatpush1.bf16.msra.mxu0 0
      %3745 = vmatprep.subr.bf16.mxu0 0
      %3746 = vmatpush1.bf16.msra.mxu0 %v3729
      %3747 = vmatprep.subr.bf16.mxu0 0
      %3748 = vmatpush2.bf16.msra.mxu0 0
      %3749 = vmatprep.subr.bf16.mxu0 0
      %3750 = vmatpush2.bf16.msra.mxu0 0
      %3751 = vmatprep.subr.bf16.mxu0 0
      %3752 = vmatpush2.bf16.msra.mxu0 0
      %3753 = vmatprep.subr.bf16.mxu0 0
      %3754 = vmatpush2.bf16.msra.mxu0 0
      %3755 = vmatprep.subr.bf16.mxu0 0
      %3756 = vmatpush2.bf16.msra.mxu0 0
      %3757 = vmatprep.subr.bf16.mxu0 0
      %3758 = vmatpush2.bf16.msra.mxu0 0
      %3759 = vmatprep.subr.bf16.mxu0 0
      %3760 = vmatpush2.bf16.msra.mxu0 0
      %3761 = vmatprep.subr.bf16.mxu0 0
      %3762 = vmatpush2.bf16.msra.mxu0 0
      %3763 = vmatprep.mubr.bf16.mxu0 0
      %3764 = vmatmul.mubr.bf16.gmra.mxu0 %v3443
      %v3765 = vpop.f32.mrf.mxu0
      %v3766 = vadd.f32 0.0, %v3765
      %v3767 = vpop.f32.mrf.mxu0
      %v3768 = vpop.f32.mrf.mxu0
      %v3769 = vadd.f32 0.0, %v3768
      %v3770 = vpop.f32.mrf.mxu0
      %3771 = vmatprep.mubr.bf16.mxu0 0
      %3772 = vmatmul.mubr.bf16.gmra.mxu0 %v3445
      %v3773 = vpop.f32.mrf.mxu0
      %v3774 = vadd.f32 0.0, %v3773
      %v3775 = vpop.f32.mrf.mxu0
      %v3776 = vpop.f32.mrf.mxu0
      %v3777 = vadd.f32 0.0, %v3776
      %v3778 = vpop.f32.mrf.mxu0
      %3779 = vmatprep.mubr.bf16.mxu0 0
      %3780 = vmatmul.mubr.bf16.gmra.mxu0 %v3447
      %v3781 = vpop.f32.mrf.mxu0
      %v3782 = vadd.f32 0.0, %v3781
      %v3783 = vpop.f32.mrf.mxu0
      %v3784 = vpop.f32.mrf.mxu0
      %v3785 = vadd.f32 0.0, %v3784
      %v3786 = vpop.f32.mrf.mxu0
      %3787 = vmatprep.mubr.bf16.mxu0 0
      %3788 = vmatmul.mubr.bf16.gmra.mxu0 %v3449
      %v3789 = vpop.f32.mrf.mxu0
      %v3790 = vadd.f32 0.0, %v3789
      %v3791 = vpop.f32.mrf.mxu0
      %v3792 = vpop.f32.mrf.mxu0
      %v3793 = vadd.f32 0.0, %v3792
      %v3794 = vpop.f32.mrf.mxu0
      %3795 = vmatprep.mubr.bf16.mxu0 0
      %3796 = vmatmul.mubr.bf16.gmra.mxu0 %v3451
      %v3797 = vpop.f32.mrf.mxu0
      %v3798 = vadd.f32 0.0, %v3797
      %v3799 = vpop.f32.mrf.mxu0
      %v3800 = vpop.f32.mrf.mxu0
      %v3801 = vadd.f32 0.0, %v3800
      %v3802 = vpop.f32.mrf.mxu0
      %3803 = vmatprep.mubr.bf16.mxu0 0
      %3804 = vmatmul.mubr.bf16.gmra.mxu0 %v3453
      %v3805 = vpop.f32.mrf.mxu0
      %v3806 = vadd.f32 0.0, %v3805
      %v3807 = vpop.f32.mrf.mxu0
      %v3808 = vpop.f32.mrf.mxu0
      %v3809 = vadd.f32 0.0, %v3808
      %v3810 = vpop.f32.mrf.mxu0
      %3811 = vmatprep.mubr.bf16.mxu0 0
      %3812 = vmatmul.mubr.bf16.gmra.mxu0 %v3723
      %v3813 = vpop.f32.mrf.mxu0
      %v3814 = vadd.f32 0.0, %v3813
      %v3815 = vpop.f32.mrf.mxu0
      %v3816 = vpop.f32.mrf.mxu0
      %v3817 = vadd.f32 0.0, %v3816
      %v3818 = vpop.f32.mrf.mxu0
      %3819 = vmatprep.mubr.bf16.mxu0 0
      %3820 = vmatmul.mubr.bf16.gmra.mxu0 %v3726
      %v3821 = vpop.f32.mrf.mxu0
      %v3822 = vadd.f32 0.0, %v3821
      %v3823 = vpop.f32.mrf.mxu0
      %v3824 = vpop.f32.mrf.mxu0
      %v3825 = vadd.f32 0.0, %v3824
      %v3826 = vpop.f32.mrf.mxu0
      %3827 = vdwg.mxu0
      %v3828 = vadd.f32 %v3697, %v3766
      %v3829 = vadd.f32 %v3698, %v3769
      %v3830 = vadd.f32 %v3699, %v3774
      %v3831 = vadd.f32 %v3700, %v3777
      %v3832 = vadd.f32 %v3701, %v3782
      %v3833 = vadd.f32 %v3702, %v3785
      %v3834 = vadd.f32 %v3703, %v3790
      %v3835 = vadd.f32 %v3704, %v3793
      %v3836 = vadd.f32 %v3705, %v3798
      %v3837 = vadd.f32 %v3706, %v3801
      %v3838 = vadd.f32 %v3707, %v3806
      %v3839 = vadd.f32 %v3708, %v3809
      %v3840 = vadd.f32 %v3709, %v3814
      %v3841 = vadd.f32 %v3710, %v3817
      %v3842 = vadd.f32 %v3711, %v3822
      %v3843 = vadd.f32 %v3712, %v3825
      %v3844 = vld [vmem:[%s874] sm:$0x3]
      %v3846 = vunpack.c.l.b16 %v3197
      %v3847 = vpack.c.b16 %v3846, %v3846
      %v3848 = vshll.u32 %v3720, 16
      %v3850 = vrot.slane %v3848, 1
      %v3851 = vsel %vm271, %v3309, %v3850
      %v3852 = vshrl.u32 %v3720, 16
      %v3854 = vor.u32 %v3852, %v3850
      %v3855 = vshll.u32 %v3721, 16
      %v3857 = vrot.slane %v3855, 1
      %v3858 = vsel %vm271, %v3854, %v3857
      %v3859 = vshrl.u32 %v3721, 16
      %v3861 = vor.u32 %v3859, %v3857
      %v3863 = vshll.u32 %v3847, 16
      %v3865 = vrot.slane %v3863, 1
      %v3866 = vsel %vm271, %v3861, %v3865
      %v3868 = vsel %vm340, %v3851, 0
      %v3871 = vsel %vm340, %v3858, 0
      %v3874 = vsel %vm340, %v3866, 0
      %v3877 = vsel %vm365, %v3844, 0
      %3879 = vmatprep.subr.bf16.mxu0 0
      %3880 = vmatpush1.bf16.msra.mxu0 0
      %3881 = vmatprep.subr.bf16.mxu0 0
      %3882 = vmatpush1.bf16.msra.mxu0 0
      %3883 = vmatprep.subr.bf16.mxu0 0
      %3884 = vmatpush1.bf16.msra.mxu0 0
      %3885 = vmatprep.subr.bf16.mxu0 0
      %3886 = vmatpush1.bf16.msra.mxu0 0
      %3887 = vmatprep.subr.bf16.mxu0 0
      %3888 = vmatpush1.bf16.msra.mxu0 0
      %3889 = vmatprep.subr.bf16.mxu0 0
      %3890 = vmatpush1.bf16.msra.mxu0 0
      %3891 = vmatprep.subr.bf16.mxu0 0
      %3892 = vmatpush1.bf16.msra.mxu0 0
      %3893 = vmatprep.subr.bf16.mxu0 0
      %3894 = vmatpush1.bf16.msra.mxu0 %v3877
      %3895 = vmatprep.subr.bf16.mxu0 0
      %3896 = vmatpush2.bf16.msra.mxu0 0
      %3897 = vmatprep.subr.bf16.mxu0 0
      %3898 = vmatpush2.bf16.msra.mxu0 0
      %3899 = vmatprep.subr.bf16.mxu0 0
      %3900 = vmatpush2.bf16.msra.mxu0 0
      %3901 = vmatprep.subr.bf16.mxu0 0
      %3902 = vmatpush2.bf16.msra.mxu0 0
      %3903 = vmatprep.subr.bf16.mxu0 0
      %3904 = vmatpush2.bf16.msra.mxu0 0
      %3905 = vmatprep.subr.bf16.mxu0 0
      %3906 = vmatpush2.bf16.msra.mxu0 0
      %3907 = vmatprep.subr.bf16.mxu0 0
      %3908 = vmatpush2.bf16.msra.mxu0 0
      %3909 = vmatprep.subr.bf16.mxu0 0
      %3910 = vmatpush2.bf16.msra.mxu0 0
      %3911 = vmatprep.mubr.bf16.mxu0 0
      %3912 = vmatmul.mubr.bf16.gmra.mxu0 %v3322
      %v3913 = vpop.f32.mrf.mxu0
      %v3914 = vadd.f32 0.0, %v3913
      %v3915 = vpop.f32.mrf.mxu0
      %v3916 = vpop.f32.mrf.mxu0
      %v3917 = vadd.f32 0.0, %v3916
      %v3918 = vpop.f32.mrf.mxu0
      %3919 = vmatprep.mubr.bf16.mxu0 0
      %3920 = vmatmul.mubr.bf16.gmra.mxu0 %v3325
      %v3921 = vpop.f32.mrf.mxu0
      %v3922 = vadd.f32 0.0, %v3921
      %v3923 = vpop.f32.mrf.mxu0
      %v3924 = vpop.f32.mrf.mxu0
      %v3925 = vadd.f32 0.0, %v3924
      %v3926 = vpop.f32.mrf.mxu0
      %3927 = vmatprep.mubr.bf16.mxu0 0
      %3928 = vmatmul.mubr.bf16.gmra.mxu0 %v3328
      %v3929 = vpop.f32.mrf.mxu0
      %v3930 = vadd.f32 0.0, %v3929
      %v3931 = vpop.f32.mrf.mxu0
      %v3932 = vpop.f32.mrf.mxu0
      %v3933 = vadd.f32 0.0, %v3932
      %v3934 = vpop.f32.mrf.mxu0
      %3935 = vmatprep.mubr.bf16.mxu0 0
      %3936 = vmatmul.mubr.bf16.gmra.mxu0 %v3331
      %v3937 = vpop.f32.mrf.mxu0
      %v3938 = vadd.f32 0.0, %v3937
      %v3939 = vpop.f32.mrf.mxu0
      %v3940 = vpop.f32.mrf.mxu0
      %v3941 = vadd.f32 0.0, %v3940
      %v3942 = vpop.f32.mrf.mxu0
      %3943 = vmatprep.mubr.bf16.mxu0 0
      %3944 = vmatmul.mubr.bf16.gmra.mxu0 %v3334
      %v3945 = vpop.f32.mrf.mxu0
      %v3946 = vadd.f32 0.0, %v3945
      %v3947 = vpop.f32.mrf.mxu0
      %v3948 = vpop.f32.mrf.mxu0
      %v3949 = vadd.f32 0.0, %v3948
      %v3950 = vpop.f32.mrf.mxu0
      %3951 = vmatprep.mubr.bf16.mxu0 0
      %3952 = vmatmul.mubr.bf16.gmra.mxu0 %v3868
      %v3953 = vpop.f32.mrf.mxu0
      %v3954 = vadd.f32 0.0, %v3953
      %v3955 = vpop.f32.mrf.mxu0
      %v3956 = vpop.f32.mrf.mxu0
      %v3957 = vadd.f32 0.0, %v3956
      %v3958 = vpop.f32.mrf.mxu0
      %3959 = vmatprep.mubr.bf16.mxu0 0
      %3960 = vmatmul.mubr.bf16.gmra.mxu0 %v3871
      %v3961 = vpop.f32.mrf.mxu0
      %v3962 = vadd.f32 0.0, %v3961
      %v3963 = vpop.f32.mrf.mxu0
      %v3964 = vpop.f32.mrf.mxu0
      %v3965 = vadd.f32 0.0, %v3964
      %v3966 = vpop.f32.mrf.mxu0
      %3967 = vmatprep.mubr.bf16.mxu0 0
      %3968 = vmatmul.mubr.bf16.gmra.mxu0 %v3874
      %v3969 = vpop.f32.mrf.mxu0
      %v3970 = vadd.f32 0.0, %v3969
      %v3971 = vpop.f32.mrf.mxu0
      %v3972 = vpop.f32.mrf.mxu0
      %v3973 = vadd.f32 0.0, %v3972
      %v3974 = vpop.f32.mrf.mxu0
      %3975 = vdwg.mxu0
      %v3976 = vadd.f32 %v3828, %v3914
      %v3977 = vadd.f32 %v3829, %v3917
      %v3978 = vadd.f32 %v3830, %v3922
      %v3979 = vadd.f32 %v3831, %v3925
      %v3980 = vadd.f32 %v3832, %v3930
      %v3981 = vadd.f32 %v3833, %v3933
      %v3982 = vadd.f32 %v3834, %v3938
      %v3983 = vadd.f32 %v3835, %v3941
      %v3984 = vadd.f32 %v3836, %v3946
      %v3985 = vadd.f32 %v3837, %v3949
      %v3986 = vadd.f32 %v3838, %v3954
      %v3987 = vadd.f32 %v3839, %v3957
      %v3988 = vadd.f32 %v3840, %v3962
      %v3989 = vadd.f32 %v3841, %v3965
      %v3990 = vadd.f32 %v3842, %v3970
      %v3991 = vadd.f32 %v3843, %v3973
      %v3992 = vld [vmem:[%s1023] sm:$0x3]
      %v3993 = vrot.slane %v3720, 1
      %v3994 = vsel %vm584, %v3569, %v3993
      %v3995 = vrot.slane %v3721, 1
      %v3996 = vsel %vm584, %v3993, %v3995
      %v3997 = vrot.slane %v3847, 1
      %v3998 = vsel %vm584, %v3995, %v3997
      %v4000 = vsel %vm340, %v3994, 0
      %v4003 = vsel %vm340, %v3996, 0
      %v4006 = vsel %vm340, %v3998, 0
      %v4009 = vsel %vm365, %v3992, 0
      %4011 = vmatprep.subr.bf16.mxu0 0
      %4012 = vmatpush1.bf16.msra.mxu0 0
      %4013 = vmatprep.subr.bf16.mxu0 0
      %4014 = vmatpush1.bf16.msra.mxu0 0
      %4015 = vmatprep.subr.bf16.mxu0 0
      %4016 = vmatpush1.bf16.msra.mxu0 0
      %4017 = vmatprep.subr.bf16.mxu0 0
      %4018 = vmatpush1.bf16.msra.mxu0 0
      %4019 = vmatprep.subr.bf16.mxu0 0
      %4020 = vmatpush1.bf16.msra.mxu0 0
      %4021 = vmatprep.subr.bf16.mxu0 0
      %4022 = vmatpush1.bf16.msra.mxu0 0
      %4023 = vmatprep.subr.bf16.mxu0 0
      %4024 = vmatpush1.bf16.msra.mxu0 0
      %4025 = vmatprep.subr.bf16.mxu0 0
      %4026 = vmatpush1.bf16.msra.mxu0 %v4009
      %4027 = vmatprep.subr.bf16.mxu0 0
      %4028 = vmatpush2.bf16.msra.mxu0 0
      %4029 = vmatprep.subr.bf16.mxu0 0
      %4030 = vmatpush2.bf16.msra.mxu0 0
      %4031 = vmatprep.subr.bf16.mxu0 0
      %4032 = vmatpush2.bf16.msra.mxu0 0
      %4033 = vmatprep.subr.bf16.mxu0 0
      %4034 = vmatpush2.bf16.msra.mxu0 0
      %4035 = vmatprep.subr.bf16.mxu0 0
      %4036 = vmatpush2.bf16.msra.mxu0 0
      %4037 = vmatprep.subr.bf16.mxu0 0
      %4038 = vmatpush2.bf16.msra.mxu0 0
      %4039 = vmatprep.subr.bf16.mxu0 0
      %4040 = vmatpush2.bf16.msra.mxu0 0
      %4041 = vmatprep.subr.bf16.mxu0 0
      %4042 = vmatpush2.bf16.msra.mxu0 0
      %4043 = vmatprep.mubr.bf16.mxu0 0
      %4044 = vmatmul.mubr.bf16.gmra.mxu0 %v3580
      %v4045 = vpop.f32.mrf.mxu0
      %v4046 = vadd.f32 0.0, %v4045
      %v4047 = vpop.f32.mrf.mxu0
      %v4048 = vpop.f32.mrf.mxu0
      %v4049 = vadd.f32 0.0, %v4048
      %v4050 = vpop.f32.mrf.mxu0
      %4051 = vmatprep.mubr.bf16.mxu0 0
      %4052 = vmatmul.mubr.bf16.gmra.mxu0 %v3583
      %v4053 = vpop.f32.mrf.mxu0
      %v4054 = vadd.f32 0.0, %v4053
      %v4055 = vpop.f32.mrf.mxu0
      %v4056 = vpop.f32.mrf.mxu0
      %v4057 = vadd.f32 0.0, %v4056
      %v4058 = vpop.f32.mrf.mxu0
      %4059 = vmatprep.mubr.bf16.mxu0 0
      %4060 = vmatmul.mubr.bf16.gmra.mxu0 %v3586
      %v4061 = vpop.f32.mrf.mxu0
      %v4062 = vadd.f32 0.0, %v4061
      %v4063 = vpop.f32.mrf.mxu0
      %v4064 = vpop.f32.mrf.mxu0
      %v4065 = vadd.f32 0.0, %v4064
      %v4066 = vpop.f32.mrf.mxu0
      %4067 = vmatprep.mubr.bf16.mxu0 0
      %4068 = vmatmul.mubr.bf16.gmra.mxu0 %v3589
      %v4069 = vpop.f32.mrf.mxu0
      %v4070 = vadd.f32 0.0, %v4069
      %v4071 = vpop.f32.mrf.mxu0
      %v4072 = vpop.f32.mrf.mxu0
      %v4073 = vadd.f32 0.0, %v4072
      %v4074 = vpop.f32.mrf.mxu0
      %4075 = vmatprep.mubr.bf16.mxu0 0
      %4076 = vmatmul.mubr.bf16.gmra.mxu0 %v3592
      %v4077 = vpop.f32.mrf.mxu0
      %v4078 = vadd.f32 0.0, %v4077
      %v4079 = vpop.f32.mrf.mxu0
      %v4080 = vpop.f32.mrf.mxu0
      %v4081 = vadd.f32 0.0, %v4080
      %v4082 = vpop.f32.mrf.mxu0
      %4083 = vmatprep.mubr.bf16.mxu0 0
      %4084 = vmatmul.mubr.bf16.gmra.mxu0 %v4000
      %v4085 = vpop.f32.mrf.mxu0
      %v4086 = vadd.f32 0.0, %v4085
      %v4087 = vpop.f32.mrf.mxu0
      %v4088 = vpop.f32.mrf.mxu0
      %v4089 = vadd.f32 0.0, %v4088
      %v4090 = vpop.f32.mrf.mxu0
      %4091 = vmatprep.mubr.bf16.mxu0 0
      %4092 = vmatmul.mubr.bf16.gmra.mxu0 %v4003
      %v4093 = vpop.f32.mrf.mxu0
      %v4094 = vadd.f32 0.0, %v4093
      %v4095 = vpop.f32.mrf.mxu0
      %v4096 = vpop.f32.mrf.mxu0
      %v4097 = vadd.f32 0.0, %v4096
      %v4098 = vpop.f32.mrf.mxu0
      %4099 = vmatprep.mubr.bf16.mxu0 0
      %4100 = vmatmul.mubr.bf16.gmra.mxu0 %v4006
      %v4101 = vpop.f32.mrf.mxu0
      %v4102 = vadd.f32 0.0, %v4101
      %v4103 = vpop.f32.mrf.mxu0
      %v4104 = vpop.f32.mrf.mxu0
      %v4105 = vadd.f32 0.0, %v4104
      %v4106 = vpop.f32.mrf.mxu0
      %4107 = vdwg.mxu0
      %v4108 = vadd.f32 %v3976, %v4046
      %v4109 = vadd.f32 %v3977, %v4049
      %v4110 = vadd.f32 %v3978, %v4054
      %v4111 = vadd.f32 %v3979, %v4057
      %v4112 = vadd.f32 %v3980, %v4062
      %v4113 = vadd.f32 %v3981, %v4065
      %v4114 = vadd.f32 %v3982, %v4070
      %v4115 = vadd.f32 %v3983, %v4073
      %v4116 = vadd.f32 %v3984, %v4078
      %v4117 = vadd.f32 %v3985, %v4081
      %v4118 = vadd.f32 %v3986, %v4086
      %v4119 = vadd.f32 %v3987, %v4089
      %v4120 = vadd.f32 %v3988, %v4094
      %v4121 = vadd.f32 %v3989, %v4097
      %v4122 = vadd.f32 %v3990, %v4102
      %v4123 = vadd.f32 %v3991, %v4105
      %v4124 = vld [vmem:[%s1156] sm:$0x3]
      %v4128 = vunpack.c.l.b16 %v3198
      %v4129 = vunpack.c.l.b16 %v3199
      %v4130 = vunpack.c.l.b16 %v3200
      %v4131 = vpack.c.b16 %v4128, %v3846
      %v4132 = vpack.c.b16 %v4130, %v4129
      %v4134 = vsel %vm340, %v4131, 0
      %v4137 = vsel %vm340, %v4132, 0
      %v4140 = vsel %vm365, %v4124, 0
      %4142 = vmatprep.subr.bf16.mxu0 0
      %4143 = vmatpush1.bf16.msra.mxu0 0
      %4144 = vmatprep.subr.bf16.mxu0 0
      %4145 = vmatpush1.bf16.msra.mxu0 0
      %4146 = vmatprep.subr.bf16.mxu0 0
      %4147 = vmatpush1.bf16.msra.mxu0 0
      %4148 = vmatprep.subr.bf16.mxu0 0
      %4149 = vmatpush1.bf16.msra.mxu0 0
      %4150 = vmatprep.subr.bf16.mxu0 0
      %4151 = vmatpush1.bf16.msra.mxu0 0
      %4152 = vmatprep.subr.bf16.mxu0 0
      %4153 = vmatpush1.bf16.msra.mxu0 0
      %4154 = vmatprep.subr.bf16.mxu0 0
      %4155 = vmatpush1.bf16.msra.mxu0 0
      %4156 = vmatprep.subr.bf16.mxu0 0
      %4157 = vmatpush1.bf16.msra.mxu0 %v4140
      %4158 = vmatprep.subr.bf16.mxu0 0
      %4159 = vmatpush2.bf16.msra.mxu0 0
      %4160 = vmatprep.subr.bf16.mxu0 0
      %4161 = vmatpush2.bf16.msra.mxu0 0
      %4162 = vmatprep.subr.bf16.mxu0 0
      %4163 = vmatpush2.bf16.msra.mxu0 0
      %4164 = vmatprep.subr.bf16.mxu0 0
      %4165 = vmatpush2.bf16.msra.mxu0 0
      %4166 = vmatprep.subr.bf16.mxu0 0
      %4167 = vmatpush2.bf16.msra.mxu0 0
      %4168 = vmatprep.subr.bf16.mxu0 0
      %4169 = vmatpush2.bf16.msra.mxu0 0
      %4170 = vmatprep.subr.bf16.mxu0 0
      %4171 = vmatpush2.bf16.msra.mxu0 0
      %4172 = vmatprep.subr.bf16.mxu0 0
      %4173 = vmatpush2.bf16.msra.mxu0 0
      %4174 = vmatprep.mubr.bf16.mxu0 0
      %4175 = vmatmul.mubr.bf16.gmra.mxu0 %v3447
      %v4176 = vpop.f32.mrf.mxu0
      %v4177 = vadd.f32 0.0, %v4176
      %v4178 = vpop.f32.mrf.mxu0
      %v4179 = vpop.f32.mrf.mxu0
      %v4180 = vadd.f32 0.0, %v4179
      %v4181 = vpop.f32.mrf.mxu0
      %4182 = vmatprep.mubr.bf16.mxu0 0
      %4183 = vmatmul.mubr.bf16.gmra.mxu0 %v3449
      %v4184 = vpop.f32.mrf.mxu0
      %v4185 = vadd.f32 0.0, %v4184
      %v4186 = vpop.f32.mrf.mxu0
      %v4187 = vpop.f32.mrf.mxu0
      %v4188 = vadd.f32 0.0, %v4187
      %v4189 = vpop.f32.mrf.mxu0
      %4190 = vmatprep.mubr.bf16.mxu0 0
      %4191 = vmatmul.mubr.bf16.gmra.mxu0 %v3451
      %v4192 = vpop.f32.mrf.mxu0
      %v4193 = vadd.f32 0.0, %v4192
      %v4194 = vpop.f32.mrf.mxu0
      %v4195 = vpop.f32.mrf.mxu0
      %v4196 = vadd.f32 0.0, %v4195
      %v4197 = vpop.f32.mrf.mxu0
      %4198 = vmatprep.mubr.bf16.mxu0 0
      %4199 = vmatmul.mubr.bf16.gmra.mxu0 %v3453
      %v4200 = vpop.f32.mrf.mxu0
      %v4201 = vadd.f32 0.0, %v4200
      %v4202 = vpop.f32.mrf.mxu0
      %v4203 = vpop.f32.mrf.mxu0
      %v4204 = vadd.f32 0.0, %v4203
      %v4205 = vpop.f32.mrf.mxu0
      %4206 = vmatprep.mubr.bf16.mxu0 0
      %4207 = vmatmul.mubr.bf16.gmra.mxu0 %v3723
      %v4208 = vpop.f32.mrf.mxu0
      %v4209 = vadd.f32 0.0, %v4208
      %v4210 = vpop.f32.mrf.mxu0
      %v4211 = vpop.f32.mrf.mxu0
      %v4212 = vadd.f32 0.0, %v4211
      %v4213 = vpop.f32.mrf.mxu0
      %4214 = vmatprep.mubr.bf16.mxu0 0
      %4215 = vmatmul.mubr.bf16.gmra.mxu0 %v3726
      %v4216 = vpop.f32.mrf.mxu0
      %v4217 = vadd.f32 0.0, %v4216
      %v4218 = vpop.f32.mrf.mxu0
      %v4219 = vpop.f32.mrf.mxu0
      %v4220 = vadd.f32 0.0, %v4219
      %v4221 = vpop.f32.mrf.mxu0
      %4222 = vmatprep.mubr.bf16.mxu0 0
      %4223 = vmatmul.mubr.bf16.gmra.mxu0 %v4134
      %v4224 = vpop.f32.mrf.mxu0
      %v4225 = vadd.f32 0.0, %v4224
      %v4226 = vpop.f32.mrf.mxu0
      %v4227 = vpop.f32.mrf.mxu0
      %v4228 = vadd.f32 0.0, %v4227
      %v4229 = vpop.f32.mrf.mxu0
      %4230 = vmatprep.mubr.bf16.mxu0 0
      %4231 = vmatmul.mubr.bf16.gmra.mxu0 %v4137
      %v4232 = vpop.f32.mrf.mxu0
      %v4233 = vadd.f32 0.0, %v4232
      %v4234 = vpop.f32.mrf.mxu0
      %v4235 = vpop.f32.mrf.mxu0
      %v4236 = vadd.f32 0.0, %v4235
      %v4237 = vpop.f32.mrf.mxu0
      %4238 = vdwg.mxu0
      %v4239 = vadd.f32 %v4108, %v4177
      %v4240 = vadd.f32 %v4109, %v4180
      %v4241 = vadd.f32 %v4110, %v4185
      %v4242 = vadd.f32 %v4111, %v4188
      %v4243 = vadd.f32 %v4112, %v4193
      %v4244 = vadd.f32 %v4113, %v4196
      %v4245 = vadd.f32 %v4114, %v4201
      %v4246 = vadd.f32 %v4115, %v4204
      %v4247 = vadd.f32 %v4116, %v4209
      %v4248 = vadd.f32 %v4117, %v4212
      %v4249 = vadd.f32 %v4118, %v4217
      %v4250 = vadd.f32 %v4119, %v4220
      %v4251 = vadd.f32 %v4120, %v4225
      %v4252 = vadd.f32 %v4121, %v4228
      %v4253 = vadd.f32 %v4122, %v4233
      %v4254 = vadd.f32 %v4123, %v4236
      %v4255 = vld [vmem:[%s1288] sm:$0x3]
      %v4257 = vunpack.c.l.b16 %v3201
      %v4258 = vpack.c.b16 %v4257, %v4257
      %v4259 = vshll.u32 %v4131, 16
      %v4261 = vrot.slane %v4259, 1
      %v4262 = vsel %vm271, %v3861, %v4261
      %v4263 = vshrl.u32 %v4131, 16
      %v4265 = vor.u32 %v4263, %v4261
      %v4266 = vshll.u32 %v4132, 16
      %v4268 = vrot.slane %v4266, 1
      %v4269 = vsel %vm271, %v4265, %v4268
      %v4270 = vshrl.u32 %v4132, 16
      %v4272 = vor.u32 %v4270, %v4268
      %v4274 = vshll.u32 %v4258, 16
      %v4276 = vrot.slane %v4274, 1
      %v4277 = vsel %vm271, %v4272, %v4276
      %v4279 = vsel %vm340, %v4262, 0
      %v4282 = vsel %vm340, %v4269, 0
      %v4285 = vsel %vm340, %v4277, 0
      %v4288 = vsel %vm365, %v4255, 0
      %4290 = vmatprep.subr.bf16.mxu0 0
      %4291 = vmatpush1.bf16.msra.mxu0 0
      %4292 = vmatprep.subr.bf16.mxu0 0
      %4293 = vmatpush1.bf16.msra.mxu0 0
      %4294 = vmatprep.subr.bf16.mxu0 0
      %4295 = vmatpush1.bf16.msra.mxu0 0
      %4296 = vmatprep.subr.bf16.mxu0 0
      %4297 = vmatpush1.bf16.msra.mxu0 0
      %4298 = vmatprep.subr.bf16.mxu0 0
      %4299 = vmatpush1.bf16.msra.mxu0 0
      %4300 = vmatprep.subr.bf16.mxu0 0
      %4301 = vmatpush1.bf16.msra.mxu0 0
      %4302 = vmatprep.subr.bf16.mxu0 0
      %4303 = vmatpush1.bf16.msra.mxu0 0
      %4304 = vmatprep.subr.bf16.mxu0 0
      %4305 = vmatpush1.bf16.msra.mxu0 %v4288
      %4306 = vmatprep.subr.bf16.mxu0 0
      %4307 = vmatpush2.bf16.msra.mxu0 0
      %4308 = vmatprep.subr.bf16.mxu0 0
      %4309 = vmatpush2.bf16.msra.mxu0 0
      %4310 = vmatprep.subr.bf16.mxu0 0
      %4311 = vmatpush2.bf16.msra.mxu0 0
      %4312 = vmatprep.subr.bf16.mxu0 0
      %4313 = vmatpush2.bf16.msra.mxu0 0
      %4314 = vmatprep.subr.bf16.mxu0 0
      %4315 = vmatpush2.bf16.msra.mxu0 0
      %4316 = vmatprep.subr.bf16.mxu0 0
      %4317 = vmatpush2.bf16.msra.mxu0 0
      %4318 = vmatprep.subr.bf16.mxu0 0
      %4319 = vmatpush2.bf16.msra.mxu0 0
      %4320 = vmatprep.subr.bf16.mxu0 0
      %4321 = vmatpush2.bf16.msra.mxu0 0
      %4322 = vmatprep.mubr.bf16.mxu0 0
      %4323 = vmatmul.mubr.bf16.gmra.mxu0 %v3328
      %v4324 = vpop.f32.mrf.mxu0
      %v4325 = vadd.f32 0.0, %v4324
      %v4326 = vpop.f32.mrf.mxu0
      %v4327 = vpop.f32.mrf.mxu0
      %v4328 = vadd.f32 0.0, %v4327
      %v4329 = vpop.f32.mrf.mxu0
      %4330 = vmatprep.mubr.bf16.mxu0 0
      %4331 = vmatmul.mubr.bf16.gmra.mxu0 %v3331
      %v4332 = vpop.f32.mrf.mxu0
      %v4333 = vadd.f32 0.0, %v4332
      %v4334 = vpop.f32.mrf.mxu0
      %v4335 = vpop.f32.mrf.mxu0
      %v4336 = vadd.f32 0.0, %v4335
      %v4337 = vpop.f32.mrf.mxu0
      %4338 = vmatprep.mubr.bf16.mxu0 0
      %4339 = vmatmul.mubr.bf16.gmra.mxu0 %v3334
      %v4340 = vpop.f32.mrf.mxu0
      %v4341 = vadd.f32 0.0, %v4340
      %v4342 = vpop.f32.mrf.mxu0
      %v4343 = vpop.f32.mrf.mxu0
      %v4344 = vadd.f32 0.0, %v4343
      %v4345 = vpop.f32.mrf.mxu0
      %4346 = vmatprep.mubr.bf16.mxu0 0
      %4347 = vmatmul.mubr.bf16.gmra.mxu0 %v3868
      %v4348 = vpop.f32.mrf.mxu0
      %v4349 = vadd.f32 0.0, %v4348
      %v4350 = vpop.f32.mrf.mxu0
      %v4351 = vpop.f32.mrf.mxu0
      %v4352 = vadd.f32 0.0, %v4351
      %v4353 = vpop.f32.mrf.mxu0
      %4354 = vmatprep.mubr.bf16.mxu0 0
      %4355 = vmatmul.mubr.bf16.gmra.mxu0 %v3871
      %v4356 = vpop.f32.mrf.mxu0
      %v4357 = vadd.f32 0.0, %v4356
      %v4358 = vpop.f32.mrf.mxu0
      %v4359 = vpop.f32.mrf.mxu0
      %v4360 = vadd.f32 0.0, %v4359
      %v4361 = vpop.f32.mrf.mxu0
      %4362 = vmatprep.mubr.bf16.mxu0 0
      %4363 = vmatmul.mubr.bf16.gmra.mxu0 %v4279
      %v4364 = vpop.f32.mrf.mxu0
      %v4365 = vadd.f32 0.0, %v4364
      %v4366 = vpop.f32.mrf.mxu0
      %v4367 = vpop.f32.mrf.mxu0
      %v4368 = vadd.f32 0.0, %v4367
      %v4369 = vpop.f32.mrf.mxu0
      %4370 = vmatprep.mubr.bf16.mxu0 0
      %4371 = vmatmul.mubr.bf16.gmra.mxu0 %v4282
      %v4372 = vpop.f32.mrf.mxu0
      %v4373 = vadd.f32 0.0, %v4372
      %v4374 = vpop.f32.mrf.mxu0
      %v4375 = vpop.f32.mrf.mxu0
      %v4376 = vadd.f32 0.0, %v4375
      %v4377 = vpop.f32.mrf.mxu0
      %4378 = vmatprep.mubr.bf16.mxu0 0
      %4379 = vmatmul.mubr.bf16.gmra.mxu0 %v4285
      %v4380 = vpop.f32.mrf.mxu0
      %v4381 = vadd.f32 0.0, %v4380
      %v4382 = vpop.f32.mrf.mxu0
      %v4383 = vpop.f32.mrf.mxu0
      %v4384 = vadd.f32 0.0, %v4383
      %v4385 = vpop.f32.mrf.mxu0
      %4386 = vdwg.mxu0
      %v4387 = vadd.f32 %v4239, %v4325
      %v4388 = vadd.f32 %v4240, %v4328
      %v4389 = vadd.f32 %v4241, %v4333
      %v4390 = vadd.f32 %v4242, %v4336
      %v4391 = vadd.f32 %v4243, %v4341
      %v4392 = vadd.f32 %v4244, %v4344
      %v4393 = vadd.f32 %v4245, %v4349
      %v4394 = vadd.f32 %v4246, %v4352
      %v4395 = vadd.f32 %v4247, %v4357
      %v4396 = vadd.f32 %v4248, %v4360
      %v4397 = vadd.f32 %v4249, %v4365
      %v4398 = vadd.f32 %v4250, %v4368
      %v4399 = vadd.f32 %v4251, %v4373
      %v4400 = vadd.f32 %v4252, %v4376
      %v4401 = vadd.f32 %v4253, %v4381
      %v4402 = vadd.f32 %v4254, %v4384
      %v4403 = vld [vmem:[%s1437] sm:$0x3]
      %v4404 = vrot.slane %v4131, 1
      %v4405 = vsel %vm584, %v3995, %v4404
      %v4406 = vrot.slane %v4132, 1
      %v4407 = vsel %vm584, %v4404, %v4406
      %v4408 = vrot.slane %v4258, 1
      %v4409 = vsel %vm584, %v4406, %v4408
      %v4411 = vsel %vm340, %v4405, 0
      %v4414 = vsel %vm340, %v4407, 0
      %v4417 = vsel %vm340, %v4409, 0
      %v4420 = vsel %vm365, %v4403, 0
      %4422 = vmatprep.subr.bf16.mxu0 0
      %4423 = vmatpush1.bf16.msra.mxu0 0
      %4424 = vmatprep.subr.bf16.mxu0 0
      %4425 = vmatpush1.bf16.msra.mxu0 0
      %4426 = vmatprep.subr.bf16.mxu0 0
      %4427 = vmatpush1.bf16.msra.mxu0 0
      %4428 = vmatprep.subr.bf16.mxu0 0
      %4429 = vmatpush1.bf16.msra.mxu0 0
      %4430 = vmatprep.subr.bf16.mxu0 0
      %4431 = vmatpush1.bf16.msra.mxu0 0
      %4432 = vmatprep.subr.bf16.mxu0 0
      %4433 = vmatpush1.bf16.msra.mxu0 0
      %4434 = vmatprep.subr.bf16.mxu0 0
      %4435 = vmatpush1.bf16.msra.mxu0 0
      %4436 = vmatprep.subr.bf16.mxu0 0
      %4437 = vmatpush1.bf16.msra.mxu0 %v4420
      %4438 = vmatprep.subr.bf16.mxu0 0
      %4439 = vmatpush2.bf16.msra.mxu0 0
      %4440 = vmatprep.subr.bf16.mxu0 0
      %4441 = vmatpush2.bf16.msra.mxu0 0
      %4442 = vmatprep.subr.bf16.mxu0 0
      %4443 = vmatpush2.bf16.msra.mxu0 0
      %4444 = vmatprep.subr.bf16.mxu0 0
      %4445 = vmatpush2.bf16.msra.mxu0 0
      %4446 = vmatprep.subr.bf16.mxu0 0
      %4447 = vmatpush2.bf16.msra.mxu0 0
      %4448 = vmatprep.subr.bf16.mxu0 0
      %4449 = vmatpush2.bf16.msra.mxu0 0
      %4450 = vmatprep.subr.bf16.mxu0 0
      %4451 = vmatpush2.bf16.msra.mxu0 0
      %4452 = vmatprep.subr.bf16.mxu0 0
      %4453 = vmatpush2.bf16.msra.mxu0 0
      %4454 = vmatprep.mubr.bf16.mxu0 0
      %4455 = vmatmul.mubr.bf16.gmra.mxu0 %v3586
      %v4456 = vpop.f32.mrf.mxu0
      %v4457 = vadd.f32 0.0, %v4456
      %v4458 = vpop.f32.mrf.mxu0
      %v4459 = vpop.f32.mrf.mxu0
      %v4460 = vadd.f32 0.0, %v4459
      %v4461 = vpop.f32.mrf.mxu0
      %4462 = vmatprep.mubr.bf16.mxu0 0
      %4463 = vmatmul.mubr.bf16.gmra.mxu0 %v3589
      %v4464 = vpop.f32.mrf.mxu0
      %v4465 = vadd.f32 0.0, %v4464
      %v4466 = vpop.f32.mrf.mxu0
      %v4467 = vpop.f32.mrf.mxu0
      %v4468 = vadd.f32 0.0, %v4467
      %v4469 = vpop.f32.mrf.mxu0
      %4470 = vmatprep.mubr.bf16.mxu0 0
      %4471 = vmatmul.mubr.bf16.gmra.mxu0 %v3592
      %v4472 = vpop.f32.mrf.mxu0
      %v4473 = vadd.f32 0.0, %v4472
      %v4474 = vpop.f32.mrf.mxu0
      %v4475 = vpop.f32.mrf.mxu0
      %v4476 = vadd.f32 0.0, %v4475
      %v4477 = vpop.f32.mrf.mxu0
      %4478 = vmatprep.mubr.bf16.mxu0 0
      %4479 = vmatmul.mubr.bf16.gmra.mxu0 %v4000
      %v4480 = vpop.f32.mrf.mxu0
      %v4481 = vadd.f32 0.0, %v4480
      %v4482 = vpop.f32.mrf.mxu0
      %v4483 = vpop.f32.mrf.mxu0
      %v4484 = vadd.f32 0.0, %v4483
      %v4485 = vpop.f32.mrf.mxu0
      %4486 = vmatprep.mubr.bf16.mxu0 0
      %4487 = vmatmul.mubr.bf16.gmra.mxu0 %v4003
      %v4488 = vpop.f32.mrf.mxu0
      %v4489 = vadd.f32 0.0, %v4488
      %v4490 = vpop.f32.mrf.mxu0
      %v4491 = vpop.f32.mrf.mxu0
      %v4492 = vadd.f32 0.0, %v4491
      %v4493 = vpop.f32.mrf.mxu0
      %4494 = vmatprep.mubr.bf16.mxu0 0
      %4495 = vmatmul.mubr.bf16.gmra.mxu0 %v4411
      %v4496 = vpop.f32.mrf.mxu0
      %v4497 = vadd.f32 0.0, %v4496
      %v4498 = vpop.f32.mrf.mxu0
      %v4499 = vpop.f32.mrf.mxu0
      %v4500 = vadd.f32 0.0, %v4499
      %v4501 = vpop.f32.mrf.mxu0
      %4502 = vmatprep.mubr.bf16.mxu0 0
      %4503 = vmatmul.mubr.bf16.gmra.mxu0 %v4414
      %v4504 = vpop.f32.mrf.mxu0
      %v4505 = vadd.f32 0.0, %v4504
      %v4506 = vpop.f32.mrf.mxu0
      %v4507 = vpop.f32.mrf.mxu0
      %v4508 = vadd.f32 0.0, %v4507
      %v4509 = vpop.f32.mrf.mxu0
      %4510 = vmatprep.mubr.bf16.mxu0 0
      %4511 = vmatmul.mubr.bf16.gmra.mxu0 %v4417
      %v4512 = vpop.f32.mrf.mxu0
      %v4513 = vadd.f32 0.0, %v4512
      %v4514 = vpop.f32.mrf.mxu0
      %v4515 = vpop.f32.mrf.mxu0
      %v4516 = vadd.f32 0.0, %v4515
      %v4517 = vpop.f32.mrf.mxu0
      %4518 = vdwg.mxu0
      %v4519 = vadd.f32 %v4387, %v4457
      %v4520 = vadd.f32 %v4388, %v4460
      %v4521 = vadd.f32 %v4389, %v4465
      %v4522 = vadd.f32 %v4390, %v4468
      %v4523 = vadd.f32 %v4391, %v4473
      %v4524 = vadd.f32 %v4392, %v4476
      %v4525 = vadd.f32 %v4393, %v4481
      %v4526 = vadd.f32 %v4394, %v4484
      %v4527 = vadd.f32 %v4395, %v4489
      %v4528 = vadd.f32 %v4396, %v4492
      %v4529 = vadd.f32 %v4397, %v4497
      %v4530 = vadd.f32 %v4398, %v4500
      %v4531 = vadd.f32 %v4399, %v4505
      %v4532 = vadd.f32 %v4400, %v4508
      %v4533 = vadd.f32 %v4401, %v4513
      %v4534 = vadd.f32 %v4402, %v4516
      %v4535 = vld [vmem:[%s2] sm:$0x1]
      %v4537 = vlaneseq
      %v4538 = vshrl.u32 %v4537, 7
      %v4539 = vsub.s32 0, %v4538
      %v4540 = vrot.slane %v4535, %v4539
      %v4542 = vadd.f32 %v4519, %v4540
      %v4543 = vadd.f32 %v4520, %v4540
      %v4544 = vadd.f32 %v4521, %v4540
      %v4545 = vadd.f32 %v4522, %v4540
      %v4546 = vadd.f32 %v4523, %v4540
      %v4547 = vadd.f32 %v4524, %v4540
      %v4548 = vadd.f32 %v4525, %v4540
      %v4549 = vadd.f32 %v4526, %v4540
      %v4550 = vadd.f32 %v4527, %v4540
      %v4551 = vadd.f32 %v4528, %v4540
      %v4552 = vadd.f32 %v4529, %v4540
      %v4553 = vadd.f32 %v4530, %v4540
      %v4554 = vadd.f32 %v4531, %v4540
      %v4555 = vadd.f32 %v4532, %v4540
      %v4556 = vadd.f32 %v4533, %v4540
      %v4557 = vadd.f32 %v4534, %v4540
      %v4558 = vmax.f32 %v4542, 0.0
      %v4559 = vmax.f32 %v4543, 0.0
      %v4560 = vmax.f32 %v4544, 0.0
      %v4561 = vmax.f32 %v4545, 0.0
      %v4562 = vmax.f32 %v4546, 0.0
      %v4563 = vmax.f32 %v4547, 0.0
      %v4564 = vmax.f32 %v4548, 0.0
      %v4565 = vmax.f32 %v4549, 0.0
      %v4566 = vmax.f32 %v4550, 0.0
      %v4567 = vmax.f32 %v4551, 0.0
      %v4568 = vmax.f32 %v4552, 0.0
      %v4569 = vmax.f32 %v4553, 0.0
      %v4570 = vmax.f32 %v4554, 0.0
      %v4571 = vmax.f32 %v4555, 0.0
      %v4572 = vmax.f32 %v4556, 0.0
      %v4573 = vmax.f32 %v4557, 0.0
      %v4574 = vpack.c.bf16 %v4559, %v4558
      %v4575 = vpack.c.bf16 %v4561, %v4560
      %v4576 = vpack.c.bf16 %v4563, %v4562
      %v4577 = vpack.c.bf16 %v4565, %v4564
      %v4578 = vpack.c.bf16 %v4567, %v4566
      %v4579 = vpack.c.bf16 %v4569, %v4568
      %v4580 = vpack.c.bf16 %v4571, %v4570
      %v4581 = vpack.c.bf16 %v4573, %v4572
      %v4590 = vunpack.c.l.b16 %v4574
      %v4591 = vunpack.c.h.b16 %v4574
      %v4592 = vunpack.c.l.b16 %v4575
      %v4593 = vunpack.c.h.b16 %v4575
      %v4594 = vunpack.c.l.b16 %v4576
      %v4595 = vunpack.c.h.b16 %v4576
      %v4596 = vunpack.c.l.b16 %v4577
      %v4597 = vunpack.c.h.b16 %v4577
      %v4598 = vunpack.c.l.b16 %v4578
      %v4599 = vunpack.c.h.b16 %v4578
      %v4600 = vunpack.c.l.b16 %v4579
      %v4601 = vunpack.c.h.b16 %v4579
      %v4602 = vunpack.c.l.b16 %v4580
      %v4603 = vunpack.c.h.b16 %v4580
      %v4604 = vunpack.c.l.b16 %v4581
      %v4605 = vunpack.c.h.b16 %v4581
      %v4606 = vpack.c.b16 %v4590, %v4590
      %v4607 = vpack.c.b16 %v4591, %v4591
      %v4608 = vpack.c.b16 %v4592, %v4592
      %v4609 = vpack.c.b16 %v4593, %v4593
      %v4610 = vpack.c.b16 %v4594, %v4594
      %v4611 = vpack.c.b16 %v4595, %v4595
      %v4612 = vpack.c.b16 %v4596, %v4596
      %v4613 = vpack.c.b16 %v4597, %v4597
      %v4614 = vpack.c.b16 %v4598, %v4598
      %v4615 = vpack.c.b16 %v4599, %v4599
      %v4616 = vpack.c.b16 %v4600, %v4600
      %v4617 = vpack.c.b16 %v4601, %v4601
      %v4618 = vpack.c.b16 %v4602, %v4602
      %v4619 = vpack.c.b16 %v4603, %v4603
      %v4620 = vpack.c.b16 %v4604, %v4604
      %v4621 = vpack.c.b16 %v4605, %v4605
      %4638 = vst.msk [vmem:[%s192 + $0x80] sm:$0xf] %vm1673, %v4606
      %4639 = vst.msk [vmem:[%s192 + $0x84] sm:$0xf] %vm1673, %v4607
      %4640 = vst.msk [vmem:[%s192 + $0x88] sm:$0xf] %vm1673, %v4608
      %4641 = vst.msk [vmem:[%s192 + $0x8c] sm:$0xf] %vm1673, %v4609
      %4642 = vst.msk [vmem:[%s192 + $0x90] sm:$0xf] %vm1673, %v4610
      %4643 = vst.msk [vmem:[%s192 + $0x94] sm:$0xf] %vm1673, %v4611
      %4644 = vst.msk [vmem:[%s192 + $0x98] sm:$0xf] %vm1673, %v4612
      %4645 = vst.msk [vmem:[%s192 + $0x9c] sm:$0xf] %vm1673, %v4613
      %4646 = vst.msk [vmem:[%s192 + $0xa0] sm:$0xf] %vm1673, %v4614
      %4647 = vst.msk [vmem:[%s192 + $0xa4] sm:$0xf] %vm1673, %v4615
      %4648 = vst.msk [vmem:[%s192 + $0xa8] sm:$0xf] %vm1673, %v4616
      %4649 = vst.msk [vmem:[%s192 + $0xac] sm:$0xf] %vm1673, %v4617
      %4650 = vst.msk [vmem:[%s192 + $0xb0] sm:$0xf] %vm1673, %v4618
      %4651 = vst.msk [vmem:[%s192 + $0xb4] sm:$0xf] %vm1673, %v4619
      %4652 = vst.msk [vmem:[%s192 + $0xb8] sm:$0xf] %vm1673, %v4620
      %4653 = vst.msk [vmem:[%s192 + $0xbc] sm:$0xf] %vm1673, %v4621
      %s4654 = sadd.s32 %s195, 384
      %s4655 = sshra.s32 %s4654, 3
      %s4656 = sand.u32 %s4654, 7
      %s4657 = smul.addr %s4655, 4
      %s4658 = scalar_lea.vmem %s183, %s4657
      %v4659 = vld [vmem:[%s4658] sm:$0xf]
      %v4660 = vld [vmem:[%s4658 + $0x4] sm:$0xf]
      %v4661 = vld [vmem:[%s4658 + $0x8] sm:$0xf]
      %v4662 = vld [vmem:[%s4658 + $0xc] sm:$0xf]
      %v4663 = vld [vmem:[%s4658 + $0x10] sm:$0xf]
      %v4664 = vld [vmem:[%s4658 + $0x14] sm:$0xf]
      %v4665 = vld [vmem:[%s4658 + $0x18] sm:$0xf]
      %v4666 = vld [vmem:[%s4658 + $0x1c] sm:$0xf]
      %v4667 = vld [vmem:[%s4658 + $0x20] sm:$0xf]
      %v4668 = vld [vmem:[%s4658 + $0x24] sm:$0xf]
      %v4669 = vld [vmem:[%s4658 + $0x28] sm:$0xf]
      %v4670 = vld [vmem:[%s4658 + $0x2c] sm:$0xf]
      %v4671 = vld [vmem:[%s4658 + $0x30] sm:$0xf]
      %v4672 = vld [vmem:[%s4658 + $0x34] sm:$0xf]
      %v4673 = vld [vmem:[%s4658 + $0x38] sm:$0xf]
      %v4674 = vld [vmem:[%s4658 + $0x3c] sm:$0xf]
      %v4675 = vld [vmem:[%s4658 + $0x40] sm:$0xf]
      %v4676 = vld [vmem:[%s4658 + $0x44] sm:$0xf]
      %v4677 = vld [vmem:[%s4658 + $0x48] sm:$0xf]
      %v4678 = vld [vmem:[%s4658 + $0x4c] sm:$0xf]
      %v4679 = vld [vmem:[%s4658 + $0x50] sm:$0xf]
      %v4680 = vld [vmem:[%s4658 + $0x54] sm:$0xf]
      %v4681 = vld [vmem:[%s4658 + $0x58] sm:$0xf]
      %v4682 = vld [vmem:[%s4658 + $0x5c] sm:$0xf]
      %v4683 = vld [vmem:[%s4658 + $0x60] sm:$0xf]
      %v4684 = vld [vmem:[%s1] sm:$0x3]
      %v4685 = vld [vmem:[%s226] sm:$0x3]
      %v4703 = vunpack.c.l.b16 %v4659
      %v4704 = vunpack.c.l.b16 %v4660
      %v4705 = vunpack.c.l.b16 %v4661
      %v4706 = vunpack.c.l.b16 %v4662
      %v4707 = vunpack.c.l.b16 %v4663
      %v4708 = vunpack.c.l.b16 %v4664
      %v4709 = vunpack.c.l.b16 %v4665
      %v4710 = vunpack.c.l.b16 %v4666
      %v4711 = vunpack.c.l.b16 %v4667
      %v4712 = vunpack.c.l.b16 %v4668
      %v4713 = vunpack.c.l.b16 %v4669
      %v4714 = vunpack.c.l.b16 %v4670
      %v4715 = vunpack.c.l.b16 %v4671
      %v4716 = vunpack.c.l.b16 %v4672
      %v4717 = vunpack.c.l.b16 %v4673
      %v4718 = vunpack.c.l.b16 %v4674
      %v4719 = vunpack.c.l.b16 %v4675
      %v4720 = vpack.c.b16 %v4704, %v4703
      %v4721 = vpack.c.b16 %v4706, %v4705
      %v4722 = vpack.c.b16 %v4708, %v4707
      %v4723 = vpack.c.b16 %v4710, %v4709
      %v4724 = vpack.c.b16 %v4712, %v4711
      %v4725 = vpack.c.b16 %v4714, %v4713
      %v4726 = vpack.c.b16 %v4716, %v4715
      %v4727 = vpack.c.b16 %v4718, %v4717
      %v4728 = vpack.c.b16 %v4719, %v4719
      %v4730 = vshrl.u32 %v4720, 16
      %v4732 = vshll.u32 %v4720, 16
      %v4734 = vrot.slane %v4732, 1
      %v4735 = vor.u32 %v4730, %v4734
      %v4737 = vshll.u32 %v4721, 16
      %v4739 = vrot.slane %v4737, 1
      %v4740 = vsel %vm271, %v4735, %v4739
      %v4741 = vshrl.u32 %v4721, 16
      %v4743 = vor.u32 %v4741, %v4739
      %v4745 = vshll.u32 %v4722, 16
      %v4747 = vrot.slane %v4745, 1
      %v4748 = vsel %vm271, %v4743, %v4747
      %v4749 = vshrl.u32 %v4722, 16
      %v4751 = vor.u32 %v4749, %v4747
      %v4753 = vshll.u32 %v4723, 16
      %v4755 = vrot.slane %v4753, 1
      %v4756 = vsel %vm271, %v4751, %v4755
      %v4757 = vshrl.u32 %v4723, 16
      %v4759 = vor.u32 %v4757, %v4755
      %v4761 = vshll.u32 %v4724, 16
      %v4763 = vrot.slane %v4761, 1
      %v4764 = vsel %vm271, %v4759, %v4763
      %v4765 = vshrl.u32 %v4724, 16
      %v4767 = vor.u32 %v4765, %v4763
      %v4769 = vshll.u32 %v4725, 16
      %v4771 = vrot.slane %v4769, 1
      %v4772 = vsel %vm271, %v4767, %v4771
      %v4773 = vshrl.u32 %v4725, 16
      %v4775 = vor.u32 %v4773, %v4771
      %v4777 = vshll.u32 %v4726, 16
      %v4779 = vrot.slane %v4777, 1
      %v4780 = vsel %vm271, %v4775, %v4779
      %v4781 = vshrl.u32 %v4726, 16
      %v4783 = vor.u32 %v4781, %v4779
      %v4785 = vshll.u32 %v4727, 16
      %v4787 = vrot.slane %v4785, 1
      %v4788 = vsel %vm271, %v4783, %v4787
      %v4789 = vshrl.u32 %v4727, 16
      %v4791 = vor.u32 %v4789, %v4787
      %v4793 = vshll.u32 %v4728, 16
      %v4795 = vrot.slane %v4793, 1
      %v4796 = vsel %vm271, %v4791, %v4795
      %v4798 = vsel %vm340, %v4740, 0
      %v4801 = vsel %vm340, %v4748, 0
      %v4804 = vsel %vm340, %v4756, 0
      %v4807 = vsel %vm340, %v4764, 0
      %v4810 = vsel %vm340, %v4772, 0
      %v4813 = vsel %vm340, %v4780, 0
      %v4816 = vsel %vm340, %v4788, 0
      %v4819 = vsel %vm340, %v4796, 0
      %v4822 = vsel %vm365, %v4685, 0
      %4824 = vmatprep.subr.bf16.mxu0 0
      %4825 = vmatpush1.bf16.msra.mxu0 0
      %4826 = vmatprep.subr.bf16.mxu0 0
      %4827 = vmatpush1.bf16.msra.mxu0 0
      %4828 = vmatprep.subr.bf16.mxu0 0
      %4829 = vmatpush1.bf16.msra.mxu0 0
      %4830 = vmatprep.subr.bf16.mxu0 0
      %4831 = vmatpush1.bf16.msra.mxu0 0
      %4832 = vmatprep.subr.bf16.mxu0 0
      %4833 = vmatpush1.bf16.msra.mxu0 0
      %4834 = vmatprep.subr.bf16.mxu0 0
      %4835 = vmatpush1.bf16.msra.mxu0 0
      %4836 = vmatprep.subr.bf16.mxu0 0
      %4837 = vmatpush1.bf16.msra.mxu0 0
      %4838 = vmatprep.subr.bf16.mxu0 0
      %4839 = vmatpush1.bf16.msra.mxu0 %v4822
      %4840 = vmatprep.subr.bf16.mxu0 0
      %4841 = vmatpush2.bf16.msra.mxu0 0
      %4842 = vmatprep.subr.bf16.mxu0 0
      %4843 = vmatpush2.bf16.msra.mxu0 0
      %4844 = vmatprep.subr.bf16.mxu0 0
      %4845 = vmatpush2.bf16.msra.mxu0 0
      %4846 = vmatprep.subr.bf16.mxu0 0
      %4847 = vmatpush2.bf16.msra.mxu0 0
      %4848 = vmatprep.subr.bf16.mxu0 0
      %4849 = vmatpush2.bf16.msra.mxu0 0
      %4850 = vmatprep.subr.bf16.mxu0 0
      %4851 = vmatpush2.bf16.msra.mxu0 0
      %4852 = vmatprep.subr.bf16.mxu0 0
      %4853 = vmatpush2.bf16.msra.mxu0 0
      %4854 = vmatprep.subr.bf16.mxu0 0
      %4855 = vmatpush2.bf16.msra.mxu0 0
      %4856 = vmatprep.mubr.bf16.mxu0 0
      %4857 = vmatmul.mubr.bf16.gmra.mxu0 %v4798
      %v4858 = vpop.f32.mrf.mxu0
      %v4859 = vadd.f32 0.0, %v4858
      %v4860 = vpop.f32.mrf.mxu0
      %v4861 = vpop.f32.mrf.mxu0
      %v4862 = vadd.f32 0.0, %v4861
      %v4863 = vpop.f32.mrf.mxu0
      %4864 = vmatprep.mubr.bf16.mxu0 0
      %4865 = vmatmul.mubr.bf16.gmra.mxu0 %v4801
      %v4866 = vpop.f32.mrf.mxu0
      %v4867 = vadd.f32 0.0, %v4866
      %v4868 = vpop.f32.mrf.mxu0
      %v4869 = vpop.f32.mrf.mxu0
      %v4870 = vadd.f32 0.0, %v4869
      %v4871 = vpop.f32.mrf.mxu0
      %4872 = vmatprep.mubr.bf16.mxu0 0
      %4873 = vmatmul.mubr.bf16.gmra.mxu0 %v4804
      %v4874 = vpop.f32.mrf.mxu0
      %v4875 = vadd.f32 0.0, %v4874
      %v4876 = vpop.f32.mrf.mxu0
      %v4877 = vpop.f32.mrf.mxu0
      %v4878 = vadd.f32 0.0, %v4877
      %v4879 = vpop.f32.mrf.mxu0
      %4880 = vmatprep.mubr.bf16.mxu0 0
      %4881 = vmatmul.mubr.bf16.gmra.mxu0 %v4807
      %v4882 = vpop.f32.mrf.mxu0
      %v4883 = vadd.f32 0.0, %v4882
      %v4884 = vpop.f32.mrf.mxu0
      %v4885 = vpop.f32.mrf.mxu0
      %v4886 = vadd.f32 0.0, %v4885
      %v4887 = vpop.f32.mrf.mxu0
      %4888 = vmatprep.mubr.bf16.mxu0 0
      %4889 = vmatmul.mubr.bf16.gmra.mxu0 %v4810
      %v4890 = vpop.f32.mrf.mxu0
      %v4891 = vadd.f32 0.0, %v4890
      %v4892 = vpop.f32.mrf.mxu0
      %v4893 = vpop.f32.mrf.mxu0
      %v4894 = vadd.f32 0.0, %v4893
      %v4895 = vpop.f32.mrf.mxu0
      %4896 = vmatprep.mubr.bf16.mxu0 0
      %4897 = vmatmul.mubr.bf16.gmra.mxu0 %v4813
      %v4898 = vpop.f32.mrf.mxu0
      %v4899 = vadd.f32 0.0, %v4898
      %v4900 = vpop.f32.mrf.mxu0
      %v4901 = vpop.f32.mrf.mxu0
      %v4902 = vadd.f32 0.0, %v4901
      %v4903 = vpop.f32.mrf.mxu0
      %4904 = vmatprep.mubr.bf16.mxu0 0
      %4905 = vmatmul.mubr.bf16.gmra.mxu0 %v4816
      %v4906 = vpop.f32.mrf.mxu0
      %v4907 = vadd.f32 0.0, %v4906
      %v4908 = vpop.f32.mrf.mxu0
      %v4909 = vpop.f32.mrf.mxu0
      %v4910 = vadd.f32 0.0, %v4909
      %v4911 = vpop.f32.mrf.mxu0
      %4912 = vmatprep.mubr.bf16.mxu0 0
      %4913 = vmatmul.mubr.bf16.gmra.mxu0 %v4819
      %v4914 = vpop.f32.mrf.mxu0
      %v4915 = vadd.f32 0.0, %v4914
      %v4916 = vpop.f32.mrf.mxu0
      %v4917 = vpop.f32.mrf.mxu0
      %v4918 = vadd.f32 0.0, %v4917
      %v4919 = vpop.f32.mrf.mxu0
      %4920 = vdwg.mxu0
      %v4921 = vsel %vm340, %v4720, 0
      %v4923 = vsel %vm340, %v4721, 0
      %v4925 = vsel %vm340, %v4722, 0
      %v4927 = vsel %vm340, %v4723, 0
      %v4929 = vsel %vm340, %v4724, 0
      %v4931 = vsel %vm340, %v4725, 0
      %v4933 = vsel %vm340, %v4726, 0
      %v4935 = vsel %vm340, %v4727, 0
      %v4938 = vsel %vm365, %v4684, 0
      %4940 = vmatprep.subr.bf16.mxu0 0
      %4941 = vmatpush1.bf16.msra.mxu0 0
      %4942 = vmatprep.subr.bf16.mxu0 0
      %4943 = vmatpush1.bf16.msra.mxu0 0
      %4944 = vmatprep.subr.bf16.mxu0 0
      %4945 = vmatpush1.bf16.msra.mxu0 0
      %4946 = vmatprep.subr.bf16.mxu0 0
      %4947 = vmatpush1.bf16.msra.mxu0 0
      %4948 = vmatprep.subr.bf16.mxu0 0
      %4949 = vmatpush1.bf16.msra.mxu0 0
      %4950 = vmatprep.subr.bf16.mxu0 0
      %4951 = vmatpush1.bf16.msra.mxu0 0
      %4952 = vmatprep.subr.bf16.mxu0 0
      %4953 = vmatpush1.bf16.msra.mxu0 0
      %4954 = vmatprep.subr.bf16.mxu0 0
      %4955 = vmatpush1.bf16.msra.mxu0 %v4938
      %4956 = vmatprep.subr.bf16.mxu0 0
      %4957 = vmatpush2.bf16.msra.mxu0 0
      %4958 = vmatprep.subr.bf16.mxu0 0
      %4959 = vmatpush2.bf16.msra.mxu0 0
      %4960 = vmatprep.subr.bf16.mxu0 0
      %4961 = vmatpush2.bf16.msra.mxu0 0
      %4962 = vmatprep.subr.bf16.mxu0 0
      %4963 = vmatpush2.bf16.msra.mxu0 0
      %4964 = vmatprep.subr.bf16.mxu0 0
      %4965 = vmatpush2.bf16.msra.mxu0 0
      %4966 = vmatprep.subr.bf16.mxu0 0
      %4967 = vmatpush2.bf16.msra.mxu0 0
      %4968 = vmatprep.subr.bf16.mxu0 0
      %4969 = vmatpush2.bf16.msra.mxu0 0
      %4970 = vmatprep.subr.bf16.mxu0 0
      %4971 = vmatpush2.bf16.msra.mxu0 0
      %4972 = vmatprep.mubr.bf16.mxu0 0
      %4973 = vmatmul.mubr.bf16.gmra.mxu0 %v4921
      %v4974 = vpop.f32.mrf.mxu0
      %v4975 = vadd.f32 %v4859, %v4974
      %v4976 = vpop.f32.mrf.mxu0
      %v4977 = vpop.f32.mrf.mxu0
      %v4978 = vadd.f32 %v4862, %v4977
      %v4979 = vpop.f32.mrf.mxu0
      %4980 = vmatprep.mubr.bf16.mxu0 0
      %4981 = vmatmul.mubr.bf16.gmra.mxu0 %v4923
      %v4982 = vpop.f32.mrf.mxu0
      %v4983 = vadd.f32 %v4867, %v4982
      %v4984 = vpop.f32.mrf.mxu0
      %v4985 = vpop.f32.mrf.mxu0
      %v4986 = vadd.f32 %v4870, %v4985
      %v4987 = vpop.f32.mrf.mxu0
      %4988 = vmatprep.mubr.bf16.mxu0 0
      %4989 = vmatmul.mubr.bf16.gmra.mxu0 %v4925
      %v4990 = vpop.f32.mrf.mxu0
      %v4991 = vadd.f32 %v4875, %v4990
      %v4992 = vpop.f32.mrf.mxu0
      %v4993 = vpop.f32.mrf.mxu0
      %v4994 = vadd.f32 %v4878, %v4993
      %v4995 = vpop.f32.mrf.mxu0
      %4996 = vmatprep.mubr.bf16.mxu0 0
      %4997 = vmatmul.mubr.bf16.gmra.mxu0 %v4927
      %v4998 = vpop.f32.mrf.mxu0
      %v4999 = vadd.f32 %v4883, %v4998
      %v5000 = vpop.f32.mrf.mxu0
      %v5001 = vpop.f32.mrf.mxu0
      %v5002 = vadd.f32 %v4886, %v5001
      %v5003 = vpop.f32.mrf.mxu0
      %5004 = vmatprep.mubr.bf16.mxu0 0
      %5005 = vmatmul.mubr.bf16.gmra.mxu0 %v4929
      %v5006 = vpop.f32.mrf.mxu0
      %v5007 = vadd.f32 %v4891, %v5006
      %v5008 = vpop.f32.mrf.mxu0
      %v5009 = vpop.f32.mrf.mxu0
      %v5010 = vadd.f32 %v4894, %v5009
      %v5011 = vpop.f32.mrf.mxu0
      %5012 = vmatprep.mubr.bf16.mxu0 0
      %5013 = vmatmul.mubr.bf16.gmra.mxu0 %v4931
      %v5014 = vpop.f32.mrf.mxu0
      %v5015 = vadd.f32 %v4899, %v5014
      %v5016 = vpop.f32.mrf.mxu0
      %v5017 = vpop.f32.mrf.mxu0
      %v5018 = vadd.f32 %v4902, %v5017
      %v5019 = vpop.f32.mrf.mxu0
      %5020 = vmatprep.mubr.bf16.mxu0 0
      %5021 = vmatmul.mubr.bf16.gmra.mxu0 %v4933
      %v5022 = vpop.f32.mrf.mxu0
      %v5023 = vadd.f32 %v4907, %v5022
      %v5024 = vpop.f32.mrf.mxu0
      %v5025 = vpop.f32.mrf.mxu0
      %v5026 = vadd.f32 %v4910, %v5025
      %v5027 = vpop.f32.mrf.mxu0
      %5028 = vmatprep.mubr.bf16.mxu0 0
      %5029 = vmatmul.mubr.bf16.gmra.mxu0 %v4935
      %v5030 = vpop.f32.mrf.mxu0
      %v5031 = vadd.f32 %v4915, %v5030
      %v5032 = vpop.f32.mrf.mxu0
      %v5033 = vpop.f32.mrf.mxu0
      %v5034 = vadd.f32 %v4918, %v5033
      %v5035 = vpop.f32.mrf.mxu0
      %5036 = vdwg.mxu0
      %v5037 = vld [vmem:[%s582] sm:$0x3]
      %v5038 = vrot.slane %v4720, 1
      %v5039 = vrot.slane %v4721, 1
      %v5040 = vsel %vm584, %v5038, %v5039
      %v5041 = vrot.slane %v4722, 1
      %v5042 = vsel %vm584, %v5039, %v5041
      %v5043 = vrot.slane %v4723, 1
      %v5044 = vsel %vm584, %v5041, %v5043
      %v5045 = vrot.slane %v4724, 1
      %v5046 = vsel %vm584, %v5043, %v5045
      %v5047 = vrot.slane %v4725, 1
      %v5048 = vsel %vm584, %v5045, %v5047
      %v5049 = vrot.slane %v4726, 1
      %v5050 = vsel %vm584, %v5047, %v5049
      %v5051 = vrot.slane %v4727, 1
      %v5052 = vsel %vm584, %v5049, %v5051
      %v5053 = vrot.slane %v4728, 1
      %v5054 = vsel %vm584, %v5051, %v5053
      %v5056 = vsel %vm340, %v5040, 0
      %v5059 = vsel %vm340, %v5042, 0
      %v5062 = vsel %vm340, %v5044, 0
      %v5065 = vsel %vm340, %v5046, 0
      %v5068 = vsel %vm340, %v5048, 0
      %v5071 = vsel %vm340, %v5050, 0
      %v5074 = vsel %vm340, %v5052, 0
      %v5077 = vsel %vm340, %v5054, 0
      %v5080 = vsel %vm365, %v5037, 0
      %5082 = vmatprep.subr.bf16.mxu0 0
      %5083 = vmatpush1.bf16.msra.mxu0 0
      %5084 = vmatprep.subr.bf16.mxu0 0
      %5085 = vmatpush1.bf16.msra.mxu0 0
      %5086 = vmatprep.subr.bf16.mxu0 0
      %5087 = vmatpush1.bf16.msra.mxu0 0
      %5088 = vmatprep.subr.bf16.mxu0 0
      %5089 = vmatpush1.bf16.msra.mxu0 0
      %5090 = vmatprep.subr.bf16.mxu0 0
      %5091 = vmatpush1.bf16.msra.mxu0 0
      %5092 = vmatprep.subr.bf16.mxu0 0
      %5093 = vmatpush1.bf16.msra.mxu0 0
      %5094 = vmatprep.subr.bf16.mxu0 0
      %5095 = vmatpush1.bf16.msra.mxu0 0
      %5096 = vmatprep.subr.bf16.mxu0 0
      %5097 = vmatpush1.bf16.msra.mxu0 %v5080
      %5098 = vmatprep.subr.bf16.mxu0 0
      %5099 = vmatpush2.bf16.msra.mxu0 0
      %5100 = vmatprep.subr.bf16.mxu0 0
      %5101 = vmatpush2.bf16.msra.mxu0 0
      %5102 = vmatprep.subr.bf16.mxu0 0
      %5103 = vmatpush2.bf16.msra.mxu0 0
      %5104 = vmatprep.subr.bf16.mxu0 0
      %5105 = vmatpush2.bf16.msra.mxu0 0
      %5106 = vmatprep.subr.bf16.mxu0 0
      %5107 = vmatpush2.bf16.msra.mxu0 0
      %5108 = vmatprep.subr.bf16.mxu0 0
      %5109 = vmatpush2.bf16.msra.mxu0 0
      %5110 = vmatprep.subr.bf16.mxu0 0
      %5111 = vmatpush2.bf16.msra.mxu0 0
      %5112 = vmatprep.subr.bf16.mxu0 0
      %5113 = vmatpush2.bf16.msra.mxu0 0
      %5114 = vmatprep.mubr.bf16.mxu0 0
      %5115 = vmatmul.mubr.bf16.gmra.mxu0 %v5056
      %v5116 = vpop.f32.mrf.mxu0
      %v5117 = vadd.f32 0.0, %v5116
      %v5118 = vpop.f32.mrf.mxu0
      %v5119 = vpop.f32.mrf.mxu0
      %v5120 = vadd.f32 0.0, %v5119
      %v5121 = vpop.f32.mrf.mxu0
      %5122 = vmatprep.mubr.bf16.mxu0 0
      %5123 = vmatmul.mubr.bf16.gmra.mxu0 %v5059
      %v5124 = vpop.f32.mrf.mxu0
      %v5125 = vadd.f32 0.0, %v5124
      %v5126 = vpop.f32.mrf.mxu0
      %v5127 = vpop.f32.mrf.mxu0
      %v5128 = vadd.f32 0.0, %v5127
      %v5129 = vpop.f32.mrf.mxu0
      %5130 = vmatprep.mubr.bf16.mxu0 0
      %5131 = vmatmul.mubr.bf16.gmra.mxu0 %v5062
      %v5132 = vpop.f32.mrf.mxu0
      %v5133 = vadd.f32 0.0, %v5132
      %v5134 = vpop.f32.mrf.mxu0
      %v5135 = vpop.f32.mrf.mxu0
      %v5136 = vadd.f32 0.0, %v5135
      %v5137 = vpop.f32.mrf.mxu0
      %5138 = vmatprep.mubr.bf16.mxu0 0
      %5139 = vmatmul.mubr.bf16.gmra.mxu0 %v5065
      %v5140 = vpop.f32.mrf.mxu0
      %v5141 = vadd.f32 0.0, %v5140
      %v5142 = vpop.f32.mrf.mxu0
      %v5143 = vpop.f32.mrf.mxu0
      %v5144 = vadd.f32 0.0, %v5143
      %v5145 = vpop.f32.mrf.mxu0
      %5146 = vmatprep.mubr.bf16.mxu0 0
      %5147 = vmatmul.mubr.bf16.gmra.mxu0 %v5068
      %v5148 = vpop.f32.mrf.mxu0
      %v5149 = vadd.f32 0.0, %v5148
      %v5150 = vpop.f32.mrf.mxu0
      %v5151 = vpop.f32.mrf.mxu0
      %v5152 = vadd.f32 0.0, %v5151
      %v5153 = vpop.f32.mrf.mxu0
      %5154 = vmatprep.mubr.bf16.mxu0 0
      %5155 = vmatmul.mubr.bf16.gmra.mxu0 %v5071
      %v5156 = vpop.f32.mrf.mxu0
      %v5157 = vadd.f32 0.0, %v5156
      %v5158 = vpop.f32.mrf.mxu0
      %v5159 = vpop.f32.mrf.mxu0
      %v5160 = vadd.f32 0.0, %v5159
      %v5161 = vpop.f32.mrf.mxu0
      %5162 = vmatprep.mubr.bf16.mxu0 0
      %5163 = vmatmul.mubr.bf16.gmra.mxu0 %v5074
      %v5164 = vpop.f32.mrf.mxu0
      %v5165 = vadd.f32 0.0, %v5164
      %v5166 = vpop.f32.mrf.mxu0
      %v5167 = vpop.f32.mrf.mxu0
      %v5168 = vadd.f32 0.0, %v5167
      %v5169 = vpop.f32.mrf.mxu0
      %5170 = vmatprep.mubr.bf16.mxu0 0
      %5171 = vmatmul.mubr.bf16.gmra.mxu0 %v5077
      %v5172 = vpop.f32.mrf.mxu0
      %v5173 = vadd.f32 0.0, %v5172
      %v5174 = vpop.f32.mrf.mxu0
      %v5175 = vpop.f32.mrf.mxu0
      %v5176 = vadd.f32 0.0, %v5175
      %v5177 = vpop.f32.mrf.mxu0
      %5178 = vdwg.mxu0
      %v5179 = vadd.f32 %v4975, %v5117
      %v5180 = vadd.f32 %v4978, %v5120
      %v5181 = vadd.f32 %v4983, %v5125
      %v5182 = vadd.f32 %v4986, %v5128
      %v5183 = vadd.f32 %v4991, %v5133
      %v5184 = vadd.f32 %v4994, %v5136
      %v5185 = vadd.f32 %v4999, %v5141
      %v5186 = vadd.f32 %v5002, %v5144
      %v5187 = vadd.f32 %v5007, %v5149
      %v5188 = vadd.f32 %v5010, %v5152
      %v5189 = vadd.f32 %v5015, %v5157
      %v5190 = vadd.f32 %v5018, %v5160
      %v5191 = vadd.f32 %v5023, %v5165
      %v5192 = vadd.f32 %v5026, %v5168
      %v5193 = vadd.f32 %v5031, %v5173
      %v5194 = vadd.f32 %v5034, %v5176
      %v5195 = vld [vmem:[%s742] sm:$0x3]
      %v5199 = vunpack.c.l.b16 %v4676
      %v5200 = vunpack.c.l.b16 %v4677
      %v5201 = vunpack.c.l.b16 %v4678
      %v5202 = vpack.c.b16 %v5199, %v4719
      %v5203 = vpack.c.b16 %v5201, %v5200
      %v5205 = vsel %vm340, %v5202, 0
      %v5208 = vsel %vm340, %v5203, 0
      %v5211 = vsel %vm365, %v5195, 0
      %5213 = vmatprep.subr.bf16.mxu0 0
      %5214 = vmatpush1.bf16.msra.mxu0 0
      %5215 = vmatprep.subr.bf16.mxu0 0
      %5216 = vmatpush1.bf16.msra.mxu0 0
      %5217 = vmatprep.subr.bf16.mxu0 0
      %5218 = vmatpush1.bf16.msra.mxu0 0
      %5219 = vmatprep.subr.bf16.mxu0 0
      %5220 = vmatpush1.bf16.msra.mxu0 0
      %5221 = vmatprep.subr.bf16.mxu0 0
      %5222 = vmatpush1.bf16.msra.mxu0 0
      %5223 = vmatprep.subr.bf16.mxu0 0
      %5224 = vmatpush1.bf16.msra.mxu0 0
      %5225 = vmatprep.subr.bf16.mxu0 0
      %5226 = vmatpush1.bf16.msra.mxu0 0
      %5227 = vmatprep.subr.bf16.mxu0 0
      %5228 = vmatpush1.bf16.msra.mxu0 %v5211
      %5229 = vmatprep.subr.bf16.mxu0 0
      %5230 = vmatpush2.bf16.msra.mxu0 0
      %5231 = vmatprep.subr.bf16.mxu0 0
      %5232 = vmatpush2.bf16.msra.mxu0 0
      %5233 = vmatprep.subr.bf16.mxu0 0
      %5234 = vmatpush2.bf16.msra.mxu0 0
      %5235 = vmatprep.subr.bf16.mxu0 0
      %5236 = vmatpush2.bf16.msra.mxu0 0
      %5237 = vmatprep.subr.bf16.mxu0 0
      %5238 = vmatpush2.bf16.msra.mxu0 0
      %5239 = vmatprep.subr.bf16.mxu0 0
      %5240 = vmatpush2.bf16.msra.mxu0 0
      %5241 = vmatprep.subr.bf16.mxu0 0
      %5242 = vmatpush2.bf16.msra.mxu0 0
      %5243 = vmatprep.subr.bf16.mxu0 0
      %5244 = vmatpush2.bf16.msra.mxu0 0
      %5245 = vmatprep.mubr.bf16.mxu0 0
      %5246 = vmatmul.mubr.bf16.gmra.mxu0 %v4925
      %v5247 = vpop.f32.mrf.mxu0
      %v5248 = vadd.f32 0.0, %v5247
      %v5249 = vpop.f32.mrf.mxu0
      %v5250 = vpop.f32.mrf.mxu0
      %v5251 = vadd.f32 0.0, %v5250
      %v5252 = vpop.f32.mrf.mxu0
      %5253 = vmatprep.mubr.bf16.mxu0 0
      %5254 = vmatmul.mubr.bf16.gmra.mxu0 %v4927
      %v5255 = vpop.f32.mrf.mxu0
      %v5256 = vadd.f32 0.0, %v5255
      %v5257 = vpop.f32.mrf.mxu0
      %v5258 = vpop.f32.mrf.mxu0
      %v5259 = vadd.f32 0.0, %v5258
      %v5260 = vpop.f32.mrf.mxu0
      %5261 = vmatprep.mubr.bf16.mxu0 0
      %5262 = vmatmul.mubr.bf16.gmra.mxu0 %v4929
      %v5263 = vpop.f32.mrf.mxu0
      %v5264 = vadd.f32 0.0, %v5263
      %v5265 = vpop.f32.mrf.mxu0
      %v5266 = vpop.f32.mrf.mxu0
      %v5267 = vadd.f32 0.0, %v5266
      %v5268 = vpop.f32.mrf.mxu0
      %5269 = vmatprep.mubr.bf16.mxu0 0
      %5270 = vmatmul.mubr.bf16.gmra.mxu0 %v4931
      %v5271 = vpop.f32.mrf.mxu0
      %v5272 = vadd.f32 0.0, %v5271
      %v5273 = vpop.f32.mrf.mxu0
      %v5274 = vpop.f32.mrf.mxu0
      %v5275 = vadd.f32 0.0, %v5274
      %v5276 = vpop.f32.mrf.mxu0
      %5277 = vmatprep.mubr.bf16.mxu0 0
      %5278 = vmatmul.mubr.bf16.gmra.mxu0 %v4933
      %v5279 = vpop.f32.mrf.mxu0
      %v5280 = vadd.f32 0.0, %v5279
      %v5281 = vpop.f32.mrf.mxu0
      %v5282 = vpop.f32.mrf.mxu0
      %v5283 = vadd.f32 0.0, %v5282
      %v5284 = vpop.f32.mrf.mxu0
      %5285 = vmatprep.mubr.bf16.mxu0 0
      %5286 = vmatmul.mubr.bf16.gmra.mxu0 %v4935
      %v5287 = vpop.f32.mrf.mxu0
      %v5288 = vadd.f32 0.0, %v5287
      %v5289 = vpop.f32.mrf.mxu0
      %v5290 = vpop.f32.mrf.mxu0
      %v5291 = vadd.f32 0.0, %v5290
      %v5292 = vpop.f32.mrf.mxu0
      %5293 = vmatprep.mubr.bf16.mxu0 0
      %5294 = vmatmul.mubr.bf16.gmra.mxu0 %v5205
      %v5295 = vpop.f32.mrf.mxu0
      %v5296 = vadd.f32 0.0, %v5295
      %v5297 = vpop.f32.mrf.mxu0
      %v5298 = vpop.f32.mrf.mxu0
      %v5299 = vadd.f32 0.0, %v5298
      %v5300 = vpop.f32.mrf.mxu0
      %5301 = vmatprep.mubr.bf16.mxu0 0
      %5302 = vmatmul.mubr.bf16.gmra.mxu0 %v5208
      %v5303 = vpop.f32.mrf.mxu0
      %v5304 = vadd.f32 0.0, %v5303
      %v5305 = vpop.f32.mrf.mxu0
      %v5306 = vpop.f32.mrf.mxu0
      %v5307 = vadd.f32 0.0, %v5306
      %v5308 = vpop.f32.mrf.mxu0
      %5309 = vdwg.mxu0
      %v5310 = vadd.f32 %v5179, %v5248
      %v5311 = vadd.f32 %v5180, %v5251
      %v5312 = vadd.f32 %v5181, %v5256
      %v5313 = vadd.f32 %v5182, %v5259
      %v5314 = vadd.f32 %v5183, %v5264
      %v5315 = vadd.f32 %v5184, %v5267
      %v5316 = vadd.f32 %v5185, %v5272
      %v5317 = vadd.f32 %v5186, %v5275
      %v5318 = vadd.f32 %v5187, %v5280
      %v5319 = vadd.f32 %v5188, %v5283
      %v5320 = vadd.f32 %v5189, %v5288
      %v5321 = vadd.f32 %v5190, %v5291
      %v5322 = vadd.f32 %v5191, %v5296
      %v5323 = vadd.f32 %v5192, %v5299
      %v5324 = vadd.f32 %v5193, %v5304
      %v5325 = vadd.f32 %v5194, %v5307
      %v5326 = vld [vmem:[%s874] sm:$0x3]
      %v5328 = vunpack.c.l.b16 %v4679
      %v5329 = vpack.c.b16 %v5328, %v5328
      %v5330 = vshll.u32 %v5202, 16
      %v5332 = vrot.slane %v5330, 1
      %v5333 = vsel %vm271, %v4791, %v5332
      %v5334 = vshrl.u32 %v5202, 16
      %v5336 = vor.u32 %v5334, %v5332
      %v5337 = vshll.u32 %v5203, 16
      %v5339 = vrot.slane %v5337, 1
      %v5340 = vsel %vm271, %v5336, %v5339
      %v5341 = vshrl.u32 %v5203, 16
      %v5343 = vor.u32 %v5341, %v5339
      %v5345 = vshll.u32 %v5329, 16
      %v5347 = vrot.slane %v5345, 1
      %v5348 = vsel %vm271, %v5343, %v5347
      %v5350 = vsel %vm340, %v5333, 0
      %v5353 = vsel %vm340, %v5340, 0
      %v5356 = vsel %vm340, %v5348, 0
      %v5359 = vsel %vm365, %v5326, 0
      %5361 = vmatprep.subr.bf16.mxu0 0
      %5362 = vmatpush1.bf16.msra.mxu0 0
      %5363 = vmatprep.subr.bf16.mxu0 0
      %5364 = vmatpush1.bf16.msra.mxu0 0
      %5365 = vmatprep.subr.bf16.mxu0 0
      %5366 = vmatpush1.bf16.msra.mxu0 0
      %5367 = vmatprep.subr.bf16.mxu0 0
      %5368 = vmatpush1.bf16.msra.mxu0 0
      %5369 = vmatprep.subr.bf16.mxu0 0
      %5370 = vmatpush1.bf16.msra.mxu0 0
      %5371 = vmatprep.subr.bf16.mxu0 0
      %5372 = vmatpush1.bf16.msra.mxu0 0
      %5373 = vmatprep.subr.bf16.mxu0 0
      %5374 = vmatpush1.bf16.msra.mxu0 0
      %5375 = vmatprep.subr.bf16.mxu0 0
      %5376 = vmatpush1.bf16.msra.mxu0 %v5359
      %5377 = vmatprep.subr.bf16.mxu0 0
      %5378 = vmatpush2.bf16.msra.mxu0 0
      %5379 = vmatprep.subr.bf16.mxu0 0
      %5380 = vmatpush2.bf16.msra.mxu0 0
      %5381 = vmatprep.subr.bf16.mxu0 0
      %5382 = vmatpush2.bf16.msra.mxu0 0
      %5383 = vmatprep.subr.bf16.mxu0 0
      %5384 = vmatpush2.bf16.msra.mxu0 0
      %5385 = vmatprep.subr.bf16.mxu0 0
      %5386 = vmatpush2.bf16.msra.mxu0 0
      %5387 = vmatprep.subr.bf16.mxu0 0
      %5388 = vmatpush2.bf16.msra.mxu0 0
      %5389 = vmatprep.subr.bf16.mxu0 0
      %5390 = vmatpush2.bf16.msra.mxu0 0
      %5391 = vmatprep.subr.bf16.mxu0 0
      %5392 = vmatpush2.bf16.msra.mxu0 0
      %5393 = vmatprep.mubr.bf16.mxu0 0
      %5394 = vmatmul.mubr.bf16.gmra.mxu0 %v4804
      %v5395 = vpop.f32.mrf.mxu0
      %v5396 = vadd.f32 0.0, %v5395
      %v5397 = vpop.f32.mrf.mxu0
      %v5398 = vpop.f32.mrf.mxu0
      %v5399 = vadd.f32 0.0, %v5398
      %v5400 = vpop.f32.mrf.mxu0
      %5401 = vmatprep.mubr.bf16.mxu0 0
      %5402 = vmatmul.mubr.bf16.gmra.mxu0 %v4807
      %v5403 = vpop.f32.mrf.mxu0
      %v5404 = vadd.f32 0.0, %v5403
      %v5405 = vpop.f32.mrf.mxu0
      %v5406 = vpop.f32.mrf.mxu0
      %v5407 = vadd.f32 0.0, %v5406
      %v5408 = vpop.f32.mrf.mxu0
      %5409 = vmatprep.mubr.bf16.mxu0 0
      %5410 = vmatmul.mubr.bf16.gmra.mxu0 %v4810
      %v5411 = vpop.f32.mrf.mxu0
      %v5412 = vadd.f32 0.0, %v5411
      %v5413 = vpop.f32.mrf.mxu0
      %v5414 = vpop.f32.mrf.mxu0
      %v5415 = vadd.f32 0.0, %v5414
      %v5416 = vpop.f32.mrf.mxu0
      %5417 = vmatprep.mubr.bf16.mxu0 0
      %5418 = vmatmul.mubr.bf16.gmra.mxu0 %v4813
      %v5419 = vpop.f32.mrf.mxu0
      %v5420 = vadd.f32 0.0, %v5419
      %v5421 = vpop.f32.mrf.mxu0
      %v5422 = vpop.f32.mrf.mxu0
      %v5423 = vadd.f32 0.0, %v5422
      %v5424 = vpop.f32.mrf.mxu0
      %5425 = vmatprep.mubr.bf16.mxu0 0
      %5426 = vmatmul.mubr.bf16.gmra.mxu0 %v4816
      %v5427 = vpop.f32.mrf.mxu0
      %v5428 = vadd.f32 0.0, %v5427
      %v5429 = vpop.f32.mrf.mxu0
      %v5430 = vpop.f32.mrf.mxu0
      %v5431 = vadd.f32 0.0, %v5430
      %v5432 = vpop.f32.mrf.mxu0
      %5433 = vmatprep.mubr.bf16.mxu0 0
      %5434 = vmatmul.mubr.bf16.gmra.mxu0 %v5350
      %v5435 = vpop.f32.mrf.mxu0
      %v5436 = vadd.f32 0.0, %v5435
      %v5437 = vpop.f32.mrf.mxu0
      %v5438 = vpop.f32.mrf.mxu0
      %v5439 = vadd.f32 0.0, %v5438
      %v5440 = vpop.f32.mrf.mxu0
      %5441 = vmatprep.mubr.bf16.mxu0 0
      %5442 = vmatmul.mubr.bf16.gmra.mxu0 %v5353
      %v5443 = vpop.f32.mrf.mxu0
      %v5444 = vadd.f32 0.0, %v5443
      %v5445 = vpop.f32.mrf.mxu0
      %v5446 = vpop.f32.mrf.mxu0
      %v5447 = vadd.f32 0.0, %v5446
      %v5448 = vpop.f32.mrf.mxu0
      %5449 = vmatprep.mubr.bf16.mxu0 0
      %5450 = vmatmul.mubr.bf16.gmra.mxu0 %v5356
      %v5451 = vpop.f32.mrf.mxu0
      %v5452 = vadd.f32 0.0, %v5451
      %v5453 = vpop.f32.mrf.mxu0
      %v5454 = vpop.f32.mrf.mxu0
      %v5455 = vadd.f32 0.0, %v5454
      %v5456 = vpop.f32.mrf.mxu0
      %5457 = vdwg.mxu0
      %v5458 = vadd.f32 %v5310, %v5396
      %v5459 = vadd.f32 %v5311, %v5399
      %v5460 = vadd.f32 %v5312, %v5404
      %v5461 = vadd.f32 %v5313, %v5407
      %v5462 = vadd.f32 %v5314, %v5412
      %v5463 = vadd.f32 %v5315, %v5415
      %v5464 = vadd.f32 %v5316, %v5420
      %v5465 = vadd.f32 %v5317, %v5423
      %v5466 = vadd.f32 %v5318, %v5428
      %v5467 = vadd.f32 %v5319, %v5431
      %v5468 = vadd.f32 %v5320, %v5436
      %v5469 = vadd.f32 %v5321, %v5439
      %v5470 = vadd.f32 %v5322, %v5444
      %v5471 = vadd.f32 %v5323, %v5447
      %v5472 = vadd.f32 %v5324, %v5452
      %v5473 = vadd.f32 %v5325, %v5455
      %v5474 = vld [vmem:[%s1023] sm:$0x3]
      %v5475 = vrot.slane %v5202, 1
      %v5476 = vsel %vm584, %v5051, %v5475
      %v5477 = vrot.slane %v5203, 1
      %v5478 = vsel %vm584, %v5475, %v5477
      %v5479 = vrot.slane %v5329, 1
      %v5480 = vsel %vm584, %v5477, %v5479
      %v5482 = vsel %vm340, %v5476, 0
      %v5485 = vsel %vm340, %v5478, 0
      %v5488 = vsel %vm340, %v5480, 0
      %v5491 = vsel %vm365, %v5474, 0
      %5493 = vmatprep.subr.bf16.mxu0 0
      %5494 = vmatpush1.bf16.msra.mxu0 0
      %5495 = vmatprep.subr.bf16.mxu0 0
      %5496 = vmatpush1.bf16.msra.mxu0 0
      %5497 = vmatprep.subr.bf16.mxu0 0
      %5498 = vmatpush1.bf16.msra.mxu0 0
      %5499 = vmatprep.subr.bf16.mxu0 0
      %5500 = vmatpush1.bf16.msra.mxu0 0
      %5501 = vmatprep.subr.bf16.mxu0 0
      %5502 = vmatpush1.bf16.msra.mxu0 0
      %5503 = vmatprep.subr.bf16.mxu0 0
      %5504 = vmatpush1.bf16.msra.mxu0 0
      %5505 = vmatprep.subr.bf16.mxu0 0
      %5506 = vmatpush1.bf16.msra.mxu0 0
      %5507 = vmatprep.subr.bf16.mxu0 0
      %5508 = vmatpush1.bf16.msra.mxu0 %v5491
      %5509 = vmatprep.subr.bf16.mxu0 0
      %5510 = vmatpush2.bf16.msra.mxu0 0
      %5511 = vmatprep.subr.bf16.mxu0 0
      %5512 = vmatpush2.bf16.msra.mxu0 0
      %5513 = vmatprep.subr.bf16.mxu0 0
      %5514 = vmatpush2.bf16.msra.mxu0 0
      %5515 = vmatprep.subr.bf16.mxu0 0
      %5516 = vmatpush2.bf16.msra.mxu0 0
      %5517 = vmatprep.subr.bf16.mxu0 0
      %5518 = vmatpush2.bf16.msra.mxu0 0
      %5519 = vmatprep.subr.bf16.mxu0 0
      %5520 = vmatpush2.bf16.msra.mxu0 0
      %5521 = vmatprep.subr.bf16.mxu0 0
      %5522 = vmatpush2.bf16.msra.mxu0 0
      %5523 = vmatprep.subr.bf16.mxu0 0
      %5524 = vmatpush2.bf16.msra.mxu0 0
      %5525 = vmatprep.mubr.bf16.mxu0 0
      %5526 = vmatmul.mubr.bf16.gmra.mxu0 %v5062
      %v5527 = vpop.f32.mrf.mxu0
      %v5528 = vadd.f32 0.0, %v5527
      %v5529 = vpop.f32.mrf.mxu0
      %v5530 = vpop.f32.mrf.mxu0
      %v5531 = vadd.f32 0.0, %v5530
      %v5532 = vpop.f32.mrf.mxu0
      %5533 = vmatprep.mubr.bf16.mxu0 0
      %5534 = vmatmul.mubr.bf16.gmra.mxu0 %v5065
      %v5535 = vpop.f32.mrf.mxu0
      %v5536 = vadd.f32 0.0, %v5535
      %v5537 = vpop.f32.mrf.mxu0
      %v5538 = vpop.f32.mrf.mxu0
      %v5539 = vadd.f32 0.0, %v5538
      %v5540 = vpop.f32.mrf.mxu0
      %5541 = vmatprep.mubr.bf16.mxu0 0
      %5542 = vmatmul.mubr.bf16.gmra.mxu0 %v5068
      %v5543 = vpop.f32.mrf.mxu0
      %v5544 = vadd.f32 0.0, %v5543
      %v5545 = vpop.f32.mrf.mxu0
      %v5546 = vpop.f32.mrf.mxu0
      %v5547 = vadd.f32 0.0, %v5546
      %v5548 = vpop.f32.mrf.mxu0
      %5549 = vmatprep.mubr.bf16.mxu0 0
      %5550 = vmatmul.mubr.bf16.gmra.mxu0 %v5071
      %v5551 = vpop.f32.mrf.mxu0
      %v5552 = vadd.f32 0.0, %v5551
      %v5553 = vpop.f32.mrf.mxu0
      %v5554 = vpop.f32.mrf.mxu0
      %v5555 = vadd.f32 0.0, %v5554
      %v5556 = vpop.f32.mrf.mxu0
      %5557 = vmatprep.mubr.bf16.mxu0 0
      %5558 = vmatmul.mubr.bf16.gmra.mxu0 %v5074
      %v5559 = vpop.f32.mrf.mxu0
      %v5560 = vadd.f32 0.0, %v5559
      %v5561 = vpop.f32.mrf.mxu0
      %v5562 = vpop.f32.mrf.mxu0
      %v5563 = vadd.f32 0.0, %v5562
      %v5564 = vpop.f32.mrf.mxu0
      %5565 = vmatprep.mubr.bf16.mxu0 0
      %5566 = vmatmul.mubr.bf16.gmra.mxu0 %v5482
      %v5567 = vpop.f32.mrf.mxu0
      %v5568 = vadd.f32 0.0, %v5567
      %v5569 = vpop.f32.mrf.mxu0
      %v5570 = vpop.f32.mrf.mxu0
      %v5571 = vadd.f32 0.0, %v5570
      %v5572 = vpop.f32.mrf.mxu0
      %5573 = vmatprep.mubr.bf16.mxu0 0
      %5574 = vmatmul.mubr.bf16.gmra.mxu0 %v5485
      %v5575 = vpop.f32.mrf.mxu0
      %v5576 = vadd.f32 0.0, %v5575
      %v5577 = vpop.f32.mrf.mxu0
      %v5578 = vpop.f32.mrf.mxu0
      %v5579 = vadd.f32 0.0, %v5578
      %v5580 = vpop.f32.mrf.mxu0
      %5581 = vmatprep.mubr.bf16.mxu0 0
      %5582 = vmatmul.mubr.bf16.gmra.mxu0 %v5488
      %v5583 = vpop.f32.mrf.mxu0
      %v5584 = vadd.f32 0.0, %v5583
      %v5585 = vpop.f32.mrf.mxu0
      %v5586 = vpop.f32.mrf.mxu0
      %v5587 = vadd.f32 0.0, %v5586
      %v5588 = vpop.f32.mrf.mxu0
      %5589 = vdwg.mxu0
      %v5590 = vadd.f32 %v5458, %v5528
      %v5591 = vadd.f32 %v5459, %v5531
      %v5592 = vadd.f32 %v5460, %v5536
      %v5593 = vadd.f32 %v5461, %v5539
      %v5594 = vadd.f32 %v5462, %v5544
      %v5595 = vadd.f32 %v5463, %v5547
      %v5596 = vadd.f32 %v5464, %v5552
      %v5597 = vadd.f32 %v5465, %v5555
      %v5598 = vadd.f32 %v5466, %v5560
      %v5599 = vadd.f32 %v5467, %v5563
      %v5600 = vadd.f32 %v5468, %v5568
      %v5601 = vadd.f32 %v5469, %v5571
      %v5602 = vadd.f32 %v5470, %v5576
      %v5603 = vadd.f32 %v5471, %v5579
      %v5604 = vadd.f32 %v5472, %v5584
      %v5605 = vadd.f32 %v5473, %v5587
      %v5606 = vld [vmem:[%s1156] sm:$0x3]
      %v5610 = vunpack.c.l.b16 %v4680
      %v5611 = vunpack.c.l.b16 %v4681
      %v5612 = vunpack.c.l.b16 %v4682
      %v5613 = vpack.c.b16 %v5610, %v5328
      %v5614 = vpack.c.b16 %v5612, %v5611
      %v5616 = vsel %vm340, %v5613, 0
      %v5619 = vsel %vm340, %v5614, 0
      %v5622 = vsel %vm365, %v5606, 0
      %5624 = vmatprep.subr.bf16.mxu0 0
      %5625 = vmatpush1.bf16.msra.mxu0 0
      %5626 = vmatprep.subr.bf16.mxu0 0
      %5627 = vmatpush1.bf16.msra.mxu0 0
      %5628 = vmatprep.subr.bf16.mxu0 0
      %5629 = vmatpush1.bf16.msra.mxu0 0
      %5630 = vmatprep.subr.bf16.mxu0 0
      %5631 = vmatpush1.bf16.msra.mxu0 0
      %5632 = vmatprep.subr.bf16.mxu0 0
      %5633 = vmatpush1.bf16.msra.mxu0 0
      %5634 = vmatprep.subr.bf16.mxu0 0
      %5635 = vmatpush1.bf16.msra.mxu0 0
      %5636 = vmatprep.subr.bf16.mxu0 0
      %5637 = vmatpush1.bf16.msra.mxu0 0
      %5638 = vmatprep.subr.bf16.mxu0 0
      %5639 = vmatpush1.bf16.msra.mxu0 %v5622
      %5640 = vmatprep.subr.bf16.mxu0 0
      %5641 = vmatpush2.bf16.msra.mxu0 0
      %5642 = vmatprep.subr.bf16.mxu0 0
      %5643 = vmatpush2.bf16.msra.mxu0 0
      %5644 = vmatprep.subr.bf16.mxu0 0
      %5645 = vmatpush2.bf16.msra.mxu0 0
      %5646 = vmatprep.subr.bf16.mxu0 0
      %5647 = vmatpush2.bf16.msra.mxu0 0
      %5648 = vmatprep.subr.bf16.mxu0 0
      %5649 = vmatpush2.bf16.msra.mxu0 0
      %5650 = vmatprep.subr.bf16.mxu0 0
      %5651 = vmatpush2.bf16.msra.mxu0 0
      %5652 = vmatprep.subr.bf16.mxu0 0
      %5653 = vmatpush2.bf16.msra.mxu0 0
      %5654 = vmatprep.subr.bf16.mxu0 0
      %5655 = vmatpush2.bf16.msra.mxu0 0
      %5656 = vmatprep.mubr.bf16.mxu0 0
      %5657 = vmatmul.mubr.bf16.gmra.mxu0 %v4929
      %v5658 = vpop.f32.mrf.mxu0
      %v5659 = vadd.f32 0.0, %v5658
      %v5660 = vpop.f32.mrf.mxu0
      %v5661 = vpop.f32.mrf.mxu0
      %v5662 = vadd.f32 0.0, %v5661
      %v5663 = vpop.f32.mrf.mxu0
      %5664 = vmatprep.mubr.bf16.mxu0 0
      %5665 = vmatmul.mubr.bf16.gmra.mxu0 %v4931
      %v5666 = vpop.f32.mrf.mxu0
      %v5667 = vadd.f32 0.0, %v5666
      %v5668 = vpop.f32.mrf.mxu0
      %v5669 = vpop.f32.mrf.mxu0
      %v5670 = vadd.f32 0.0, %v5669
      %v5671 = vpop.f32.mrf.mxu0
      %5672 = vmatprep.mubr.bf16.mxu0 0
      %5673 = vmatmul.mubr.bf16.gmra.mxu0 %v4933
      %v5674 = vpop.f32.mrf.mxu0
      %v5675 = vadd.f32 0.0, %v5674
      %v5676 = vpop.f32.mrf.mxu0
      %v5677 = vpop.f32.mrf.mxu0
      %v5678 = vadd.f32 0.0, %v5677
      %v5679 = vpop.f32.mrf.mxu0
      %5680 = vmatprep.mubr.bf16.mxu0 0
      %5681 = vmatmul.mubr.bf16.gmra.mxu0 %v4935
      %v5682 = vpop.f32.mrf.mxu0
      %v5683 = vadd.f32 0.0, %v5682
      %v5684 = vpop.f32.mrf.mxu0
      %v5685 = vpop.f32.mrf.mxu0
      %v5686 = vadd.f32 0.0, %v5685
      %v5687 = vpop.f32.mrf.mxu0
      %5688 = vmatprep.mubr.bf16.mxu0 0
      %5689 = vmatmul.mubr.bf16.gmra.mxu0 %v5205
      %v5690 = vpop.f32.mrf.mxu0
      %v5691 = vadd.f32 0.0, %v5690
      %v5692 = vpop.f32.mrf.mxu0
      %v5693 = vpop.f32.mrf.mxu0
      %v5694 = vadd.f32 0.0, %v5693
      %v5695 = vpop.f32.mrf.mxu0
      %5696 = vmatprep.mubr.bf16.mxu0 0
      %5697 = vmatmul.mubr.bf16.gmra.mxu0 %v5208
      %v5698 = vpop.f32.mrf.mxu0
      %v5699 = vadd.f32 0.0, %v5698
      %v5700 = vpop.f32.mrf.mxu0
      %v5701 = vpop.f32.mrf.mxu0
      %v5702 = vadd.f32 0.0, %v5701
      %v5703 = vpop.f32.mrf.mxu0
      %5704 = vmatprep.mubr.bf16.mxu0 0
      %5705 = vmatmul.mubr.bf16.gmra.mxu0 %v5616
      %v5706 = vpop.f32.mrf.mxu0
      %v5707 = vadd.f32 0.0, %v5706
      %v5708 = vpop.f32.mrf.mxu0
      %v5709 = vpop.f32.mrf.mxu0
      %v5710 = vadd.f32 0.0, %v5709
      %v5711 = vpop.f32.mrf.mxu0
      %5712 = vmatprep.mubr.bf16.mxu0 0
      %5713 = vmatmul.mubr.bf16.gmra.mxu0 %v5619
      %v5714 = vpop.f32.mrf.mxu0
      %v5715 = vadd.f32 0.0, %v5714
      %v5716 = vpop.f32.mrf.mxu0
      %v5717 = vpop.f32.mrf.mxu0
      %v5718 = vadd.f32 0.0, %v5717
      %v5719 = vpop.f32.mrf.mxu0
      %5720 = vdwg.mxu0
      %v5721 = vadd.f32 %v5590, %v5659
      %v5722 = vadd.f32 %v5591, %v5662
      %v5723 = vadd.f32 %v5592, %v5667
      %v5724 = vadd.f32 %v5593, %v5670
      %v5725 = vadd.f32 %v5594, %v5675
      %v5726 = vadd.f32 %v5595, %v5678
      %v5727 = vadd.f32 %v5596, %v5683
      %v5728 = vadd.f32 %v5597, %v5686
      %v5729 = vadd.f32 %v5598, %v5691
      %v5730 = vadd.f32 %v5599, %v5694
      %v5731 = vadd.f32 %v5600, %v5699
      %v5732 = vadd.f32 %v5601, %v5702
      %v5733 = vadd.f32 %v5602, %v5707
      %v5734 = vadd.f32 %v5603, %v5710
      %v5735 = vadd.f32 %v5604, %v5715
      %v5736 = vadd.f32 %v5605, %v5718
      %v5737 = vld [vmem:[%s1288] sm:$0x3]
      %v5739 = vunpack.c.l.b16 %v4683
      %v5740 = vpack.c.b16 %v5739, %v5739
      %v5741 = vshll.u32 %v5613, 16
      %v5743 = vrot.slane %v5741, 1
      %v5744 = vsel %vm271, %v5343, %v5743
      %v5745 = vshrl.u32 %v5613, 16
      %v5747 = vor.u32 %v5745, %v5743
      %v5748 = vshll.u32 %v5614, 16
      %v5750 = vrot.slane %v5748, 1
      %v5751 = vsel %vm271, %v5747, %v5750
      %v5752 = vshrl.u32 %v5614, 16
      %v5754 = vor.u32 %v5752, %v5750
      %v5756 = vshll.u32 %v5740, 16
      %v5758 = vrot.slane %v5756, 1
      %v5759 = vsel %vm271, %v5754, %v5758
      %v5761 = vsel %vm340, %v5744, 0
      %v5764 = vsel %vm340, %v5751, 0
      %v5767 = vsel %vm340, %v5759, 0
      %v5770 = vsel %vm365, %v5737, 0
      %5772 = vmatprep.subr.bf16.mxu0 0
      %5773 = vmatpush1.bf16.msra.mxu0 0
      %5774 = vmatprep.subr.bf16.mxu0 0
      %5775 = vmatpush1.bf16.msra.mxu0 0
      %5776 = vmatprep.subr.bf16.mxu0 0
      %5777 = vmatpush1.bf16.msra.mxu0 0
      %5778 = vmatprep.subr.bf16.mxu0 0
      %5779 = vmatpush1.bf16.msra.mxu0 0
      %5780 = vmatprep.subr.bf16.mxu0 0
      %5781 = vmatpush1.bf16.msra.mxu0 0
      %5782 = vmatprep.subr.bf16.mxu0 0
      %5783 = vmatpush1.bf16.msra.mxu0 0
      %5784 = vmatprep.subr.bf16.mxu0 0
      %5785 = vmatpush1.bf16.msra.mxu0 0
      %5786 = vmatprep.subr.bf16.mxu0 0
      %5787 = vmatpush1.bf16.msra.mxu0 %v5770
      %5788 = vmatprep.subr.bf16.mxu0 0
      %5789 = vmatpush2.bf16.msra.mxu0 0
      %5790 = vmatprep.subr.bf16.mxu0 0
      %5791 = vmatpush2.bf16.msra.mxu0 0
      %5792 = vmatprep.subr.bf16.mxu0 0
      %5793 = vmatpush2.bf16.msra.mxu0 0
      %5794 = vmatprep.subr.bf16.mxu0 0
      %5795 = vmatpush2.bf16.msra.mxu0 0
      %5796 = vmatprep.subr.bf16.mxu0 0
      %5797 = vmatpush2.bf16.msra.mxu0 0
      %5798 = vmatprep.subr.bf16.mxu0 0
      %5799 = vmatpush2.bf16.msra.mxu0 0
      %5800 = vmatprep.subr.bf16.mxu0 0
      %5801 = vmatpush2.bf16.msra.mxu0 0
      %5802 = vmatprep.subr.bf16.mxu0 0
      %5803 = vmatpush2.bf16.msra.mxu0 0
      %5804 = vmatprep.mubr.bf16.mxu0 0
      %5805 = vmatmul.mubr.bf16.gmra.mxu0 %v4810
      %v5806 = vpop.f32.mrf.mxu0
      %v5807 = vadd.f32 0.0, %v5806
      %v5808 = vpop.f32.mrf.mxu0
      %v5809 = vpop.f32.mrf.mxu0
      %v5810 = vadd.f32 0.0, %v5809
      %v5811 = vpop.f32.mrf.mxu0
      %5812 = vmatprep.mubr.bf16.mxu0 0
      %5813 = vmatmul.mubr.bf16.gmra.mxu0 %v4813
      %v5814 = vpop.f32.mrf.mxu0
      %v5815 = vadd.f32 0.0, %v5814
      %v5816 = vpop.f32.mrf.mxu0
      %v5817 = vpop.f32.mrf.mxu0
      %v5818 = vadd.f32 0.0, %v5817
      %v5819 = vpop.f32.mrf.mxu0
      %5820 = vmatprep.mubr.bf16.mxu0 0
      %5821 = vmatmul.mubr.bf16.gmra.mxu0 %v4816
      %v5822 = vpop.f32.mrf.mxu0
      %v5823 = vadd.f32 0.0, %v5822
      %v5824 = vpop.f32.mrf.mxu0
      %v5825 = vpop.f32.mrf.mxu0
      %v5826 = vadd.f32 0.0, %v5825
      %v5827 = vpop.f32.mrf.mxu0
      %5828 = vmatprep.mubr.bf16.mxu0 0
      %5829 = vmatmul.mubr.bf16.gmra.mxu0 %v5350
      %v5830 = vpop.f32.mrf.mxu0
      %v5831 = vadd.f32 0.0, %v5830
      %v5832 = vpop.f32.mrf.mxu0
      %v5833 = vpop.f32.mrf.mxu0
      %v5834 = vadd.f32 0.0, %v5833
      %v5835 = vpop.f32.mrf.mxu0
      %5836 = vmatprep.mubr.bf16.mxu0 0
      %5837 = vmatmul.mubr.bf16.gmra.mxu0 %v5353
      %v5838 = vpop.f32.mrf.mxu0
      %v5839 = vadd.f32 0.0, %v5838
      %v5840 = vpop.f32.mrf.mxu0
      %v5841 = vpop.f32.mrf.mxu0
      %v5842 = vadd.f32 0.0, %v5841
      %v5843 = vpop.f32.mrf.mxu0
      %5844 = vmatprep.mubr.bf16.mxu0 0
      %5845 = vmatmul.mubr.bf16.gmra.mxu0 %v5761
      %v5846 = vpop.f32.mrf.mxu0
      %v5847 = vadd.f32 0.0, %v5846
      %v5848 = vpop.f32.mrf.mxu0
      %v5849 = vpop.f32.mrf.mxu0
      %v5850 = vadd.f32 0.0, %v5849
      %v5851 = vpop.f32.mrf.mxu0
      %5852 = vmatprep.mubr.bf16.mxu0 0
      %5853 = vmatmul.mubr.bf16.gmra.mxu0 %v5764
      %v5854 = vpop.f32.mrf.mxu0
      %v5855 = vadd.f32 0.0, %v5854
      %v5856 = vpop.f32.mrf.mxu0
      %v5857 = vpop.f32.mrf.mxu0
      %v5858 = vadd.f32 0.0, %v5857
      %v5859 = vpop.f32.mrf.mxu0
      %5860 = vmatprep.mubr.bf16.mxu0 0
      %5861 = vmatmul.mubr.bf16.gmra.mxu0 %v5767
      %v5862 = vpop.f32.mrf.mxu0
      %v5863 = vadd.f32 0.0, %v5862
      %v5864 = vpop.f32.mrf.mxu0
      %v5865 = vpop.f32.mrf.mxu0
      %v5866 = vadd.f32 0.0, %v5865
      %v5867 = vpop.f32.mrf.mxu0
      %5868 = vdwg.mxu0
      %v5869 = vadd.f32 %v5721, %v5807
      %v5870 = vadd.f32 %v5722, %v5810
      %v5871 = vadd.f32 %v5723, %v5815
      %v5872 = vadd.f32 %v5724, %v5818
      %v5873 = vadd.f32 %v5725, %v5823
      %v5874 = vadd.f32 %v5726, %v5826
      %v5875 = vadd.f32 %v5727, %v5831
      %v5876 = vadd.f32 %v5728, %v5834
      %v5877 = vadd.f32 %v5729, %v5839
      %v5878 = vadd.f32 %v5730, %v5842
      %v5879 = vadd.f32 %v5731, %v5847
      %v5880 = vadd.f32 %v5732, %v5850
      %v5881 = vadd.f32 %v5733, %v5855
      %v5882 = vadd.f32 %v5734, %v5858
      %v5883 = vadd.f32 %v5735, %v5863
      %v5884 = vadd.f32 %v5736, %v5866
      %v5885 = vld [vmem:[%s1437] sm:$0x3]
      %v5886 = vrot.slane %v5613, 1
      %v5887 = vsel %vm584, %v5477, %v5886
      %v5888 = vrot.slane %v5614, 1
      %v5889 = vsel %vm584, %v5886, %v5888
      %v5890 = vrot.slane %v5740, 1
      %v5891 = vsel %vm584, %v5888, %v5890
      %v5893 = vsel %vm340, %v5887, 0
      %v5896 = vsel %vm340, %v5889, 0
      %v5899 = vsel %vm340, %v5891, 0
      %v5902 = vsel %vm365, %v5885, 0
      %5904 = vmatprep.subr.bf16.mxu0 0
      %5905 = vmatpush1.bf16.msra.mxu0 0
      %5906 = vmatprep.subr.bf16.mxu0 0
      %5907 = vmatpush1.bf16.msra.mxu0 0
      %5908 = vmatprep.subr.bf16.mxu0 0
      %5909 = vmatpush1.bf16.msra.mxu0 0
      %5910 = vmatprep.subr.bf16.mxu0 0
      %5911 = vmatpush1.bf16.msra.mxu0 0
      %5912 = vmatprep.subr.bf16.mxu0 0
      %5913 = vmatpush1.bf16.msra.mxu0 0
      %5914 = vmatprep.subr.bf16.mxu0 0
      %5915 = vmatpush1.bf16.msra.mxu0 0
      %5916 = vmatprep.subr.bf16.mxu0 0
      %5917 = vmatpush1.bf16.msra.mxu0 0
      %5918 = vmatprep.subr.bf16.mxu0 0
      %5919 = vmatpush1.bf16.msra.mxu0 %v5902
      %5920 = vmatprep.subr.bf16.mxu0 0
      %5921 = vmatpush2.bf16.msra.mxu0 0
      %5922 = vmatprep.subr.bf16.mxu0 0
      %5923 = vmatpush2.bf16.msra.mxu0 0
      %5924 = vmatprep.subr.bf16.mxu0 0
      %5925 = vmatpush2.bf16.msra.mxu0 0
      %5926 = vmatprep.subr.bf16.mxu0 0
      %5927 = vmatpush2.bf16.msra.mxu0 0
      %5928 = vmatprep.subr.bf16.mxu0 0
      %5929 = vmatpush2.bf16.msra.mxu0 0
      %5930 = vmatprep.subr.bf16.mxu0 0
      %5931 = vmatpush2.bf16.msra.mxu0 0
      %5932 = vmatprep.subr.bf16.mxu0 0
      %5933 = vmatpush2.bf16.msra.mxu0 0
      %5934 = vmatprep.subr.bf16.mxu0 0
      %5935 = vmatpush2.bf16.msra.mxu0 0
      %5936 = vmatprep.mubr.bf16.mxu0 0
      %5937 = vmatmul.mubr.bf16.gmra.mxu0 %v5068
      %v5938 = vpop.f32.mrf.mxu0
      %v5939 = vadd.f32 0.0, %v5938
      %v5940 = vpop.f32.mrf.mxu0
      %v5941 = vpop.f32.mrf.mxu0
      %v5942 = vadd.f32 0.0, %v5941
      %v5943 = vpop.f32.mrf.mxu0
      %5944 = vmatprep.mubr.bf16.mxu0 0
      %5945 = vmatmul.mubr.bf16.gmra.mxu0 %v5071
      %v5946 = vpop.f32.mrf.mxu0
      %v5947 = vadd.f32 0.0, %v5946
      %v5948 = vpop.f32.mrf.mxu0
      %v5949 = vpop.f32.mrf.mxu0
      %v5950 = vadd.f32 0.0, %v5949
      %v5951 = vpop.f32.mrf.mxu0
      %5952 = vmatprep.mubr.bf16.mxu0 0
      %5953 = vmatmul.mubr.bf16.gmra.mxu0 %v5074
      %v5954 = vpop.f32.mrf.mxu0
      %v5955 = vadd.f32 0.0, %v5954
      %v5956 = vpop.f32.mrf.mxu0
      %v5957 = vpop.f32.mrf.mxu0
      %v5958 = vadd.f32 0.0, %v5957
      %v5959 = vpop.f32.mrf.mxu0
      %5960 = vmatprep.mubr.bf16.mxu0 0
      %5961 = vmatmul.mubr.bf16.gmra.mxu0 %v5482
      %v5962 = vpop.f32.mrf.mxu0
      %v5963 = vadd.f32 0.0, %v5962
      %v5964 = vpop.f32.mrf.mxu0
      %v5965 = vpop.f32.mrf.mxu0
      %v5966 = vadd.f32 0.0, %v5965
      %v5967 = vpop.f32.mrf.mxu0
      %5968 = vmatprep.mubr.bf16.mxu0 0
      %5969 = vmatmul.mubr.bf16.gmra.mxu0 %v5485
      %v5970 = vpop.f32.mrf.mxu0
      %v5971 = vadd.f32 0.0, %v5970
      %v5972 = vpop.f32.mrf.mxu0
      %v5973 = vpop.f32.mrf.mxu0
      %v5974 = vadd.f32 0.0, %v5973
      %v5975 = vpop.f32.mrf.mxu0
      %5976 = vmatprep.mubr.bf16.mxu0 0
      %5977 = vmatmul.mubr.bf16.gmra.mxu0 %v5893
      %v5978 = vpop.f32.mrf.mxu0
      %v5979 = vadd.f32 0.0, %v5978
      %v5980 = vpop.f32.mrf.mxu0
      %v5981 = vpop.f32.mrf.mxu0
      %v5982 = vadd.f32 0.0, %v5981
      %v5983 = vpop.f32.mrf.mxu0
      %5984 = vmatprep.mubr.bf16.mxu0 0
      %5985 = vmatmul.mubr.bf16.gmra.mxu0 %v5896
      %v5986 = vpop.f32.mrf.mxu0
      %v5987 = vadd.f32 0.0, %v5986
      %v5988 = vpop.f32.mrf.mxu0
      %v5989 = vpop.f32.mrf.mxu0
      %v5990 = vadd.f32 0.0, %v5989
      %v5991 = vpop.f32.mrf.mxu0
      %5992 = vmatprep.mubr.bf16.mxu0 0
      %5993 = vmatmul.mubr.bf16.gmra.mxu0 %v5899
      %v5994 = vpop.f32.mrf.mxu0
      %v5995 = vadd.f32 0.0, %v5994
      %v5996 = vpop.f32.mrf.mxu0
      %v5997 = vpop.f32.mrf.mxu0
      %v5998 = vadd.f32 0.0, %v5997
      %v5999 = vpop.f32.mrf.mxu0
      %6000 = vdwg.mxu0
      %v6001 = vadd.f32 %v5869, %v5939
      %v6002 = vadd.f32 %v5870, %v5942
      %v6003 = vadd.f32 %v5871, %v5947
      %v6004 = vadd.f32 %v5872, %v5950
      %v6005 = vadd.f32 %v5873, %v5955
      %v6006 = vadd.f32 %v5874, %v5958
      %v6007 = vadd.f32 %v5875, %v5963
      %v6008 = vadd.f32 %v5876, %v5966
      %v6009 = vadd.f32 %v5877, %v5971
      %v6010 = vadd.f32 %v5878, %v5974
      %v6011 = vadd.f32 %v5879, %v5979
      %v6012 = vadd.f32 %v5880, %v5982
      %v6013 = vadd.f32 %v5881, %v5987
      %v6014 = vadd.f32 %v5882, %v5990
      %v6015 = vadd.f32 %v5883, %v5995
      %v6016 = vadd.f32 %v5884, %v5998
      %v6017 = vld [vmem:[%s2] sm:$0x1]
      %v6019 = vlaneseq
      %v6020 = vshrl.u32 %v6019, 7
      %v6021 = vsub.s32 0, %v6020
      %v6022 = vrot.slane %v6017, %v6021
      %v6024 = vadd.f32 %v6001, %v6022
      %v6025 = vadd.f32 %v6002, %v6022
      %v6026 = vadd.f32 %v6003, %v6022
      %v6027 = vadd.f32 %v6004, %v6022
      %v6028 = vadd.f32 %v6005, %v6022
      %v6029 = vadd.f32 %v6006, %v6022
      %v6030 = vadd.f32 %v6007, %v6022
      %v6031 = vadd.f32 %v6008, %v6022
      %v6032 = vadd.f32 %v6009, %v6022
      %v6033 = vadd.f32 %v6010, %v6022
      %v6034 = vadd.f32 %v6011, %v6022
      %v6035 = vadd.f32 %v6012, %v6022
      %v6036 = vadd.f32 %v6013, %v6022
      %v6037 = vadd.f32 %v6014, %v6022
      %v6038 = vadd.f32 %v6015, %v6022
      %v6039 = vadd.f32 %v6016, %v6022
      %v6040 = vmax.f32 %v6024, 0.0
      %v6041 = vmax.f32 %v6025, 0.0
      %v6042 = vmax.f32 %v6026, 0.0
      %v6043 = vmax.f32 %v6027, 0.0
      %v6044 = vmax.f32 %v6028, 0.0
      %v6045 = vmax.f32 %v6029, 0.0
      %v6046 = vmax.f32 %v6030, 0.0
      %v6047 = vmax.f32 %v6031, 0.0
      %v6048 = vmax.f32 %v6032, 0.0
      %v6049 = vmax.f32 %v6033, 0.0
      %v6050 = vmax.f32 %v6034, 0.0
      %v6051 = vmax.f32 %v6035, 0.0
      %v6052 = vmax.f32 %v6036, 0.0
      %v6053 = vmax.f32 %v6037, 0.0
      %v6054 = vmax.f32 %v6038, 0.0
      %v6055 = vmax.f32 %v6039, 0.0
      %v6056 = vpack.c.bf16 %v6041, %v6040
      %v6057 = vpack.c.bf16 %v6043, %v6042
      %v6058 = vpack.c.bf16 %v6045, %v6044
      %v6059 = vpack.c.bf16 %v6047, %v6046
      %v6060 = vpack.c.bf16 %v6049, %v6048
      %v6061 = vpack.c.bf16 %v6051, %v6050
      %v6062 = vpack.c.bf16 %v6053, %v6052
      %v6063 = vpack.c.bf16 %v6055, %v6054
      %v6072 = vunpack.c.l.b16 %v6056
      %v6073 = vunpack.c.h.b16 %v6056
      %v6074 = vunpack.c.l.b16 %v6057
      %v6075 = vunpack.c.h.b16 %v6057
      %v6076 = vunpack.c.l.b16 %v6058
      %v6077 = vunpack.c.h.b16 %v6058
      %v6078 = vunpack.c.l.b16 %v6059
      %v6079 = vunpack.c.h.b16 %v6059
      %v6080 = vunpack.c.l.b16 %v6060
      %v6081 = vunpack.c.h.b16 %v6060
      %v6082 = vunpack.c.l.b16 %v6061
      %v6083 = vunpack.c.h.b16 %v6061
      %v6084 = vunpack.c.l.b16 %v6062
      %v6085 = vunpack.c.h.b16 %v6062
      %v6086 = vunpack.c.l.b16 %v6063
      %v6087 = vunpack.c.h.b16 %v6063
      %v6088 = vpack.c.b16 %v6072, %v6072
      %v6089 = vpack.c.b16 %v6073, %v6073
      %v6090 = vpack.c.b16 %v6074, %v6074
      %v6091 = vpack.c.b16 %v6075, %v6075
      %v6092 = vpack.c.b16 %v6076, %v6076
      %v6093 = vpack.c.b16 %v6077, %v6077
      %v6094 = vpack.c.b16 %v6078, %v6078
      %v6095 = vpack.c.b16 %v6079, %v6079
      %v6096 = vpack.c.b16 %v6080, %v6080
      %v6097 = vpack.c.b16 %v6081, %v6081
      %v6098 = vpack.c.b16 %v6082, %v6082
      %v6099 = vpack.c.b16 %v6083, %v6083
      %v6100 = vpack.c.b16 %v6084, %v6084
      %v6101 = vpack.c.b16 %v6085, %v6085
      %v6102 = vpack.c.b16 %v6086, %v6086
      %v6103 = vpack.c.b16 %v6087, %v6087
      %6120 = vst.msk [vmem:[%s192 + $0xc0] sm:$0xf] %vm1673, %v6088
      %6121 = vst.msk [vmem:[%s192 + $0xc4] sm:$0xf] %vm1673, %v6089
      %6122 = vst.msk [vmem:[%s192 + $0xc8] sm:$0xf] %vm1673, %v6090
      %6123 = vst.msk [vmem:[%s192 + $0xcc] sm:$0xf] %vm1673, %v6091
      %6124 = vst.msk [vmem:[%s192 + $0xd0] sm:$0xf] %vm1673, %v6092
      %6125 = vst.msk [vmem:[%s192 + $0xd4] sm:$0xf] %vm1673, %v6093
      %6126 = vst.msk [vmem:[%s192 + $0xd8] sm:$0xf] %vm1673, %v6094
      %6127 = vst.msk [vmem:[%s192 + $0xdc] sm:$0xf] %vm1673, %v6095
      %6128 = vst.msk [vmem:[%s192 + $0xe0] sm:$0xf] %vm1673, %v6096
      %6129 = vst.msk [vmem:[%s192 + $0xe4] sm:$0xf] %vm1673, %v6097
      %6130 = vst.msk [vmem:[%s192 + $0xe8] sm:$0xf] %vm1673, %v6098
      %6131 = vst.msk [vmem:[%s192 + $0xec] sm:$0xf] %vm1673, %v6099
      %6132 = vst.msk [vmem:[%s192 + $0xf0] sm:$0xf] %vm1673, %v6100
      %6133 = vst.msk [vmem:[%s192 + $0xf4] sm:$0xf] %vm1673, %v6101
      %6134 = vst.msk [vmem:[%s192 + $0xf8] sm:$0xf] %vm1673, %v6102
      %6135 = vst.msk [vmem:[%s192 + $0xfc] sm:$0xf] %vm1673, %v6103
      %s6136 = smul.u32 64, %s19
      %p6137 = scmp.lt.s32.totalorder %s18, 1
      %s6138 = scalar_select %p6137, %s18, 1
      %p6139 = scmp.lt.s32.totalorder %s6136, 63
      %s6140 = scalar_select %p6139, %s6136, 63
      %s6141 = smul.addr %s6138, 64
      %s6142 = sadd.s32 %s6140, %s6141
      %s6143 = smul.addr %s6142, 4
      %s6144 = scalar_lea.vmem %s3, %s6143
      // Predicated region
      $region33: #{bottleneck_forward.4} parent=31 // pred_check
        %p6145 = pneg %p114
      $region34: #{bottleneck_forward.4} parent=31 // pred_check_branch
        %6147 = sbr.rel (%p6145) target = $region36
      $region35: #{bottleneck_forward.4} parent=31 // pred_region
        %s6148 = smul.u32 64, %s19
      $region36: #{bottleneck_forward.4} parent=31 // pred_fallthru
        _
    $region32: #{bottleneck_forward.4} parent=5 // pred_fallthru
      _
    %p6149 = scmp.le.s32.totalorder 2, %s9
    // Predicated region
    $region37: #{bottleneck_forward.4} parent=5 // pred_check
      %p6150 = pneg %p6149
    $region38: #{bottleneck_forward.4} parent=5 // pred_check_branch
      %6152 = sbr.rel (%p6150) target = $region40
    $region39: #{bottleneck_forward.4} parent=5 // pred_region
      %s6153 = ssub.s32 %s9, 2
      // Predicated region
      $region41: #{bottleneck_forward.4} parent=39 // pred_check
        %p6154 = pneg %p120
      $region42: #{bottleneck_forward.4} parent=39 // pred_check_branch
        %6156 = sbr.rel (%p6154) target = $region44
      $region43: #{bottleneck_forward.4} parent=39 // pred_region
        %s6157 = smul.u32 64, %s21
        %p6158 = scmp.lt.s32.totalorder %s20, 1
        %s6159 = scalar_select %p6158, %s20, 1
        %p6160 = scmp.lt.s32.totalorder %s6157, 63
        %s6161 = scalar_select %p6160, %s6157, 63
        %s6162 = smul.addr %s6159, 64
        %s6163 = sadd.s32 %s6161, %s6162
        %s6164 = smul.addr %s6163, 4
        %s6165 = scalar_lea.vmem %s3, %s6164
      $region44: #{bottleneck_forward.4} parent=39 // pred_fallthru
        _
    $region40: #{bottleneck_forward.4} parent=5 // pred_fallthru
      _
  $region6: #{bottleneck_forward.4} parent=0 // loop_footer
    %s13 = sadd.s32 1, %s9
  $region7: #{bottleneck_forward.4} parent=0 // loop_footer_branch
    %8 = sbr.rel target = $region3
  $region8: #{bottleneck_forward.4} parent=0 // loop_exit
    _

</llo_original>
